<compile_context>
chip_gen: v5e
topology: v5e:2x2
jax: 0.10.0
libtpu: 0.0.40
codegen_flags: <defaults>
</compile_context>

<pallas_src>
import math

import jax
import jax.numpy as jnp
from jax.experimental import pallas as pl
from jax.experimental.pallas import tpu as pltpu

_BN_EPS = 1e-5
_CPAD = 128                       # lane granule: channel axis padded to this

_VMEM_LIMIT_CACHE = None


def _vmem_limit_bytes():
    """Generation-aware scoped-VMEM limit (<= ~48 MiB on v7x's 64 MiB)."""
    global _VMEM_LIMIT_CACHE
    if _VMEM_LIMIT_CACHE is None:
        try:
            cap = pltpu.get_tpu_info().vmem_capacity_bytes
            _VMEM_LIMIT_CACHE = min(int(cap) * 3 // 4, 64 * 1024 * 1024)
        except Exception:                      # conservative fallback
            _VMEM_LIMIT_CACHE = 32 * 1024 * 1024
    return _VMEM_LIMIT_CACHE


# ---------------------------------------------------------------------------
# Pass 1: stride-1 'same' KxKxK conv for one (batch item, full depth) slab.
# Writes the bf16 pre-BN activation and per-channel sum / sum-of-squares
# partials (BatchNorm needs global batch statistics, so normalization happens
# in pass 2 after a tiny cross-step reduction).
# Assumes W is a multiple of 8 so the in-kernel (D,H,W,C)->(M,C) reshapes are
# layout-free.
# ---------------------------------------------------------------------------
def _make_conv_kernel(D, H, W, K):
    M = D * H * W

    def kernel(x_ref, w_ref, y_ref, stat_ref):
        C = y_ref.shape[-1]
        xs = x_ref[0]                                    # (Dp, Hp, Wp, C) bf16
        if K > 1:
            # Fold the kw taps into the contraction: lane-concat of W-shifted
            # windows -> (Dp, Hp, W, K*C) patches, paid once per grid step.
            xs = jnp.concatenate(
                [xs[:, :, kw:kw + W, :] for kw in range(K)], axis=-1)
        acc = jnp.zeros((M, C), jnp.float32)
        for kd in range(K):                    # K*K matmuls, contraction = K*C
            for kh in range(K):                # (kd, kh slices are tile-aligned)
                patch = xs[kd:kd + D, kh:kh + H, :, :].reshape(M, K * C)
                acc += jnp.dot(patch, w_ref[kd, kh],
                               preferred_element_type=jnp.float32)
        y16 = acc.astype(jnp.bfloat16)
        y_ref[0] = y16.reshape(D, H, W, C)
        # Stats from the bf16-rounded tensor so they are self-consistent with
        # the values pass 2 normalizes.
        yf = y16.astype(jnp.float32)
        s1 = jnp.sum(yf, axis=0, keepdims=True)
        s2 = jnp.sum(yf * yf, axis=0, keepdims=True)
        stat_ref[0] = jnp.concatenate([s1, s2], axis=0)

    return kernel


# ---------------------------------------------------------------------------
# Pass 2: pure elementwise BN (precomputed scale/shift) + ReLU (+ residual).
# ---------------------------------------------------------------------------
def _make_bn_kernel(has_residual):
    def kernel(*refs):
        if has_residual:
            y_ref, sb_ref, res_ref, o_ref = refs
        else:
            y_ref, sb_ref, o_ref = refs
        y = y_ref[0].astype(jnp.float32)                       # (D, H, W, C)
        out = jnp.maximum(y * sb_ref[0:1, :] + sb_ref[1:2, :], 0.0)
        if has_residual:
            out = out + res_ref[0].astype(jnp.float32)         # add AFTER ReLU
        o_ref[0] = out.astype(jnp.bfloat16)

    return kernel


# ---------------------------------------------------------------------------
# One ConvBlock (Conv3d 'same' + BatchNorm3d(training stats) + ReLU)
# [+ residual added after the ReLU, matching torch.add(x, x_res)].
# ---------------------------------------------------------------------------
def conv_block_pallas(x5, w, gamma, beta, k, residual=None):
    """x5: (N, D, H, W, _CPAD) bf16 channel-padded NDHWC activation.
    w: PyTorch Conv3d weight (Cout, Cin, k, k, k) f32.
    residual: optional (N, D, H, W, _CPAD) bf16 added after the ReLU.
    Returns (N, D, H, W, _CPAD) bf16 (padded channels stay exactly zero).

    Note: the Conv3d bias is intentionally not applied — with batch-statistics
    BatchNorm immediately after the conv it cancels exactly."""
    n, d, h, wsp, cpad = x5.shape
    cout, cin = w.shape[0], w.shape[1]
    p = k // 2
    m = n * d * h * wsp

    # Weights -> (kd, kh, kw*C_in-fold, C_out) bf16 MXU operand, zero-padded to
    # the lane granule so padded in/out channels contribute exactly zero.
    w_t = jnp.transpose(w, (2, 3, 4, 1, 0))                  # (kd,kh,kw,ci,co)
    w_pad = (jnp.zeros((k, k, k, cpad, cpad), jnp.float32)
             .at[..., :cin, :cout].set(w_t)
             .astype(jnp.bfloat16)
             .reshape(k, k, k * cpad, cpad))
    g_pad = jnp.zeros((cpad,), jnp.float32).at[:cout].set(gamma)
    beta_pad = jnp.zeros((cpad,), jnp.float32).at[:cout].set(beta)

    # Spatial 'same' padding once per block in HBM (bf16 -> cheap).
    xp = jnp.pad(x5, ((0, 0), (p, p), (p, p), (p, p), (0, 0))) if p else x5
    dp, hp, wp = d + 2 * p, h + 2 * p, wsp + 2 * p

    cparams = pltpu.CompilerParams(
        dimension_semantics=("parallel",),   # N independent slabs -> 2 TCs on v7x
        vmem_limit_bytes=_vmem_limit_bytes())

    x_spec = pl.BlockSpec((1, dp, hp, wp, cpad), lambda i: (i, 0, 0, 0, 0))
    w_spec = pl.BlockSpec((k, k, k * cpad, cpad), lambda i: (0, 0, 0, 0))
    act_spec = pl.BlockSpec((1, d, h, wsp, cpad), lambda i: (i, 0, 0, 0, 0))
    stat_spec = pl.BlockSpec((1, 2, cpad), lambda i: (i, 0, 0))
    sb_spec = pl.BlockSpec((2, cpad), lambda i: (0, 0))

    # ---- Pass 1: conv once, write bf16 pre-BN activation + stats partials.
    y_pre, stats = pl.pallas_call(
        _make_conv_kernel(d, h, wsp, k),
        out_shape=(jax.ShapeDtypeStruct((n, d, h, wsp, cpad), jnp.bfloat16),
                   jax.ShapeDtypeStruct((n, 2, cpad), jnp.float32)),
        grid=(n,),
        in_specs=[x_spec, w_spec],
        out_specs=(act_spec, stat_spec),
        compiler_params=cparams,
    )(xp, w_pad)

    # Global (biased) batch statistics -> fused per-channel scale / shift.
    s = jnp.sum(stats, axis=0)                               # (2, cpad)
    mean = s[0] / float(m)
    var = jnp.maximum(s[1] / float(m) - mean * mean, 0.0)
    scale = g_pad * jax.lax.rsqrt(var + _BN_EPS)
    shift = beta_pad - mean * scale
    sb = jnp.stack([scale, shift], axis=0)                   # (2, cpad) f32

    # ---- Pass 2: elementwise BN + ReLU (+ residual) on the stored activation.
    in_specs = [act_spec, sb_spec]
    args = [y_pre, sb]
    if residual is not None:
        in_specs.append(act_spec)
        args.append(residual)

    return pl.pallas_call(
        _make_bn_kernel(residual is not None),
        out_shape=jax.ShapeDtypeStruct((n, d, h, wsp, cpad), jnp.bfloat16),
        grid=(n,),
        in_specs=in_specs,
        out_specs=act_spec,
        compiler_params=cparams,
    )(*args)


# ---------------------------------------------------------------------------
# ResidualBlock.forward (NCDHW in / NCDHW out, PyTorch convention)
# ---------------------------------------------------------------------------
def residual_block_forward(x_ncdhw, params):
    x = jnp.transpose(x_ncdhw, (0, 2, 3, 4, 1)).astype(jnp.float32)  # NDHWC
    n, d, h, w, cin = x.shape
    cout = params["conv"]["w"].shape[0]

    # Channel-pad once to the 128-lane granule and keep activations bf16; the
    # whole chain stays lane-dense and padded channels stay exactly zero.
    x_pad = (jnp.zeros((n, d, h, w, _CPAD), jnp.float32)
             .at[..., :cin].set(x)
             .astype(jnp.bfloat16))

    pr = params["conv_res"]                                # 1x1x1 projection
    x_res = conv_block_pallas(x_pad, pr["w"], pr["gamma"], pr["beta"], k=1)

    pc = params["conv"]                                    # 3x3x3 + x_res
    x_out = conv_block_pallas(x_pad, pc["w"], pc["gamma"], pc["beta"], k=3,
                              residual=x_res)

    for prm in params["remain"]:                           # 3x3x3 + x_out
        x_out = conv_block_pallas(x_out, prm["w"], prm["gamma"], prm["beta"],
                                  k=3, residual=x_out)

    out = x_out[..., :cout].astype(jnp.float32)
    return jnp.transpose(out, (0, 4, 1, 2, 3))             # -> NCDHW


# ---------------------------------------------------------------------------
# Deterministic synthetic parameter init (Conv3d / BatchNorm3d shapes)
# ---------------------------------------------------------------------------
def init_conv_block(key, cin, cout, k):
    kw, kb, kg, kbe = jax.random.split(key, 4)
    fan_in = cin * k ** 3
    bound = 1.0 / math.sqrt(fan_in)
    return dict(
        w=jax.random.uniform(kw, (cout, cin, k, k, k), jnp.float32, -bound, bound),
        # Conv bias kept for module fidelity; it cancels under batch-stats BN.
        b=jax.random.uniform(kb, (cout,), jnp.float32, -bound, bound),
        gamma=jax.random.uniform(kg, (cout,), jnp.float32, 0.5, 1.5),
        beta=jax.random.uniform(kbe, (cout,), jnp.float32, -0.5, 0.5),
    )


def init_residual_block(key, in_channels, out_channels, conv_num):
    keys = jax.random.split(key, conv_num + 1)
    return {
        "conv_res": init_conv_block(keys[0], in_channels, out_channels, 1),
        "conv": init_conv_block(keys[1], in_channels, out_channels, 3),
        "remain": [
            init_conv_block(keys[2 + i], out_channels, out_channels, 3)
            for i in range(conv_num - 1)
        ],
    }


if __name__ == "__main__":
    key = jax.random.PRNGKey(0)
    k_params, k_x = jax.random.split(key)

    in_channels, out_channels, conv_num = 4, 8, 2
    N, D, H, W = 2, 8, 8, 8

    params = init_residual_block(k_params, in_channels, out_channels, conv_num)
    x = jax.random.normal(k_x, (N, in_channels, D, H, W), jnp.float32)  # NCDHW

    out = jax.jit(residual_block_forward)(x, params)
    jax.block_until_ready(out)
    assert out.shape == (N, out_channels, D, H, W)
    print("KERNEL_OK")
</pallas_src>

<mosaic_0001>
module attributes {stable_mosaic.version = 11 : i64} {
  func.func @kernel(%arg0: i32, %arg1: memref<1x8x8x8x128xbf16, #tpu.memory_space<vmem>>, %arg2: memref<1x1x128x128xbf16, #tpu.memory_space<vmem>>, %arg3: memref<1x8x8x8x128xbf16, #tpu.memory_space<vmem>>, %arg4: memref<1x2x128xf32, #tpu.memory_space<vmem>>) attributes {dimension_semantics = [#tpu.dimension_semantics<parallel>], iteration_bounds = array<i64: 2>, scalar_prefetch = 0 : i64, scratch_operands = 0 : i64, tpu.core_type = #tpu.core_type<tc>, window_params = [{transform_indices = @transform_0, window_bounds = array<i64: 1, 8, 8, 8, 128>}, {pipeline_mode = #tpu.pipeline_mode<synchronous>, transform_indices = @transform_1, window_bounds = array<i64: 1, 1, 128, 128>}, {transform_indices = @transform_2, window_bounds = array<i64: 1, 8, 8, 8, 128>}, {transform_indices = @transform_3, window_bounds = array<i64: 1, 2, 128>}]} {
    %c0 = arith.constant 0 : index
    %c0_0 = arith.constant 0 : index
    %c0_1 = arith.constant 0 : index
    %c0_2 = arith.constant 0 : index
    %c0_3 = arith.constant 0 : index
    %0 = vector.load %arg1[%c0, %c0_0, %c0_1, %c0_2, %c0_3] : memref<1x8x8x8x128xbf16, #tpu.memory_space<vmem>>, vector<1x8x8x8x128xbf16>
    %1 = vector.shape_cast %0 : vector<1x8x8x8x128xbf16> to vector<8x8x8x128xbf16>
    %cst = arith.constant 0.000000e+00 : f32
    %2 = vector.broadcast %cst : f32 to vector<512x128xf32>
    %3 = vector.shape_cast %1 : vector<8x8x8x128xbf16> to vector<512x128xbf16>
    %c0_4 = arith.constant 0 : index
    %c0_5 = arith.constant 0 : index
    %c0_6 = arith.constant 0 : index
    %c0_7 = arith.constant 0 : index
    %4 = vector.load %arg2[%c0_4, %c0_5, %c0_6, %c0_7] : memref<1x1x128x128xbf16, #tpu.memory_space<vmem>>, vector<1x1x128x128xbf16>
    %5 = vector.shape_cast %4 : vector<1x1x128x128xbf16> to vector<128x128xbf16>
    %cst_8 = arith.constant dense<0.000000e+00> : vector<512x128xf32>
    %6 = tpu.matmul %3, %5, %cst_8 {dimension_numbers = #tpu.dot_dimension_numbers<[1], [0], [0], [1], [0, 0, 1, 1], [], []>} : vector<512x128xbf16>, vector<128x128xbf16>, vector<512x128xf32> -> vector<512x128xf32>
    %7 = arith.addf %2, %6 : vector<512x128xf32>
    %8 = arith.truncf %7 : vector<512x128xf32> to vector<512x128xbf16>
    %9 = vector.shape_cast %8 : vector<512x128xbf16> to vector<8x8x8x128xbf16>
    %c0_9 = arith.constant 0 : index
    %c0_10 = arith.constant 0 : index
    %c0_11 = arith.constant 0 : index
    %c0_12 = arith.constant 0 : index
    %c0_13 = arith.constant 0 : index
    %10 = vector.load %arg3[%c0_9, %c0_10, %c0_11, %c0_12, %c0_13] : memref<1x8x8x8x128xbf16, #tpu.memory_space<vmem>>, vector<1x8x8x8x128xbf16>
    %11 = vector.shape_cast %10 : vector<1x8x8x8x128xbf16> to vector<8x8x8x128xbf16>
    %12 = vector.shape_cast %9 : vector<8x8x8x128xbf16> to vector<1x8x8x8x128xbf16>
    tpu.vector_store %arg3[%c0_9, %c0_10, %c0_11, %c0_12, %c0_13], %12 {strides = array<i32>} : memref<1x8x8x8x128xbf16, #tpu.memory_space<vmem>>, vector<1x8x8x8x128xbf16>,
    %13 = arith.extf %8 : vector<512x128xbf16> to vector<512x128xf32>
    %cst_14 = arith.constant dense<0.000000e+00> : vector<128xf32>
    %14 = vector.multi_reduction <add>, %13, %cst_14 [0] : vector<512x128xf32> to vector<128xf32>
    %15 = vector.shape_cast %14 : vector<128xf32> to vector<1x128xf32>
    %16 = arith.mulf %13, %13 : vector<512x128xf32>
    %cst_15 = arith.constant dense<0.000000e+00> : vector<128xf32>
    %17 = vector.multi_reduction <add>, %16, %cst_15 [0] : vector<512x128xf32> to vector<128xf32>
    %18 = vector.shape_cast %17 : vector<128xf32> to vector<1x128xf32>
    %19 = tpu.concatenate %15, %18 in 0 : vector<1x128xf32>, vector<1x128xf32> -> vector<2x128xf32>
    %c0_16 = arith.constant 0 : index
    %c0_17 = arith.constant 0 : index
    %c0_18 = arith.constant 0 : index
    %20 = vector.load %arg4[%c0_16, %c0_17, %c0_18] : memref<1x2x128xf32, #tpu.memory_space<vmem>>, vector<1x2x128xf32>
    %21 = vector.shape_cast %20 : vector<1x2x128xf32> to vector<2x128xf32>
    %22 = vector.shape_cast %19 : vector<2x128xf32> to vector<1x2x128xf32>
    tpu.vector_store %arg4[%c0_16, %c0_17, %c0_18], %22 {strides = array<i32>} : memref<1x2x128xf32, #tpu.memory_space<vmem>>, vector<1x2x128xf32>,
    return
  }
  func.func @transform_0(%arg0: i32) -> (i32, i32, i32, i32, i32) {
    %c0_i32 = arith.constant 0 : i32
    %c0_i32_0 = arith.constant 0 : i32
    %c0_i32_1 = arith.constant 0 : i32
    %c0_i32_2 = arith.constant 0 : i32
    %c0_i32_3 = arith.constant 0 : i32
    return %arg0, %c0_i32, %c0_i32_0, %c0_i32_1, %c0_i32_2 : i32, i32, i32, i32, i32
  }
  func.func @transform_1(%arg0: i32) -> (i32, i32, i32, i32) {
    %c0_i32 = arith.constant 0 : i32
    %c0_i32_0 = arith.constant 0 : i32
    %c0_i32_1 = arith.constant 0 : i32
    %c0_i32_2 = arith.constant 0 : i32
    %c0_i32_3 = arith.constant 0 : i32
    return %c0_i32, %c0_i32_0, %c0_i32_1, %c0_i32_2 : i32, i32, i32, i32
  }
  func.func @transform_2(%arg0: i32) -> (i32, i32, i32, i32, i32) {
    %c0_i32 = arith.constant 0 : i32
    %c0_i32_0 = arith.constant 0 : i32
    %c0_i32_1 = arith.constant 0 : i32
    %c0_i32_2 = arith.constant 0 : i32
    %c0_i32_3 = arith.constant 0 : i32
    return %arg0, %c0_i32, %c0_i32_0, %c0_i32_1, %c0_i32_2 : i32, i32, i32, i32, i32
  }
  func.func @transform_3(%arg0: i32) -> (i32, i32, i32) {
    %c0_i32 = arith.constant 0 : i32
    %c0_i32_0 = arith.constant 0 : i32
    %c0_i32_1 = arith.constant 0 : i32
    return %arg0, %c0_i32, %c0_i32_0 : i32, i32, i32
  }
}

module attributes {stable_mosaic.version = 11 : i64} {
  func.func @kernel(%arg0: i32, %arg1: memref<1x8x8x8x128xbf16, #tpu.memory_space<vmem>>, %arg2: memref<2x128xf32, #tpu.memory_space<vmem>>, %arg3: memref<1x8x8x8x128xbf16, #tpu.memory_space<vmem>>) attributes {dimension_semantics = [#tpu.dimension_semantics<parallel>], iteration_bounds = array<i64: 2>, scalar_prefetch = 0 : i64, scratch_operands = 0 : i64, tpu.core_type = #tpu.core_type<tc>, window_params = [{transform_indices = @transform_0, window_bounds = array<i64: 1, 8, 8, 8, 128>}, {pipeline_mode = #tpu.pipeline_mode<synchronous>, transform_indices = @transform_1, window_bounds = array<i64: 2, 128>}, {transform_indices = @transform_2, window_bounds = array<i64: 1, 8, 8, 8, 128>}]} {
    %c0 = arith.constant 0 : index
    %c0_0 = arith.constant 0 : index
    %c0_1 = arith.constant 0 : index
    %c0_2 = arith.constant 0 : index
    %c0_3 = arith.constant 0 : index
    %0 = vector.load %arg1[%c0, %c0_0, %c0_1, %c0_2, %c0_3] : memref<1x8x8x8x128xbf16, #tpu.memory_space<vmem>>, vector<1x8x8x8x128xbf16>
    %1 = vector.shape_cast %0 : vector<1x8x8x8x128xbf16> to vector<8x8x8x128xbf16>
    %2 = arith.extf %1 : vector<8x8x8x128xbf16> to vector<8x8x8x128xf32>
    %c0_4 = arith.constant 0 : index
    %c0_5 = arith.constant 0 : index
    %3 = vector.load %arg2[%c0_4, %c0_5] : memref<2x128xf32, #tpu.memory_space<vmem>>, vector<1x128xf32>
    %4 = vector.shape_cast %3 : vector<1x128xf32> to vector<1x1x1x128xf32>
    %5 = vector.broadcast %4 : vector<1x1x1x128xf32> to vector<8x8x8x128xf32>
    %6 = arith.mulf %2, %5 : vector<8x8x8x128xf32>
    %c1 = arith.constant 1 : index
    %c0_6 = arith.constant 0 : index
    %7 = vector.load %arg2[%c1, %c0_6] : memref<2x128xf32, #tpu.memory_space<vmem>>, vector<1x128xf32>
    %8 = vector.shape_cast %7 : vector<1x128xf32> to vector<1x1x1x128xf32>
    %9 = vector.broadcast %8 : vector<1x1x1x128xf32> to vector<8x8x8x128xf32>
    %10 = arith.addf %6, %9 : vector<8x8x8x128xf32>
    %cst = arith.constant 0.000000e+00 : f32
    %11 = vector.broadcast %cst : f32 to vector<8x8x8x128xf32>
    %12 = arith.maximumf %10, %11 : vector<8x8x8x128xf32>
    %13 = arith.truncf %12 : vector<8x8x8x128xf32> to vector<8x8x8x128xbf16>
    %c0_7 = arith.constant 0 : index
    %c0_8 = arith.constant 0 : index
    %c0_9 = arith.constant 0 : index
    %c0_10 = arith.constant 0 : index
    %c0_11 = arith.constant 0 : index
    %14 = vector.load %arg3[%c0_7, %c0_8, %c0_9, %c0_10, %c0_11] : memref<1x8x8x8x128xbf16, #tpu.memory_space<vmem>>, vector<1x8x8x8x128xbf16>
    %15 = vector.shape_cast %14 : vector<1x8x8x8x128xbf16> to vector<8x8x8x128xbf16>
    %16 = vector.shape_cast %13 : vector<8x8x8x128xbf16> to vector<1x8x8x8x128xbf16>
    tpu.vector_store %arg3[%c0_7, %c0_8, %c0_9, %c0_10, %c0_11], %16 {strides = array<i32>} : memref<1x8x8x8x128xbf16, #tpu.memory_space<vmem>>, vector<1x8x8x8x128xbf16>,
    return
  }
  func.func @transform_0(%arg0: i32) -> (i32, i32, i32, i32, i32) {
    %c0_i32 = arith.constant 0 : i32
    %c0_i32_0 = arith.constant 0 : i32
    %c0_i32_1 = arith.constant 0 : i32
    %c0_i32_2 = arith.constant 0 : i32
    %c0_i32_3 = arith.constant 0 : i32
    return %arg0, %c0_i32, %c0_i32_0, %c0_i32_1, %c0_i32_2 : i32, i32, i32, i32, i32
  }
  func.func @transform_1(%arg0: i32) -> (i32, i32) {
    %c0_i32 = arith.constant 0 : i32
    %c0_i32_0 = arith.constant 0 : i32
    %c0_i32_1 = arith.constant 0 : i32
    return %c0_i32, %c0_i32_0 : i32, i32
  }
  func.func @transform_2(%arg0: i32) -> (i32, i32, i32, i32, i32) {
    %c0_i32 = arith.constant 0 : i32
    %c0_i32_0 = arith.constant 0 : i32
    %c0_i32_1 = arith.constant 0 : i32
    %c0_i32_2 = arith.constant 0 : i32
    %c0_i32_3 = arith.constant 0 : i32
    return %arg0, %c0_i32, %c0_i32_0, %c0_i32_1, %c0_i32_2 : i32, i32, i32, i32, i32
  }
}

module attributes {stable_mosaic.version = 11 : i64} {
  func.func @kernel(%arg0: i32, %arg1: memref<1x10x10x10x128xbf16, #tpu.memory_space<vmem>>, %arg2: memref<3x3x384x128xbf16, #tpu.memory_space<vmem>>, %arg3: memref<1x8x8x8x128xbf16, #tpu.memory_space<vmem>>, %arg4: memref<1x2x128xf32, #tpu.memory_space<vmem>>) attributes {dimension_semantics = [#tpu.dimension_semantics<parallel>], iteration_bounds = array<i64: 2>, scalar_prefetch = 0 : i64, scratch_operands = 0 : i64, tpu.core_type = #tpu.core_type<tc>, window_params = [{transform_indices = @transform_0, window_bounds = array<i64: 1, 10, 10, 10, 128>}, {pipeline_mode = #tpu.pipeline_mode<synchronous>, transform_indices = @transform_1, window_bounds = array<i64: 3, 3, 384, 128>}, {transform_indices = @transform_2, window_bounds = array<i64: 1, 8, 8, 8, 128>}, {transform_indices = @transform_3, window_bounds = array<i64: 1, 2, 128>}]} {
    %c0 = arith.constant 0 : index
    %c0_0 = arith.constant 0 : index
    %c0_1 = arith.constant 0 : index
    %c0_2 = arith.constant 0 : index
    %c0_3 = arith.constant 0 : index
    %0 = vector.load %arg1[%c0, %c0_0, %c0_1, %c0_2, %c0_3] : memref<1x10x10x10x128xbf16, #tpu.memory_space<vmem>>, vector<1x10x10x10x128xbf16>
    %1 = vector.shape_cast %0 : vector<1x10x10x10x128xbf16> to vector<10x10x10x128xbf16>
    %2 = vector.extract_strided_slice %1 {offsets = [0, 0, 0, 0], sizes = [10, 10, 8, 128], strides = [1, 1, 1, 1]} : vector<10x10x10x128xbf16> to vector<10x10x8x128xbf16>
    %3 = vector.extract_strided_slice %1 {offsets = [0, 0, 1, 0], sizes = [10, 10, 8, 128], strides = [1, 1, 1, 1]} : vector<10x10x10x128xbf16> to vector<10x10x8x128xbf16>
    %4 = vector.extract_strided_slice %1 {offsets = [0, 0, 2, 0], sizes = [10, 10, 8, 128], strides = [1, 1, 1, 1]} : vector<10x10x10x128xbf16> to vector<10x10x8x128xbf16>
    %5 = tpu.concatenate %2, %3, %4 in 3 : vector<10x10x8x128xbf16>, vector<10x10x8x128xbf16>, vector<10x10x8x128xbf16> -> vector<10x10x8x384xbf16>
    %cst = arith.constant 0.000000e+00 : f32
    %6 = vector.broadcast %cst : f32 to vector<512x128xf32>
    %7 = vector.extract_strided_slice %5 {offsets = [0, 0, 0, 0], sizes = [8, 8, 8, 384], strides = [1, 1, 1, 1]} : vector<10x10x8x384xbf16> to vector<8x8x8x384xbf16>
    %8 = vector.shape_cast %7 : vector<8x8x8x384xbf16> to vector<512x384xbf16>
    %c0_4 = arith.constant 0 : index
    %c0_5 = arith.constant 0 : index
    %c0_6 = arith.constant 0 : index
    %c0_7 = arith.constant 0 : index
    %9 = vector.load %arg2[%c0_4, %c0_5, %c0_6, %c0_7] : memref<3x3x384x128xbf16, #tpu.memory_space<vmem>>, vector<1x1x384x128xbf16>
    %10 = vector.shape_cast %9 : vector<1x1x384x128xbf16> to vector<384x128xbf16>
    %cst_8 = arith.constant dense<0.000000e+00> : vector<512x128xf32>
    %11 = tpu.matmul %8, %10, %cst_8 {dimension_numbers = #tpu.dot_dimension_numbers<[1], [0], [0], [1], [0, 0, 1, 1], [], []>} : vector<512x384xbf16>, vector<384x128xbf16>, vector<512x128xf32> -> vector<512x128xf32>
    %12 = arith.addf %6, %11 : vector<512x128xf32>
    %13 = vector.extract_strided_slice %5 {offsets = [0, 1, 0, 0], sizes = [8, 8, 8, 384], strides = [1, 1, 1, 1]} : vector<10x10x8x384xbf16> to vector<8x8x8x384xbf16>
    %14 = vector.shape_cast %13 : vector<8x8x8x384xbf16> to vector<512x384xbf16>
    %c0_9 = arith.constant 0 : index
    %c1 = arith.constant 1 : index
    %c0_10 = arith.constant 0 : index
    %c0_11 = arith.constant 0 : index
    %15 = vector.load %arg2[%c0_9, %c1, %c0_10, %c0_11] : memref<3x3x384x128xbf16, #tpu.memory_space<vmem>>, vector<1x1x384x128xbf16>
    %16 = vector.shape_cast %15 : vector<1x1x384x128xbf16> to vector<384x128xbf16>
    %cst_12 = arith.constant dense<0.000000e+00> : vector<512x128xf32>
    %17 = tpu.matmul %14, %16, %cst_12 {dimension_numbers = #tpu.dot_dimension_numbers<[1], [0], [0], [1], [0, 0, 1, 1], [], []>} : vector<512x384xbf16>, vector<384x128xbf16>, vector<512x128xf32> -> vector<512x128xf32>
    %18 = arith.addf %12, %17 : vector<512x128xf32>
    %19 = vector.extract_strided_slice %5 {offsets = [0, 2, 0, 0], sizes = [8, 8, 8, 384], strides = [1, 1, 1, 1]} : vector<10x10x8x384xbf16> to vector<8x8x8x384xbf16>
    %20 = vector.shape_cast %19 : vector<8x8x8x384xbf16> to vector<512x384xbf16>
    %c0_13 = arith.constant 0 : index
    %c2 = arith.constant 2 : index
    %c0_14 = arith.constant 0 : index
    %c0_15 = arith.constant 0 : index
    %21 = vector.load %arg2[%c0_13, %c2, %c0_14, %c0_15] : memref<3x3x384x128xbf16, #tpu.memory_space<vmem>>, vector<1x1x384x128xbf16>
    %22 = vector.shape_cast %21 : vector<1x1x384x128xbf16> to vector<384x128xbf16>
    %cst_16 = arith.constant dense<0.000000e+00> : vector<512x128xf32>
    %23 = tpu.matmul %20, %22, %cst_16 {dimension_numbers = #tpu.dot_dimension_numbers<[1], [0], [0], [1], [0, 0, 1, 1], [], []>} : vector<512x384xbf16>, vector<384x128xbf16>, vector<512x128xf32> -> vector<512x128xf32>
    %24 = arith.addf %18, %23 : vector<512x128xf32>
    %25 = vector.extract_strided_slice %5 {offsets = [1, 0, 0, 0], sizes = [8, 8, 8, 384], strides = [1, 1, 1, 1]} : vector<10x10x8x384xbf16> to vector<8x8x8x384xbf16>
    %26 = vector.shape_cast %25 : vector<8x8x8x384xbf16> to vector<512x384xbf16>
    %c1_17 = arith.constant 1 : index
    %c0_18 = arith.constant 0 : index
    %c0_19 = arith.constant 0 : index
    %c0_20 = arith.constant 0 : index
    %27 = vector.load %arg2[%c1_17, %c0_18, %c0_19, %c0_20] : memref<3x3x384x128xbf16, #tpu.memory_space<vmem>>, vector<1x1x384x128xbf16>
    %28 = vector.shape_cast %27 : vector<1x1x384x128xbf16> to vector<384x128xbf16>
    %cst_21 = arith.constant dense<0.000000e+00> : vector<512x128xf32>
    %29 = tpu.matmul %26, %28, %cst_21 {dimension_numbers = #tpu.dot_dimension_numbers<[1], [0], [0], [1], [0, 0, 1, 1], [], []>} : vector<512x384xbf16>, vector<384x128xbf16>, vector<512x128xf32> -> vector<512x128xf32>
    %30 = arith.addf %24, %29 : vector<512x128xf32>
    %31 = vector.extract_strided_slice %5 {offsets = [1, 1, 0, 0], sizes = [8, 8, 8, 384], strides = [1, 1, 1, 1]} : vector<10x10x8x384xbf16> to vector<8x8x8x384xbf16>
    %32 = vector.shape_cast %31 : vector<8x8x8x384xbf16> to vector<512x384xbf16>
    %c1_22 = arith.constant 1 : index
    %c1_23 = arith.constant 1 : index
    %c0_24 = arith.constant 0 : index
    %c0_25 = arith.constant 0 : index
    %33 = vector.load %arg2[%c1_22, %c1_23, %c0_24, %c0_25] : memref<3x3x384x128xbf16, #tpu.memory_space<vmem>>, vector<1x1x384x128xbf16>
    %34 = vector.shape_cast %33 : vector<1x1x384x128xbf16> to vector<384x128xbf16>
    %cst_26 = arith.constant dense<0.000000e+00> : vector<512x128xf32>
    %35 = tpu.matmul %32, %34, %cst_26 {dimension_numbers = #tpu.dot_dimension_numbers<[1], [0], [0], [1], [0, 0, 1, 1], [], []>} : vector<512x384xbf16>, vector<384x128xbf16>, vector<512x128xf32> -> vector<512x128xf32>
    %36 = arith.addf %30, %35 : vector<512x128xf32>
    %37 = vector.extract_strided_slice %5 {offsets = [1, 2, 0, 0], sizes = [8, 8, 8, 384], strides = [1, 1, 1, 1]} : vector<10x10x8x384xbf16> to vector<8x8x8x384xbf16>
    %38 = vector.shape_cast %37 : vector<8x8x8x384xbf16> to vector<512x384xbf16>
    %c1_27 = arith.constant 1 : index
    %c2_28 = arith.constant 2 : index
    %c0_29 = arith.constant 0 : index
    %c0_30 = arith.constant 0 : index
    %39 = vector.load %arg2[%c1_27, %c2_28, %c0_29, %c0_30] : memref<3x3x384x128xbf16, #tpu.memory_space<vmem>>, vector<1x1x384x128xbf16>
    %40 = vector.shape_cast %39 : vector<1x1x384x128xbf16> to vector<384x128xbf16>
    %cst_31 = arith.constant dense<0.000000e+00> : vector<512x128xf32>
    %41 = tpu.matmul %38, %40, %cst_31 {dimension_numbers = #tpu.dot_dimension_numbers<[1], [0], [0], [1], [0, 0, 1, 1], [], []>} : vector<512x384xbf16>, vector<384x128xbf16>, vector<512x128xf32> -> vector<512x128xf32>
    %42 = arith.addf %36, %41 : vector<512x128xf32>
    %43 = vector.extract_strided_slice %5 {offsets = [2, 0, 0, 0], sizes = [8, 8, 8, 384], strides = [1, 1, 1, 1]} : vector<10x10x8x384xbf16> to vector<8x8x8x384xbf16>
    %44 = vector.shape_cast %43 : vector<8x8x8x384xbf16> to vector<512x384xbf16>
    %c2_32 = arith.constant 2 : index
    %c0_33 = arith.constant 0 : index
    %c0_34 = arith.constant 0 : index
    %c0_35 = arith.constant 0 : index
    %45 = vector.load %arg2[%c2_32, %c0_33, %c0_34, %c0_35] : memref<3x3x384x128xbf16, #tpu.memory_space<vmem>>, vector<1x1x384x128xbf16>
    %46 = vector.shape_cast %45 : vector<1x1x384x128xbf16> to vector<384x128xbf16>
    %cst_36 = arith.constant dense<0.000000e+00> : vector<512x128xf32>
    %47 = tpu.matmul %44, %46, %cst_36 {dimension_numbers = #tpu.dot_dimension_numbers<[1], [0], [0], [1], [0, 0, 1, 1], [], []>} : vector<512x384xbf16>, vector<384x128xbf16>, vector<512x128xf32> -> vector<512x128xf32>
    %48 = arith.addf %42, %47 : vector<512x128xf32>
    %49 = vector.extract_strided_slice %5 {offsets = [2, 1, 0, 0], sizes = [8, 8, 8, 384], strides = [1, 1, 1, 1]} : vector<10x10x8x384xbf16> to vector<8x8x8x384xbf16>
    %50 = vector.shape_cast %49 : vector<8x8x8x384xbf16> to vector<512x384xbf16>
    %c2_37 = arith.constant 2 : index
    %c1_38 = arith.constant 1 : index
    %c0_39 = arith.constant 0 : index
    %c0_40 = arith.constant 0 : index
    %51 = vector.load %arg2[%c2_37, %c1_38, %c0_39, %c0_40] : memref<3x3x384x128xbf16, #tpu.memory_space<vmem>>, vector<1x1x384x128xbf16>
    %52 = vector.shape_cast %51 : vector<1x1x384x128xbf16> to vector<384x128xbf16>
    %cst_41 = arith.constant dense<0.000000e+00> : vector<512x128xf32>
    %53 = tpu.matmul %50, %52, %cst_41 {dimension_numbers = #tpu.dot_dimension_numbers<[1], [0], [0], [1], [0, 0, 1, 1], [], []>} : vector<512x384xbf16>, vector<384x128xbf16>, vector<512x128xf32> -> vector<512x128xf32>
    %54 = arith.addf %48, %53 : vector<512x128xf32>
    %55 = vector.extract_strided_slice %5 {offsets = [2, 2, 0, 0], sizes = [8, 8, 8, 384], strides = [1, 1, 1, 1]} : vector<10x10x8x384xbf16> to vector<8x8x8x384xbf16>
    %56 = vector.shape_cast %55 : vector<8x8x8x384xbf16> to vector<512x384xbf16>
    %c2_42 = arith.constant 2 : index
    %c2_43 = arith.constant 2 : index
    %c0_44 = arith.constant 0 : index
    %c0_45 = arith.constant 0 : index
    %57 = vector.load %arg2[%c2_42, %c2_43, %c0_44, %c0_45] : memref<3x3x384x128xbf16, #tpu.memory_space<vmem>>, vector<1x1x384x128xbf16>
    %58 = vector.shape_cast %57 : vector<1x1x384x128xbf16> to vector<384x128xbf16>
    %cst_46 = arith.constant dense<0.000000e+00> : vector<512x128xf32>
    %59 = tpu.matmul %56, %58, %cst_46 {dimension_numbers = #tpu.dot_dimension_numbers<[1], [0], [0], [1], [0, 0, 1, 1], [], []>} : vector<512x384xbf16>, vector<384x128xbf16>, vector<512x128xf32> -> vector<512x128xf32>
    %60 = arith.addf %54, %59 : vector<512x128xf32>
    %61 = arith.truncf %60 : vector<512x128xf32> to vector<512x128xbf16>
    %62 = vector.shape_cast %61 : vector<512x128xbf16> to vector<8x8x8x128xbf16>
    %c0_47 = arith.constant 0 : index
    %c0_48 = arith.constant 0 : index
    %c0_49 = arith.constant 0 : index
    %c0_50 = arith.constant 0 : index
    %c0_51 = arith.constant 0 : index
    %63 = vector.load %arg3[%c0_47, %c0_48, %c0_49, %c0_50, %c0_51] : memref<1x8x8x8x128xbf16, #tpu.memory_space<vmem>>, vector<1x8x8x8x128xbf16>
    %64 = vector.shape_cast %63 : vector<1x8x8x8x128xbf16> to vector<8x8x8x128xbf16>
    %65 = vector.shape_cast %62 : vector<8x8x8x128xbf16> to vector<1x8x8x8x128xbf16>
    tpu.vector_store %arg3[%c0_47, %c0_48, %c0_49, %c0_50, %c0_51], %65 {strides = array<i32>} : memref<1x8x8x8x128xbf16, #tpu.memory_space<vmem>>, vector<1x8x8x8x128xbf16>,
    %66 = arith.extf %61 : vector<512x128xbf16> to vector<512x128xf32>
    %cst_52 = arith.constant dense<0.000000e+00> : vector<128xf32>
    %67 = vector.multi_reduction <add>, %66, %cst_52 [0] : vector<512x128xf32> to vector<128xf32>
    %68 = vector.shape_cast %67 : vector<128xf32> to vector<1x128xf32>
    %69 = arith.mulf %66, %66 : vector<512x128xf32>
    %cst_53 = arith.constant dense<0.000000e+00> : vector<128xf32>
    %70 = vector.multi_reduction <add>, %69, %cst_53 [0] : vector<512x128xf32> to vector<128xf32>
    %71 = vector.shape_cast %70 : vector<128xf32> to vector<1x128xf32>
    %72 = tpu.concatenate %68, %71 in 0 : vector<1x128xf32>, vector<1x128xf32> -> vector<2x128xf32>
    %c0_54 = arith.constant 0 : index
    %c0_55 = arith.constant 0 : index
    %c0_56 = arith.constant 0 : index
    %73 = vector.load %arg4[%c0_54, %c0_55, %c0_56] : memref<1x2x128xf32, #tpu.memory_space<vmem>>, vector<1x2x128xf32>
    %74 = vector.shape_cast %73 : vector<1x2x128xf32> to vector<2x128xf32>
    %75 = vector.shape_cast %72 : vector<2x128xf32> to vector<1x2x128xf32>
    tpu.vector_store %arg4[%c0_54, %c0_55, %c0_56], %75 {strides = array<i32>} : memref<1x2x128xf32, #tpu.memory_space<vmem>>, vector<1x2x128xf32>,
    return
  }
  func.func @transform_0(%arg0: i32) -> (i32, i32, i32, i32, i32) {
    %c0_i32 = arith.constant 0 : i32
    %c0_i32_0 = arith.constant 0 : i32
    %c0_i32_1 = arith.constant 0 : i32
    %c0_i32_2 = arith.constant 0 : i32
    %c0_i32_3 = arith.constant 0 : i32
    return %arg0, %c0_i32, %c0_i32_0, %c0_i32_1, %c0_i32_2 : i32, i32, i32, i32, i32
  }
  func.func @transform_1(%arg0: i32) -> (i32, i32, i32, i32) {
    %c0_i32 = arith.constant 0 : i32
    %c0_i32_0 = arith.constant 0 : i32
    %c0_i32_1 = arith.constant 0 : i32
    %c0_i32_2 = arith.constant 0 : i32
    %c0_i32_3 = arith.constant 0 : i32
    return %c0_i32, %c0_i32_0, %c0_i32_1, %c0_i32_2 : i32, i32, i32, i32
  }
  func.func @transform_2(%arg0: i32) -> (i32, i32, i32, i32, i32) {
    %c0_i32 = arith.constant 0 : i32
    %c0_i32_0 = arith.constant 0 : i32
    %c0_i32_1 = arith.constant 0 : i32
    %c0_i32_2 = arith.constant 0 : i32
    %c0_i32_3 = arith.constant 0 : i32
    return %arg0, %c0_i32, %c0_i32_0, %c0_i32_1, %c0_i32_2 : i32, i32, i32, i32, i32
  }
  func.func @transform_3(%arg0: i32) -> (i32, i32, i32) {
    %c0_i32 = arith.constant 0 : i32
    %c0_i32_0 = arith.constant 0 : i32
    %c0_i32_1 = arith.constant 0 : i32
    return %arg0, %c0_i32, %c0_i32_0 : i32, i32, i32
  }
}

module attributes {stable_mosaic.version = 11 : i64} {
  func.func @kernel(%arg0: i32, %arg1: memref<1x8x8x8x128xbf16, #tpu.memory_space<vmem>>, %arg2: memref<2x128xf32, #tpu.memory_space<vmem>>, %arg3: memref<1x8x8x8x128xbf16, #tpu.memory_space<vmem>>, %arg4: memref<1x8x8x8x128xbf16, #tpu.memory_space<vmem>>) attributes {dimension_semantics = [#tpu.dimension_semantics<parallel>], iteration_bounds = array<i64: 2>, scalar_prefetch = 0 : i64, scratch_operands = 0 : i64, tpu.core_type = #tpu.core_type<tc>, window_params = [{transform_indices = @transform_0, window_bounds = array<i64: 1, 8, 8, 8, 128>}, {pipeline_mode = #tpu.pipeline_mode<synchronous>, transform_indices = @transform_1, window_bounds = array<i64: 2, 128>}, {transform_indices = @transform_2, window_bounds = array<i64: 1, 8, 8, 8, 128>}, {transform_indices = @transform_3, window_bounds = array<i64: 1, 8, 8, 8, 128>}]} {
    %c0 = arith.constant 0 : index
    %c0_0 = arith.constant 0 : index
    %c0_1 = arith.constant 0 : index
    %c0_2 = arith.constant 0 : index
    %c0_3 = arith.constant 0 : index
    %0 = vector.load %arg1[%c0, %c0_0, %c0_1, %c0_2, %c0_3] : memref<1x8x8x8x128xbf16, #tpu.memory_space<vmem>>, vector<1x8x8x8x128xbf16>
    %1 = vector.shape_cast %0 : vector<1x8x8x8x128xbf16> to vector<8x8x8x128xbf16>
    %2 = arith.extf %1 : vector<8x8x8x128xbf16> to vector<8x8x8x128xf32>
    %c0_4 = arith.constant 0 : index
    %c0_5 = arith.constant 0 : index
    %3 = vector.load %arg2[%c0_4, %c0_5] : memref<2x128xf32, #tpu.memory_space<vmem>>, vector<1x128xf32>
    %4 = vector.shape_cast %3 : vector<1x128xf32> to vector<1x1x1x128xf32>
    %5 = vector.broadcast %4 : vector<1x1x1x128xf32> to vector<8x8x8x128xf32>
    %6 = arith.mulf %2, %5 : vector<8x8x8x128xf32>
    %c1 = arith.constant 1 : index
    %c0_6 = arith.constant 0 : index
    %7 = vector.load %arg2[%c1, %c0_6] : memref<2x128xf32, #tpu.memory_space<vmem>>, vector<1x128xf32>
    %8 = vector.shape_cast %7 : vector<1x128xf32> to vector<1x1x1x128xf32>
    %9 = vector.broadcast %8 : vector<1x1x1x128xf32> to vector<8x8x8x128xf32>
    %10 = arith.addf %6, %9 : vector<8x8x8x128xf32>
    %cst = arith.constant 0.000000e+00 : f32
    %11 = vector.broadcast %cst : f32 to vector<8x8x8x128xf32>
    %12 = arith.maximumf %10, %11 : vector<8x8x8x128xf32>
    %c0_7 = arith.constant 0 : index
    %c0_8 = arith.constant 0 : index
    %c0_9 = arith.constant 0 : index
    %c0_10 = arith.constant 0 : index
    %c0_11 = arith.constant 0 : index
    %13 = vector.load %arg3[%c0_7, %c0_8, %c0_9, %c0_10, %c0_11] : memref<1x8x8x8x128xbf16, #tpu.memory_space<vmem>>, vector<1x8x8x8x128xbf16>
    %14 = vector.shape_cast %13 : vector<1x8x8x8x128xbf16> to vector<8x8x8x128xbf16>
    %15 = arith.extf %14 : vector<8x8x8x128xbf16> to vector<8x8x8x128xf32>
    %16 = arith.addf %12, %15 : vector<8x8x8x128xf32>
    %17 = arith.truncf %16 : vector<8x8x8x128xf32> to vector<8x8x8x128xbf16>
    %c0_12 = arith.constant 0 : index
    %c0_13 = arith.constant 0 : index
    %c0_14 = arith.constant 0 : index
    %c0_15 = arith.constant 0 : index
    %c0_16 = arith.constant 0 : index
    %18 = vector.load %arg4[%c0_12, %c0_13, %c0_14, %c0_15, %c0_16] : memref<1x8x8x8x128xbf16, #tpu.memory_space<vmem>>, vector<1x8x8x8x128xbf16>
    %19 = vector.shape_cast %18 : vector<1x8x8x8x128xbf16> to vector<8x8x8x128xbf16>
    %20 = vector.shape_cast %17 : vector<8x8x8x128xbf16> to vector<1x8x8x8x128xbf16>
    tpu.vector_store %arg4[%c0_12, %c0_13, %c0_14, %c0_15, %c0_16], %20 {strides = array<i32>} : memref<1x8x8x8x128xbf16, #tpu.memory_space<vmem>>, vector<1x8x8x8x128xbf16>,
    return
  }
  func.func @transform_0(%arg0: i32) -> (i32, i32, i32, i32, i32) {
    %c0_i32 = arith.constant 0 : i32
    %c0_i32_0 = arith.constant 0 : i32
    %c0_i32_1 = arith.constant 0 : i32
    %c0_i32_2 = arith.constant 0 : i32
    %c0_i32_3 = arith.constant 0 : i32
    return %arg0, %c0_i32, %c0_i32_0, %c0_i32_1, %c0_i32_2 : i32, i32, i32, i32, i32
  }
  func.func @transform_1(%arg0: i32) -> (i32, i32) {
    %c0_i32 = arith.constant 0 : i32
    %c0_i32_0 = arith.constant 0 : i32
    %c0_i32_1 = arith.constant 0 : i32
    return %c0_i32, %c0_i32_0 : i32, i32
  }
  func.func @transform_2(%arg0: i32) -> (i32, i32, i32, i32, i32) {
    %c0_i32 = arith.constant 0 : i32
    %c0_i32_0 = arith.constant 0 : i32
    %c0_i32_1 = arith.constant 0 : i32
    %c0_i32_2 = arith.constant 0 : i32
    %c0_i32_3 = arith.constant 0 : i32
    return %arg0, %c0_i32, %c0_i32_0, %c0_i32_1, %c0_i32_2 : i32, i32, i32, i32, i32
  }
  func.func @transform_3(%arg0: i32) -> (i32, i32, i32, i32, i32) {
    %c0_i32 = arith.constant 0 : i32
    %c0_i32_0 = arith.constant 0 : i32
    %c0_i32_1 = arith.constant 0 : i32
    %c0_i32_2 = arith.constant 0 : i32
    %c0_i32_3 = arith.constant 0 : i32
    return %arg0, %c0_i32, %c0_i32_0, %c0_i32_1, %c0_i32_2 : i32, i32, i32, i32, i32
  }
}

</mosaic_0001>

<llo_original>
// kernel: residual_block_forward.7
$region0: #{residual_block_forward.7}
  #allocation0 [shape = 'u32[]', space=smem, size = 0x4, offset = 0x4, fixed_abs, tag = 'smem constant byte address 0x4 - core index']
  #allocation1 [shape = 'u32[72,128]{1,0:T(1,128)}', space=vmem, size = 0x9000, scoped, tag = 'internal scratch']
  %s0 = inlined_call_operand.vmem [shape: bf16[2,8,8,8,128], index: 0, kind: input, shape index: {}]
  %s1 = inlined_call_operand.vmem [shape: f32[2,128], index: 1, kind: input, shape index: {}]
  %s2 = inlined_call_operand.vmem [shape: bf16[2,8,8,8,128], index: 2, kind: output, shape index: {}]
  %s3 = sld [smem:[#allocation0]]
  $region41: #{residual_block_forward.7} parent=0
    _
  %s5 = ssub.s32 1, %s3
  %s6 = scalar_select 0, %s5, %s3
  loop: start=0, step=1, limit=4
  $region2: #{residual_block_forward.7} parent=0 // loop_pre_header
    _
  $region3: #{residual_block_forward.7} parent=0 // loop_header
    %s8 = sphi 0, %s12
    %p9 = scmp.ge.s32.totalorder %s8, 4
    %s18 = sphi 0, %s20
    %s21 = sphi 0, %s18
    %s22 = sphi 0, %s21
    %s38 = sphi 0, %s22
    %s42 = sphi 0, %s42
    %s44 = sphi 0, %s42
    %s45 = sphi 0, %s44
    %s59 = sphi 0, %s45
    %s65 = sphi 0, %s67
    %s68 = sphi 0, %s65
    %s69 = sphi 0, %s68
    %s85 = sphi 0, %s69
  $region4: #{residual_block_forward.7} parent=0 // loop_header_branch
    %11 = sbr.rel (%p9) target = $region8
  $region5: #{residual_block_forward.7} parent=0 // loop_body
    %s13 = ssub.s32 %s8, 1
    %s14 = ssub.s32 %s8, 2
    %s15 = sadd.s32 %s8, 1
    %s16 = ssub.s32 %s8, %s15
    %p17 = scmp.eq.s32.totalorder %s16, 0
    %s19 = sadd.s32 %s18, 1
    %s20 = scalar_select %p17, %s18, %s19
    %p23 = pneg %p17
    %p24 = scmp.eq.s32.totalorder %s8, 1
    %p25 = por %p23, %p24
    %p26 = scmp.ne.s32.totalorder %s18, %s21
    %p27 = scmp.eq.s32.totalorder %s8, 0
    %p28 = por %p26, %p27
    %p29 = scmp.ne.s32.totalorder %s18, %s21
    %p30 = scmp.eq.s32.totalorder %s13, 1
    %p31 = por %p29, %p30
    %p32 = scmp.ne.s32.totalorder %s21, %s22
    %p33 = scmp.eq.s32.totalorder %s13, 0
    %p34 = por %p32, %p33
    %p35 = scmp.ne.s32.totalorder %s21, %s22
    %p36 = scmp.eq.s32.totalorder %s14, 1
    %p37 = por %p35, %p36
    %p39 = scmp.ne.s32.totalorder %s22, %s38
    %p40 = scmp.eq.s32.totalorder %s14, 0
    %p41 = por %p39, %p40
    %s43 = sadd.s32 %s42, 1
    %p46 = scmp.eq.s32.totalorder %s8, 1
    %p47 = scmp.ne.s32.totalorder %s42, %s44
    %p48 = scmp.eq.s32.totalorder %s8, 0
    %p49 = por %p47, %p48
    %p50 = scmp.ne.s32.totalorder %s42, %s44
    %p51 = scmp.eq.s32.totalorder %s13, 1
    %p52 = por %p50, %p51
    %p53 = scmp.ne.s32.totalorder %s44, %s45
    %p54 = scmp.eq.s32.totalorder %s13, 0
    %p55 = por %p53, %p54
    %p56 = scmp.ne.s32.totalorder %s44, %s45
    %p57 = scmp.eq.s32.totalorder %s14, 1
    %p58 = por %p56, %p57
    %p60 = scmp.ne.s32.totalorder %s45, %s59
    %p61 = scmp.eq.s32.totalorder %s14, 0
    %p62 = por %p60, %p61
    %s63 = ssub.s32 %s8, %s15
    %p64 = scmp.eq.s32.totalorder %s63, 0
    %s66 = sadd.s32 %s65, 1
    %s67 = scalar_select %p64, %s65, %s66
    %p70 = pneg %p64
    %p71 = scmp.eq.s32.totalorder %s8, 1
    %p72 = por %p70, %p71
    %p73 = scmp.ne.s32.totalorder %s65, %s68
    %p74 = scmp.eq.s32.totalorder %s8, 0
    %p75 = por %p73, %p74
    %p76 = scmp.ne.s32.totalorder %s65, %s68
    %p77 = scmp.eq.s32.totalorder %s13, 1
    %p78 = por %p76, %p77
    %p79 = scmp.ne.s32.totalorder %s68, %s69
    %p80 = scmp.eq.s32.totalorder %s13, 0
    %p81 = por %p79, %p80
    %p82 = scmp.ne.s32.totalorder %s68, %s69
    %p83 = scmp.eq.s32.totalorder %s14, 1
    %p84 = por %p82, %p83
    %p86 = scmp.ne.s32.totalorder %s69, %s85
    %p87 = scmp.eq.s32.totalorder %s14, 0
    %p88 = por %p86, %p87
    %p89 = scmp.le.s32.totalorder 1, %s8
    %p90 = scmp.lt.s32.totalorder %s8, 3
    %p91 = pnand %p89, %p90
    %p92 = pneg %p91
    // Predicated region
    $region9: #{residual_block_forward.7} parent=5 // pred_check
      _
    $region10: #{residual_block_forward.7} parent=5 // pred_check_branch
      %94 = sbr.rel (%p91) target = $region12
    $region11: #{residual_block_forward.7} parent=5 // pred_region
      %s95 = ssub.s32 %s8, 1
      // Predicated region
      $region13: #{residual_block_forward.7} parent=11 // pred_check
        %p96 = pneg %p55
      $region14: #{residual_block_forward.7} parent=11 // pred_check_branch
        %98 = sbr.rel (%p96) target = $region16
      $region15: #{residual_block_forward.7} parent=11 // pred_region
        _
      $region16: #{residual_block_forward.7} parent=11 // pred_fallthru
        _
    $region12: #{residual_block_forward.7} parent=5 // pred_fallthru
      _
    %p99 = scmp.lt.s32.totalorder %s8, 2
    // Predicated region
    $region17: #{residual_block_forward.7} parent=5 // pred_check
      %p100 = pneg %p99
    $region18: #{residual_block_forward.7} parent=5 // pred_check_branch
      %102 = sbr.rel (%p100) target = $region20
    $region19: #{residual_block_forward.7} parent=5 // pred_region
      // Predicated region
      $region21: #{residual_block_forward.7} parent=19 // pred_check
        %p103 = pneg %p28
      $region22: #{residual_block_forward.7} parent=19 // pred_check_branch
        %105 = sbr.rel (%p103) target = $region24
      $region23: #{residual_block_forward.7} parent=19 // pred_region
        %p106 = scmp.lt.s32.totalorder %s8, 1
        %s107 = scalar_select %p106, %s8, 1
        %s108 = smul.addr %s107, 64
        %s109 = smul.addr %s108, 4
        %s110 = scalar_lea.vmem %s0, %s109
      $region24: #{residual_block_forward.7} parent=19 // pred_fallthru
        _
    $region20: #{residual_block_forward.7} parent=5 // pred_fallthru
      _
    %p111 = scmp.le.s32.totalorder 1, %s8
    %p112 = scmp.lt.s32.totalorder %s8, 3
    %p113 = pnand %p111, %p112
    %p114 = pneg %p113
    // Predicated region
    $region25: #{residual_block_forward.7} parent=5 // pred_check
      _
    $region26: #{residual_block_forward.7} parent=5 // pred_check_branch
      %116 = sbr.rel (%p113) target = $region28
    $region27: #{residual_block_forward.7} parent=5 // pred_region
      %s117 = ssub.s32 %s8, 1
      %p118 = scmp.lt.s32.totalorder %s13, 1
      %s119 = scalar_select %p118, %s13, 1
      %s120 = smul.addr %s119, 64
      %s121 = smul.addr %s120, 4
      %s122 = scalar_lea.vmem %s0, %s121
      %p123 = pneg %p34
      %p124 = pneg %p31
      %p125 = pneg %p55
      %p126 = pneg %p52
      %p127 = pneg %p81
      %p128 = pneg %p78
      %p129 = scmp.lt.s32.totalorder %s13, 1
      %s130 = scalar_select %p129, %s13, 1
      %s131 = smul.addr %s130, 64
      %s132 = smul.addr %s131, 4
      %s133 = scalar_lea.vmem %s2, %s132
      %p134 = scmp.lt.s32.totalorder %s13, 1
      %s135 = scalar_select %p134, %s13, 1
      %s136 = smul.addr %s135, 64
      %s137 = smul.addr %s136, 4
      %s138 = scalar_lea.vmem %s0, %s137
      %p139 = scmp.lt.s32.totalorder %s13, 1
      %s140 = scalar_select %p139, %s13, 1
      %s141 = smul.addr %s140, 64
      %s142 = smul.addr %s141, 4
      %s143 = scalar_lea.vmem %s2, %s142
      %v144 = vld [vmem:[%s138] sm:$0xf]
      %v145 = vld [vmem:[%s138 + $0x4] sm:$0xf]
      %v146 = vld [vmem:[%s138 + $0x8] sm:$0xf]
      %v147 = vld [vmem:[%s138 + $0xc] sm:$0xf]
      %v148 = vld [vmem:[%s138 + $0x10] sm:$0xf]
      %v149 = vld [vmem:[%s138 + $0x14] sm:$0xf]
      %v150 = vld [vmem:[%s138 + $0x18] sm:$0xf]
      %v151 = vld [vmem:[%s138 + $0x1c] sm:$0xf]
      %v152 = vld [vmem:[%s138 + $0x20] sm:$0xf]
      %v153 = vld [vmem:[%s138 + $0x24] sm:$0xf]
      %v154 = vld [vmem:[%s138 + $0x28] sm:$0xf]
      %v155 = vld [vmem:[%s138 + $0x2c] sm:$0xf]
      %v156 = vld [vmem:[%s138 + $0x30] sm:$0xf]
      %v157 = vld [vmem:[%s138 + $0x34] sm:$0xf]
      %v158 = vld [vmem:[%s138 + $0x38] sm:$0xf]
      %v159 = vld [vmem:[%s138 + $0x3c] sm:$0xf]
      %v160 = vld [vmem:[%s138 + $0x40] sm:$0xf]
      %v161 = vld [vmem:[%s138 + $0x44] sm:$0xf]
      %v162 = vld [vmem:[%s138 + $0x48] sm:$0xf]
      %v163 = vld [vmem:[%s138 + $0x4c] sm:$0xf]
      %v164 = vld [vmem:[%s138 + $0x50] sm:$0xf]
      %v165 = vld [vmem:[%s138 + $0x54] sm:$0xf]
      %v166 = vld [vmem:[%s138 + $0x58] sm:$0xf]
      %v167 = vld [vmem:[%s138 + $0x5c] sm:$0xf]
      %v168 = vld [vmem:[%s138 + $0x60] sm:$0xf]
      %v169 = vld [vmem:[%s138 + $0x64] sm:$0xf]
      %v170 = vld [vmem:[%s138 + $0x68] sm:$0xf]
      %v171 = vld [vmem:[%s138 + $0x6c] sm:$0xf]
      %v172 = vld [vmem:[%s138 + $0x70] sm:$0xf]
      %v173 = vld [vmem:[%s138 + $0x74] sm:$0xf]
      %v174 = vld [vmem:[%s138 + $0x78] sm:$0xf]
      %v175 = vld [vmem:[%s138 + $0x7c] sm:$0xf]
      %v176 = vld [vmem:[%s138 + $0x80] sm:$0xf]
      %v177 = vld [vmem:[%s138 + $0x84] sm:$0xf]
      %v178 = vld [vmem:[%s138 + $0x88] sm:$0xf]
      %v179 = vld [vmem:[%s138 + $0x8c] sm:$0xf]
      %v180 = vld [vmem:[%s138 + $0x90] sm:$0xf]
      %v181 = vld [vmem:[%s138 + $0x94] sm:$0xf]
      %v182 = vld [vmem:[%s138 + $0x98] sm:$0xf]
      %v183 = vld [vmem:[%s138 + $0x9c] sm:$0xf]
      %v184 = vld [vmem:[%s138 + $0xa0] sm:$0xf]
      %v185 = vld [vmem:[%s138 + $0xa4] sm:$0xf]
      %v186 = vld [vmem:[%s138 + $0xa8] sm:$0xf]
      %v187 = vld [vmem:[%s138 + $0xac] sm:$0xf]
      %v188 = vld [vmem:[%s138 + $0xb0] sm:$0xf]
      %v189 = vld [vmem:[%s138 + $0xb4] sm:$0xf]
      %v190 = vld [vmem:[%s138 + $0xb8] sm:$0xf]
      %v191 = vld [vmem:[%s138 + $0xbc] sm:$0xf]
      %v192 = vld [vmem:[%s138 + $0xc0] sm:$0xf]
      %v193 = vld [vmem:[%s138 + $0xc4] sm:$0xf]
      %v194 = vld [vmem:[%s138 + $0xc8] sm:$0xf]
      %v195 = vld [vmem:[%s138 + $0xcc] sm:$0xf]
      %v196 = vld [vmem:[%s138 + $0xd0] sm:$0xf]
      %v197 = vld [vmem:[%s138 + $0xd4] sm:$0xf]
      %v198 = vld [vmem:[%s138 + $0xd8] sm:$0xf]
      %v199 = vld [vmem:[%s138 + $0xdc] sm:$0xf]
      %v200 = vld [vmem:[%s138 + $0xe0] sm:$0xf]
      %v201 = vld [vmem:[%s138 + $0xe4] sm:$0xf]
      %v202 = vld [vmem:[%s138 + $0xe8] sm:$0xf]
      %v203 = vld [vmem:[%s138 + $0xec] sm:$0xf]
      %v204 = vld [vmem:[%s138 + $0xf0] sm:$0xf]
      %v205 = vld [vmem:[%s138 + $0xf4] sm:$0xf]
      %v206 = vld [vmem:[%s138 + $0xf8] sm:$0xf]
      %v207 = vld [vmem:[%s138 + $0xfc] sm:$0xf]
      %v208 = vunpack.c.l.bf16 %v144
      %v209 = vunpack.c.l.bf16 %v145
      %v210 = vunpack.c.l.bf16 %v146
      %v211 = vunpack.c.l.bf16 %v147
      %v212 = vunpack.c.l.bf16 %v148
      %v213 = vunpack.c.l.bf16 %v149
      %v214 = vunpack.c.l.bf16 %v150
      %v215 = vunpack.c.l.bf16 %v151
      %v216 = vunpack.c.l.bf16 %v152
      %v217 = vunpack.c.l.bf16 %v153
      %v218 = vunpack.c.l.bf16 %v154
      %v219 = vunpack.c.l.bf16 %v155
      %v220 = vunpack.c.l.bf16 %v156
      %v221 = vunpack.c.l.bf16 %v157
      %v222 = vunpack.c.l.bf16 %v158
      %v223 = vunpack.c.l.bf16 %v159
      %v224 = vunpack.c.l.bf16 %v160
      %v225 = vunpack.c.l.bf16 %v161
      %v226 = vunpack.c.l.bf16 %v162
      %v227 = vunpack.c.l.bf16 %v163
      %v228 = vunpack.c.l.bf16 %v164
      %v229 = vunpack.c.l.bf16 %v165
      %v230 = vunpack.c.l.bf16 %v166
      %v231 = vunpack.c.l.bf16 %v167
      %v232 = vunpack.c.l.bf16 %v168
      %v233 = vunpack.c.l.bf16 %v169
      %v234 = vunpack.c.l.bf16 %v170
      %v235 = vunpack.c.l.bf16 %v171
      %v236 = vunpack.c.l.bf16 %v172
      %v237 = vunpack.c.l.bf16 %v173
      %v238 = vunpack.c.l.bf16 %v174
      %v239 = vunpack.c.l.bf16 %v175
      %v240 = vunpack.c.l.bf16 %v176
      %v241 = vunpack.c.l.bf16 %v177
      %v242 = vunpack.c.l.bf16 %v178
      %v243 = vunpack.c.l.bf16 %v179
      %v244 = vunpack.c.l.bf16 %v180
      %v245 = vunpack.c.l.bf16 %v181
      %v246 = vunpack.c.l.bf16 %v182
      %v247 = vunpack.c.l.bf16 %v183
      %v248 = vunpack.c.l.bf16 %v184
      %v249 = vunpack.c.l.bf16 %v185
      %v250 = vunpack.c.l.bf16 %v186
      %v251 = vunpack.c.l.bf16 %v187
      %v252 = vunpack.c.l.bf16 %v188
      %v253 = vunpack.c.l.bf16 %v189
      %v254 = vunpack.c.l.bf16 %v190
      %v255 = vunpack.c.l.bf16 %v191
      %v256 = vunpack.c.l.bf16 %v192
      %v257 = vunpack.c.l.bf16 %v193
      %v258 = vunpack.c.l.bf16 %v194
      %v259 = vunpack.c.l.bf16 %v195
      %v260 = vunpack.c.l.bf16 %v196
      %v261 = vunpack.c.l.bf16 %v197
      %v262 = vunpack.c.l.bf16 %v198
      %v263 = vunpack.c.l.bf16 %v199
      %v264 = vunpack.c.l.bf16 %v200
      %v265 = vunpack.c.l.bf16 %v201
      %v266 = vunpack.c.l.bf16 %v202
      %v267 = vunpack.c.l.bf16 %v203
      %v268 = vunpack.c.l.bf16 %v204
      %v269 = vunpack.c.l.bf16 %v205
      %v270 = vunpack.c.l.bf16 %v206
      %v271 = vunpack.c.l.bf16 %v207
      %v272 = vld [vmem:[%s1] sm:$0x1]
      %v273 = vperm.slane %v272, 0
      %v274 = vmul.f32 %v208, %v273
      %v275 = vmul.f32 %v209, %v273
      %v276 = vmul.f32 %v210, %v273
      %v277 = vmul.f32 %v211, %v273
      %v278 = vmul.f32 %v212, %v273
      %v279 = vmul.f32 %v213, %v273
      %v280 = vmul.f32 %v214, %v273
      %v281 = vmul.f32 %v215, %v273
      %v282 = vmul.f32 %v216, %v273
      %v283 = vmul.f32 %v217, %v273
      %v284 = vmul.f32 %v218, %v273
      %v285 = vmul.f32 %v219, %v273
      %v286 = vmul.f32 %v220, %v273
      %v287 = vmul.f32 %v221, %v273
      %v288 = vmul.f32 %v222, %v273
      %v289 = vmul.f32 %v223, %v273
      %v290 = vmul.f32 %v224, %v273
      %v291 = vmul.f32 %v225, %v273
      %v292 = vmul.f32 %v226, %v273
      %v293 = vmul.f32 %v227, %v273
      %v294 = vmul.f32 %v228, %v273
      %v295 = vmul.f32 %v229, %v273
      %v296 = vmul.f32 %v230, %v273
      %v297 = vmul.f32 %v231, %v273
      %v298 = vmul.f32 %v232, %v273
      %v299 = vmul.f32 %v233, %v273
      %v300 = vmul.f32 %v234, %v273
      %v301 = vmul.f32 %v235, %v273
      %v302 = vmul.f32 %v236, %v273
      %v303 = vmul.f32 %v237, %v273
      %v304 = vmul.f32 %v238, %v273
      %v305 = vmul.f32 %v239, %v273
      %v306 = vmul.f32 %v240, %v273
      %v307 = vmul.f32 %v241, %v273
      %v308 = vmul.f32 %v242, %v273
      %v309 = vmul.f32 %v243, %v273
      %v310 = vmul.f32 %v244, %v273
      %v311 = vmul.f32 %v245, %v273
      %v312 = vmul.f32 %v246, %v273
      %v313 = vmul.f32 %v247, %v273
      %v314 = vmul.f32 %v248, %v273
      %v315 = vmul.f32 %v249, %v273
      %v316 = vmul.f32 %v250, %v273
      %v317 = vmul.f32 %v251, %v273
      %v318 = vmul.f32 %v252, %v273
      %v319 = vmul.f32 %v253, %v273
      %v320 = vmul.f32 %v254, %v273
      %v321 = vmul.f32 %v255, %v273
      %v322 = vmul.f32 %v256, %v273
      %v323 = vmul.f32 %v257, %v273
      %v324 = vmul.f32 %v258, %v273
      %v325 = vmul.f32 %v259, %v273
      %v326 = vmul.f32 %v260, %v273
      %v327 = vmul.f32 %v261, %v273
      %v328 = vmul.f32 %v262, %v273
      %v329 = vmul.f32 %v263, %v273
      %v330 = vmul.f32 %v264, %v273
      %v331 = vmul.f32 %v265, %v273
      %v332 = vmul.f32 %v266, %v273
      %v333 = vmul.f32 %v267, %v273
      %v334 = vmul.f32 %v268, %v273
      %v335 = vmul.f32 %v269, %v273
      %v336 = vmul.f32 %v270, %v273
      %v337 = vmul.f32 %v271, %v273
      %v338 = vld [vmem:[%s1 + $0x1] sm:$0x1]
      %v339 = vperm.slane %v338, 0
      %v340 = vadd.f32 %v274, %v339
      %v341 = vadd.f32 %v275, %v339
      %v342 = vadd.f32 %v276, %v339
      %v343 = vadd.f32 %v277, %v339
      %v344 = vadd.f32 %v278, %v339
      %v345 = vadd.f32 %v279, %v339
      %v346 = vadd.f32 %v280, %v339
      %v347 = vadd.f32 %v281, %v339
      %v348 = vadd.f32 %v282, %v339
      %v349 = vadd.f32 %v283, %v339
      %v350 = vadd.f32 %v284, %v339
      %v351 = vadd.f32 %v285, %v339
      %v352 = vadd.f32 %v286, %v339
      %v353 = vadd.f32 %v287, %v339
      %v354 = vadd.f32 %v288, %v339
      %v355 = vadd.f32 %v289, %v339
      %v356 = vadd.f32 %v290, %v339
      %v357 = vadd.f32 %v291, %v339
      %v358 = vadd.f32 %v292, %v339
      %v359 = vadd.f32 %v293, %v339
      %v360 = vadd.f32 %v294, %v339
      %v361 = vadd.f32 %v295, %v339
      %v362 = vadd.f32 %v296, %v339
      %v363 = vadd.f32 %v297, %v339
      %v364 = vadd.f32 %v298, %v339
      %v365 = vadd.f32 %v299, %v339
      %v366 = vadd.f32 %v300, %v339
      %v367 = vadd.f32 %v301, %v339
      %v368 = vadd.f32 %v302, %v339
      %v369 = vadd.f32 %v303, %v339
      %v370 = vadd.f32 %v304, %v339
      %v371 = vadd.f32 %v305, %v339
      %v372 = vadd.f32 %v306, %v339
      %v373 = vadd.f32 %v307, %v339
      %v374 = vadd.f32 %v308, %v339
      %v375 = vadd.f32 %v309, %v339
      %v376 = vadd.f32 %v310, %v339
      %v377 = vadd.f32 %v311, %v339
      %v378 = vadd.f32 %v312, %v339
      %v379 = vadd.f32 %v313, %v339
      %v380 = vadd.f32 %v314, %v339
      %v381 = vadd.f32 %v315, %v339
      %v382 = vadd.f32 %v316, %v339
      %v383 = vadd.f32 %v317, %v339
      %v384 = vadd.f32 %v318, %v339
      %v385 = vadd.f32 %v319, %v339
      %v386 = vadd.f32 %v320, %v339
      %v387 = vadd.f32 %v321, %v339
      %v388 = vadd.f32 %v322, %v339
      %v389 = vadd.f32 %v323, %v339
      %v390 = vadd.f32 %v324, %v339
      %v391 = vadd.f32 %v325, %v339
      %v392 = vadd.f32 %v326, %v339
      %v393 = vadd.f32 %v327, %v339
      %v394 = vadd.f32 %v328, %v339
      %v395 = vadd.f32 %v329, %v339
      %v396 = vadd.f32 %v330, %v339
      %v397 = vadd.f32 %v331, %v339
      %v398 = vadd.f32 %v332, %v339
      %v399 = vadd.f32 %v333, %v339
      %v400 = vadd.f32 %v334, %v339
      %v401 = vadd.f32 %v335, %v339
      %v402 = vadd.f32 %v336, %v339
      %v403 = vadd.f32 %v337, %v339
      %v404 = vmax.f32 %v340, 0.0
      %v405 = vmax.f32 %v341, 0.0
      %v406 = vmax.f32 %v342, 0.0
      %v407 = vmax.f32 %v343, 0.0
      %v408 = vmax.f32 %v344, 0.0
      %v409 = vmax.f32 %v345, 0.0
      %v410 = vmax.f32 %v346, 0.0
      %v411 = vmax.f32 %v347, 0.0
      %v412 = vmax.f32 %v348, 0.0
      %v413 = vmax.f32 %v349, 0.0
      %v414 = vmax.f32 %v350, 0.0
      %v415 = vmax.f32 %v351, 0.0
      %v416 = vmax.f32 %v352, 0.0
      %v417 = vmax.f32 %v353, 0.0
      %v418 = vmax.f32 %v354, 0.0
      %v419 = vmax.f32 %v355, 0.0
      %v420 = vmax.f32 %v356, 0.0
      %v421 = vmax.f32 %v357, 0.0
      %v422 = vmax.f32 %v358, 0.0
      %v423 = vmax.f32 %v359, 0.0
      %v424 = vmax.f32 %v360, 0.0
      %v425 = vmax.f32 %v361, 0.0
      %v426 = vmax.f32 %v362, 0.0
      %v427 = vmax.f32 %v363, 0.0
      %v428 = vmax.f32 %v364, 0.0
      %v429 = vmax.f32 %v365, 0.0
      %v430 = vmax.f32 %v366, 0.0
      %v431 = vmax.f32 %v367, 0.0
      %v432 = vmax.f32 %v368, 0.0
      %v433 = vmax.f32 %v369, 0.0
      %v434 = vmax.f32 %v370, 0.0
      %v435 = vmax.f32 %v371, 0.0
      %v436 = vmax.f32 %v372, 0.0
      %v437 = vmax.f32 %v373, 0.0
      %v438 = vmax.f32 %v374, 0.0
      %v439 = vmax.f32 %v375, 0.0
      %v440 = vmax.f32 %v376, 0.0
      %v441 = vmax.f32 %v377, 0.0
      %v442 = vmax.f32 %v378, 0.0
      %v443 = vmax.f32 %v379, 0.0
      %v444 = vmax.f32 %v380, 0.0
      %v445 = vmax.f32 %v381, 0.0
      %v446 = vmax.f32 %v382, 0.0
      %v447 = vmax.f32 %v383, 0.0
      %v448 = vmax.f32 %v384, 0.0
      %v449 = vmax.f32 %v385, 0.0
      %v450 = vmax.f32 %v386, 0.0
      %v451 = vmax.f32 %v387, 0.0
      %v452 = vmax.f32 %v388, 0.0
      %v453 = vmax.f32 %v389, 0.0
      %v454 = vmax.f32 %v390, 0.0
      %v455 = vmax.f32 %v391, 0.0
      %v456 = vmax.f32 %v392, 0.0
      %v457 = vmax.f32 %v393, 0.0
      %v458 = vmax.f32 %v394, 0.0
      %v459 = vmax.f32 %v395, 0.0
      %v460 = vmax.f32 %v396, 0.0
      %v461 = vmax.f32 %v397, 0.0
      %v462 = vmax.f32 %v398, 0.0
      %v463 = vmax.f32 %v399, 0.0
      %v464 = vmax.f32 %v400, 0.0
      %v465 = vmax.f32 %v401, 0.0
      %v466 = vmax.f32 %v402, 0.0
      %v467 = vmax.f32 %v403, 0.0
      %v468 = vpack.c.bf16 %v404, %v404
      %v469 = vpack.c.bf16 %v405, %v405
      %v470 = vpack.c.bf16 %v406, %v406
      %v471 = vpack.c.bf16 %v407, %v407
      %v472 = vpack.c.bf16 %v408, %v408
      %v473 = vpack.c.bf16 %v409, %v409
      %v474 = vpack.c.bf16 %v410, %v410
      %v475 = vpack.c.bf16 %v411, %v411
      %v476 = vpack.c.bf16 %v412, %v412
      %v477 = vpack.c.bf16 %v413, %v413
      %v478 = vpack.c.bf16 %v414, %v414
      %v479 = vpack.c.bf16 %v415, %v415
      %v480 = vpack.c.bf16 %v416, %v416
      %v481 = vpack.c.bf16 %v417, %v417
      %v482 = vpack.c.bf16 %v418, %v418
      %v483 = vpack.c.bf16 %v419, %v419
      %v484 = vpack.c.bf16 %v420, %v420
      %v485 = vpack.c.bf16 %v421, %v421
      %v486 = vpack.c.bf16 %v422, %v422
      %v487 = vpack.c.bf16 %v423, %v423
      %v488 = vpack.c.bf16 %v424, %v424
      %v489 = vpack.c.bf16 %v425, %v425
      %v490 = vpack.c.bf16 %v426, %v426
      %v491 = vpack.c.bf16 %v427, %v427
      %v492 = vpack.c.bf16 %v428, %v428
      %v493 = vpack.c.bf16 %v429, %v429
      %v494 = vpack.c.bf16 %v430, %v430
      %v495 = vpack.c.bf16 %v431, %v431
      %v496 = vpack.c.bf16 %v432, %v432
      %v497 = vpack.c.bf16 %v433, %v433
      %v498 = vpack.c.bf16 %v434, %v434
      %v499 = vpack.c.bf16 %v435, %v435
      %v500 = vpack.c.bf16 %v436, %v436
      %v501 = vpack.c.bf16 %v437, %v437
      %v502 = vpack.c.bf16 %v438, %v438
      %v503 = vpack.c.bf16 %v439, %v439
      %v504 = vpack.c.bf16 %v440, %v440
      %v505 = vpack.c.bf16 %v441, %v441
      %v506 = vpack.c.bf16 %v442, %v442
      %v507 = vpack.c.bf16 %v443, %v443
      %v508 = vpack.c.bf16 %v444, %v444
      %v509 = vpack.c.bf16 %v445, %v445
      %v510 = vpack.c.bf16 %v446, %v446
      %v511 = vpack.c.bf16 %v447, %v447
      %v512 = vpack.c.bf16 %v448, %v448
      %v513 = vpack.c.bf16 %v449, %v449
      %v514 = vpack.c.bf16 %v450, %v450
      %v515 = vpack.c.bf16 %v451, %v451
      %v516 = vpack.c.bf16 %v452, %v452
      %v517 = vpack.c.bf16 %v453, %v453
      %v518 = vpack.c.bf16 %v454, %v454
      %v519 = vpack.c.bf16 %v455, %v455
      %v520 = vpack.c.bf16 %v456, %v456
      %v521 = vpack.c.bf16 %v457, %v457
      %v522 = vpack.c.bf16 %v458, %v458
      %v523 = vpack.c.bf16 %v459, %v459
      %v524 = vpack.c.bf16 %v460, %v460
      %v525 = vpack.c.bf16 %v461, %v461
      %v526 = vpack.c.bf16 %v462, %v462
      %v527 = vpack.c.bf16 %v463, %v463
      %v528 = vpack.c.bf16 %v464, %v464
      %v529 = vpack.c.bf16 %v465, %v465
      %v530 = vpack.c.bf16 %v466, %v466
      %v531 = vpack.c.bf16 %v467, %v467
      %532 = vst [vmem:[%s143] sm:$0xf] %v468
      %533 = vst [vmem:[%s143 + $0x4] sm:$0xf] %v469
      %534 = vst [vmem:[%s143 + $0x8] sm:$0xf] %v470
      %535 = vst [vmem:[%s143 + $0xc] sm:$0xf] %v471
      %536 = vst [vmem:[%s143 + $0x10] sm:$0xf] %v472
      %537 = vst [vmem:[%s143 + $0x14] sm:$0xf] %v473
      %538 = vst [vmem:[%s143 + $0x18] sm:$0xf] %v474
      %539 = vst [vmem:[%s143 + $0x1c] sm:$0xf] %v475
      %540 = vst [vmem:[%s143 + $0x20] sm:$0xf] %v476
      %541 = vst [vmem:[%s143 + $0x24] sm:$0xf] %v477
      %542 = vst [vmem:[%s143 + $0x28] sm:$0xf] %v478
      %543 = vst [vmem:[%s143 + $0x2c] sm:$0xf] %v479
      %544 = vst [vmem:[%s143 + $0x30] sm:$0xf] %v480
      %545 = vst [vmem:[%s143 + $0x34] sm:$0xf] %v481
      %546 = vst [vmem:[%s143 + $0x38] sm:$0xf] %v482
      %547 = vst [vmem:[%s143 + $0x3c] sm:$0xf] %v483
      %548 = vst [vmem:[%s143 + $0x40] sm:$0xf] %v484
      %549 = vst [vmem:[%s143 + $0x44] sm:$0xf] %v485
      %550 = vst [vmem:[%s143 + $0x48] sm:$0xf] %v486
      %551 = vst [vmem:[%s143 + $0x4c] sm:$0xf] %v487
      %552 = vst [vmem:[%s143 + $0x50] sm:$0xf] %v488
      %553 = vst [vmem:[%s143 + $0x54] sm:$0xf] %v489
      %554 = vst [vmem:[%s143 + $0x58] sm:$0xf] %v490
      %555 = vst [vmem:[%s143 + $0x5c] sm:$0xf] %v491
      %556 = vst [vmem:[%s143 + $0x60] sm:$0xf] %v492
      %557 = vst [vmem:[%s143 + $0x64] sm:$0xf] %v493
      %558 = vst [vmem:[%s143 + $0x68] sm:$0xf] %v494
      %559 = vst [vmem:[%s143 + $0x6c] sm:$0xf] %v495
      %560 = vst [vmem:[%s143 + $0x70] sm:$0xf] %v496
      %561 = vst [vmem:[%s143 + $0x74] sm:$0xf] %v497
      %562 = vst [vmem:[%s143 + $0x78] sm:$0xf] %v498
      %563 = vst [vmem:[%s143 + $0x7c] sm:$0xf] %v499
      %564 = vst [vmem:[%s143 + $0x80] sm:$0xf] %v500
      %565 = vst [vmem:[%s143 + $0x84] sm:$0xf] %v501
      %566 = vst [vmem:[%s143 + $0x88] sm:$0xf] %v502
      %567 = vst [vmem:[%s143 + $0x8c] sm:$0xf] %v503
      %568 = vst [vmem:[%s143 + $0x90] sm:$0xf] %v504
      %569 = vst [vmem:[%s143 + $0x94] sm:$0xf] %v505
      %570 = vst [vmem:[%s143 + $0x98] sm:$0xf] %v506
      %571 = vst [vmem:[%s143 + $0x9c] sm:$0xf] %v507
      %572 = vst [vmem:[%s143 + $0xa0] sm:$0xf] %v508
      %573 = vst [vmem:[%s143 + $0xa4] sm:$0xf] %v509
      %574 = vst [vmem:[%s143 + $0xa8] sm:$0xf] %v510
      %575 = vst [vmem:[%s143 + $0xac] sm:$0xf] %v511
      %576 = vst [vmem:[%s143 + $0xb0] sm:$0xf] %v512
      %577 = vst [vmem:[%s143 + $0xb4] sm:$0xf] %v513
      %578 = vst [vmem:[%s143 + $0xb8] sm:$0xf] %v514
      %579 = vst [vmem:[%s143 + $0xbc] sm:$0xf] %v515
      %580 = vst [vmem:[%s143 + $0xc0] sm:$0xf] %v516
      %581 = vst [vmem:[%s143 + $0xc4] sm:$0xf] %v517
      %582 = vst [vmem:[%s143 + $0xc8] sm:$0xf] %v518
      %583 = vst [vmem:[%s143 + $0xcc] sm:$0xf] %v519
      %584 = vst [vmem:[%s143 + $0xd0] sm:$0xf] %v520
      %585 = vst [vmem:[%s143 + $0xd4] sm:$0xf] %v521
      %586 = vst [vmem:[%s143 + $0xd8] sm:$0xf] %v522
      %587 = vst [vmem:[%s143 + $0xdc] sm:$0xf] %v523
      %588 = vst [vmem:[%s143 + $0xe0] sm:$0xf] %v524
      %589 = vst [vmem:[%s143 + $0xe4] sm:$0xf] %v525
      %590 = vst [vmem:[%s143 + $0xe8] sm:$0xf] %v526
      %591 = vst [vmem:[%s143 + $0xec] sm:$0xf] %v527
      %592 = vst [vmem:[%s143 + $0xf0] sm:$0xf] %v528
      %593 = vst [vmem:[%s143 + $0xf4] sm:$0xf] %v529
      %594 = vst [vmem:[%s143 + $0xf8] sm:$0xf] %v530
      %595 = vst [vmem:[%s143 + $0xfc] sm:$0xf] %v531
      %p596 = scmp.lt.s32.totalorder %s13, 1
      %s597 = scalar_select %p596, %s13, 1
      %s598 = smul.addr %s597, 64
      %s599 = smul.addr %s598, 4
      %s600 = scalar_lea.vmem %s2, %s599
      // Predicated region
      $region29: #{residual_block_forward.7} parent=27 // pred_check
        %p601 = pneg %p78
      $region30: #{residual_block_forward.7} parent=27 // pred_check_branch
        %603 = sbr.rel (%p601) target = $region32
      $region31: #{residual_block_forward.7} parent=27 // pred_region
        _
      $region32: #{residual_block_forward.7} parent=27 // pred_fallthru
        _
    $region28: #{residual_block_forward.7} parent=5 // pred_fallthru
      _
    %p604 = scmp.le.s32.totalorder 2, %s8
    // Predicated region
    $region33: #{residual_block_forward.7} parent=5 // pred_check
      %p605 = pneg %p604
    $region34: #{residual_block_forward.7} parent=5 // pred_check_branch
      %607 = sbr.rel (%p605) target = $region36
    $region35: #{residual_block_forward.7} parent=5 // pred_region
      %s608 = ssub.s32 %s8, 2
      // Predicated region
      $region37: #{residual_block_forward.7} parent=35 // pred_check
        %p609 = pneg %p84
      $region38: #{residual_block_forward.7} parent=35 // pred_check_branch
        %611 = sbr.rel (%p609) target = $region40
      $region39: #{residual_block_forward.7} parent=35 // pred_region
        %p612 = scmp.lt.s32.totalorder %s14, 1
        %s613 = scalar_select %p612, %s14, 1
        %s614 = smul.addr %s613, 64
        %s615 = smul.addr %s614, 4
        %s616 = scalar_lea.vmem %s2, %s615
      $region40: #{residual_block_forward.7} parent=35 // pred_fallthru
        _
    $region36: #{residual_block_forward.7} parent=5 // pred_fallthru
      _
  $region6: #{residual_block_forward.7} parent=0 // loop_footer
    %s12 = sadd.s32 1, %s8
  $region7: #{residual_block_forward.7} parent=0 // loop_footer_branch
    %7 = sbr.rel target = $region3
  $region8: #{residual_block_forward.7} parent=0 // loop_exit
    _

// kernel: residual_block_forward.6
$region0: #{residual_block_forward.6}
  #allocation0 [shape = 'u32[]', space=smem, size = 0x4, offset = 0x4, fixed_abs, tag = 'smem constant byte address 0x4 - core index']
  #allocation1 [shape = 'u32[72,128]{1,0:T(1,128)}', space=vmem, size = 0x9000, scoped, tag = 'internal scratch']
  %s0 = inlined_call_operand.vmem [shape: bf16[2,8,8,8,128], index: 0, kind: input, shape index: {}]
  %s1 = inlined_call_operand.vmem [shape: bf16[1,1,128,128], index: 1, kind: input, shape index: {}]
  %s2 = inlined_call_operand.vmem [shape: bf16[2,8,8,8,128], index: 2, kind: output, shape index: {0}]
  %s3 = inlined_call_operand.vmem [shape: f32[2,2,128], index: 3, kind: output, shape index: {1}]
  %4 = xla_tuple %s2, %s3
  %s5 = sld [smem:[#allocation0]]
  $region49: #{residual_block_forward.6} parent=0
    _
  %s7 = ssub.s32 1, %s5
  %s8 = scalar_select 0, %s7, %s5
  loop: start=0, step=1, limit=4
  $region2: #{residual_block_forward.6} parent=0 // loop_pre_header
    _
  $region3: #{residual_block_forward.6} parent=0 // loop_header
    %s10 = sphi 0, %s14
    %p11 = scmp.ge.s32.totalorder %s10, 4
    %s20 = sphi 0, %s22
    %s23 = sphi 0, %s20
    %s24 = sphi 0, %s23
    %s40 = sphi 0, %s24
    %s44 = sphi 0, %s44
    %s46 = sphi 0, %s44
    %s47 = sphi 0, %s46
    %s61 = sphi 0, %s47
    %s67 = sphi 0, %s69
    %s70 = sphi 0, %s67
    %s71 = sphi 0, %s70
    %s87 = sphi 0, %s71
    %s93 = sphi 0, %s95
    %s96 = sphi 0, %s93
    %s97 = sphi 0, %s96
    %s113 = sphi 0, %s97
  $region4: #{residual_block_forward.6} parent=0 // loop_header_branch
    %13 = sbr.rel (%p11) target = $region8
  $region5: #{residual_block_forward.6} parent=0 // loop_body
    %s15 = ssub.s32 %s10, 1
    %s16 = ssub.s32 %s10, 2
    %s17 = sadd.s32 %s10, 1
    %s18 = ssub.s32 %s10, %s17
    %p19 = scmp.eq.s32.totalorder %s18, 0
    %s21 = sadd.s32 %s20, 1
    %s22 = scalar_select %p19, %s20, %s21
    %p25 = pneg %p19
    %p26 = scmp.eq.s32.totalorder %s10, 1
    %p27 = por %p25, %p26
    %p28 = scmp.ne.s32.totalorder %s20, %s23
    %p29 = scmp.eq.s32.totalorder %s10, 0
    %p30 = por %p28, %p29
    %p31 = scmp.ne.s32.totalorder %s20, %s23
    %p32 = scmp.eq.s32.totalorder %s15, 1
    %p33 = por %p31, %p32
    %p34 = scmp.ne.s32.totalorder %s23, %s24
    %p35 = scmp.eq.s32.totalorder %s15, 0
    %p36 = por %p34, %p35
    %p37 = scmp.ne.s32.totalorder %s23, %s24
    %p38 = scmp.eq.s32.totalorder %s16, 1
    %p39 = por %p37, %p38
    %p41 = scmp.ne.s32.totalorder %s24, %s40
    %p42 = scmp.eq.s32.totalorder %s16, 0
    %p43 = por %p41, %p42
    %s45 = sadd.s32 %s44, 1
    %p48 = scmp.eq.s32.totalorder %s10, 1
    %p49 = scmp.ne.s32.totalorder %s44, %s46
    %p50 = scmp.eq.s32.totalorder %s10, 0
    %p51 = por %p49, %p50
    %p52 = scmp.ne.s32.totalorder %s44, %s46
    %p53 = scmp.eq.s32.totalorder %s15, 1
    %p54 = por %p52, %p53
    %p55 = scmp.ne.s32.totalorder %s46, %s47
    %p56 = scmp.eq.s32.totalorder %s15, 0
    %p57 = por %p55, %p56
    %p58 = scmp.ne.s32.totalorder %s46, %s47
    %p59 = scmp.eq.s32.totalorder %s16, 1
    %p60 = por %p58, %p59
    %p62 = scmp.ne.s32.totalorder %s47, %s61
    %p63 = scmp.eq.s32.totalorder %s16, 0
    %p64 = por %p62, %p63
    %s65 = ssub.s32 %s10, %s17
    %p66 = scmp.eq.s32.totalorder %s65, 0
    %s68 = sadd.s32 %s67, 1
    %s69 = scalar_select %p66, %s67, %s68
    %p72 = pneg %p66
    %p73 = scmp.eq.s32.totalorder %s10, 1
    %p74 = por %p72, %p73
    %p75 = scmp.ne.s32.totalorder %s67, %s70
    %p76 = scmp.eq.s32.totalorder %s10, 0
    %p77 = por %p75, %p76
    %p78 = scmp.ne.s32.totalorder %s67, %s70
    %p79 = scmp.eq.s32.totalorder %s15, 1
    %p80 = por %p78, %p79
    %p81 = scmp.ne.s32.totalorder %s70, %s71
    %p82 = scmp.eq.s32.totalorder %s15, 0
    %p83 = por %p81, %p82
    %p84 = scmp.ne.s32.totalorder %s70, %s71
    %p85 = scmp.eq.s32.totalorder %s16, 1
    %p86 = por %p84, %p85
    %p88 = scmp.ne.s32.totalorder %s71, %s87
    %p89 = scmp.eq.s32.totalorder %s16, 0
    %p90 = por %p88, %p89
    %s91 = ssub.s32 %s10, %s17
    %p92 = scmp.eq.s32.totalorder %s91, 0
    %s94 = sadd.s32 %s93, 1
    %s95 = scalar_select %p92, %s93, %s94
    %p98 = pneg %p92
    %p99 = scmp.eq.s32.totalorder %s10, 1
    %p100 = por %p98, %p99
    %p101 = scmp.ne.s32.totalorder %s93, %s96
    %p102 = scmp.eq.s32.totalorder %s10, 0
    %p103 = por %p101, %p102
    %p104 = scmp.ne.s32.totalorder %s93, %s96
    %p105 = scmp.eq.s32.totalorder %s15, 1
    %p106 = por %p104, %p105
    %p107 = scmp.ne.s32.totalorder %s96, %s97
    %p108 = scmp.eq.s32.totalorder %s15, 0
    %p109 = por %p107, %p108
    %p110 = scmp.ne.s32.totalorder %s96, %s97
    %p111 = scmp.eq.s32.totalorder %s16, 1
    %p112 = por %p110, %p111
    %p114 = scmp.ne.s32.totalorder %s97, %s113
    %p115 = scmp.eq.s32.totalorder %s16, 0
    %p116 = por %p114, %p115
    %p117 = scmp.le.s32.totalorder 1, %s10
    %p118 = scmp.lt.s32.totalorder %s10, 3
    %p119 = pnand %p117, %p118
    %p120 = pneg %p119
    // Predicated region
    $region9: #{residual_block_forward.6} parent=5 // pred_check
      _
    $region10: #{residual_block_forward.6} parent=5 // pred_check_branch
      %122 = sbr.rel (%p119) target = $region12
    $region11: #{residual_block_forward.6} parent=5 // pred_region
      %s123 = ssub.s32 %s10, 1
      // Predicated region
      $region13: #{residual_block_forward.6} parent=11 // pred_check
        %p124 = pneg %p57
      $region14: #{residual_block_forward.6} parent=11 // pred_check_branch
        %126 = sbr.rel (%p124) target = $region16
      $region15: #{residual_block_forward.6} parent=11 // pred_region
        _
      $region16: #{residual_block_forward.6} parent=11 // pred_fallthru
        _
    $region12: #{residual_block_forward.6} parent=5 // pred_fallthru
      _
    %p127 = scmp.lt.s32.totalorder %s10, 2
    // Predicated region
    $region17: #{residual_block_forward.6} parent=5 // pred_check
      %p128 = pneg %p127
    $region18: #{residual_block_forward.6} parent=5 // pred_check_branch
      %130 = sbr.rel (%p128) target = $region20
    $region19: #{residual_block_forward.6} parent=5 // pred_region
      // Predicated region
      $region21: #{residual_block_forward.6} parent=19 // pred_check
        %p131 = pneg %p30
      $region22: #{residual_block_forward.6} parent=19 // pred_check_branch
        %133 = sbr.rel (%p131) target = $region24
      $region23: #{residual_block_forward.6} parent=19 // pred_region
        %p134 = scmp.lt.s32.totalorder %s10, 1
        %s135 = scalar_select %p134, %s10, 1
        %s136 = smul.addr %s135, 64
        %s137 = smul.addr %s136, 4
        %s138 = scalar_lea.vmem %s0, %s137
      $region24: #{residual_block_forward.6} parent=19 // pred_fallthru
        _
    $region20: #{residual_block_forward.6} parent=5 // pred_fallthru
      _
    %p139 = scmp.le.s32.totalorder 1, %s10
    %p140 = scmp.lt.s32.totalorder %s10, 3
    %p141 = pnand %p139, %p140
    %p142 = pneg %p141
    // Predicated region
    $region25: #{residual_block_forward.6} parent=5 // pred_check
      _
    $region26: #{residual_block_forward.6} parent=5 // pred_check_branch
      %144 = sbr.rel (%p141) target = $region28
    $region27: #{residual_block_forward.6} parent=5 // pred_region
      %s145 = ssub.s32 %s10, 1
      %p146 = scmp.lt.s32.totalorder %s15, 1
      %s147 = scalar_select %p146, %s15, 1
      %s148 = smul.addr %s147, 64
      %s149 = smul.addr %s148, 4
      %s150 = scalar_lea.vmem %s0, %s149
      %p151 = pneg %p36
      %p152 = pneg %p33
      %p153 = pneg %p57
      %p154 = pneg %p54
      %p155 = pneg %p83
      %p156 = pneg %p80
      %p157 = scmp.lt.s32.totalorder %s15, 1
      %s158 = scalar_select %p157, %s15, 1
      %s159 = smul.addr %s158, 64
      %s160 = smul.addr %s159, 4
      %s161 = scalar_lea.vmem %s2, %s160
      %p162 = pneg %p109
      %p163 = pneg %p106
      %p164 = scmp.lt.s32.totalorder %s15, 1
      %s165 = scalar_select %p164, %s15, 1
      %s166 = smul.addr %s165, 2
      %s167 = scalar_lea.vmem %s3, %s166
      %p168 = scmp.lt.s32.totalorder %s15, 1
      %s169 = scalar_select %p168, %s15, 1
      %s170 = smul.addr %s169, 64
      %s171 = smul.addr %s170, 4
      %s172 = scalar_lea.vmem %s0, %s171
      %p173 = scmp.lt.s32.totalorder %s15, 1
      %s174 = scalar_select %p173, %s15, 1
      %s175 = smul.addr %s174, 64
      %s176 = smul.addr %s175, 4
      %s177 = scalar_lea.vmem %s2, %s176
      %p178 = scmp.lt.s32.totalorder %s15, 1
      %s179 = scalar_select %p178, %s15, 1
      %s180 = smul.addr %s179, 2
      %s181 = scalar_lea.vmem %s3, %s180
      %v182 = vld [vmem:[%s172] sm:$0xf]
      %v183 = vld [vmem:[%s172 + $0x4] sm:$0xf]
      %v184 = vld [vmem:[%s172 + $0x8] sm:$0xf]
      %v185 = vld [vmem:[%s172 + $0xc] sm:$0xf]
      %v186 = vld [vmem:[%s172 + $0x10] sm:$0xf]
      %v187 = vld [vmem:[%s172 + $0x14] sm:$0xf]
      %v188 = vld [vmem:[%s172 + $0x18] sm:$0xf]
      %v189 = vld [vmem:[%s172 + $0x1c] sm:$0xf]
      %v190 = vld [vmem:[%s172 + $0x20] sm:$0xf]
      %v191 = vld [vmem:[%s172 + $0x24] sm:$0xf]
      %v192 = vld [vmem:[%s172 + $0x28] sm:$0xf]
      %v193 = vld [vmem:[%s172 + $0x2c] sm:$0xf]
      %v194 = vld [vmem:[%s172 + $0x30] sm:$0xf]
      %v195 = vld [vmem:[%s172 + $0x34] sm:$0xf]
      %v196 = vld [vmem:[%s172 + $0x38] sm:$0xf]
      %v197 = vld [vmem:[%s172 + $0x3c] sm:$0xf]
      %v198 = vld [vmem:[%s172 + $0x40] sm:$0xf]
      %v199 = vld [vmem:[%s172 + $0x44] sm:$0xf]
      %v200 = vld [vmem:[%s172 + $0x48] sm:$0xf]
      %v201 = vld [vmem:[%s172 + $0x4c] sm:$0xf]
      %v202 = vld [vmem:[%s172 + $0x50] sm:$0xf]
      %v203 = vld [vmem:[%s172 + $0x54] sm:$0xf]
      %v204 = vld [vmem:[%s172 + $0x58] sm:$0xf]
      %v205 = vld [vmem:[%s172 + $0x5c] sm:$0xf]
      %v206 = vld [vmem:[%s172 + $0x60] sm:$0xf]
      %v207 = vld [vmem:[%s172 + $0x64] sm:$0xf]
      %v208 = vld [vmem:[%s172 + $0x68] sm:$0xf]
      %v209 = vld [vmem:[%s172 + $0x6c] sm:$0xf]
      %v210 = vld [vmem:[%s172 + $0x70] sm:$0xf]
      %v211 = vld [vmem:[%s172 + $0x74] sm:$0xf]
      %v212 = vld [vmem:[%s172 + $0x78] sm:$0xf]
      %v213 = vld [vmem:[%s172 + $0x7c] sm:$0xf]
      %v214 = vld [vmem:[%s172 + $0x80] sm:$0xf]
      %v215 = vld [vmem:[%s172 + $0x84] sm:$0xf]
      %v216 = vld [vmem:[%s172 + $0x88] sm:$0xf]
      %v217 = vld [vmem:[%s172 + $0x8c] sm:$0xf]
      %v218 = vld [vmem:[%s172 + $0x90] sm:$0xf]
      %v219 = vld [vmem:[%s172 + $0x94] sm:$0xf]
      %v220 = vld [vmem:[%s172 + $0x98] sm:$0xf]
      %v221 = vld [vmem:[%s172 + $0x9c] sm:$0xf]
      %v222 = vld [vmem:[%s172 + $0xa0] sm:$0xf]
      %v223 = vld [vmem:[%s172 + $0xa4] sm:$0xf]
      %v224 = vld [vmem:[%s172 + $0xa8] sm:$0xf]
      %v225 = vld [vmem:[%s172 + $0xac] sm:$0xf]
      %v226 = vld [vmem:[%s172 + $0xb0] sm:$0xf]
      %v227 = vld [vmem:[%s172 + $0xb4] sm:$0xf]
      %v228 = vld [vmem:[%s172 + $0xb8] sm:$0xf]
      %v229 = vld [vmem:[%s172 + $0xbc] sm:$0xf]
      %v230 = vld [vmem:[%s172 + $0xc0] sm:$0xf]
      %v231 = vld [vmem:[%s172 + $0xc4] sm:$0xf]
      %v232 = vld [vmem:[%s172 + $0xc8] sm:$0xf]
      %v233 = vld [vmem:[%s172 + $0xcc] sm:$0xf]
      %v234 = vld [vmem:[%s172 + $0xd0] sm:$0xf]
      %v235 = vld [vmem:[%s172 + $0xd4] sm:$0xf]
      %v236 = vld [vmem:[%s172 + $0xd8] sm:$0xf]
      %v237 = vld [vmem:[%s172 + $0xdc] sm:$0xf]
      %v238 = vld [vmem:[%s172 + $0xe0] sm:$0xf]
      %v239 = vld [vmem:[%s172 + $0xe4] sm:$0xf]
      %v240 = vld [vmem:[%s172 + $0xe8] sm:$0xf]
      %v241 = vld [vmem:[%s172 + $0xec] sm:$0xf]
      %v242 = vld [vmem:[%s172 + $0xf0] sm:$0xf]
      %v243 = vld [vmem:[%s172 + $0xf4] sm:$0xf]
      %v244 = vld [vmem:[%s172 + $0xf8] sm:$0xf]
      %v245 = vld [vmem:[%s172 + $0xfc] sm:$0xf]
      %v246 = vld [vmem:[%s1] sm:$0xf]
      %v247 = vld [vmem:[%s1 + $0x4] sm:$0xf]
      %v248 = vld [vmem:[%s1 + $0x8] sm:$0xf]
      %v249 = vld [vmem:[%s1 + $0xc] sm:$0xf]
      %v250 = vld [vmem:[%s1 + $0x10] sm:$0xf]
      %v251 = vld [vmem:[%s1 + $0x14] sm:$0xf]
      %v252 = vld [vmem:[%s1 + $0x18] sm:$0xf]
      %v253 = vld [vmem:[%s1 + $0x1c] sm:$0xf]
      %v254 = vld [vmem:[%s1 + $0x20] sm:$0xf]
      %v255 = vld [vmem:[%s1 + $0x24] sm:$0xf]
      %v256 = vld [vmem:[%s1 + $0x28] sm:$0xf]
      %v257 = vld [vmem:[%s1 + $0x2c] sm:$0xf]
      %v258 = vld [vmem:[%s1 + $0x30] sm:$0xf]
      %v259 = vld [vmem:[%s1 + $0x34] sm:$0xf]
      %v260 = vld [vmem:[%s1 + $0x38] sm:$0xf]
      %v261 = vld [vmem:[%s1 + $0x3c] sm:$0xf]
      %v326 = vunpack.c.l.b16 %v182
      %v327 = vunpack.c.l.b16 %v183
      %v328 = vunpack.c.l.b16 %v184
      %v329 = vunpack.c.l.b16 %v185
      %v330 = vunpack.c.l.b16 %v186
      %v331 = vunpack.c.l.b16 %v187
      %v332 = vunpack.c.l.b16 %v188
      %v333 = vunpack.c.l.b16 %v189
      %v334 = vunpack.c.l.b16 %v190
      %v335 = vunpack.c.l.b16 %v191
      %v336 = vunpack.c.l.b16 %v192
      %v337 = vunpack.c.l.b16 %v193
      %v338 = vunpack.c.l.b16 %v194
      %v339 = vunpack.c.l.b16 %v195
      %v340 = vunpack.c.l.b16 %v196
      %v341 = vunpack.c.l.b16 %v197
      %v342 = vunpack.c.l.b16 %v198
      %v343 = vunpack.c.l.b16 %v199
      %v344 = vunpack.c.l.b16 %v200
      %v345 = vunpack.c.l.b16 %v201
      %v346 = vunpack.c.l.b16 %v202
      %v347 = vunpack.c.l.b16 %v203
      %v348 = vunpack.c.l.b16 %v204
      %v349 = vunpack.c.l.b16 %v205
      %v350 = vunpack.c.l.b16 %v206
      %v351 = vunpack.c.l.b16 %v207
      %v352 = vunpack.c.l.b16 %v208
      %v353 = vunpack.c.l.b16 %v209
      %v354 = vunpack.c.l.b16 %v210
      %v355 = vunpack.c.l.b16 %v211
      %v356 = vunpack.c.l.b16 %v212
      %v357 = vunpack.c.l.b16 %v213
      %v358 = vunpack.c.l.b16 %v214
      %v359 = vunpack.c.l.b16 %v215
      %v360 = vunpack.c.l.b16 %v216
      %v361 = vunpack.c.l.b16 %v217
      %v362 = vunpack.c.l.b16 %v218
      %v363 = vunpack.c.l.b16 %v219
      %v364 = vunpack.c.l.b16 %v220
      %v365 = vunpack.c.l.b16 %v221
      %v366 = vunpack.c.l.b16 %v222
      %v367 = vunpack.c.l.b16 %v223
      %v368 = vunpack.c.l.b16 %v224
      %v369 = vunpack.c.l.b16 %v225
      %v370 = vunpack.c.l.b16 %v226
      %v371 = vunpack.c.l.b16 %v227
      %v372 = vunpack.c.l.b16 %v228
      %v373 = vunpack.c.l.b16 %v229
      %v374 = vunpack.c.l.b16 %v230
      %v375 = vunpack.c.l.b16 %v231
      %v376 = vunpack.c.l.b16 %v232
      %v377 = vunpack.c.l.b16 %v233
      %v378 = vunpack.c.l.b16 %v234
      %v379 = vunpack.c.l.b16 %v235
      %v380 = vunpack.c.l.b16 %v236
      %v381 = vunpack.c.l.b16 %v237
      %v382 = vunpack.c.l.b16 %v238
      %v383 = vunpack.c.l.b16 %v239
      %v384 = vunpack.c.l.b16 %v240
      %v385 = vunpack.c.l.b16 %v241
      %v386 = vunpack.c.l.b16 %v242
      %v387 = vunpack.c.l.b16 %v243
      %v388 = vunpack.c.l.b16 %v244
      %v389 = vunpack.c.l.b16 %v245
      %v390 = vpack.c.b16 %v327, %v326
      %v391 = vpack.c.b16 %v329, %v328
      %v392 = vpack.c.b16 %v331, %v330
      %v393 = vpack.c.b16 %v333, %v332
      %v394 = vpack.c.b16 %v335, %v334
      %v395 = vpack.c.b16 %v337, %v336
      %v396 = vpack.c.b16 %v339, %v338
      %v397 = vpack.c.b16 %v341, %v340
      %v398 = vpack.c.b16 %v343, %v342
      %v399 = vpack.c.b16 %v345, %v344
      %v400 = vpack.c.b16 %v347, %v346
      %v401 = vpack.c.b16 %v349, %v348
      %v402 = vpack.c.b16 %v351, %v350
      %v403 = vpack.c.b16 %v353, %v352
      %v404 = vpack.c.b16 %v355, %v354
      %v405 = vpack.c.b16 %v357, %v356
      %v406 = vpack.c.b16 %v359, %v358
      %v407 = vpack.c.b16 %v361, %v360
      %v408 = vpack.c.b16 %v363, %v362
      %v409 = vpack.c.b16 %v365, %v364
      %v410 = vpack.c.b16 %v367, %v366
      %v411 = vpack.c.b16 %v369, %v368
      %v412 = vpack.c.b16 %v371, %v370
      %v413 = vpack.c.b16 %v373, %v372
      %v414 = vpack.c.b16 %v375, %v374
      %v415 = vpack.c.b16 %v377, %v376
      %v416 = vpack.c.b16 %v379, %v378
      %v417 = vpack.c.b16 %v381, %v380
      %v418 = vpack.c.b16 %v383, %v382
      %v419 = vpack.c.b16 %v385, %v384
      %v420 = vpack.c.b16 %v387, %v386
      %v421 = vpack.c.b16 %v389, %v388
      %v470 = vunpack.c.l.b16 %v246
      %v471 = vunpack.c.l.b16 %v247
      %v472 = vunpack.c.l.b16 %v248
      %v473 = vunpack.c.l.b16 %v249
      %v474 = vunpack.c.l.b16 %v250
      %v475 = vunpack.c.l.b16 %v251
      %v476 = vunpack.c.l.b16 %v252
      %v477 = vunpack.c.l.b16 %v253
      %v478 = vunpack.c.l.b16 %v254
      %v479 = vunpack.c.l.b16 %v255
      %v480 = vunpack.c.l.b16 %v256
      %v481 = vunpack.c.l.b16 %v257
      %v482 = vunpack.c.l.b16 %v258
      %v483 = vunpack.c.l.b16 %v259
      %v484 = vunpack.c.l.b16 %v260
      %v485 = vunpack.c.l.b16 %v261
      %v486 = vpack.c.b16 %v471, %v470
      %v487 = vpack.c.b16 %v473, %v472
      %v488 = vpack.c.b16 %v475, %v474
      %v489 = vpack.c.b16 %v477, %v476
      %v490 = vpack.c.b16 %v479, %v478
      %v491 = vpack.c.b16 %v481, %v480
      %v492 = vpack.c.b16 %v483, %v482
      %v493 = vpack.c.b16 %v485, %v484
      %502 = vmatpush.bf16.msra.mxu0 %v493
      %503 = vmatpush.bf16.msra.mxu0 %v492
      %504 = vmatpush.bf16.msra.mxu0 %v491
      %505 = vmatpush.bf16.msra.mxu0 %v490
      %506 = vmatpush.bf16.msra.mxu0 %v489
      %507 = vmatpush.bf16.msra.mxu0 %v488
      %508 = vmatpush.bf16.msra.mxu0 %v487
      %509 = vmatpush.bf16.msra.mxu0 %v486
      %510 = vmatmul.bf16.gmra.mxu0 %v390
      %v511 = vpop.f32.mrf.mxu0
      %v512 = vadd.f32 0.0, %v511
      %v513 = vpop.f32.mrf.mxu0
      %v514 = vadd.f32 0.0, %v513
      %515 = vmatmul.bf16.gmra.mxu0 %v391
      %v516 = vpop.f32.mrf.mxu0
      %v517 = vadd.f32 0.0, %v516
      %v518 = vpop.f32.mrf.mxu0
      %v519 = vadd.f32 0.0, %v518
      %520 = vmatmul.bf16.gmra.mxu0 %v392
      %v521 = vpop.f32.mrf.mxu0
      %v522 = vadd.f32 0.0, %v521
      %v523 = vpop.f32.mrf.mxu0
      %v524 = vadd.f32 0.0, %v523
      %525 = vmatmul.bf16.gmra.mxu0 %v393
      %v526 = vpop.f32.mrf.mxu0
      %v527 = vadd.f32 0.0, %v526
      %v528 = vpop.f32.mrf.mxu0
      %v529 = vadd.f32 0.0, %v528
      %530 = vmatmul.bf16.gmra.mxu0 %v394
      %v531 = vpop.f32.mrf.mxu0
      %v532 = vadd.f32 0.0, %v531
      %v533 = vpop.f32.mrf.mxu0
      %v534 = vadd.f32 0.0, %v533
      %535 = vmatmul.bf16.gmra.mxu0 %v395
      %v536 = vpop.f32.mrf.mxu0
      %v537 = vadd.f32 0.0, %v536
      %v538 = vpop.f32.mrf.mxu0
      %v539 = vadd.f32 0.0, %v538
      %540 = vmatmul.bf16.gmra.mxu0 %v396
      %v541 = vpop.f32.mrf.mxu0
      %v542 = vadd.f32 0.0, %v541
      %v543 = vpop.f32.mrf.mxu0
      %v544 = vadd.f32 0.0, %v543
      %545 = vmatmul.bf16.gmra.mxu0 %v397
      %v546 = vpop.f32.mrf.mxu0
      %v547 = vadd.f32 0.0, %v546
      %v548 = vpop.f32.mrf.mxu0
      %v549 = vadd.f32 0.0, %v548
      %550 = vmatmul.bf16.gmra.mxu0 %v398
      %v551 = vpop.f32.mrf.mxu0
      %v552 = vadd.f32 0.0, %v551
      %v553 = vpop.f32.mrf.mxu0
      %v554 = vadd.f32 0.0, %v553
      %555 = vmatmul.bf16.gmra.mxu0 %v399
      %v556 = vpop.f32.mrf.mxu0
      %v557 = vadd.f32 0.0, %v556
      %v558 = vpop.f32.mrf.mxu0
      %v559 = vadd.f32 0.0, %v558
      %560 = vmatmul.bf16.gmra.mxu0 %v400
      %v561 = vpop.f32.mrf.mxu0
      %v562 = vadd.f32 0.0, %v561
      %v563 = vpop.f32.mrf.mxu0
      %v564 = vadd.f32 0.0, %v563
      %565 = vmatmul.bf16.gmra.mxu0 %v401
      %v566 = vpop.f32.mrf.mxu0
      %v567 = vadd.f32 0.0, %v566
      %v568 = vpop.f32.mrf.mxu0
      %v569 = vadd.f32 0.0, %v568
      %570 = vmatmul.bf16.gmra.mxu0 %v402
      %v571 = vpop.f32.mrf.mxu0
      %v572 = vadd.f32 0.0, %v571
      %v573 = vpop.f32.mrf.mxu0
      %v574 = vadd.f32 0.0, %v573
      %575 = vmatmul.bf16.gmra.mxu0 %v403
      %v576 = vpop.f32.mrf.mxu0
      %v577 = vadd.f32 0.0, %v576
      %v578 = vpop.f32.mrf.mxu0
      %v579 = vadd.f32 0.0, %v578
      %580 = vmatmul.bf16.gmra.mxu0 %v404
      %v581 = vpop.f32.mrf.mxu0
      %v582 = vadd.f32 0.0, %v581
      %v583 = vpop.f32.mrf.mxu0
      %v584 = vadd.f32 0.0, %v583
      %585 = vmatmul.bf16.gmra.mxu0 %v405
      %v586 = vpop.f32.mrf.mxu0
      %v587 = vadd.f32 0.0, %v586
      %v588 = vpop.f32.mrf.mxu0
      %v589 = vadd.f32 0.0, %v588
      %590 = vmatmul.bf16.gmra.mxu0 %v406
      %v591 = vpop.f32.mrf.mxu0
      %v592 = vadd.f32 0.0, %v591
      %v593 = vpop.f32.mrf.mxu0
      %v594 = vadd.f32 0.0, %v593
      %595 = vmatmul.bf16.gmra.mxu0 %v407
      %v596 = vpop.f32.mrf.mxu0
      %v597 = vadd.f32 0.0, %v596
      %v598 = vpop.f32.mrf.mxu0
      %v599 = vadd.f32 0.0, %v598
      %600 = vmatmul.bf16.gmra.mxu0 %v408
      %v601 = vpop.f32.mrf.mxu0
      %v602 = vadd.f32 0.0, %v601
      %v603 = vpop.f32.mrf.mxu0
      %v604 = vadd.f32 0.0, %v603
      %605 = vmatmul.bf16.gmra.mxu0 %v409
      %v606 = vpop.f32.mrf.mxu0
      %v607 = vadd.f32 0.0, %v606
      %v608 = vpop.f32.mrf.mxu0
      %v609 = vadd.f32 0.0, %v608
      %610 = vmatmul.bf16.gmra.mxu0 %v410
      %v611 = vpop.f32.mrf.mxu0
      %v612 = vadd.f32 0.0, %v611
      %v613 = vpop.f32.mrf.mxu0
      %v614 = vadd.f32 0.0, %v613
      %615 = vmatmul.bf16.gmra.mxu0 %v411
      %v616 = vpop.f32.mrf.mxu0
      %v617 = vadd.f32 0.0, %v616
      %v618 = vpop.f32.mrf.mxu0
      %v619 = vadd.f32 0.0, %v618
      %620 = vmatmul.bf16.gmra.mxu0 %v412
      %v621 = vpop.f32.mrf.mxu0
      %v622 = vadd.f32 0.0, %v621
      %v623 = vpop.f32.mrf.mxu0
      %v624 = vadd.f32 0.0, %v623
      %625 = vmatmul.bf16.gmra.mxu0 %v413
      %v626 = vpop.f32.mrf.mxu0
      %v627 = vadd.f32 0.0, %v626
      %v628 = vpop.f32.mrf.mxu0
      %v629 = vadd.f32 0.0, %v628
      %630 = vmatmul.bf16.gmra.mxu0 %v414
      %v631 = vpop.f32.mrf.mxu0
      %v632 = vadd.f32 0.0, %v631
      %v633 = vpop.f32.mrf.mxu0
      %v634 = vadd.f32 0.0, %v633
      %635 = vmatmul.bf16.gmra.mxu0 %v415
      %v636 = vpop.f32.mrf.mxu0
      %v637 = vadd.f32 0.0, %v636
      %v638 = vpop.f32.mrf.mxu0
      %v639 = vadd.f32 0.0, %v638
      %640 = vmatmul.bf16.gmra.mxu0 %v416
      %v641 = vpop.f32.mrf.mxu0
      %v642 = vadd.f32 0.0, %v641
      %v643 = vpop.f32.mrf.mxu0
      %v644 = vadd.f32 0.0, %v643
      %645 = vmatmul.bf16.gmra.mxu0 %v417
      %v646 = vpop.f32.mrf.mxu0
      %v647 = vadd.f32 0.0, %v646
      %v648 = vpop.f32.mrf.mxu0
      %v649 = vadd.f32 0.0, %v648
      %650 = vmatmul.bf16.gmra.mxu0 %v418
      %v651 = vpop.f32.mrf.mxu0
      %v652 = vadd.f32 0.0, %v651
      %v653 = vpop.f32.mrf.mxu0
      %v654 = vadd.f32 0.0, %v653
      %655 = vmatmul.bf16.gmra.mxu0 %v419
      %v656 = vpop.f32.mrf.mxu0
      %v657 = vadd.f32 0.0, %v656
      %v658 = vpop.f32.mrf.mxu0
      %v659 = vadd.f32 0.0, %v658
      %660 = vmatmul.bf16.gmra.mxu0 %v420
      %v661 = vpop.f32.mrf.mxu0
      %v662 = vadd.f32 0.0, %v661
      %v663 = vpop.f32.mrf.mxu0
      %v664 = vadd.f32 0.0, %v663
      %665 = vmatmul.bf16.gmra.mxu0 %v421
      %v666 = vpop.f32.mrf.mxu0
      %v667 = vadd.f32 0.0, %v666
      %v668 = vpop.f32.mrf.mxu0
      %v669 = vadd.f32 0.0, %v668
      %670 = vdwg.mxu0
      %v671 = vpack.c.bf16 %v512, %v512
      %v672 = vpack.c.bf16 %v514, %v514
      %v673 = vpack.c.bf16 %v517, %v517
      %v674 = vpack.c.bf16 %v519, %v519
      %v675 = vpack.c.bf16 %v522, %v522
      %v676 = vpack.c.bf16 %v524, %v524
      %v677 = vpack.c.bf16 %v527, %v527
      %v678 = vpack.c.bf16 %v529, %v529
      %v679 = vpack.c.bf16 %v532, %v532
      %v680 = vpack.c.bf16 %v534, %v534
      %v681 = vpack.c.bf16 %v537, %v537
      %v682 = vpack.c.bf16 %v539, %v539
      %v683 = vpack.c.bf16 %v542, %v542
      %v684 = vpack.c.bf16 %v544, %v544
      %v685 = vpack.c.bf16 %v547, %v547
      %v686 = vpack.c.bf16 %v549, %v549
      %v687 = vpack.c.bf16 %v552, %v552
      %v688 = vpack.c.bf16 %v554, %v554
      %v689 = vpack.c.bf16 %v557, %v557
      %v690 = vpack.c.bf16 %v559, %v559
      %v691 = vpack.c.bf16 %v562, %v562
      %v692 = vpack.c.bf16 %v564, %v564
      %v693 = vpack.c.bf16 %v567, %v567
      %v694 = vpack.c.bf16 %v569, %v569
      %v695 = vpack.c.bf16 %v572, %v572
      %v696 = vpack.c.bf16 %v574, %v574
      %v697 = vpack.c.bf16 %v577, %v577
      %v698 = vpack.c.bf16 %v579, %v579
      %v699 = vpack.c.bf16 %v582, %v582
      %v700 = vpack.c.bf16 %v584, %v584
      %v701 = vpack.c.bf16 %v587, %v587
      %v702 = vpack.c.bf16 %v589, %v589
      %v703 = vpack.c.bf16 %v592, %v592
      %v704 = vpack.c.bf16 %v594, %v594
      %v705 = vpack.c.bf16 %v597, %v597
      %v706 = vpack.c.bf16 %v599, %v599
      %v707 = vpack.c.bf16 %v602, %v602
      %v708 = vpack.c.bf16 %v604, %v604
      %v709 = vpack.c.bf16 %v607, %v607
      %v710 = vpack.c.bf16 %v609, %v609
      %v711 = vpack.c.bf16 %v612, %v612
      %v712 = vpack.c.bf16 %v614, %v614
      %v713 = vpack.c.bf16 %v617, %v617
      %v714 = vpack.c.bf16 %v619, %v619
      %v715 = vpack.c.bf16 %v622, %v622
      %v716 = vpack.c.bf16 %v624, %v624
      %v717 = vpack.c.bf16 %v627, %v627
      %v718 = vpack.c.bf16 %v629, %v629
      %v719 = vpack.c.bf16 %v632, %v632
      %v720 = vpack.c.bf16 %v634, %v634
      %v721 = vpack.c.bf16 %v637, %v637
      %v722 = vpack.c.bf16 %v639, %v639
      %v723 = vpack.c.bf16 %v642, %v642
      %v724 = vpack.c.bf16 %v644, %v644
      %v725 = vpack.c.bf16 %v647, %v647
      %v726 = vpack.c.bf16 %v649, %v649
      %v727 = vpack.c.bf16 %v652, %v652
      %v728 = vpack.c.bf16 %v654, %v654
      %v729 = vpack.c.bf16 %v657, %v657
      %v730 = vpack.c.bf16 %v659, %v659
      %v731 = vpack.c.bf16 %v662, %v662
      %v732 = vpack.c.bf16 %v664, %v664
      %v733 = vpack.c.bf16 %v667, %v667
      %v734 = vpack.c.bf16 %v669, %v669
      %735 = vst [vmem:[%s177] sm:$0xf] %v671
      %736 = vst [vmem:[%s177 + $0x4] sm:$0xf] %v672
      %737 = vst [vmem:[%s177 + $0x8] sm:$0xf] %v673
      %738 = vst [vmem:[%s177 + $0xc] sm:$0xf] %v674
      %739 = vst [vmem:[%s177 + $0x10] sm:$0xf] %v675
      %740 = vst [vmem:[%s177 + $0x14] sm:$0xf] %v676
      %741 = vst [vmem:[%s177 + $0x18] sm:$0xf] %v677
      %742 = vst [vmem:[%s177 + $0x1c] sm:$0xf] %v678
      %743 = vst [vmem:[%s177 + $0x20] sm:$0xf] %v679
      %744 = vst [vmem:[%s177 + $0x24] sm:$0xf] %v680
      %745 = vst [vmem:[%s177 + $0x28] sm:$0xf] %v681
      %746 = vst [vmem:[%s177 + $0x2c] sm:$0xf] %v682
      %747 = vst [vmem:[%s177 + $0x30] sm:$0xf] %v683
      %748 = vst [vmem:[%s177 + $0x34] sm:$0xf] %v684
      %749 = vst [vmem:[%s177 + $0x38] sm:$0xf] %v685
      %750 = vst [vmem:[%s177 + $0x3c] sm:$0xf] %v686
      %751 = vst [vmem:[%s177 + $0x40] sm:$0xf] %v687
      %752 = vst [vmem:[%s177 + $0x44] sm:$0xf] %v688
      %753 = vst [vmem:[%s177 + $0x48] sm:$0xf] %v689
      %754 = vst [vmem:[%s177 + $0x4c] sm:$0xf] %v690
      %755 = vst [vmem:[%s177 + $0x50] sm:$0xf] %v691
      %756 = vst [vmem:[%s177 + $0x54] sm:$0xf] %v692
      %757 = vst [vmem:[%s177 + $0x58] sm:$0xf] %v693
      %758 = vst [vmem:[%s177 + $0x5c] sm:$0xf] %v694
      %759 = vst [vmem:[%s177 + $0x60] sm:$0xf] %v695
      %760 = vst [vmem:[%s177 + $0x64] sm:$0xf] %v696
      %761 = vst [vmem:[%s177 + $0x68] sm:$0xf] %v697
      %762 = vst [vmem:[%s177 + $0x6c] sm:$0xf] %v698
      %763 = vst [vmem:[%s177 + $0x70] sm:$0xf] %v699
      %764 = vst [vmem:[%s177 + $0x74] sm:$0xf] %v700
      %765 = vst [vmem:[%s177 + $0x78] sm:$0xf] %v701
      %766 = vst [vmem:[%s177 + $0x7c] sm:$0xf] %v702
      %767 = vst [vmem:[%s177 + $0x80] sm:$0xf] %v703
      %768 = vst [vmem:[%s177 + $0x84] sm:$0xf] %v704
      %769 = vst [vmem:[%s177 + $0x88] sm:$0xf] %v705
      %770 = vst [vmem:[%s177 + $0x8c] sm:$0xf] %v706
      %771 = vst [vmem:[%s177 + $0x90] sm:$0xf] %v707
      %772 = vst [vmem:[%s177 + $0x94] sm:$0xf] %v708
      %773 = vst [vmem:[%s177 + $0x98] sm:$0xf] %v709
      %774 = vst [vmem:[%s177 + $0x9c] sm:$0xf] %v710
      %775 = vst [vmem:[%s177 + $0xa0] sm:$0xf] %v711
      %776 = vst [vmem:[%s177 + $0xa4] sm:$0xf] %v712
      %777 = vst [vmem:[%s177 + $0xa8] sm:$0xf] %v713
      %778 = vst [vmem:[%s177 + $0xac] sm:$0xf] %v714
      %779 = vst [vmem:[%s177 + $0xb0] sm:$0xf] %v715
      %780 = vst [vmem:[%s177 + $0xb4] sm:$0xf] %v716
      %781 = vst [vmem:[%s177 + $0xb8] sm:$0xf] %v717
      %782 = vst [vmem:[%s177 + $0xbc] sm:$0xf] %v718
      %783 = vst [vmem:[%s177 + $0xc0] sm:$0xf] %v719
      %784 = vst [vmem:[%s177 + $0xc4] sm:$0xf] %v720
      %785 = vst [vmem:[%s177 + $0xc8] sm:$0xf] %v721
      %786 = vst [vmem:[%s177 + $0xcc] sm:$0xf] %v722
      %787 = vst [vmem:[%s177 + $0xd0] sm:$0xf] %v723
      %788 = vst [vmem:[%s177 + $0xd4] sm:$0xf] %v724
      %789 = vst [vmem:[%s177 + $0xd8] sm:$0xf] %v725
      %790 = vst [vmem:[%s177 + $0xdc] sm:$0xf] %v726
      %791 = vst [vmem:[%s177 + $0xe0] sm:$0xf] %v727
      %792 = vst [vmem:[%s177 + $0xe4] sm:$0xf] %v728
      %793 = vst [vmem:[%s177 + $0xe8] sm:$0xf] %v729
      %794 = vst [vmem:[%s177 + $0xec] sm:$0xf] %v730
      %795 = vst [vmem:[%s177 + $0xf0] sm:$0xf] %v731
      %796 = vst [vmem:[%s177 + $0xf4] sm:$0xf] %v732
      %797 = vst [vmem:[%s177 + $0xf8] sm:$0xf] %v733
      %798 = vst [vmem:[%s177 + $0xfc] sm:$0xf] %v734
      %v799 = vunpack.c.l.bf16 %v671
      %v800 = vunpack.c.l.bf16 %v672
      %v801 = vunpack.c.l.bf16 %v673
      %v802 = vunpack.c.l.bf16 %v674
      %v803 = vunpack.c.l.bf16 %v675
      %v804 = vunpack.c.l.bf16 %v676
      %v805 = vunpack.c.l.bf16 %v677
      %v806 = vunpack.c.l.bf16 %v678
      %v807 = vunpack.c.l.bf16 %v679
      %v808 = vunpack.c.l.bf16 %v680
      %v809 = vunpack.c.l.bf16 %v681
      %v810 = vunpack.c.l.bf16 %v682
      %v811 = vunpack.c.l.bf16 %v683
      %v812 = vunpack.c.l.bf16 %v684
      %v813 = vunpack.c.l.bf16 %v685
      %v814 = vunpack.c.l.bf16 %v686
      %v815 = vunpack.c.l.bf16 %v687
      %v816 = vunpack.c.l.bf16 %v688
      %v817 = vunpack.c.l.bf16 %v689
      %v818 = vunpack.c.l.bf16 %v690
      %v819 = vunpack.c.l.bf16 %v691
      %v820 = vunpack.c.l.bf16 %v692
      %v821 = vunpack.c.l.bf16 %v693
      %v822 = vunpack.c.l.bf16 %v694
      %v823 = vunpack.c.l.bf16 %v695
      %v824 = vunpack.c.l.bf16 %v696
      %v825 = vunpack.c.l.bf16 %v697
      %v826 = vunpack.c.l.bf16 %v698
      %v827 = vunpack.c.l.bf16 %v699
      %v828 = vunpack.c.l.bf16 %v700
      %v829 = vunpack.c.l.bf16 %v701
      %v830 = vunpack.c.l.bf16 %v702
      %v831 = vunpack.c.l.bf16 %v703
      %v832 = vunpack.c.l.bf16 %v704
      %v833 = vunpack.c.l.bf16 %v705
      %v834 = vunpack.c.l.bf16 %v706
      %v835 = vunpack.c.l.bf16 %v707
      %v836 = vunpack.c.l.bf16 %v708
      %v837 = vunpack.c.l.bf16 %v709
      %v838 = vunpack.c.l.bf16 %v710
      %v839 = vunpack.c.l.bf16 %v711
      %v840 = vunpack.c.l.bf16 %v712
      %v841 = vunpack.c.l.bf16 %v713
      %v842 = vunpack.c.l.bf16 %v714
      %v843 = vunpack.c.l.bf16 %v715
      %v844 = vunpack.c.l.bf16 %v716
      %v845 = vunpack.c.l.bf16 %v717
      %v846 = vunpack.c.l.bf16 %v718
      %v847 = vunpack.c.l.bf16 %v719
      %v848 = vunpack.c.l.bf16 %v720
      %v849 = vunpack.c.l.bf16 %v721
      %v850 = vunpack.c.l.bf16 %v722
      %v851 = vunpack.c.l.bf16 %v723
      %v852 = vunpack.c.l.bf16 %v724
      %v853 = vunpack.c.l.bf16 %v725
      %v854 = vunpack.c.l.bf16 %v726
      %v855 = vunpack.c.l.bf16 %v727
      %v856 = vunpack.c.l.bf16 %v728
      %v857 = vunpack.c.l.bf16 %v729
      %v858 = vunpack.c.l.bf16 %v730
      %v859 = vunpack.c.l.bf16 %v731
      %v860 = vunpack.c.l.bf16 %v732
      %v861 = vunpack.c.l.bf16 %v733
      %v862 = vunpack.c.l.bf16 %v734
      %v863 = vadd.f32 %v799, %v800
      %v864 = vadd.f32 %v863, %v801
      %v865 = vadd.f32 %v864, %v802
      %v866 = vadd.f32 %v865, %v803
      %v867 = vadd.f32 %v866, %v804
      %v868 = vadd.f32 %v867, %v805
      %v869 = vadd.f32 %v868, %v806
      %v870 = vadd.f32 %v869, %v807
      %v871 = vadd.f32 %v870, %v808
      %v872 = vadd.f32 %v871, %v809
      %v873 = vadd.f32 %v872, %v810
      %v874 = vadd.f32 %v873, %v811
      %v875 = vadd.f32 %v874, %v812
      %v876 = vadd.f32 %v875, %v813
      %v877 = vadd.f32 %v876, %v814
      %v878 = vadd.f32 %v877, %v815
      %v879 = vadd.f32 %v878, %v816
      %v880 = vadd.f32 %v879, %v817
      %v881 = vadd.f32 %v880, %v818
      %v882 = vadd.f32 %v881, %v819
      %v883 = vadd.f32 %v882, %v820
      %v884 = vadd.f32 %v883, %v821
      %v885 = vadd.f32 %v884, %v822
      %v886 = vadd.f32 %v885, %v823
      %v887 = vadd.f32 %v886, %v824
      %v888 = vadd.f32 %v887, %v825
      %v889 = vadd.f32 %v888, %v826
      %v890 = vadd.f32 %v889, %v827
      %v891 = vadd.f32 %v890, %v828
      %v892 = vadd.f32 %v891, %v829
      %v893 = vadd.f32 %v892, %v830
      %v894 = vadd.f32 %v893, %v831
      %v895 = vadd.f32 %v894, %v832
      %v896 = vadd.f32 %v895, %v833
      %v897 = vadd.f32 %v896, %v834
      %v898 = vadd.f32 %v897, %v835
      %v899 = vadd.f32 %v898, %v836
      %v900 = vadd.f32 %v899, %v837
      %v901 = vadd.f32 %v900, %v838
      %v902 = vadd.f32 %v901, %v839
      %v903 = vadd.f32 %v902, %v840
      %v904 = vadd.f32 %v903, %v841
      %v905 = vadd.f32 %v904, %v842
      %v906 = vadd.f32 %v905, %v843
      %v907 = vadd.f32 %v906, %v844
      %v908 = vadd.f32 %v907, %v845
      %v909 = vadd.f32 %v908, %v846
      %v910 = vadd.f32 %v909, %v847
      %v911 = vadd.f32 %v910, %v848
      %v912 = vadd.f32 %v911, %v849
      %v913 = vadd.f32 %v912, %v850
      %v914 = vadd.f32 %v913, %v851
      %v915 = vadd.f32 %v914, %v852
      %v916 = vadd.f32 %v915, %v853
      %v917 = vadd.f32 %v916, %v854
      %v918 = vadd.f32 %v917, %v855
      %v919 = vadd.f32 %v918, %v856
      %v920 = vadd.f32 %v919, %v857
      %v921 = vadd.f32 %v920, %v858
      %v922 = vadd.f32 %v921, %v859
      %v923 = vadd.f32 %v922, %v860
      %v924 = vadd.f32 %v923, %v861
      %v925 = vadd.f32 %v924, %v862
      %v926 = vrot.slane %v925, 4
      %v927 = vadd.f32 %v925, %v926
      %v928 = vrot.slane %v927, 2
      %v929 = vadd.f32 %v927, %v928
      %v930 = vrot.slane %v929, 1
      %v931 = vadd.f32 %v929, %v930
      %v932 = vmul.f32 %v799, %v799
      %v933 = vmul.f32 %v800, %v800
      %v934 = vmul.f32 %v801, %v801
      %v935 = vmul.f32 %v802, %v802
      %v936 = vmul.f32 %v803, %v803
      %v937 = vmul.f32 %v804, %v804
      %v938 = vmul.f32 %v805, %v805
      %v939 = vmul.f32 %v806, %v806
      %v940 = vmul.f32 %v807, %v807
      %v941 = vmul.f32 %v808, %v808
      %v942 = vmul.f32 %v809, %v809
      %v943 = vmul.f32 %v810, %v810
      %v944 = vmul.f32 %v811, %v811
      %v945 = vmul.f32 %v812, %v812
      %v946 = vmul.f32 %v813, %v813
      %v947 = vmul.f32 %v814, %v814
      %v948 = vmul.f32 %v815, %v815
      %v949 = vmul.f32 %v816, %v816
      %v950 = vmul.f32 %v817, %v817
      %v951 = vmul.f32 %v818, %v818
      %v952 = vmul.f32 %v819, %v819
      %v953 = vmul.f32 %v820, %v820
      %v954 = vmul.f32 %v821, %v821
      %v955 = vmul.f32 %v822, %v822
      %v956 = vmul.f32 %v823, %v823
      %v957 = vmul.f32 %v824, %v824
      %v958 = vmul.f32 %v825, %v825
      %v959 = vmul.f32 %v826, %v826
      %v960 = vmul.f32 %v827, %v827
      %v961 = vmul.f32 %v828, %v828
      %v962 = vmul.f32 %v829, %v829
      %v963 = vmul.f32 %v830, %v830
      %v964 = vmul.f32 %v831, %v831
      %v965 = vmul.f32 %v832, %v832
      %v966 = vmul.f32 %v833, %v833
      %v967 = vmul.f32 %v834, %v834
      %v968 = vmul.f32 %v835, %v835
      %v969 = vmul.f32 %v836, %v836
      %v970 = vmul.f32 %v837, %v837
      %v971 = vmul.f32 %v838, %v838
      %v972 = vmul.f32 %v839, %v839
      %v973 = vmul.f32 %v840, %v840
      %v974 = vmul.f32 %v841, %v841
      %v975 = vmul.f32 %v842, %v842
      %v976 = vmul.f32 %v843, %v843
      %v977 = vmul.f32 %v844, %v844
      %v978 = vmul.f32 %v845, %v845
      %v979 = vmul.f32 %v846, %v846
      %v980 = vmul.f32 %v847, %v847
      %v981 = vmul.f32 %v848, %v848
      %v982 = vmul.f32 %v849, %v849
      %v983 = vmul.f32 %v850, %v850
      %v984 = vmul.f32 %v851, %v851
      %v985 = vmul.f32 %v852, %v852
      %v986 = vmul.f32 %v853, %v853
      %v987 = vmul.f32 %v854, %v854
      %v988 = vmul.f32 %v855, %v855
      %v989 = vmul.f32 %v856, %v856
      %v990 = vmul.f32 %v857, %v857
      %v991 = vmul.f32 %v858, %v858
      %v992 = vmul.f32 %v859, %v859
      %v993 = vmul.f32 %v860, %v860
      %v994 = vmul.f32 %v861, %v861
      %v995 = vmul.f32 %v862, %v862
      %v996 = vadd.f32 %v932, %v933
      %v997 = vadd.f32 %v996, %v934
      %v998 = vadd.f32 %v997, %v935
      %v999 = vadd.f32 %v998, %v936
      %v1000 = vadd.f32 %v999, %v937
      %v1001 = vadd.f32 %v1000, %v938
      %v1002 = vadd.f32 %v1001, %v939
      %v1003 = vadd.f32 %v1002, %v940
      %v1004 = vadd.f32 %v1003, %v941
      %v1005 = vadd.f32 %v1004, %v942
      %v1006 = vadd.f32 %v1005, %v943
      %v1007 = vadd.f32 %v1006, %v944
      %v1008 = vadd.f32 %v1007, %v945
      %v1009 = vadd.f32 %v1008, %v946
      %v1010 = vadd.f32 %v1009, %v947
      %v1011 = vadd.f32 %v1010, %v948
      %v1012 = vadd.f32 %v1011, %v949
      %v1013 = vadd.f32 %v1012, %v950
      %v1014 = vadd.f32 %v1013, %v951
      %v1015 = vadd.f32 %v1014, %v952
      %v1016 = vadd.f32 %v1015, %v953
      %v1017 = vadd.f32 %v1016, %v954
      %v1018 = vadd.f32 %v1017, %v955
      %v1019 = vadd.f32 %v1018, %v956
      %v1020 = vadd.f32 %v1019, %v957
      %v1021 = vadd.f32 %v1020, %v958
      %v1022 = vadd.f32 %v1021, %v959
      %v1023 = vadd.f32 %v1022, %v960
      %v1024 = vadd.f32 %v1023, %v961
      %v1025 = vadd.f32 %v1024, %v962
      %v1026 = vadd.f32 %v1025, %v963
      %v1027 = vadd.f32 %v1026, %v964
      %v1028 = vadd.f32 %v1027, %v965
      %v1029 = vadd.f32 %v1028, %v966
      %v1030 = vadd.f32 %v1029, %v967
      %v1031 = vadd.f32 %v1030, %v968
      %v1032 = vadd.f32 %v1031, %v969
      %v1033 = vadd.f32 %v1032, %v970
      %v1034 = vadd.f32 %v1033, %v971
      %v1035 = vadd.f32 %v1034, %v972
      %v1036 = vadd.f32 %v1035, %v973
      %v1037 = vadd.f32 %v1036, %v974
      %v1038 = vadd.f32 %v1037, %v975
      %v1039 = vadd.f32 %v1038, %v976
      %v1040 = vadd.f32 %v1039, %v977
      %v1041 = vadd.f32 %v1040, %v978
      %v1042 = vadd.f32 %v1041, %v979
      %v1043 = vadd.f32 %v1042, %v980
      %v1044 = vadd.f32 %v1043, %v981
      %v1045 = vadd.f32 %v1044, %v982
      %v1046 = vadd.f32 %v1045, %v983
      %v1047 = vadd.f32 %v1046, %v984
      %v1048 = vadd.f32 %v1047, %v985
      %v1049 = vadd.f32 %v1048, %v986
      %v1050 = vadd.f32 %v1049, %v987
      %v1051 = vadd.f32 %v1050, %v988
      %v1052 = vadd.f32 %v1051, %v989
      %v1053 = vadd.f32 %v1052, %v990
      %v1054 = vadd.f32 %v1053, %v991
      %v1055 = vadd.f32 %v1054, %v992
      %v1056 = vadd.f32 %v1055, %v993
      %v1057 = vadd.f32 %v1056, %v994
      %v1058 = vadd.f32 %v1057, %v995
      %v1059 = vrot.slane %v1058, 4
      %v1060 = vadd.f32 %v1058, %v1059
      %v1061 = vrot.slane %v1060, 2
      %v1062 = vadd.f32 %v1060, %v1061
      %v1063 = vrot.slane %v1062, 1
      %v1064 = vadd.f32 %v1062, %v1063
      %vm1065 = vcmask 1040384
      %v1066 = vsel %vm1065, %v931, %v1064
      %1067 = vst [vmem:[%s181] sm:$0x3] %v1066
      %p1068 = scmp.lt.s32.totalorder %s15, 1
      %s1069 = scalar_select %p1068, %s15, 1
      %s1070 = smul.addr %s1069, 64
      %s1071 = smul.addr %s1070, 4
      %s1072 = scalar_lea.vmem %s2, %s1071
      %p1073 = scmp.lt.s32.totalorder %s15, 1
      %s1074 = scalar_select %p1073, %s15, 1
      %s1075 = smul.addr %s1074, 2
      %s1076 = scalar_lea.vmem %s3, %s1075
      // Predicated region
      $region29: #{residual_block_forward.6} parent=27 // pred_check
        %p1077 = pneg %p80
      $region30: #{residual_block_forward.6} parent=27 // pred_check_branch
        %1079 = sbr.rel (%p1077) target = $region32
      $region31: #{residual_block_forward.6} parent=27 // pred_region
        _
      $region32: #{residual_block_forward.6} parent=27 // pred_fallthru
        _
      // Predicated region
      $region33: #{residual_block_forward.6} parent=27 // pred_check
        %p1080 = pneg %p106
      $region34: #{residual_block_forward.6} parent=27 // pred_check_branch
        %1082 = sbr.rel (%p1080) target = $region36
      $region35: #{residual_block_forward.6} parent=27 // pred_region
        _
      $region36: #{residual_block_forward.6} parent=27 // pred_fallthru
        _
    $region28: #{residual_block_forward.6} parent=5 // pred_fallthru
      _
    %p1083 = scmp.le.s32.totalorder 2, %s10
    // Predicated region
    $region37: #{residual_block_forward.6} parent=5 // pred_check
      %p1084 = pneg %p1083
    $region38: #{residual_block_forward.6} parent=5 // pred_check_branch
      %1086 = sbr.rel (%p1084) target = $region40
    $region39: #{residual_block_forward.6} parent=5 // pred_region
      %s1087 = ssub.s32 %s10, 2
      // Predicated region
      $region41: #{residual_block_forward.6} parent=39 // pred_check
        %p1088 = pneg %p86
      $region42: #{residual_block_forward.6} parent=39 // pred_check_branch
        %1090 = sbr.rel (%p1088) target = $region44
      $region43: #{residual_block_forward.6} parent=39 // pred_region
        %p1091 = scmp.lt.s32.totalorder %s16, 1
        %s1092 = scalar_select %p1091, %s16, 1
        %s1093 = smul.addr %s1092, 64
        %s1094 = smul.addr %s1093, 4
        %s1095 = scalar_lea.vmem %s2, %s1094
      $region44: #{residual_block_forward.6} parent=39 // pred_fallthru
        _
      // Predicated region
      $region45: #{residual_block_forward.6} parent=39 // pred_check
        %p1096 = pneg %p112
      $region46: #{residual_block_forward.6} parent=39 // pred_check_branch
        %1098 = sbr.rel (%p1096) target = $region48
      $region47: #{residual_block_forward.6} parent=39 // pred_region
        %p1099 = scmp.lt.s32.totalorder %s16, 1
        %s1100 = scalar_select %p1099, %s16, 1
        %s1101 = smul.addr %s1100, 2
        %s1102 = scalar_lea.vmem %s3, %s1101
      $region48: #{residual_block_forward.6} parent=39 // pred_fallthru
        _
    $region40: #{residual_block_forward.6} parent=5 // pred_fallthru
      _
  $region6: #{residual_block_forward.6} parent=0 // loop_footer
    %s14 = sadd.s32 1, %s10
  $region7: #{residual_block_forward.6} parent=0 // loop_footer_branch
    %9 = sbr.rel target = $region3
  $region8: #{residual_block_forward.6} parent=0 // loop_exit
    _

// kernel: residual_block_forward.9
$region0: #{residual_block_forward.9}
  #allocation0 [shape = 'u32[]', space=smem, size = 0x4, offset = 0x4, fixed_abs, tag = 'smem constant byte address 0x4 - core index']
  #allocation1 [shape = 'u32[72,128]{1,0:T(1,128)}', space=vmem, size = 0x9000, scoped, tag = 'internal scratch']
  %s0 = inlined_call_operand.vmem [shape: bf16[2,8,8,8,128], index: 0, kind: input, shape index: {}]
  %s1 = inlined_call_operand.vmem [shape: f32[2,128], index: 1, kind: input, shape index: {}]
  %s2 = inlined_call_operand.vmem [shape: bf16[2,8,8,8,128], index: 2, kind: input, shape index: {}]
  %s3 = inlined_call_operand.vmem [shape: bf16[2,8,8,8,128], index: 3, kind: output, shape index: {}]
  %s4 = sld [smem:[#allocation0]]
  $region45: #{residual_block_forward.9} parent=0
    _
  %s6 = ssub.s32 1, %s4
  %s7 = scalar_select 0, %s6, %s4
  loop: start=0, step=1, limit=4
  $region2: #{residual_block_forward.9} parent=0 // loop_pre_header
    _
  $region3: #{residual_block_forward.9} parent=0 // loop_header
    %s9 = sphi 0, %s13
    %p10 = scmp.ge.s32.totalorder %s9, 4
    %s19 = sphi 0, %s21
    %s22 = sphi 0, %s19
    %s23 = sphi 0, %s22
    %s39 = sphi 0, %s23
    %s43 = sphi 0, %s43
    %s45 = sphi 0, %s43
    %s46 = sphi 0, %s45
    %s60 = sphi 0, %s46
    %s66 = sphi 0, %s68
    %s69 = sphi 0, %s66
    %s70 = sphi 0, %s69
    %s86 = sphi 0, %s70
    %s92 = sphi 0, %s94
    %s95 = sphi 0, %s92
    %s96 = sphi 0, %s95
    %s112 = sphi 0, %s96
  $region4: #{residual_block_forward.9} parent=0 // loop_header_branch
    %12 = sbr.rel (%p10) target = $region8
  $region5: #{residual_block_forward.9} parent=0 // loop_body
    %s14 = ssub.s32 %s9, 1
    %s15 = ssub.s32 %s9, 2
    %s16 = sadd.s32 %s9, 1
    %s17 = ssub.s32 %s9, %s16
    %p18 = scmp.eq.s32.totalorder %s17, 0
    %s20 = sadd.s32 %s19, 1
    %s21 = scalar_select %p18, %s19, %s20
    %p24 = pneg %p18
    %p25 = scmp.eq.s32.totalorder %s9, 1
    %p26 = por %p24, %p25
    %p27 = scmp.ne.s32.totalorder %s19, %s22
    %p28 = scmp.eq.s32.totalorder %s9, 0
    %p29 = por %p27, %p28
    %p30 = scmp.ne.s32.totalorder %s19, %s22
    %p31 = scmp.eq.s32.totalorder %s14, 1
    %p32 = por %p30, %p31
    %p33 = scmp.ne.s32.totalorder %s22, %s23
    %p34 = scmp.eq.s32.totalorder %s14, 0
    %p35 = por %p33, %p34
    %p36 = scmp.ne.s32.totalorder %s22, %s23
    %p37 = scmp.eq.s32.totalorder %s15, 1
    %p38 = por %p36, %p37
    %p40 = scmp.ne.s32.totalorder %s23, %s39
    %p41 = scmp.eq.s32.totalorder %s15, 0
    %p42 = por %p40, %p41
    %s44 = sadd.s32 %s43, 1
    %p47 = scmp.eq.s32.totalorder %s9, 1
    %p48 = scmp.ne.s32.totalorder %s43, %s45
    %p49 = scmp.eq.s32.totalorder %s9, 0
    %p50 = por %p48, %p49
    %p51 = scmp.ne.s32.totalorder %s43, %s45
    %p52 = scmp.eq.s32.totalorder %s14, 1
    %p53 = por %p51, %p52
    %p54 = scmp.ne.s32.totalorder %s45, %s46
    %p55 = scmp.eq.s32.totalorder %s14, 0
    %p56 = por %p54, %p55
    %p57 = scmp.ne.s32.totalorder %s45, %s46
    %p58 = scmp.eq.s32.totalorder %s15, 1
    %p59 = por %p57, %p58
    %p61 = scmp.ne.s32.totalorder %s46, %s60
    %p62 = scmp.eq.s32.totalorder %s15, 0
    %p63 = por %p61, %p62
    %s64 = ssub.s32 %s9, %s16
    %p65 = scmp.eq.s32.totalorder %s64, 0
    %s67 = sadd.s32 %s66, 1
    %s68 = scalar_select %p65, %s66, %s67
    %p71 = pneg %p65
    %p72 = scmp.eq.s32.totalorder %s9, 1
    %p73 = por %p71, %p72
    %p74 = scmp.ne.s32.totalorder %s66, %s69
    %p75 = scmp.eq.s32.totalorder %s9, 0
    %p76 = por %p74, %p75
    %p77 = scmp.ne.s32.totalorder %s66, %s69
    %p78 = scmp.eq.s32.totalorder %s14, 1
    %p79 = por %p77, %p78
    %p80 = scmp.ne.s32.totalorder %s69, %s70
    %p81 = scmp.eq.s32.totalorder %s14, 0
    %p82 = por %p80, %p81
    %p83 = scmp.ne.s32.totalorder %s69, %s70
    %p84 = scmp.eq.s32.totalorder %s15, 1
    %p85 = por %p83, %p84
    %p87 = scmp.ne.s32.totalorder %s70, %s86
    %p88 = scmp.eq.s32.totalorder %s15, 0
    %p89 = por %p87, %p88
    %s90 = ssub.s32 %s9, %s16
    %p91 = scmp.eq.s32.totalorder %s90, 0
    %s93 = sadd.s32 %s92, 1
    %s94 = scalar_select %p91, %s92, %s93
    %p97 = pneg %p91
    %p98 = scmp.eq.s32.totalorder %s9, 1
    %p99 = por %p97, %p98
    %p100 = scmp.ne.s32.totalorder %s92, %s95
    %p101 = scmp.eq.s32.totalorder %s9, 0
    %p102 = por %p100, %p101
    %p103 = scmp.ne.s32.totalorder %s92, %s95
    %p104 = scmp.eq.s32.totalorder %s14, 1
    %p105 = por %p103, %p104
    %p106 = scmp.ne.s32.totalorder %s95, %s96
    %p107 = scmp.eq.s32.totalorder %s14, 0
    %p108 = por %p106, %p107
    %p109 = scmp.ne.s32.totalorder %s95, %s96
    %p110 = scmp.eq.s32.totalorder %s15, 1
    %p111 = por %p109, %p110
    %p113 = scmp.ne.s32.totalorder %s96, %s112
    %p114 = scmp.eq.s32.totalorder %s15, 0
    %p115 = por %p113, %p114
    %p116 = scmp.le.s32.totalorder 1, %s9
    %p117 = scmp.lt.s32.totalorder %s9, 3
    %p118 = pnand %p116, %p117
    %p119 = pneg %p118
    // Predicated region
    $region9: #{residual_block_forward.9} parent=5 // pred_check
      _
    $region10: #{residual_block_forward.9} parent=5 // pred_check_branch
      %121 = sbr.rel (%p118) target = $region12
    $region11: #{residual_block_forward.9} parent=5 // pred_region
      %s122 = ssub.s32 %s9, 1
      // Predicated region
      $region13: #{residual_block_forward.9} parent=11 // pred_check
        %p123 = pneg %p56
      $region14: #{residual_block_forward.9} parent=11 // pred_check_branch
        %125 = sbr.rel (%p123) target = $region16
      $region15: #{residual_block_forward.9} parent=11 // pred_region
        _
      $region16: #{residual_block_forward.9} parent=11 // pred_fallthru
        _
    $region12: #{residual_block_forward.9} parent=5 // pred_fallthru
      _
    %p126 = scmp.lt.s32.totalorder %s9, 2
    // Predicated region
    $region17: #{residual_block_forward.9} parent=5 // pred_check
      %p127 = pneg %p126
    $region18: #{residual_block_forward.9} parent=5 // pred_check_branch
      %129 = sbr.rel (%p127) target = $region20
    $region19: #{residual_block_forward.9} parent=5 // pred_region
      // Predicated region
      $region21: #{residual_block_forward.9} parent=19 // pred_check
        %p130 = pneg %p29
      $region22: #{residual_block_forward.9} parent=19 // pred_check_branch
        %132 = sbr.rel (%p130) target = $region24
      $region23: #{residual_block_forward.9} parent=19 // pred_region
        %p133 = scmp.lt.s32.totalorder %s9, 1
        %s134 = scalar_select %p133, %s9, 1
        %s135 = smul.addr %s134, 64
        %s136 = smul.addr %s135, 4
        %s137 = scalar_lea.vmem %s0, %s136
      $region24: #{residual_block_forward.9} parent=19 // pred_fallthru
        _
      // Predicated region
      $region25: #{residual_block_forward.9} parent=19 // pred_check
        %p138 = pneg %p76
      $region26: #{residual_block_forward.9} parent=19 // pred_check_branch
        %140 = sbr.rel (%p138) target = $region28
      $region27: #{residual_block_forward.9} parent=19 // pred_region
        %p141 = scmp.lt.s32.totalorder %s9, 1
        %s142 = scalar_select %p141, %s9, 1
        %s143 = smul.addr %s142, 64
        %s144 = smul.addr %s143, 4
        %s145 = scalar_lea.vmem %s2, %s144
      $region28: #{residual_block_forward.9} parent=19 // pred_fallthru
        _
    $region20: #{residual_block_forward.9} parent=5 // pred_fallthru
      _
    %p146 = scmp.le.s32.totalorder 1, %s9
    %p147 = scmp.lt.s32.totalorder %s9, 3
    %p148 = pnand %p146, %p147
    %p149 = pneg %p148
    // Predicated region
    $region29: #{residual_block_forward.9} parent=5 // pred_check
      _
    $region30: #{residual_block_forward.9} parent=5 // pred_check_branch
      %151 = sbr.rel (%p148) target = $region32
    $region31: #{residual_block_forward.9} parent=5 // pred_region
      %s152 = ssub.s32 %s9, 1
      %p153 = scmp.lt.s32.totalorder %s14, 1
      %s154 = scalar_select %p153, %s14, 1
      %s155 = smul.addr %s154, 64
      %s156 = smul.addr %s155, 4
      %s157 = scalar_lea.vmem %s0, %s156
      %p158 = pneg %p35
      %p159 = pneg %p32
      %p160 = pneg %p56
      %p161 = pneg %p53
      %p162 = scmp.lt.s32.totalorder %s14, 1
      %s163 = scalar_select %p162, %s14, 1
      %s164 = smul.addr %s163, 64
      %s165 = smul.addr %s164, 4
      %s166 = scalar_lea.vmem %s2, %s165
      %p167 = pneg %p82
      %p168 = pneg %p79
      %p169 = pneg %p108
      %p170 = pneg %p105
      %p171 = scmp.lt.s32.totalorder %s14, 1
      %s172 = scalar_select %p171, %s14, 1
      %s173 = smul.addr %s172, 64
      %s174 = smul.addr %s173, 4
      %s175 = scalar_lea.vmem %s3, %s174
      %p176 = scmp.lt.s32.totalorder %s14, 1
      %s177 = scalar_select %p176, %s14, 1
      %s178 = smul.addr %s177, 64
      %s179 = smul.addr %s178, 4
      %s180 = scalar_lea.vmem %s0, %s179
      %p181 = scmp.lt.s32.totalorder %s14, 1
      %s182 = scalar_select %p181, %s14, 1
      %s183 = smul.addr %s182, 64
      %s184 = smul.addr %s183, 4
      %s185 = scalar_lea.vmem %s2, %s184
      %p186 = scmp.lt.s32.totalorder %s14, 1
      %s187 = scalar_select %p186, %s14, 1
      %s188 = smul.addr %s187, 64
      %s189 = smul.addr %s188, 4
      %s190 = scalar_lea.vmem %s3, %s189
      %v191 = vld [vmem:[%s180] sm:$0xf]
      %v192 = vld [vmem:[%s180 + $0x4] sm:$0xf]
      %v193 = vld [vmem:[%s180 + $0x8] sm:$0xf]
      %v194 = vld [vmem:[%s180 + $0xc] sm:$0xf]
      %v195 = vld [vmem:[%s180 + $0x10] sm:$0xf]
      %v196 = vld [vmem:[%s180 + $0x14] sm:$0xf]
      %v197 = vld [vmem:[%s180 + $0x18] sm:$0xf]
      %v198 = vld [vmem:[%s180 + $0x1c] sm:$0xf]
      %v199 = vld [vmem:[%s180 + $0x20] sm:$0xf]
      %v200 = vld [vmem:[%s180 + $0x24] sm:$0xf]
      %v201 = vld [vmem:[%s180 + $0x28] sm:$0xf]
      %v202 = vld [vmem:[%s180 + $0x2c] sm:$0xf]
      %v203 = vld [vmem:[%s180 + $0x30] sm:$0xf]
      %v204 = vld [vmem:[%s180 + $0x34] sm:$0xf]
      %v205 = vld [vmem:[%s180 + $0x38] sm:$0xf]
      %v206 = vld [vmem:[%s180 + $0x3c] sm:$0xf]
      %v207 = vld [vmem:[%s180 + $0x40] sm:$0xf]
      %v208 = vld [vmem:[%s180 + $0x44] sm:$0xf]
      %v209 = vld [vmem:[%s180 + $0x48] sm:$0xf]
      %v210 = vld [vmem:[%s180 + $0x4c] sm:$0xf]
      %v211 = vld [vmem:[%s180 + $0x50] sm:$0xf]
      %v212 = vld [vmem:[%s180 + $0x54] sm:$0xf]
      %v213 = vld [vmem:[%s180 + $0x58] sm:$0xf]
      %v214 = vld [vmem:[%s180 + $0x5c] sm:$0xf]
      %v215 = vld [vmem:[%s180 + $0x60] sm:$0xf]
      %v216 = vld [vmem:[%s180 + $0x64] sm:$0xf]
      %v217 = vld [vmem:[%s180 + $0x68] sm:$0xf]
      %v218 = vld [vmem:[%s180 + $0x6c] sm:$0xf]
      %v219 = vld [vmem:[%s180 + $0x70] sm:$0xf]
      %v220 = vld [vmem:[%s180 + $0x74] sm:$0xf]
      %v221 = vld [vmem:[%s180 + $0x78] sm:$0xf]
      %v222 = vld [vmem:[%s180 + $0x7c] sm:$0xf]
      %v223 = vld [vmem:[%s180 + $0x80] sm:$0xf]
      %v224 = vld [vmem:[%s180 + $0x84] sm:$0xf]
      %v225 = vld [vmem:[%s180 + $0x88] sm:$0xf]
      %v226 = vld [vmem:[%s180 + $0x8c] sm:$0xf]
      %v227 = vld [vmem:[%s180 + $0x90] sm:$0xf]
      %v228 = vld [vmem:[%s180 + $0x94] sm:$0xf]
      %v229 = vld [vmem:[%s180 + $0x98] sm:$0xf]
      %v230 = vld [vmem:[%s180 + $0x9c] sm:$0xf]
      %v231 = vld [vmem:[%s180 + $0xa0] sm:$0xf]
      %v232 = vld [vmem:[%s180 + $0xa4] sm:$0xf]
      %v233 = vld [vmem:[%s180 + $0xa8] sm:$0xf]
      %v234 = vld [vmem:[%s180 + $0xac] sm:$0xf]
      %v235 = vld [vmem:[%s180 + $0xb0] sm:$0xf]
      %v236 = vld [vmem:[%s180 + $0xb4] sm:$0xf]
      %v237 = vld [vmem:[%s180 + $0xb8] sm:$0xf]
      %v238 = vld [vmem:[%s180 + $0xbc] sm:$0xf]
      %v239 = vld [vmem:[%s180 + $0xc0] sm:$0xf]
      %v240 = vld [vmem:[%s180 + $0xc4] sm:$0xf]
      %v241 = vld [vmem:[%s180 + $0xc8] sm:$0xf]
      %v242 = vld [vmem:[%s180 + $0xcc] sm:$0xf]
      %v243 = vld [vmem:[%s180 + $0xd0] sm:$0xf]
      %v244 = vld [vmem:[%s180 + $0xd4] sm:$0xf]
      %v245 = vld [vmem:[%s180 + $0xd8] sm:$0xf]
      %v246 = vld [vmem:[%s180 + $0xdc] sm:$0xf]
      %v247 = vld [vmem:[%s180 + $0xe0] sm:$0xf]
      %v248 = vld [vmem:[%s180 + $0xe4] sm:$0xf]
      %v249 = vld [vmem:[%s180 + $0xe8] sm:$0xf]
      %v250 = vld [vmem:[%s180 + $0xec] sm:$0xf]
      %v251 = vld [vmem:[%s180 + $0xf0] sm:$0xf]
      %v252 = vld [vmem:[%s180 + $0xf4] sm:$0xf]
      %v253 = vld [vmem:[%s180 + $0xf8] sm:$0xf]
      %v254 = vld [vmem:[%s180 + $0xfc] sm:$0xf]
      %v255 = vunpack.c.l.bf16 %v191
      %v256 = vunpack.c.l.bf16 %v192
      %v257 = vunpack.c.l.bf16 %v193
      %v258 = vunpack.c.l.bf16 %v194
      %v259 = vunpack.c.l.bf16 %v195
      %v260 = vunpack.c.l.bf16 %v196
      %v261 = vunpack.c.l.bf16 %v197
      %v262 = vunpack.c.l.bf16 %v198
      %v263 = vunpack.c.l.bf16 %v199
      %v264 = vunpack.c.l.bf16 %v200
      %v265 = vunpack.c.l.bf16 %v201
      %v266 = vunpack.c.l.bf16 %v202
      %v267 = vunpack.c.l.bf16 %v203
      %v268 = vunpack.c.l.bf16 %v204
      %v269 = vunpack.c.l.bf16 %v205
      %v270 = vunpack.c.l.bf16 %v206
      %v271 = vunpack.c.l.bf16 %v207
      %v272 = vunpack.c.l.bf16 %v208
      %v273 = vunpack.c.l.bf16 %v209
      %v274 = vunpack.c.l.bf16 %v210
      %v275 = vunpack.c.l.bf16 %v211
      %v276 = vunpack.c.l.bf16 %v212
      %v277 = vunpack.c.l.bf16 %v213
      %v278 = vunpack.c.l.bf16 %v214
      %v279 = vunpack.c.l.bf16 %v215
      %v280 = vunpack.c.l.bf16 %v216
      %v281 = vunpack.c.l.bf16 %v217
      %v282 = vunpack.c.l.bf16 %v218
      %v283 = vunpack.c.l.bf16 %v219
      %v284 = vunpack.c.l.bf16 %v220
      %v285 = vunpack.c.l.bf16 %v221
      %v286 = vunpack.c.l.bf16 %v222
      %v287 = vunpack.c.l.bf16 %v223
      %v288 = vunpack.c.l.bf16 %v224
      %v289 = vunpack.c.l.bf16 %v225
      %v290 = vunpack.c.l.bf16 %v226
      %v291 = vunpack.c.l.bf16 %v227
      %v292 = vunpack.c.l.bf16 %v228
      %v293 = vunpack.c.l.bf16 %v229
      %v294 = vunpack.c.l.bf16 %v230
      %v295 = vunpack.c.l.bf16 %v231
      %v296 = vunpack.c.l.bf16 %v232
      %v297 = vunpack.c.l.bf16 %v233
      %v298 = vunpack.c.l.bf16 %v234
      %v299 = vunpack.c.l.bf16 %v235
      %v300 = vunpack.c.l.bf16 %v236
      %v301 = vunpack.c.l.bf16 %v237
      %v302 = vunpack.c.l.bf16 %v238
      %v303 = vunpack.c.l.bf16 %v239
      %v304 = vunpack.c.l.bf16 %v240
      %v305 = vunpack.c.l.bf16 %v241
      %v306 = vunpack.c.l.bf16 %v242
      %v307 = vunpack.c.l.bf16 %v243
      %v308 = vunpack.c.l.bf16 %v244
      %v309 = vunpack.c.l.bf16 %v245
      %v310 = vunpack.c.l.bf16 %v246
      %v311 = vunpack.c.l.bf16 %v247
      %v312 = vunpack.c.l.bf16 %v248
      %v313 = vunpack.c.l.bf16 %v249
      %v314 = vunpack.c.l.bf16 %v250
      %v315 = vunpack.c.l.bf16 %v251
      %v316 = vunpack.c.l.bf16 %v252
      %v317 = vunpack.c.l.bf16 %v253
      %v318 = vunpack.c.l.bf16 %v254
      %v319 = vld [vmem:[%s1] sm:$0x1]
      %v320 = vperm.slane %v319, 0
      %v321 = vmul.f32 %v255, %v320
      %v322 = vmul.f32 %v256, %v320
      %v323 = vmul.f32 %v257, %v320
      %v324 = vmul.f32 %v258, %v320
      %v325 = vmul.f32 %v259, %v320
      %v326 = vmul.f32 %v260, %v320
      %v327 = vmul.f32 %v261, %v320
      %v328 = vmul.f32 %v262, %v320
      %v329 = vmul.f32 %v263, %v320
      %v330 = vmul.f32 %v264, %v320
      %v331 = vmul.f32 %v265, %v320
      %v332 = vmul.f32 %v266, %v320
      %v333 = vmul.f32 %v267, %v320
      %v334 = vmul.f32 %v268, %v320
      %v335 = vmul.f32 %v269, %v320
      %v336 = vmul.f32 %v270, %v320
      %v337 = vmul.f32 %v271, %v320
      %v338 = vmul.f32 %v272, %v320
      %v339 = vmul.f32 %v273, %v320
      %v340 = vmul.f32 %v274, %v320
      %v341 = vmul.f32 %v275, %v320
      %v342 = vmul.f32 %v276, %v320
      %v343 = vmul.f32 %v277, %v320
      %v344 = vmul.f32 %v278, %v320
      %v345 = vmul.f32 %v279, %v320
      %v346 = vmul.f32 %v280, %v320
      %v347 = vmul.f32 %v281, %v320
      %v348 = vmul.f32 %v282, %v320
      %v349 = vmul.f32 %v283, %v320
      %v350 = vmul.f32 %v284, %v320
      %v351 = vmul.f32 %v285, %v320
      %v352 = vmul.f32 %v286, %v320
      %v353 = vmul.f32 %v287, %v320
      %v354 = vmul.f32 %v288, %v320
      %v355 = vmul.f32 %v289, %v320
      %v356 = vmul.f32 %v290, %v320
      %v357 = vmul.f32 %v291, %v320
      %v358 = vmul.f32 %v292, %v320
      %v359 = vmul.f32 %v293, %v320
      %v360 = vmul.f32 %v294, %v320
      %v361 = vmul.f32 %v295, %v320
      %v362 = vmul.f32 %v296, %v320
      %v363 = vmul.f32 %v297, %v320
      %v364 = vmul.f32 %v298, %v320
      %v365 = vmul.f32 %v299, %v320
      %v366 = vmul.f32 %v300, %v320
      %v367 = vmul.f32 %v301, %v320
      %v368 = vmul.f32 %v302, %v320
      %v369 = vmul.f32 %v303, %v320
      %v370 = vmul.f32 %v304, %v320
      %v371 = vmul.f32 %v305, %v320
      %v372 = vmul.f32 %v306, %v320
      %v373 = vmul.f32 %v307, %v320
      %v374 = vmul.f32 %v308, %v320
      %v375 = vmul.f32 %v309, %v320
      %v376 = vmul.f32 %v310, %v320
      %v377 = vmul.f32 %v311, %v320
      %v378 = vmul.f32 %v312, %v320
      %v379 = vmul.f32 %v313, %v320
      %v380 = vmul.f32 %v314, %v320
      %v381 = vmul.f32 %v315, %v320
      %v382 = vmul.f32 %v316, %v320
      %v383 = vmul.f32 %v317, %v320
      %v384 = vmul.f32 %v318, %v320
      %v385 = vld [vmem:[%s1 + $0x1] sm:$0x1]
      %v386 = vperm.slane %v385, 0
      %v387 = vadd.f32 %v321, %v386
      %v388 = vadd.f32 %v322, %v386
      %v389 = vadd.f32 %v323, %v386
      %v390 = vadd.f32 %v324, %v386
      %v391 = vadd.f32 %v325, %v386
      %v392 = vadd.f32 %v326, %v386
      %v393 = vadd.f32 %v327, %v386
      %v394 = vadd.f32 %v328, %v386
      %v395 = vadd.f32 %v329, %v386
      %v396 = vadd.f32 %v330, %v386
      %v397 = vadd.f32 %v331, %v386
      %v398 = vadd.f32 %v332, %v386
      %v399 = vadd.f32 %v333, %v386
      %v400 = vadd.f32 %v334, %v386
      %v401 = vadd.f32 %v335, %v386
      %v402 = vadd.f32 %v336, %v386
      %v403 = vadd.f32 %v337, %v386
      %v404 = vadd.f32 %v338, %v386
      %v405 = vadd.f32 %v339, %v386
      %v406 = vadd.f32 %v340, %v386
      %v407 = vadd.f32 %v341, %v386
      %v408 = vadd.f32 %v342, %v386
      %v409 = vadd.f32 %v343, %v386
      %v410 = vadd.f32 %v344, %v386
      %v411 = vadd.f32 %v345, %v386
      %v412 = vadd.f32 %v346, %v386
      %v413 = vadd.f32 %v347, %v386
      %v414 = vadd.f32 %v348, %v386
      %v415 = vadd.f32 %v349, %v386
      %v416 = vadd.f32 %v350, %v386
      %v417 = vadd.f32 %v351, %v386
      %v418 = vadd.f32 %v352, %v386
      %v419 = vadd.f32 %v353, %v386
      %v420 = vadd.f32 %v354, %v386
      %v421 = vadd.f32 %v355, %v386
      %v422 = vadd.f32 %v356, %v386
      %v423 = vadd.f32 %v357, %v386
      %v424 = vadd.f32 %v358, %v386
      %v425 = vadd.f32 %v359, %v386
      %v426 = vadd.f32 %v360, %v386
      %v427 = vadd.f32 %v361, %v386
      %v428 = vadd.f32 %v362, %v386
      %v429 = vadd.f32 %v363, %v386
      %v430 = vadd.f32 %v364, %v386
      %v431 = vadd.f32 %v365, %v386
      %v432 = vadd.f32 %v366, %v386
      %v433 = vadd.f32 %v367, %v386
      %v434 = vadd.f32 %v368, %v386
      %v435 = vadd.f32 %v369, %v386
      %v436 = vadd.f32 %v370, %v386
      %v437 = vadd.f32 %v371, %v386
      %v438 = vadd.f32 %v372, %v386
      %v439 = vadd.f32 %v373, %v386
      %v440 = vadd.f32 %v374, %v386
      %v441 = vadd.f32 %v375, %v386
      %v442 = vadd.f32 %v376, %v386
      %v443 = vadd.f32 %v377, %v386
      %v444 = vadd.f32 %v378, %v386
      %v445 = vadd.f32 %v379, %v386
      %v446 = vadd.f32 %v380, %v386
      %v447 = vadd.f32 %v381, %v386
      %v448 = vadd.f32 %v382, %v386
      %v449 = vadd.f32 %v383, %v386
      %v450 = vadd.f32 %v384, %v386
      %v451 = vmax.f32 %v387, 0.0
      %v452 = vmax.f32 %v388, 0.0
      %v453 = vmax.f32 %v389, 0.0
      %v454 = vmax.f32 %v390, 0.0
      %v455 = vmax.f32 %v391, 0.0
      %v456 = vmax.f32 %v392, 0.0
      %v457 = vmax.f32 %v393, 0.0
      %v458 = vmax.f32 %v394, 0.0
      %v459 = vmax.f32 %v395, 0.0
      %v460 = vmax.f32 %v396, 0.0
      %v461 = vmax.f32 %v397, 0.0
      %v462 = vmax.f32 %v398, 0.0
      %v463 = vmax.f32 %v399, 0.0
      %v464 = vmax.f32 %v400, 0.0
      %v465 = vmax.f32 %v401, 0.0
      %v466 = vmax.f32 %v402, 0.0
      %v467 = vmax.f32 %v403, 0.0
      %v468 = vmax.f32 %v404, 0.0
      %v469 = vmax.f32 %v405, 0.0
      %v470 = vmax.f32 %v406, 0.0
      %v471 = vmax.f32 %v407, 0.0
      %v472 = vmax.f32 %v408, 0.0
      %v473 = vmax.f32 %v409, 0.0
      %v474 = vmax.f32 %v410, 0.0
      %v475 = vmax.f32 %v411, 0.0
      %v476 = vmax.f32 %v412, 0.0
      %v477 = vmax.f32 %v413, 0.0
      %v478 = vmax.f32 %v414, 0.0
      %v479 = vmax.f32 %v415, 0.0
      %v480 = vmax.f32 %v416, 0.0
      %v481 = vmax.f32 %v417, 0.0
      %v482 = vmax.f32 %v418, 0.0
      %v483 = vmax.f32 %v419, 0.0
      %v484 = vmax.f32 %v420, 0.0
      %v485 = vmax.f32 %v421, 0.0
      %v486 = vmax.f32 %v422, 0.0
      %v487 = vmax.f32 %v423, 0.0
      %v488 = vmax.f32 %v424, 0.0
      %v489 = vmax.f32 %v425, 0.0
      %v490 = vmax.f32 %v426, 0.0
      %v491 = vmax.f32 %v427, 0.0
      %v492 = vmax.f32 %v428, 0.0
      %v493 = vmax.f32 %v429, 0.0
      %v494 = vmax.f32 %v430, 0.0
      %v495 = vmax.f32 %v431, 0.0
      %v496 = vmax.f32 %v432, 0.0
      %v497 = vmax.f32 %v433, 0.0
      %v498 = vmax.f32 %v434, 0.0
      %v499 = vmax.f32 %v435, 0.0
      %v500 = vmax.f32 %v436, 0.0
      %v501 = vmax.f32 %v437, 0.0
      %v502 = vmax.f32 %v438, 0.0
      %v503 = vmax.f32 %v439, 0.0
      %v504 = vmax.f32 %v440, 0.0
      %v505 = vmax.f32 %v441, 0.0
      %v506 = vmax.f32 %v442, 0.0
      %v507 = vmax.f32 %v443, 0.0
      %v508 = vmax.f32 %v444, 0.0
      %v509 = vmax.f32 %v445, 0.0
      %v510 = vmax.f32 %v446, 0.0
      %v511 = vmax.f32 %v447, 0.0
      %v512 = vmax.f32 %v448, 0.0
      %v513 = vmax.f32 %v449, 0.0
      %v514 = vmax.f32 %v450, 0.0
      %v515 = vld [vmem:[%s185] sm:$0xf]
      %v516 = vld [vmem:[%s185 + $0x4] sm:$0xf]
      %v517 = vld [vmem:[%s185 + $0x8] sm:$0xf]
      %v518 = vld [vmem:[%s185 + $0xc] sm:$0xf]
      %v519 = vld [vmem:[%s185 + $0x10] sm:$0xf]
      %v520 = vld [vmem:[%s185 + $0x14] sm:$0xf]
      %v521 = vld [vmem:[%s185 + $0x18] sm:$0xf]
      %v522 = vld [vmem:[%s185 + $0x1c] sm:$0xf]
      %v523 = vld [vmem:[%s185 + $0x20] sm:$0xf]
      %v524 = vld [vmem:[%s185 + $0x24] sm:$0xf]
      %v525 = vld [vmem:[%s185 + $0x28] sm:$0xf]
      %v526 = vld [vmem:[%s185 + $0x2c] sm:$0xf]
      %v527 = vld [vmem:[%s185 + $0x30] sm:$0xf]
      %v528 = vld [vmem:[%s185 + $0x34] sm:$0xf]
      %v529 = vld [vmem:[%s185 + $0x38] sm:$0xf]
      %v530 = vld [vmem:[%s185 + $0x3c] sm:$0xf]
      %v531 = vld [vmem:[%s185 + $0x40] sm:$0xf]
      %v532 = vld [vmem:[%s185 + $0x44] sm:$0xf]
      %v533 = vld [vmem:[%s185 + $0x48] sm:$0xf]
      %v534 = vld [vmem:[%s185 + $0x4c] sm:$0xf]
      %v535 = vld [vmem:[%s185 + $0x50] sm:$0xf]
      %v536 = vld [vmem:[%s185 + $0x54] sm:$0xf]
      %v537 = vld [vmem:[%s185 + $0x58] sm:$0xf]
      %v538 = vld [vmem:[%s185 + $0x5c] sm:$0xf]
      %v539 = vld [vmem:[%s185 + $0x60] sm:$0xf]
      %v540 = vld [vmem:[%s185 + $0x64] sm:$0xf]
      %v541 = vld [vmem:[%s185 + $0x68] sm:$0xf]
      %v542 = vld [vmem:[%s185 + $0x6c] sm:$0xf]
      %v543 = vld [vmem:[%s185 + $0x70] sm:$0xf]
      %v544 = vld [vmem:[%s185 + $0x74] sm:$0xf]
      %v545 = vld [vmem:[%s185 + $0x78] sm:$0xf]
      %v546 = vld [vmem:[%s185 + $0x7c] sm:$0xf]
      %v547 = vld [vmem:[%s185 + $0x80] sm:$0xf]
      %v548 = vld [vmem:[%s185 + $0x84] sm:$0xf]
      %v549 = vld [vmem:[%s185 + $0x88] sm:$0xf]
      %v550 = vld [vmem:[%s185 + $0x8c] sm:$0xf]
      %v551 = vld [vmem:[%s185 + $0x90] sm:$0xf]
      %v552 = vld [vmem:[%s185 + $0x94] sm:$0xf]
      %v553 = vld [vmem:[%s185 + $0x98] sm:$0xf]
      %v554 = vld [vmem:[%s185 + $0x9c] sm:$0xf]
      %v555 = vld [vmem:[%s185 + $0xa0] sm:$0xf]
      %v556 = vld [vmem:[%s185 + $0xa4] sm:$0xf]
      %v557 = vld [vmem:[%s185 + $0xa8] sm:$0xf]
      %v558 = vld [vmem:[%s185 + $0xac] sm:$0xf]
      %v559 = vld [vmem:[%s185 + $0xb0] sm:$0xf]
      %v560 = vld [vmem:[%s185 + $0xb4] sm:$0xf]
      %v561 = vld [vmem:[%s185 + $0xb8] sm:$0xf]
      %v562 = vld [vmem:[%s185 + $0xbc] sm:$0xf]
      %v563 = vld [vmem:[%s185 + $0xc0] sm:$0xf]
      %v564 = vld [vmem:[%s185 + $0xc4] sm:$0xf]
      %v565 = vld [vmem:[%s185 + $0xc8] sm:$0xf]
      %v566 = vld [vmem:[%s185 + $0xcc] sm:$0xf]
      %v567 = vld [vmem:[%s185 + $0xd0] sm:$0xf]
      %v568 = vld [vmem:[%s185 + $0xd4] sm:$0xf]
      %v569 = vld [vmem:[%s185 + $0xd8] sm:$0xf]
      %v570 = vld [vmem:[%s185 + $0xdc] sm:$0xf]
      %v571 = vld [vmem:[%s185 + $0xe0] sm:$0xf]
      %v572 = vld [vmem:[%s185 + $0xe4] sm:$0xf]
      %v573 = vld [vmem:[%s185 + $0xe8] sm:$0xf]
      %v574 = vld [vmem:[%s185 + $0xec] sm:$0xf]
      %v575 = vld [vmem:[%s185 + $0xf0] sm:$0xf]
      %v576 = vld [vmem:[%s185 + $0xf4] sm:$0xf]
      %v577 = vld [vmem:[%s185 + $0xf8] sm:$0xf]
      %v578 = vld [vmem:[%s185 + $0xfc] sm:$0xf]
      %v579 = vunpack.c.l.bf16 %v515
      %v580 = vunpack.c.l.bf16 %v516
      %v581 = vunpack.c.l.bf16 %v517
      %v582 = vunpack.c.l.bf16 %v518
      %v583 = vunpack.c.l.bf16 %v519
      %v584 = vunpack.c.l.bf16 %v520
      %v585 = vunpack.c.l.bf16 %v521
      %v586 = vunpack.c.l.bf16 %v522
      %v587 = vunpack.c.l.bf16 %v523
      %v588 = vunpack.c.l.bf16 %v524
      %v589 = vunpack.c.l.bf16 %v525
      %v590 = vunpack.c.l.bf16 %v526
      %v591 = vunpack.c.l.bf16 %v527
      %v592 = vunpack.c.l.bf16 %v528
      %v593 = vunpack.c.l.bf16 %v529
      %v594 = vunpack.c.l.bf16 %v530
      %v595 = vunpack.c.l.bf16 %v531
      %v596 = vunpack.c.l.bf16 %v532
      %v597 = vunpack.c.l.bf16 %v533
      %v598 = vunpack.c.l.bf16 %v534
      %v599 = vunpack.c.l.bf16 %v535
      %v600 = vunpack.c.l.bf16 %v536
      %v601 = vunpack.c.l.bf16 %v537
      %v602 = vunpack.c.l.bf16 %v538
      %v603 = vunpack.c.l.bf16 %v539
      %v604 = vunpack.c.l.bf16 %v540
      %v605 = vunpack.c.l.bf16 %v541
      %v606 = vunpack.c.l.bf16 %v542
      %v607 = vunpack.c.l.bf16 %v543
      %v608 = vunpack.c.l.bf16 %v544
      %v609 = vunpack.c.l.bf16 %v545
      %v610 = vunpack.c.l.bf16 %v546
      %v611 = vunpack.c.l.bf16 %v547
      %v612 = vunpack.c.l.bf16 %v548
      %v613 = vunpack.c.l.bf16 %v549
      %v614 = vunpack.c.l.bf16 %v550
      %v615 = vunpack.c.l.bf16 %v551
      %v616 = vunpack.c.l.bf16 %v552
      %v617 = vunpack.c.l.bf16 %v553
      %v618 = vunpack.c.l.bf16 %v554
      %v619 = vunpack.c.l.bf16 %v555
      %v620 = vunpack.c.l.bf16 %v556
      %v621 = vunpack.c.l.bf16 %v557
      %v622 = vunpack.c.l.bf16 %v558
      %v623 = vunpack.c.l.bf16 %v559
      %v624 = vunpack.c.l.bf16 %v560
      %v625 = vunpack.c.l.bf16 %v561
      %v626 = vunpack.c.l.bf16 %v562
      %v627 = vunpack.c.l.bf16 %v563
      %v628 = vunpack.c.l.bf16 %v564
      %v629 = vunpack.c.l.bf16 %v565
      %v630 = vunpack.c.l.bf16 %v566
      %v631 = vunpack.c.l.bf16 %v567
      %v632 = vunpack.c.l.bf16 %v568
      %v633 = vunpack.c.l.bf16 %v569
      %v634 = vunpack.c.l.bf16 %v570
      %v635 = vunpack.c.l.bf16 %v571
      %v636 = vunpack.c.l.bf16 %v572
      %v637 = vunpack.c.l.bf16 %v573
      %v638 = vunpack.c.l.bf16 %v574
      %v639 = vunpack.c.l.bf16 %v575
      %v640 = vunpack.c.l.bf16 %v576
      %v641 = vunpack.c.l.bf16 %v577
      %v642 = vunpack.c.l.bf16 %v578
      %v643 = vadd.f32 %v451, %v579
      %v644 = vadd.f32 %v452, %v580
      %v645 = vadd.f32 %v453, %v581
      %v646 = vadd.f32 %v454, %v582
      %v647 = vadd.f32 %v455, %v583
      %v648 = vadd.f32 %v456, %v584
      %v649 = vadd.f32 %v457, %v585
      %v650 = vadd.f32 %v458, %v586
      %v651 = vadd.f32 %v459, %v587
      %v652 = vadd.f32 %v460, %v588
      %v653 = vadd.f32 %v461, %v589
      %v654 = vadd.f32 %v462, %v590
      %v655 = vadd.f32 %v463, %v591
      %v656 = vadd.f32 %v464, %v592
      %v657 = vadd.f32 %v465, %v593
      %v658 = vadd.f32 %v466, %v594
      %v659 = vadd.f32 %v467, %v595
      %v660 = vadd.f32 %v468, %v596
      %v661 = vadd.f32 %v469, %v597
      %v662 = vadd.f32 %v470, %v598
      %v663 = vadd.f32 %v471, %v599
      %v664 = vadd.f32 %v472, %v600
      %v665 = vadd.f32 %v473, %v601
      %v666 = vadd.f32 %v474, %v602
      %v667 = vadd.f32 %v475, %v603
      %v668 = vadd.f32 %v476, %v604
      %v669 = vadd.f32 %v477, %v605
      %v670 = vadd.f32 %v478, %v606
      %v671 = vadd.f32 %v479, %v607
      %v672 = vadd.f32 %v480, %v608
      %v673 = vadd.f32 %v481, %v609
      %v674 = vadd.f32 %v482, %v610
      %v675 = vadd.f32 %v483, %v611
      %v676 = vadd.f32 %v484, %v612
      %v677 = vadd.f32 %v485, %v613
      %v678 = vadd.f32 %v486, %v614
      %v679 = vadd.f32 %v487, %v615
      %v680 = vadd.f32 %v488, %v616
      %v681 = vadd.f32 %v489, %v617
      %v682 = vadd.f32 %v490, %v618
      %v683 = vadd.f32 %v491, %v619
      %v684 = vadd.f32 %v492, %v620
      %v685 = vadd.f32 %v493, %v621
      %v686 = vadd.f32 %v494, %v622
      %v687 = vadd.f32 %v495, %v623
      %v688 = vadd.f32 %v496, %v624
      %v689 = vadd.f32 %v497, %v625
      %v690 = vadd.f32 %v498, %v626
      %v691 = vadd.f32 %v499, %v627
      %v692 = vadd.f32 %v500, %v628
      %v693 = vadd.f32 %v501, %v629
      %v694 = vadd.f32 %v502, %v630
      %v695 = vadd.f32 %v503, %v631
      %v696 = vadd.f32 %v504, %v632
      %v697 = vadd.f32 %v505, %v633
      %v698 = vadd.f32 %v506, %v634
      %v699 = vadd.f32 %v507, %v635
      %v700 = vadd.f32 %v508, %v636
      %v701 = vadd.f32 %v509, %v637
      %v702 = vadd.f32 %v510, %v638
      %v703 = vadd.f32 %v511, %v639
      %v704 = vadd.f32 %v512, %v640
      %v705 = vadd.f32 %v513, %v641
      %v706 = vadd.f32 %v514, %v642
      %v707 = vpack.c.bf16 %v643, %v643
      %v708 = vpack.c.bf16 %v644, %v644
      %v709 = vpack.c.bf16 %v645, %v645
      %v710 = vpack.c.bf16 %v646, %v646
      %v711 = vpack.c.bf16 %v647, %v647
      %v712 = vpack.c.bf16 %v648, %v648
      %v713 = vpack.c.bf16 %v649, %v649
      %v714 = vpack.c.bf16 %v650, %v650
      %v715 = vpack.c.bf16 %v651, %v651
      %v716 = vpack.c.bf16 %v652, %v652
      %v717 = vpack.c.bf16 %v653, %v653
      %v718 = vpack.c.bf16 %v654, %v654
      %v719 = vpack.c.bf16 %v655, %v655
      %v720 = vpack.c.bf16 %v656, %v656
      %v721 = vpack.c.bf16 %v657, %v657
      %v722 = vpack.c.bf16 %v658, %v658
      %v723 = vpack.c.bf16 %v659, %v659
      %v724 = vpack.c.bf16 %v660, %v660
      %v725 = vpack.c.bf16 %v661, %v661
      %v726 = vpack.c.bf16 %v662, %v662
      %v727 = vpack.c.bf16 %v663, %v663
      %v728 = vpack.c.bf16 %v664, %v664
      %v729 = vpack.c.bf16 %v665, %v665
      %v730 = vpack.c.bf16 %v666, %v666
      %v731 = vpack.c.bf16 %v667, %v667
      %v732 = vpack.c.bf16 %v668, %v668
      %v733 = vpack.c.bf16 %v669, %v669
      %v734 = vpack.c.bf16 %v670, %v670
      %v735 = vpack.c.bf16 %v671, %v671
      %v736 = vpack.c.bf16 %v672, %v672
      %v737 = vpack.c.bf16 %v673, %v673
      %v738 = vpack.c.bf16 %v674, %v674
      %v739 = vpack.c.bf16 %v675, %v675
      %v740 = vpack.c.bf16 %v676, %v676
      %v741 = vpack.c.bf16 %v677, %v677
      %v742 = vpack.c.bf16 %v678, %v678
      %v743 = vpack.c.bf16 %v679, %v679
      %v744 = vpack.c.bf16 %v680, %v680
      %v745 = vpack.c.bf16 %v681, %v681
      %v746 = vpack.c.bf16 %v682, %v682
      %v747 = vpack.c.bf16 %v683, %v683
      %v748 = vpack.c.bf16 %v684, %v684
      %v749 = vpack.c.bf16 %v685, %v685
      %v750 = vpack.c.bf16 %v686, %v686
      %v751 = vpack.c.bf16 %v687, %v687
      %v752 = vpack.c.bf16 %v688, %v688
      %v753 = vpack.c.bf16 %v689, %v689
      %v754 = vpack.c.bf16 %v690, %v690
      %v755 = vpack.c.bf16 %v691, %v691
      %v756 = vpack.c.bf16 %v692, %v692
      %v757 = vpack.c.bf16 %v693, %v693
      %v758 = vpack.c.bf16 %v694, %v694
      %v759 = vpack.c.bf16 %v695, %v695
      %v760 = vpack.c.bf16 %v696, %v696
      %v761 = vpack.c.bf16 %v697, %v697
      %v762 = vpack.c.bf16 %v698, %v698
      %v763 = vpack.c.bf16 %v699, %v699
      %v764 = vpack.c.bf16 %v700, %v700
      %v765 = vpack.c.bf16 %v701, %v701
      %v766 = vpack.c.bf16 %v702, %v702
      %v767 = vpack.c.bf16 %v703, %v703
      %v768 = vpack.c.bf16 %v704, %v704
      %v769 = vpack.c.bf16 %v705, %v705
      %v770 = vpack.c.bf16 %v706, %v706
      %771 = vst [vmem:[%s190] sm:$0xf] %v707
      %772 = vst [vmem:[%s190 + $0x4] sm:$0xf] %v708
      %773 = vst [vmem:[%s190 + $0x8] sm:$0xf] %v709
      %774 = vst [vmem:[%s190 + $0xc] sm:$0xf] %v710
      %775 = vst [vmem:[%s190 + $0x10] sm:$0xf] %v711
      %776 = vst [vmem:[%s190 + $0x14] sm:$0xf] %v712
      %777 = vst [vmem:[%s190 + $0x18] sm:$0xf] %v713
      %778 = vst [vmem:[%s190 + $0x1c] sm:$0xf] %v714
      %779 = vst [vmem:[%s190 + $0x20] sm:$0xf] %v715
      %780 = vst [vmem:[%s190 + $0x24] sm:$0xf] %v716
      %781 = vst [vmem:[%s190 + $0x28] sm:$0xf] %v717
      %782 = vst [vmem:[%s190 + $0x2c] sm:$0xf] %v718
      %783 = vst [vmem:[%s190 + $0x30] sm:$0xf] %v719
      %784 = vst [vmem:[%s190 + $0x34] sm:$0xf] %v720
      %785 = vst [vmem:[%s190 + $0x38] sm:$0xf] %v721
      %786 = vst [vmem:[%s190 + $0x3c] sm:$0xf] %v722
      %787 = vst [vmem:[%s190 + $0x40] sm:$0xf] %v723
      %788 = vst [vmem:[%s190 + $0x44] sm:$0xf] %v724
      %789 = vst [vmem:[%s190 + $0x48] sm:$0xf] %v725
      %790 = vst [vmem:[%s190 + $0x4c] sm:$0xf] %v726
      %791 = vst [vmem:[%s190 + $0x50] sm:$0xf] %v727
      %792 = vst [vmem:[%s190 + $0x54] sm:$0xf] %v728
      %793 = vst [vmem:[%s190 + $0x58] sm:$0xf] %v729
      %794 = vst [vmem:[%s190 + $0x5c] sm:$0xf] %v730
      %795 = vst [vmem:[%s190 + $0x60] sm:$0xf] %v731
      %796 = vst [vmem:[%s190 + $0x64] sm:$0xf] %v732
      %797 = vst [vmem:[%s190 + $0x68] sm:$0xf] %v733
      %798 = vst [vmem:[%s190 + $0x6c] sm:$0xf] %v734
      %799 = vst [vmem:[%s190 + $0x70] sm:$0xf] %v735
      %800 = vst [vmem:[%s190 + $0x74] sm:$0xf] %v736
      %801 = vst [vmem:[%s190 + $0x78] sm:$0xf] %v737
      %802 = vst [vmem:[%s190 + $0x7c] sm:$0xf] %v738
      %803 = vst [vmem:[%s190 + $0x80] sm:$0xf] %v739
      %804 = vst [vmem:[%s190 + $0x84] sm:$0xf] %v740
      %805 = vst [vmem:[%s190 + $0x88] sm:$0xf] %v741
      %806 = vst [vmem:[%s190 + $0x8c] sm:$0xf] %v742
      %807 = vst [vmem:[%s190 + $0x90] sm:$0xf] %v743
      %808 = vst [vmem:[%s190 + $0x94] sm:$0xf] %v744
      %809 = vst [vmem:[%s190 + $0x98] sm:$0xf] %v745
      %810 = vst [vmem:[%s190 + $0x9c] sm:$0xf] %v746
      %811 = vst [vmem:[%s190 + $0xa0] sm:$0xf] %v747
      %812 = vst [vmem:[%s190 + $0xa4] sm:$0xf] %v748
      %813 = vst [vmem:[%s190 + $0xa8] sm:$0xf] %v749
      %814 = vst [vmem:[%s190 + $0xac] sm:$0xf] %v750
      %815 = vst [vmem:[%s190 + $0xb0] sm:$0xf] %v751
      %816 = vst [vmem:[%s190 + $0xb4] sm:$0xf] %v752
      %817 = vst [vmem:[%s190 + $0xb8] sm:$0xf] %v753
      %818 = vst [vmem:[%s190 + $0xbc] sm:$0xf] %v754
      %819 = vst [vmem:[%s190 + $0xc0] sm:$0xf] %v755
      %820 = vst [vmem:[%s190 + $0xc4] sm:$0xf] %v756
      %821 = vst [vmem:[%s190 + $0xc8] sm:$0xf] %v757
      %822 = vst [vmem:[%s190 + $0xcc] sm:$0xf] %v758
      %823 = vst [vmem:[%s190 + $0xd0] sm:$0xf] %v759
      %824 = vst [vmem:[%s190 + $0xd4] sm:$0xf] %v760
      %825 = vst [vmem:[%s190 + $0xd8] sm:$0xf] %v761
      %826 = vst [vmem:[%s190 + $0xdc] sm:$0xf] %v762
      %827 = vst [vmem:[%s190 + $0xe0] sm:$0xf] %v763
      %828 = vst [vmem:[%s190 + $0xe4] sm:$0xf] %v764
      %829 = vst [vmem:[%s190 + $0xe8] sm:$0xf] %v765
      %830 = vst [vmem:[%s190 + $0xec] sm:$0xf] %v766
      %831 = vst [vmem:[%s190 + $0xf0] sm:$0xf] %v767
      %832 = vst [vmem:[%s190 + $0xf4] sm:$0xf] %v768
      %833 = vst [vmem:[%s190 + $0xf8] sm:$0xf] %v769
      %834 = vst [vmem:[%s190 + $0xfc] sm:$0xf] %v770
      %p835 = scmp.lt.s32.totalorder %s14, 1
      %s836 = scalar_select %p835, %s14, 1
      %s837 = smul.addr %s836, 64
      %s838 = smul.addr %s837, 4
      %s839 = scalar_lea.vmem %s3, %s838
      // Predicated region
      $region33: #{residual_block_forward.9} parent=31 // pred_check
        %p840 = pneg %p105
      $region34: #{residual_block_forward.9} parent=31 // pred_check_branch
        %842 = sbr.rel (%p840) target = $region36
      $region35: #{residual_block_forward.9} parent=31 // pred_region
        _
      $region36: #{residual_block_forward.9} parent=31 // pred_fallthru
        _
    $region32: #{residual_block_forward.9} parent=5 // pred_fallthru
      _
    %p843 = scmp.le.s32.totalorder 2, %s9
    // Predicated region
    $region37: #{residual_block_forward.9} parent=5 // pred_check
      %p844 = pneg %p843
    $region38: #{residual_block_forward.9} parent=5 // pred_check_branch
      %846 = sbr.rel (%p844) target = $region40
    $region39: #{residual_block_forward.9} parent=5 // pred_region
      %s847 = ssub.s32 %s9, 2
      // Predicated region
      $region41: #{residual_block_forward.9} parent=39 // pred_check
        %p848 = pneg %p111
      $region42: #{residual_block_forward.9} parent=39 // pred_check_branch
        %850 = sbr.rel (%p848) target = $region44
      $region43: #{residual_block_forward.9} parent=39 // pred_region
        %p851 = scmp.lt.s32.totalorder %s15, 1
        %s852 = scalar_select %p851, %s15, 1
        %s853 = smul.addr %s852, 64
        %s854 = smul.addr %s853, 4
        %s855 = scalar_lea.vmem %s3, %s854
      $region44: #{residual_block_forward.9} parent=39 // pred_fallthru
        _
    $region40: #{residual_block_forward.9} parent=5 // pred_fallthru
      _
  $region6: #{residual_block_forward.9} parent=0 // loop_footer
    %s13 = sadd.s32 1, %s9
  $region7: #{residual_block_forward.9} parent=0 // loop_footer_branch
    %8 = sbr.rel target = $region3
  $region8: #{residual_block_forward.9} parent=0 // loop_exit
    _

// kernel: residual_block_forward.8
$region0: #{residual_block_forward.8}
  #allocation0 [shape = 'u32[]', space=smem, size = 0x4, offset = 0x4, fixed_abs, tag = 'smem constant byte address 0x4 - core index']
  #allocation1 [shape = 'u32[72,128]{1,0:T(1,128)}', space=vmem, size = 0x9000, scoped, tag = 'internal scratch']
  %s0 = inlined_call_operand.vmem [shape: bf16[2,10,10,10,128], index: 0, kind: input, shape index: {}]
  %s1 = inlined_call_operand.vmem [shape: bf16[3,3,384,128], index: 1, kind: input, shape index: {}]
  %s2 = inlined_call_operand.vmem [shape: bf16[2,8,8,8,128], index: 2, kind: output, shape index: {0}]
  %s3 = inlined_call_operand.vmem [shape: f32[2,2,128], index: 3, kind: output, shape index: {1}]
  %4 = xla_tuple %s2, %s3
  %s5 = sld [smem:[#allocation0]]
  $region49: #{residual_block_forward.8} parent=0
    _
  %s7 = ssub.s32 1, %s5
  %s8 = scalar_select 0, %s7, %s5
  loop: start=0, step=1, limit=4
  $region2: #{residual_block_forward.8} parent=0 // loop_pre_header
    _
  $region3: #{residual_block_forward.8} parent=0 // loop_header
    %s10 = sphi 0, %s14
    %p11 = scmp.ge.s32.totalorder %s10, 4
    %s20 = sphi 0, %s22
    %s23 = sphi 0, %s20
    %s24 = sphi 0, %s23
    %s40 = sphi 0, %s24
    %s44 = sphi 0, %s44
    %s46 = sphi 0, %s44
    %s47 = sphi 0, %s46
    %s61 = sphi 0, %s47
    %s67 = sphi 0, %s69
    %s70 = sphi 0, %s67
    %s71 = sphi 0, %s70
    %s87 = sphi 0, %s71
    %s93 = sphi 0, %s95
    %s96 = sphi 0, %s93
    %s97 = sphi 0, %s96
    %s113 = sphi 0, %s97
  $region4: #{residual_block_forward.8} parent=0 // loop_header_branch
    %13 = sbr.rel (%p11) target = $region8
  $region5: #{residual_block_forward.8} parent=0 // loop_body
    %s15 = ssub.s32 %s10, 1
    %s16 = ssub.s32 %s10, 2
    %s17 = sadd.s32 %s10, 1
    %s18 = ssub.s32 %s10, %s17
    %p19 = scmp.eq.s32.totalorder %s18, 0
    %s21 = sadd.s32 %s20, 1
    %s22 = scalar_select %p19, %s20, %s21
    %p25 = pneg %p19
    %p26 = scmp.eq.s32.totalorder %s10, 1
    %p27 = por %p25, %p26
    %p28 = scmp.ne.s32.totalorder %s20, %s23
    %p29 = scmp.eq.s32.totalorder %s10, 0
    %p30 = por %p28, %p29
    %p31 = scmp.ne.s32.totalorder %s20, %s23
    %p32 = scmp.eq.s32.totalorder %s15, 1
    %p33 = por %p31, %p32
    %p34 = scmp.ne.s32.totalorder %s23, %s24
    %p35 = scmp.eq.s32.totalorder %s15, 0
    %p36 = por %p34, %p35
    %p37 = scmp.ne.s32.totalorder %s23, %s24
    %p38 = scmp.eq.s32.totalorder %s16, 1
    %p39 = por %p37, %p38
    %p41 = scmp.ne.s32.totalorder %s24, %s40
    %p42 = scmp.eq.s32.totalorder %s16, 0
    %p43 = por %p41, %p42
    %s45 = sadd.s32 %s44, 1
    %p48 = scmp.eq.s32.totalorder %s10, 1
    %p49 = scmp.ne.s32.totalorder %s44, %s46
    %p50 = scmp.eq.s32.totalorder %s10, 0
    %p51 = por %p49, %p50
    %p52 = scmp.ne.s32.totalorder %s44, %s46
    %p53 = scmp.eq.s32.totalorder %s15, 1
    %p54 = por %p52, %p53
    %p55 = scmp.ne.s32.totalorder %s46, %s47
    %p56 = scmp.eq.s32.totalorder %s15, 0
    %p57 = por %p55, %p56
    %p58 = scmp.ne.s32.totalorder %s46, %s47
    %p59 = scmp.eq.s32.totalorder %s16, 1
    %p60 = por %p58, %p59
    %p62 = scmp.ne.s32.totalorder %s47, %s61
    %p63 = scmp.eq.s32.totalorder %s16, 0
    %p64 = por %p62, %p63
    %s65 = ssub.s32 %s10, %s17
    %p66 = scmp.eq.s32.totalorder %s65, 0
    %s68 = sadd.s32 %s67, 1
    %s69 = scalar_select %p66, %s67, %s68
    %p72 = pneg %p66
    %p73 = scmp.eq.s32.totalorder %s10, 1
    %p74 = por %p72, %p73
    %p75 = scmp.ne.s32.totalorder %s67, %s70
    %p76 = scmp.eq.s32.totalorder %s10, 0
    %p77 = por %p75, %p76
    %p78 = scmp.ne.s32.totalorder %s67, %s70
    %p79 = scmp.eq.s32.totalorder %s15, 1
    %p80 = por %p78, %p79
    %p81 = scmp.ne.s32.totalorder %s70, %s71
    %p82 = scmp.eq.s32.totalorder %s15, 0
    %p83 = por %p81, %p82
    %p84 = scmp.ne.s32.totalorder %s70, %s71
    %p85 = scmp.eq.s32.totalorder %s16, 1
    %p86 = por %p84, %p85
    %p88 = scmp.ne.s32.totalorder %s71, %s87
    %p89 = scmp.eq.s32.totalorder %s16, 0
    %p90 = por %p88, %p89
    %s91 = ssub.s32 %s10, %s17
    %p92 = scmp.eq.s32.totalorder %s91, 0
    %s94 = sadd.s32 %s93, 1
    %s95 = scalar_select %p92, %s93, %s94
    %p98 = pneg %p92
    %p99 = scmp.eq.s32.totalorder %s10, 1
    %p100 = por %p98, %p99
    %p101 = scmp.ne.s32.totalorder %s93, %s96
    %p102 = scmp.eq.s32.totalorder %s10, 0
    %p103 = por %p101, %p102
    %p104 = scmp.ne.s32.totalorder %s93, %s96
    %p105 = scmp.eq.s32.totalorder %s15, 1
    %p106 = por %p104, %p105
    %p107 = scmp.ne.s32.totalorder %s96, %s97
    %p108 = scmp.eq.s32.totalorder %s15, 0
    %p109 = por %p107, %p108
    %p110 = scmp.ne.s32.totalorder %s96, %s97
    %p111 = scmp.eq.s32.totalorder %s16, 1
    %p112 = por %p110, %p111
    %p114 = scmp.ne.s32.totalorder %s97, %s113
    %p115 = scmp.eq.s32.totalorder %s16, 0
    %p116 = por %p114, %p115
    %p117 = scmp.le.s32.totalorder 1, %s10
    %p118 = scmp.lt.s32.totalorder %s10, 3
    %p119 = pnand %p117, %p118
    %p120 = pneg %p119
    // Predicated region
    $region9: #{residual_block_forward.8} parent=5 // pred_check
      _
    $region10: #{residual_block_forward.8} parent=5 // pred_check_branch
      %122 = sbr.rel (%p119) target = $region12
    $region11: #{residual_block_forward.8} parent=5 // pred_region
      %s123 = ssub.s32 %s10, 1
      // Predicated region
      $region13: #{residual_block_forward.8} parent=11 // pred_check
        %p124 = pneg %p57
      $region14: #{residual_block_forward.8} parent=11 // pred_check_branch
        %126 = sbr.rel (%p124) target = $region16
      $region15: #{residual_block_forward.8} parent=11 // pred_region
        _
      $region16: #{residual_block_forward.8} parent=11 // pred_fallthru
        _
    $region12: #{residual_block_forward.8} parent=5 // pred_fallthru
      _
    %p127 = scmp.lt.s32.totalorder %s10, 2
    // Predicated region
    $region17: #{residual_block_forward.8} parent=5 // pred_check
      %p128 = pneg %p127
    $region18: #{residual_block_forward.8} parent=5 // pred_check_branch
      %130 = sbr.rel (%p128) target = $region20
    $region19: #{residual_block_forward.8} parent=5 // pred_region
      // Predicated region
      $region21: #{residual_block_forward.8} parent=19 // pred_check
        %p131 = pneg %p30
      $region22: #{residual_block_forward.8} parent=19 // pred_check_branch
        %133 = sbr.rel (%p131) target = $region24
      $region23: #{residual_block_forward.8} parent=19 // pred_region
        %p134 = scmp.lt.s32.totalorder %s10, 1
        %s135 = scalar_select %p134, %s10, 1
        %s136 = smul.addr %s135, 200
        %s137 = smul.addr %s136, 4
        %s138 = scalar_lea.vmem %s0, %s137
      $region24: #{residual_block_forward.8} parent=19 // pred_fallthru
        _
    $region20: #{residual_block_forward.8} parent=5 // pred_fallthru
      _
    %p139 = scmp.le.s32.totalorder 1, %s10
    %p140 = scmp.lt.s32.totalorder %s10, 3
    %p141 = pnand %p139, %p140
    %p142 = pneg %p141
    // Predicated region
    $region25: #{residual_block_forward.8} parent=5 // pred_check
      _
    $region26: #{residual_block_forward.8} parent=5 // pred_check_branch
      %144 = sbr.rel (%p141) target = $region28
    $region27: #{residual_block_forward.8} parent=5 // pred_region
      %s145 = ssub.s32 %s10, 1
      %p146 = scmp.lt.s32.totalorder %s15, 1
      %s147 = scalar_select %p146, %s15, 1
      %s148 = smul.addr %s147, 200
      %s149 = smul.addr %s148, 4
      %s150 = scalar_lea.vmem %s0, %s149
      %p151 = pneg %p36
      %p152 = pneg %p33
      %p153 = pneg %p57
      %p154 = pneg %p54
      %p155 = pneg %p83
      %p156 = pneg %p80
      %p157 = scmp.lt.s32.totalorder %s15, 1
      %s158 = scalar_select %p157, %s15, 1
      %s159 = smul.addr %s158, 64
      %s160 = smul.addr %s159, 4
      %s161 = scalar_lea.vmem %s2, %s160
      %p162 = pneg %p109
      %p163 = pneg %p106
      %p164 = scmp.lt.s32.totalorder %s15, 1
      %s165 = scalar_select %p164, %s15, 1
      %s166 = smul.addr %s165, 2
      %s167 = scalar_lea.vmem %s3, %s166
      %p168 = scmp.lt.s32.totalorder %s15, 1
      %s169 = scalar_select %p168, %s15, 1
      %s170 = smul.addr %s169, 200
      %s171 = smul.addr %s170, 4
      %s172 = scalar_lea.vmem %s0, %s171
      %p173 = scmp.lt.s32.totalorder %s15, 1
      %s174 = scalar_select %p173, %s15, 1
      %s175 = smul.addr %s174, 64
      %s176 = smul.addr %s175, 4
      %s177 = scalar_lea.vmem %s2, %s176
      %p178 = scmp.lt.s32.totalorder %s15, 1
      %s179 = scalar_select %p178, %s15, 1
      %s180 = smul.addr %s179, 2
      %s181 = scalar_lea.vmem %s3, %s180
      %v182 = vld [vmem:[%s172] sm:$0xf]
      %v183 = vld [vmem:[%s172 + $0x4] sm:$0x1]
      %v184 = vld [vmem:[%s172 + $0x8] sm:$0xf]
      %v185 = vld [vmem:[%s172 + $0xc] sm:$0x1]
      %v186 = vld [vmem:[%s172 + $0x10] sm:$0xf]
      %v187 = vld [vmem:[%s172 + $0x14] sm:$0x1]
      %v188 = vld [vmem:[%s172 + $0x18] sm:$0xf]
      %v189 = vld [vmem:[%s172 + $0x1c] sm:$0x1]
      %v190 = vld [vmem:[%s172 + $0x20] sm:$0xf]
      %v191 = vld [vmem:[%s172 + $0x24] sm:$0x1]
      %v192 = vld [vmem:[%s172 + $0x28] sm:$0xf]
      %v193 = vld [vmem:[%s172 + $0x2c] sm:$0x1]
      %v194 = vld [vmem:[%s172 + $0x30] sm:$0xf]
      %v195 = vld [vmem:[%s172 + $0x34] sm:$0x1]
      %v196 = vld [vmem:[%s172 + $0x38] sm:$0xf]
      %v197 = vld [vmem:[%s172 + $0x3c] sm:$0x1]
      %v198 = vld [vmem:[%s172 + $0x40] sm:$0xf]
      %v199 = vld [vmem:[%s172 + $0x44] sm:$0x1]
      %v200 = vld [vmem:[%s172 + $0x48] sm:$0xf]
      %v201 = vld [vmem:[%s172 + $0x4c] sm:$0x1]
      %v202 = vld [vmem:[%s172 + $0x50] sm:$0xf]
      %v203 = vld [vmem:[%s172 + $0x54] sm:$0x1]
      %v204 = vld [vmem:[%s172 + $0x58] sm:$0xf]
      %v205 = vld [vmem:[%s172 + $0x5c] sm:$0x1]
      %v206 = vld [vmem:[%s172 + $0x60] sm:$0xf]
      %v207 = vld [vmem:[%s172 + $0x64] sm:$0x1]
      %v208 = vld [vmem:[%s172 + $0x68] sm:$0xf]
      %v209 = vld [vmem:[%s172 + $0x6c] sm:$0x1]
      %v210 = vld [vmem:[%s172 + $0x70] sm:$0xf]
      %v211 = vld [vmem:[%s172 + $0x74] sm:$0x1]
      %v212 = vld [vmem:[%s172 + $0x78] sm:$0xf]
      %v213 = vld [vmem:[%s172 + $0x7c] sm:$0x1]
      %v214 = vld [vmem:[%s172 + $0x80] sm:$0xf]
      %v215 = vld [vmem:[%s172 + $0x84] sm:$0x1]
      %v216 = vld [vmem:[%s172 + $0x88] sm:$0xf]
      %v217 = vld [vmem:[%s172 + $0x8c] sm:$0x1]
      %v218 = vld [vmem:[%s172 + $0x90] sm:$0xf]
      %v219 = vld [vmem:[%s172 + $0x94] sm:$0x1]
      %v220 = vld [vmem:[%s172 + $0x98] sm:$0xf]
      %v221 = vld [vmem:[%s172 + $0x9c] sm:$0x1]
      %v222 = vld [vmem:[%s172 + $0xa0] sm:$0xf]
      %v223 = vld [vmem:[%s172 + $0xa4] sm:$0x1]
      %v224 = vld [vmem:[%s172 + $0xa8] sm:$0xf]
      %v225 = vld [vmem:[%s172 + $0xac] sm:$0x1]
      %v226 = vld [vmem:[%s172 + $0xb0] sm:$0xf]
      %v227 = vld [vmem:[%s172 + $0xb4] sm:$0x1]
      %v228 = vld [vmem:[%s172 + $0xb8] sm:$0xf]
      %v229 = vld [vmem:[%s172 + $0xbc] sm:$0x1]
      %v230 = vld [vmem:[%s172 + $0xc0] sm:$0xf]
      %v231 = vld [vmem:[%s172 + $0xc4] sm:$0x1]
      %v232 = vld [vmem:[%s172 + $0xc8] sm:$0xf]
      %v233 = vld [vmem:[%s172 + $0xcc] sm:$0x1]
      %v234 = vld [vmem:[%s172 + $0xd0] sm:$0xf]
      %v235 = vld [vmem:[%s172 + $0xd4] sm:$0x1]
      %v236 = vld [vmem:[%s172 + $0xd8] sm:$0xf]
      %v237 = vld [vmem:[%s172 + $0xdc] sm:$0x1]
      %v238 = vld [vmem:[%s172 + $0xe0] sm:$0xf]
      %v239 = vld [vmem:[%s172 + $0xe4] sm:$0x1]
      %v240 = vld [vmem:[%s172 + $0xe8] sm:$0xf]
      %v241 = vld [vmem:[%s172 + $0xec] sm:$0x1]
      %v242 = vld [vmem:[%s172 + $0xf0] sm:$0xf]
      %v243 = vld [vmem:[%s172 + $0xf4] sm:$0x1]
      %v244 = vld [vmem:[%s172 + $0xf8] sm:$0xf]
      %v245 = vld [vmem:[%s172 + $0xfc] sm:$0x1]
      %v246 = vld [vmem:[%s172 + $0x100] sm:$0xf]
      %v247 = vld [vmem:[%s172 + $0x104] sm:$0x1]
      %v248 = vld [vmem:[%s172 + $0x108] sm:$0xf]
      %v249 = vld [vmem:[%s172 + $0x10c] sm:$0x1]
      %v250 = vld [vmem:[%s172 + $0x110] sm:$0xf]
      %v251 = vld [vmem:[%s172 + $0x114] sm:$0x1]
      %v252 = vld [vmem:[%s172 + $0x118] sm:$0xf]
      %v253 = vld [vmem:[%s172 + $0x11c] sm:$0x1]
      %v254 = vld [vmem:[%s172 + $0x120] sm:$0xf]
      %v255 = vld [vmem:[%s172 + $0x124] sm:$0x1]
      %v256 = vld [vmem:[%s172 + $0x128] sm:$0xf]
      %v257 = vld [vmem:[%s172 + $0x12c] sm:$0x1]
      %v258 = vld [vmem:[%s172 + $0x130] sm:$0xf]
      %v259 = vld [vmem:[%s172 + $0x134] sm:$0x1]
      %v260 = vld [vmem:[%s172 + $0x138] sm:$0xf]
      %v261 = vld [vmem:[%s172 + $0x13c] sm:$0x1]
      %v262 = vld [vmem:[%s172 + $0x140] sm:$0xf]
      %v263 = vld [vmem:[%s172 + $0x144] sm:$0x1]
      %v264 = vld [vmem:[%s172 + $0x148] sm:$0xf]
      %v265 = vld [vmem:[%s172 + $0x14c] sm:$0x1]
      %v266 = vld [vmem:[%s172 + $0x150] sm:$0xf]
      %v267 = vld [vmem:[%s172 + $0x154] sm:$0x1]
      %v268 = vld [vmem:[%s172 + $0x158] sm:$0xf]
      %v269 = vld [vmem:[%s172 + $0x15c] sm:$0x1]
      %v270 = vld [vmem:[%s172 + $0x160] sm:$0xf]
      %v271 = vld [vmem:[%s172 + $0x164] sm:$0x1]
      %v272 = vld [vmem:[%s172 + $0x168] sm:$0xf]
      %v273 = vld [vmem:[%s172 + $0x16c] sm:$0x1]
      %v274 = vld [vmem:[%s172 + $0x170] sm:$0xf]
      %v275 = vld [vmem:[%s172 + $0x174] sm:$0x1]
      %v276 = vld [vmem:[%s172 + $0x178] sm:$0xf]
      %v277 = vld [vmem:[%s172 + $0x17c] sm:$0x1]
      %v278 = vld [vmem:[%s172 + $0x180] sm:$0xf]
      %v279 = vld [vmem:[%s172 + $0x184] sm:$0x1]
      %v280 = vld [vmem:[%s172 + $0x188] sm:$0xf]
      %v281 = vld [vmem:[%s172 + $0x18c] sm:$0x1]
      %v282 = vld [vmem:[%s172 + $0x190] sm:$0xf]
      %v283 = vld [vmem:[%s172 + $0x194] sm:$0x1]
      %v284 = vld [vmem:[%s172 + $0x198] sm:$0xf]
      %v285 = vld [vmem:[%s172 + $0x19c] sm:$0x1]
      %v286 = vld [vmem:[%s172 + $0x1a0] sm:$0xf]
      %v287 = vld [vmem:[%s172 + $0x1a4] sm:$0x1]
      %v288 = vld [vmem:[%s172 + $0x1a8] sm:$0xf]
      %v289 = vld [vmem:[%s172 + $0x1ac] sm:$0x1]
      %v290 = vld [vmem:[%s172 + $0x1b0] sm:$0xf]
      %v291 = vld [vmem:[%s172 + $0x1b4] sm:$0x1]
      %v292 = vld [vmem:[%s172 + $0x1b8] sm:$0xf]
      %v293 = vld [vmem:[%s172 + $0x1bc] sm:$0x1]
      %v294 = vld [vmem:[%s172 + $0x1c0] sm:$0xf]
      %v295 = vld [vmem:[%s172 + $0x1c4] sm:$0x1]
      %v296 = vld [vmem:[%s172 + $0x1c8] sm:$0xf]
      %v297 = vld [vmem:[%s172 + $0x1cc] sm:$0x1]
      %v298 = vld [vmem:[%s172 + $0x1d0] sm:$0xf]
      %v299 = vld [vmem:[%s172 + $0x1d4] sm:$0x1]
      %v300 = vld [vmem:[%s172 + $0x1d8] sm:$0xf]
      %v301 = vld [vmem:[%s172 + $0x1dc] sm:$0x1]
      %v302 = vld [vmem:[%s172 + $0x1e0] sm:$0xf]
      %v303 = vld [vmem:[%s172 + $0x1e4] sm:$0x1]
      %v304 = vld [vmem:[%s172 + $0x1e8] sm:$0xf]
      %v305 = vld [vmem:[%s172 + $0x1ec] sm:$0x1]
      %v306 = vld [vmem:[%s172 + $0x1f0] sm:$0xf]
      %v307 = vld [vmem:[%s172 + $0x1f4] sm:$0x1]
      %v308 = vld [vmem:[%s172 + $0x1f8] sm:$0xf]
      %v309 = vld [vmem:[%s172 + $0x1fc] sm:$0x1]
      %v310 = vld [vmem:[%s172 + $0x200] sm:$0xf]
      %v311 = vld [vmem:[%s172 + $0x204] sm:$0x1]
      %v312 = vld [vmem:[%s172 + $0x208] sm:$0xf]
      %v313 = vld [vmem:[%s172 + $0x20c] sm:$0x1]
      %v314 = vld [vmem:[%s172 + $0x210] sm:$0xf]
      %v315 = vld [vmem:[%s172 + $0x214] sm:$0x1]
      %v316 = vld [vmem:[%s172 + $0x218] sm:$0xf]
      %v317 = vld [vmem:[%s172 + $0x21c] sm:$0x1]
      %v318 = vld [vmem:[%s172 + $0x220] sm:$0xf]
      %v319 = vld [vmem:[%s172 + $0x224] sm:$0x1]
      %v320 = vld [vmem:[%s172 + $0x228] sm:$0xf]
      %v321 = vld [vmem:[%s172 + $0x22c] sm:$0x1]
      %v322 = vld [vmem:[%s172 + $0x230] sm:$0xf]
      %v323 = vld [vmem:[%s172 + $0x234] sm:$0x1]
      %v324 = vld [vmem:[%s172 + $0x238] sm:$0xf]
      %v325 = vld [vmem:[%s172 + $0x23c] sm:$0x1]
      %v326 = vld [vmem:[%s172 + $0x240] sm:$0xf]
      %v327 = vld [vmem:[%s172 + $0x244] sm:$0x1]
      %v328 = vld [vmem:[%s172 + $0x248] sm:$0xf]
      %v329 = vld [vmem:[%s172 + $0x24c] sm:$0x1]
      %v330 = vld [vmem:[%s172 + $0x250] sm:$0xf]
      %v331 = vld [vmem:[%s172 + $0x254] sm:$0x1]
      %v332 = vld [vmem:[%s172 + $0x258] sm:$0xf]
      %v333 = vld [vmem:[%s172 + $0x25c] sm:$0x1]
      %v334 = vld [vmem:[%s172 + $0x260] sm:$0xf]
      %v335 = vld [vmem:[%s172 + $0x264] sm:$0x1]
      %v336 = vld [vmem:[%s172 + $0x268] sm:$0xf]
      %v337 = vld [vmem:[%s172 + $0x26c] sm:$0x1]
      %v338 = vld [vmem:[%s172 + $0x270] sm:$0xf]
      %v339 = vld [vmem:[%s172 + $0x274] sm:$0x1]
      %v340 = vld [vmem:[%s172 + $0x278] sm:$0xf]
      %v341 = vld [vmem:[%s172 + $0x27c] sm:$0x1]
      %v342 = vld [vmem:[%s172 + $0x280] sm:$0xf]
      %v343 = vld [vmem:[%s172 + $0x284] sm:$0x1]
      %v344 = vld [vmem:[%s172 + $0x288] sm:$0xf]
      %v345 = vld [vmem:[%s172 + $0x28c] sm:$0x1]
      %v346 = vld [vmem:[%s172 + $0x290] sm:$0xf]
      %v347 = vld [vmem:[%s172 + $0x294] sm:$0x1]
      %v348 = vld [vmem:[%s172 + $0x298] sm:$0xf]
      %v349 = vld [vmem:[%s172 + $0x29c] sm:$0x1]
      %v350 = vld [vmem:[%s172 + $0x2a0] sm:$0xf]
      %v351 = vld [vmem:[%s172 + $0x2a4] sm:$0x1]
      %v352 = vld [vmem:[%s172 + $0x2a8] sm:$0xf]
      %v353 = vld [vmem:[%s172 + $0x2ac] sm:$0x1]
      %v354 = vld [vmem:[%s172 + $0x2b0] sm:$0xf]
      %v355 = vld [vmem:[%s172 + $0x2b4] sm:$0x1]
      %v356 = vld [vmem:[%s172 + $0x2b8] sm:$0xf]
      %v357 = vld [vmem:[%s172 + $0x2bc] sm:$0x1]
      %v358 = vld [vmem:[%s172 + $0x2c0] sm:$0xf]
      %v359 = vld [vmem:[%s172 + $0x2c4] sm:$0x1]
      %v360 = vld [vmem:[%s172 + $0x2c8] sm:$0xf]
      %v361 = vld [vmem:[%s172 + $0x2cc] sm:$0x1]
      %v362 = vld [vmem:[%s172 + $0x2d0] sm:$0xf]
      %v363 = vld [vmem:[%s172 + $0x2d4] sm:$0x1]
      %v364 = vld [vmem:[%s172 + $0x2d8] sm:$0xf]
      %v365 = vld [vmem:[%s172 + $0x2dc] sm:$0x1]
      %v366 = vld [vmem:[%s172 + $0x2e0] sm:$0xf]
      %v367 = vld [vmem:[%s172 + $0x2e4] sm:$0x1]
      %v368 = vld [vmem:[%s172 + $0x2e8] sm:$0xf]
      %v369 = vld [vmem:[%s172 + $0x2ec] sm:$0x1]
      %v370 = vld [vmem:[%s172 + $0x2f0] sm:$0xf]
      %v371 = vld [vmem:[%s172 + $0x2f4] sm:$0x1]
      %v372 = vld [vmem:[%s172 + $0x2f8] sm:$0xf]
      %v373 = vld [vmem:[%s172 + $0x2fc] sm:$0x1]
      %v374 = vld [vmem:[%s172 + $0x300] sm:$0xf]
      %v375 = vld [vmem:[%s172 + $0x304] sm:$0x1]
      %v376 = vld [vmem:[%s172 + $0x308] sm:$0xf]
      %v377 = vld [vmem:[%s172 + $0x30c] sm:$0x1]
      %v378 = vld [vmem:[%s172 + $0x310] sm:$0xf]
      %v379 = vld [vmem:[%s172 + $0x314] sm:$0x1]
      %v380 = vld [vmem:[%s172 + $0x318] sm:$0xf]
      %v381 = vld [vmem:[%s172 + $0x31c] sm:$0x1]
      %v582 = vunpack.c.l.b16 %v182
      %v583 = vunpack.c.l.b16 %v183
      %v584 = vunpack.c.l.b16 %v184
      %v585 = vunpack.c.l.b16 %v185
      %v586 = vunpack.c.l.b16 %v186
      %v587 = vunpack.c.l.b16 %v187
      %v588 = vunpack.c.l.b16 %v188
      %v589 = vunpack.c.l.b16 %v189
      %v590 = vunpack.c.l.b16 %v190
      %v591 = vunpack.c.l.b16 %v191
      %v592 = vunpack.c.l.b16 %v192
      %v593 = vunpack.c.l.b16 %v193
      %v594 = vunpack.c.l.b16 %v194
      %v595 = vunpack.c.l.b16 %v195
      %v596 = vunpack.c.l.b16 %v196
      %v597 = vunpack.c.l.b16 %v197
      %v598 = vunpack.c.l.b16 %v198
      %v599 = vunpack.c.l.b16 %v199
      %v600 = vunpack.c.l.b16 %v200
      %v601 = vunpack.c.l.b16 %v201
      %v602 = vunpack.c.l.b16 %v202
      %v603 = vunpack.c.l.b16 %v203
      %v604 = vunpack.c.l.b16 %v204
      %v605 = vunpack.c.l.b16 %v205
      %v606 = vunpack.c.l.b16 %v206
      %v607 = vunpack.c.l.b16 %v207
      %v608 = vunpack.c.l.b16 %v208
      %v609 = vunpack.c.l.b16 %v209
      %v610 = vunpack.c.l.b16 %v210
      %v611 = vunpack.c.l.b16 %v211
      %v612 = vunpack.c.l.b16 %v212
      %v613 = vunpack.c.l.b16 %v213
      %v614 = vunpack.c.l.b16 %v214
      %v615 = vunpack.c.l.b16 %v215
      %v616 = vunpack.c.l.b16 %v216
      %v617 = vunpack.c.l.b16 %v217
      %v618 = vunpack.c.l.b16 %v218
      %v619 = vunpack.c.l.b16 %v219
      %v620 = vunpack.c.l.b16 %v220
      %v621 = vunpack.c.l.b16 %v221
      %v622 = vunpack.c.l.b16 %v222
      %v623 = vunpack.c.l.b16 %v223
      %v624 = vunpack.c.l.b16 %v224
      %v625 = vunpack.c.l.b16 %v225
      %v626 = vunpack.c.l.b16 %v226
      %v627 = vunpack.c.l.b16 %v227
      %v628 = vunpack.c.l.b16 %v228
      %v629 = vunpack.c.l.b16 %v229
      %v630 = vunpack.c.l.b16 %v230
      %v631 = vunpack.c.l.b16 %v231
      %v632 = vunpack.c.l.b16 %v232
      %v633 = vunpack.c.l.b16 %v233
      %v634 = vunpack.c.l.b16 %v234
      %v635 = vunpack.c.l.b16 %v235
      %v636 = vunpack.c.l.b16 %v236
      %v637 = vunpack.c.l.b16 %v237
      %v638 = vunpack.c.l.b16 %v238
      %v639 = vunpack.c.l.b16 %v239
      %v640 = vunpack.c.l.b16 %v240
      %v641 = vunpack.c.l.b16 %v241
      %v642 = vunpack.c.l.b16 %v242
      %v643 = vunpack.c.l.b16 %v243
      %v644 = vunpack.c.l.b16 %v244
      %v645 = vunpack.c.l.b16 %v245
      %v646 = vunpack.c.l.b16 %v246
      %v647 = vunpack.c.l.b16 %v247
      %v648 = vunpack.c.l.b16 %v248
      %v649 = vunpack.c.l.b16 %v249
      %v650 = vunpack.c.l.b16 %v250
      %v651 = vunpack.c.l.b16 %v251
      %v652 = vunpack.c.l.b16 %v252
      %v653 = vunpack.c.l.b16 %v253
      %v654 = vunpack.c.l.b16 %v254
      %v655 = vunpack.c.l.b16 %v255
      %v656 = vunpack.c.l.b16 %v256
      %v657 = vunpack.c.l.b16 %v257
      %v658 = vunpack.c.l.b16 %v258
      %v659 = vunpack.c.l.b16 %v259
      %v660 = vunpack.c.l.b16 %v260
      %v661 = vunpack.c.l.b16 %v261
      %v662 = vunpack.c.l.b16 %v262
      %v663 = vunpack.c.l.b16 %v263
      %v664 = vunpack.c.l.b16 %v264
      %v665 = vunpack.c.l.b16 %v265
      %v666 = vunpack.c.l.b16 %v266
      %v667 = vunpack.c.l.b16 %v267
      %v668 = vunpack.c.l.b16 %v268
      %v669 = vunpack.c.l.b16 %v269
      %v670 = vunpack.c.l.b16 %v270
      %v671 = vunpack.c.l.b16 %v271
      %v672 = vunpack.c.l.b16 %v272
      %v673 = vunpack.c.l.b16 %v273
      %v674 = vunpack.c.l.b16 %v274
      %v675 = vunpack.c.l.b16 %v275
      %v676 = vunpack.c.l.b16 %v276
      %v677 = vunpack.c.l.b16 %v277
      %v678 = vunpack.c.l.b16 %v278
      %v679 = vunpack.c.l.b16 %v279
      %v680 = vunpack.c.l.b16 %v280
      %v681 = vunpack.c.l.b16 %v281
      %v682 = vunpack.c.l.b16 %v282
      %v683 = vunpack.c.l.b16 %v283
      %v684 = vunpack.c.l.b16 %v284
      %v685 = vunpack.c.l.b16 %v285
      %v686 = vunpack.c.l.b16 %v286
      %v687 = vunpack.c.l.b16 %v287
      %v688 = vunpack.c.l.b16 %v288
      %v689 = vunpack.c.l.b16 %v289
      %v690 = vunpack.c.l.b16 %v290
      %v691 = vunpack.c.l.b16 %v291
      %v692 = vunpack.c.l.b16 %v292
      %v693 = vunpack.c.l.b16 %v293
      %v694 = vunpack.c.l.b16 %v294
      %v695 = vunpack.c.l.b16 %v295
      %v696 = vunpack.c.l.b16 %v296
      %v697 = vunpack.c.l.b16 %v297
      %v698 = vunpack.c.l.b16 %v298
      %v699 = vunpack.c.l.b16 %v299
      %v700 = vunpack.c.l.b16 %v300
      %v701 = vunpack.c.l.b16 %v301
      %v702 = vunpack.c.l.b16 %v302
      %v703 = vunpack.c.l.b16 %v303
      %v704 = vunpack.c.l.b16 %v304
      %v705 = vunpack.c.l.b16 %v305
      %v706 = vunpack.c.l.b16 %v306
      %v707 = vunpack.c.l.b16 %v307
      %v708 = vunpack.c.l.b16 %v308
      %v709 = vunpack.c.l.b16 %v309
      %v710 = vunpack.c.l.b16 %v310
      %v711 = vunpack.c.l.b16 %v311
      %v712 = vunpack.c.l.b16 %v312
      %v713 = vunpack.c.l.b16 %v313
      %v714 = vunpack.c.l.b16 %v314
      %v715 = vunpack.c.l.b16 %v315
      %v716 = vunpack.c.l.b16 %v316
      %v717 = vunpack.c.l.b16 %v317
      %v718 = vunpack.c.l.b16 %v318
      %v719 = vunpack.c.l.b16 %v319
      %v720 = vunpack.c.l.b16 %v320
      %v721 = vunpack.c.l.b16 %v321
      %v722 = vunpack.c.l.b16 %v322
      %v723 = vunpack.c.l.b16 %v323
      %v724 = vunpack.c.l.b16 %v324
      %v725 = vunpack.c.l.b16 %v325
      %v726 = vunpack.c.l.b16 %v326
      %v727 = vunpack.c.l.b16 %v327
      %v728 = vunpack.c.l.b16 %v328
      %v729 = vunpack.c.l.b16 %v329
      %v730 = vunpack.c.l.b16 %v330
      %v731 = vunpack.c.l.b16 %v331
      %v732 = vunpack.c.l.b16 %v332
      %v733 = vunpack.c.l.b16 %v333
      %v734 = vunpack.c.l.b16 %v334
      %v735 = vunpack.c.l.b16 %v335
      %v736 = vunpack.c.l.b16 %v336
      %v737 = vunpack.c.l.b16 %v337
      %v738 = vunpack.c.l.b16 %v338
      %v739 = vunpack.c.l.b16 %v339
      %v740 = vunpack.c.l.b16 %v340
      %v741 = vunpack.c.l.b16 %v341
      %v742 = vunpack.c.l.b16 %v342
      %v743 = vunpack.c.l.b16 %v343
      %v744 = vunpack.c.l.b16 %v344
      %v745 = vunpack.c.l.b16 %v345
      %v746 = vunpack.c.l.b16 %v346
      %v747 = vunpack.c.l.b16 %v347
      %v748 = vunpack.c.l.b16 %v348
      %v749 = vunpack.c.l.b16 %v349
      %v750 = vunpack.c.l.b16 %v350
      %v751 = vunpack.c.l.b16 %v351
      %v752 = vunpack.c.l.b16 %v352
      %v753 = vunpack.c.l.b16 %v353
      %v754 = vunpack.c.l.b16 %v354
      %v755 = vunpack.c.l.b16 %v355
      %v756 = vunpack.c.l.b16 %v356
      %v757 = vunpack.c.l.b16 %v357
      %v758 = vunpack.c.l.b16 %v358
      %v759 = vunpack.c.l.b16 %v359
      %v760 = vunpack.c.l.b16 %v360
      %v761 = vunpack.c.l.b16 %v361
      %v762 = vunpack.c.l.b16 %v362
      %v763 = vunpack.c.l.b16 %v363
      %v764 = vunpack.c.l.b16 %v364
      %v765 = vunpack.c.l.b16 %v365
      %v766 = vunpack.c.l.b16 %v366
      %v767 = vunpack.c.l.b16 %v367
      %v768 = vunpack.c.l.b16 %v368
      %v769 = vunpack.c.l.b16 %v369
      %v770 = vunpack.c.l.b16 %v370
      %v771 = vunpack.c.l.b16 %v371
      %v772 = vunpack.c.l.b16 %v372
      %v773 = vunpack.c.l.b16 %v373
      %v774 = vunpack.c.l.b16 %v374
      %v775 = vunpack.c.l.b16 %v375
      %v776 = vunpack.c.l.b16 %v376
      %v777 = vunpack.c.l.b16 %v377
      %v778 = vunpack.c.l.b16 %v378
      %v779 = vunpack.c.l.b16 %v379
      %v780 = vunpack.c.l.b16 %v380
      %v781 = vunpack.c.l.b16 %v381
      %v782 = vpack.c.b16 %v583, %v582
      %v783 = vpack.c.b16 %v585, %v584
      %v784 = vpack.c.b16 %v587, %v586
      %v785 = vpack.c.b16 %v589, %v588
      %v786 = vpack.c.b16 %v591, %v590
      %v787 = vpack.c.b16 %v593, %v592
      %v788 = vpack.c.b16 %v595, %v594
      %v789 = vpack.c.b16 %v597, %v596
      %v790 = vpack.c.b16 %v599, %v598
      %v791 = vpack.c.b16 %v601, %v600
      %v792 = vpack.c.b16 %v603, %v602
      %v793 = vpack.c.b16 %v605, %v604
      %v794 = vpack.c.b16 %v607, %v606
      %v795 = vpack.c.b16 %v609, %v608
      %v796 = vpack.c.b16 %v611, %v610
      %v797 = vpack.c.b16 %v613, %v612
      %v798 = vpack.c.b16 %v615, %v614
      %v799 = vpack.c.b16 %v617, %v616
      %v800 = vpack.c.b16 %v619, %v618
      %v801 = vpack.c.b16 %v621, %v620
      %v802 = vpack.c.b16 %v623, %v622
      %v803 = vpack.c.b16 %v625, %v624
      %v804 = vpack.c.b16 %v627, %v626
      %v805 = vpack.c.b16 %v629, %v628
      %v806 = vpack.c.b16 %v631, %v630
      %v807 = vpack.c.b16 %v633, %v632
      %v808 = vpack.c.b16 %v635, %v634
      %v809 = vpack.c.b16 %v637, %v636
      %v810 = vpack.c.b16 %v639, %v638
      %v811 = vpack.c.b16 %v641, %v640
      %v812 = vpack.c.b16 %v643, %v642
      %v813 = vpack.c.b16 %v645, %v644
      %v814 = vpack.c.b16 %v647, %v646
      %v815 = vpack.c.b16 %v649, %v648
      %v816 = vpack.c.b16 %v651, %v650
      %v817 = vpack.c.b16 %v653, %v652
      %v818 = vpack.c.b16 %v655, %v654
      %v819 = vpack.c.b16 %v657, %v656
      %v820 = vpack.c.b16 %v659, %v658
      %v821 = vpack.c.b16 %v661, %v660
      %v822 = vpack.c.b16 %v663, %v662
      %v823 = vpack.c.b16 %v665, %v664
      %v824 = vpack.c.b16 %v667, %v666
      %v825 = vpack.c.b16 %v669, %v668
      %v826 = vpack.c.b16 %v671, %v670
      %v827 = vpack.c.b16 %v673, %v672
      %v828 = vpack.c.b16 %v675, %v674
      %v829 = vpack.c.b16 %v677, %v676
      %v830 = vpack.c.b16 %v679, %v678
      %v831 = vpack.c.b16 %v681, %v680
      %v832 = vpack.c.b16 %v683, %v682
      %v833 = vpack.c.b16 %v685, %v684
      %v834 = vpack.c.b16 %v687, %v686
      %v835 = vpack.c.b16 %v689, %v688
      %v836 = vpack.c.b16 %v691, %v690
      %v837 = vpack.c.b16 %v693, %v692
      %v838 = vpack.c.b16 %v695, %v694
      %v839 = vpack.c.b16 %v697, %v696
      %v840 = vpack.c.b16 %v699, %v698
      %v841 = vpack.c.b16 %v701, %v700
      %v842 = vpack.c.b16 %v703, %v702
      %v843 = vpack.c.b16 %v705, %v704
      %v844 = vpack.c.b16 %v707, %v706
      %v845 = vpack.c.b16 %v709, %v708
      %v846 = vpack.c.b16 %v711, %v710
      %v847 = vpack.c.b16 %v713, %v712
      %v848 = vpack.c.b16 %v715, %v714
      %v849 = vpack.c.b16 %v717, %v716
      %v850 = vpack.c.b16 %v719, %v718
      %v851 = vpack.c.b16 %v721, %v720
      %v852 = vpack.c.b16 %v723, %v722
      %v853 = vpack.c.b16 %v725, %v724
      %v854 = vpack.c.b16 %v727, %v726
      %v855 = vpack.c.b16 %v729, %v728
      %v856 = vpack.c.b16 %v731, %v730
      %v857 = vpack.c.b16 %v733, %v732
      %v858 = vpack.c.b16 %v735, %v734
      %v859 = vpack.c.b16 %v737, %v736
      %v860 = vpack.c.b16 %v739, %v738
      %v861 = vpack.c.b16 %v741, %v740
      %v862 = vpack.c.b16 %v743, %v742
      %v863 = vpack.c.b16 %v745, %v744
      %v864 = vpack.c.b16 %v747, %v746
      %v865 = vpack.c.b16 %v749, %v748
      %v866 = vpack.c.b16 %v751, %v750
      %v867 = vpack.c.b16 %v753, %v752
      %v868 = vpack.c.b16 %v755, %v754
      %v869 = vpack.c.b16 %v757, %v756
      %v870 = vpack.c.b16 %v759, %v758
      %v871 = vpack.c.b16 %v761, %v760
      %v872 = vpack.c.b16 %v763, %v762
      %v873 = vpack.c.b16 %v765, %v764
      %v874 = vpack.c.b16 %v767, %v766
      %v875 = vpack.c.b16 %v769, %v768
      %v876 = vpack.c.b16 %v771, %v770
      %v877 = vpack.c.b16 %v773, %v772
      %v878 = vpack.c.b16 %v775, %v774
      %v879 = vpack.c.b16 %v777, %v776
      %v880 = vpack.c.b16 %v779, %v778
      %v881 = vpack.c.b16 %v781, %v780
      %v883 = vshrl.u32 %v782, 16
      %v885 = vshll.u32 %v782, 16
      %v887 = vrot.slane %v885, 1
      %v888 = vor.u32 %v883, %v887
      %v890 = vshrl.u32 %v783, 16
      %v892 = vshll.u32 %v783, 16
      %v894 = vrot.slane %v892, 1
      %v895 = vor.u32 %v890, %v894
      %v897 = vshrl.u32 %v784, 16
      %v899 = vshll.u32 %v784, 16
      %v901 = vrot.slane %v899, 1
      %v902 = vor.u32 %v897, %v901
      %v904 = vshrl.u32 %v785, 16
      %v906 = vshll.u32 %v785, 16
      %v908 = vrot.slane %v906, 1
      %v909 = vor.u32 %v904, %v908
      %v911 = vshrl.u32 %v786, 16
      %v913 = vshll.u32 %v786, 16
      %v915 = vrot.slane %v913, 1
      %v916 = vor.u32 %v911, %v915
      %v918 = vshrl.u32 %v787, 16
      %v920 = vshll.u32 %v787, 16
      %v922 = vrot.slane %v920, 1
      %v923 = vor.u32 %v918, %v922
      %v925 = vshrl.u32 %v788, 16
      %v927 = vshll.u32 %v788, 16
      %v929 = vrot.slane %v927, 1
      %v930 = vor.u32 %v925, %v929
      %v932 = vshrl.u32 %v789, 16
      %v934 = vshll.u32 %v789, 16
      %v936 = vrot.slane %v934, 1
      %v937 = vor.u32 %v932, %v936
      %v939 = vshrl.u32 %v790, 16
      %v941 = vshll.u32 %v790, 16
      %v943 = vrot.slane %v941, 1
      %v944 = vor.u32 %v939, %v943
      %v946 = vshrl.u32 %v791, 16
      %v948 = vshll.u32 %v791, 16
      %v950 = vrot.slane %v948, 1
      %v951 = vor.u32 %v946, %v950
      %v953 = vshrl.u32 %v792, 16
      %v955 = vshll.u32 %v792, 16
      %v957 = vrot.slane %v955, 1
      %v958 = vor.u32 %v953, %v957
      %v960 = vshrl.u32 %v793, 16
      %v962 = vshll.u32 %v793, 16
      %v964 = vrot.slane %v962, 1
      %v965 = vor.u32 %v960, %v964
      %v967 = vshrl.u32 %v794, 16
      %v969 = vshll.u32 %v794, 16
      %v971 = vrot.slane %v969, 1
      %v972 = vor.u32 %v967, %v971
      %v974 = vshrl.u32 %v795, 16
      %v976 = vshll.u32 %v795, 16
      %v978 = vrot.slane %v976, 1
      %v979 = vor.u32 %v974, %v978
      %v981 = vshrl.u32 %v796, 16
      %v983 = vshll.u32 %v796, 16
      %v985 = vrot.slane %v983, 1
      %v986 = vor.u32 %v981, %v985
      %v988 = vshrl.u32 %v797, 16
      %v990 = vshll.u32 %v797, 16
      %v992 = vrot.slane %v990, 1
      %v993 = vor.u32 %v988, %v992
      %v995 = vshrl.u32 %v798, 16
      %v997 = vshll.u32 %v798, 16
      %v999 = vrot.slane %v997, 1
      %v1000 = vor.u32 %v995, %v999
      %v1002 = vshrl.u32 %v799, 16
      %v1004 = vshll.u32 %v799, 16
      %v1006 = vrot.slane %v1004, 1
      %v1007 = vor.u32 %v1002, %v1006
      %v1009 = vshrl.u32 %v800, 16
      %v1011 = vshll.u32 %v800, 16
      %v1013 = vrot.slane %v1011, 1
      %v1014 = vor.u32 %v1009, %v1013
      %v1016 = vshrl.u32 %v801, 16
      %v1018 = vshll.u32 %v801, 16
      %v1020 = vrot.slane %v1018, 1
      %v1021 = vor.u32 %v1016, %v1020
      %v1023 = vshrl.u32 %v802, 16
      %v1025 = vshll.u32 %v802, 16
      %v1027 = vrot.slane %v1025, 1
      %v1028 = vor.u32 %v1023, %v1027
      %v1030 = vshrl.u32 %v803, 16
      %v1032 = vshll.u32 %v803, 16
      %v1034 = vrot.slane %v1032, 1
      %v1035 = vor.u32 %v1030, %v1034
      %v1037 = vshrl.u32 %v804, 16
      %v1039 = vshll.u32 %v804, 16
      %v1041 = vrot.slane %v1039, 1
      %v1042 = vor.u32 %v1037, %v1041
      %v1044 = vshrl.u32 %v805, 16
      %v1046 = vshll.u32 %v805, 16
      %v1048 = vrot.slane %v1046, 1
      %v1049 = vor.u32 %v1044, %v1048
      %v1051 = vshrl.u32 %v806, 16
      %v1053 = vshll.u32 %v806, 16
      %v1055 = vrot.slane %v1053, 1
      %v1056 = vor.u32 %v1051, %v1055
      %v1058 = vshrl.u32 %v807, 16
      %v1060 = vshll.u32 %v807, 16
      %v1062 = vrot.slane %v1060, 1
      %v1063 = vor.u32 %v1058, %v1062
      %v1065 = vshrl.u32 %v808, 16
      %v1067 = vshll.u32 %v808, 16
      %v1069 = vrot.slane %v1067, 1
      %v1070 = vor.u32 %v1065, %v1069
      %v1072 = vshrl.u32 %v809, 16
      %v1074 = vshll.u32 %v809, 16
      %v1076 = vrot.slane %v1074, 1
      %v1077 = vor.u32 %v1072, %v1076
      %v1079 = vshrl.u32 %v810, 16
      %v1081 = vshll.u32 %v810, 16
      %v1083 = vrot.slane %v1081, 1
      %v1084 = vor.u32 %v1079, %v1083
      %v1086 = vshrl.u32 %v811, 16
      %v1088 = vshll.u32 %v811, 16
      %v1090 = vrot.slane %v1088, 1
      %v1091 = vor.u32 %v1086, %v1090
      %v1093 = vshrl.u32 %v812, 16
      %v1095 = vshll.u32 %v812, 16
      %v1097 = vrot.slane %v1095, 1
      %v1098 = vor.u32 %v1093, %v1097
      %v1100 = vshrl.u32 %v813, 16
      %v1102 = vshll.u32 %v813, 16
      %v1104 = vrot.slane %v1102, 1
      %v1105 = vor.u32 %v1100, %v1104
      %v1107 = vshrl.u32 %v814, 16
      %v1109 = vshll.u32 %v814, 16
      %v1111 = vrot.slane %v1109, 1
      %v1112 = vor.u32 %v1107, %v1111
      %v1114 = vshrl.u32 %v815, 16
      %v1116 = vshll.u32 %v815, 16
      %v1118 = vrot.slane %v1116, 1
      %v1119 = vor.u32 %v1114, %v1118
      %v1121 = vshrl.u32 %v816, 16
      %v1123 = vshll.u32 %v816, 16
      %v1125 = vrot.slane %v1123, 1
      %v1126 = vor.u32 %v1121, %v1125
      %v1128 = vshrl.u32 %v817, 16
      %v1130 = vshll.u32 %v817, 16
      %v1132 = vrot.slane %v1130, 1
      %v1133 = vor.u32 %v1128, %v1132
      %v1135 = vshrl.u32 %v818, 16
      %v1137 = vshll.u32 %v818, 16
      %v1139 = vrot.slane %v1137, 1
      %v1140 = vor.u32 %v1135, %v1139
      %v1142 = vshrl.u32 %v819, 16
      %v1144 = vshll.u32 %v819, 16
      %v1146 = vrot.slane %v1144, 1
      %v1147 = vor.u32 %v1142, %v1146
      %v1149 = vshrl.u32 %v820, 16
      %v1151 = vshll.u32 %v820, 16
      %v1153 = vrot.slane %v1151, 1
      %v1154 = vor.u32 %v1149, %v1153
      %v1156 = vshrl.u32 %v821, 16
      %v1158 = vshll.u32 %v821, 16
      %v1160 = vrot.slane %v1158, 1
      %v1161 = vor.u32 %v1156, %v1160
      %v1163 = vshrl.u32 %v822, 16
      %v1165 = vshll.u32 %v822, 16
      %v1167 = vrot.slane %v1165, 1
      %v1168 = vor.u32 %v1163, %v1167
      %v1170 = vshrl.u32 %v823, 16
      %v1172 = vshll.u32 %v823, 16
      %v1174 = vrot.slane %v1172, 1
      %v1175 = vor.u32 %v1170, %v1174
      %v1177 = vshrl.u32 %v824, 16
      %v1179 = vshll.u32 %v824, 16
      %v1181 = vrot.slane %v1179, 1
      %v1182 = vor.u32 %v1177, %v1181
      %v1184 = vshrl.u32 %v825, 16
      %v1186 = vshll.u32 %v825, 16
      %v1188 = vrot.slane %v1186, 1
      %v1189 = vor.u32 %v1184, %v1188
      %v1191 = vshrl.u32 %v826, 16
      %v1193 = vshll.u32 %v826, 16
      %v1195 = vrot.slane %v1193, 1
      %v1196 = vor.u32 %v1191, %v1195
      %v1198 = vshrl.u32 %v827, 16
      %v1200 = vshll.u32 %v827, 16
      %v1202 = vrot.slane %v1200, 1
      %v1203 = vor.u32 %v1198, %v1202
      %v1205 = vshrl.u32 %v828, 16
      %v1207 = vshll.u32 %v828, 16
      %v1209 = vrot.slane %v1207, 1
      %v1210 = vor.u32 %v1205, %v1209
      %v1212 = vshrl.u32 %v829, 16
      %v1214 = vshll.u32 %v829, 16
      %v1216 = vrot.slane %v1214, 1
      %v1217 = vor.u32 %v1212, %v1216
      %v1219 = vshrl.u32 %v830, 16
      %v1221 = vshll.u32 %v830, 16
      %v1223 = vrot.slane %v1221, 1
      %v1224 = vor.u32 %v1219, %v1223
      %v1226 = vshrl.u32 %v831, 16
      %v1228 = vshll.u32 %v831, 16
      %v1230 = vrot.slane %v1228, 1
      %v1231 = vor.u32 %v1226, %v1230
      %v1233 = vshrl.u32 %v832, 16
      %v1235 = vshll.u32 %v832, 16
      %v1237 = vrot.slane %v1235, 1
      %v1238 = vor.u32 %v1233, %v1237
      %v1240 = vshrl.u32 %v833, 16
      %v1242 = vshll.u32 %v833, 16
      %v1244 = vrot.slane %v1242, 1
      %v1245 = vor.u32 %v1240, %v1244
      %v1247 = vshrl.u32 %v834, 16
      %v1249 = vshll.u32 %v834, 16
      %v1251 = vrot.slane %v1249, 1
      %v1252 = vor.u32 %v1247, %v1251
      %v1254 = vshrl.u32 %v835, 16
      %v1256 = vshll.u32 %v835, 16
      %v1258 = vrot.slane %v1256, 1
      %v1259 = vor.u32 %v1254, %v1258
      %v1261 = vshrl.u32 %v836, 16
      %v1263 = vshll.u32 %v836, 16
      %v1265 = vrot.slane %v1263, 1
      %v1266 = vor.u32 %v1261, %v1265
      %v1268 = vshrl.u32 %v837, 16
      %v1270 = vshll.u32 %v837, 16
      %v1272 = vrot.slane %v1270, 1
      %v1273 = vor.u32 %v1268, %v1272
      %v1275 = vshrl.u32 %v838, 16
      %v1277 = vshll.u32 %v838, 16
      %v1279 = vrot.slane %v1277, 1
      %v1280 = vor.u32 %v1275, %v1279
      %v1282 = vshrl.u32 %v839, 16
      %v1284 = vshll.u32 %v839, 16
      %v1286 = vrot.slane %v1284, 1
      %v1287 = vor.u32 %v1282, %v1286
      %v1289 = vshrl.u32 %v840, 16
      %v1291 = vshll.u32 %v840, 16
      %v1293 = vrot.slane %v1291, 1
      %v1294 = vor.u32 %v1289, %v1293
      %v1296 = vshrl.u32 %v841, 16
      %v1298 = vshll.u32 %v841, 16
      %v1300 = vrot.slane %v1298, 1
      %v1301 = vor.u32 %v1296, %v1300
      %v1303 = vshrl.u32 %v842, 16
      %v1305 = vshll.u32 %v842, 16
      %v1307 = vrot.slane %v1305, 1
      %v1308 = vor.u32 %v1303, %v1307
      %v1310 = vshrl.u32 %v843, 16
      %v1312 = vshll.u32 %v843, 16
      %v1314 = vrot.slane %v1312, 1
      %v1315 = vor.u32 %v1310, %v1314
      %v1317 = vshrl.u32 %v844, 16
      %v1319 = vshll.u32 %v844, 16
      %v1321 = vrot.slane %v1319, 1
      %v1322 = vor.u32 %v1317, %v1321
      %v1324 = vshrl.u32 %v845, 16
      %v1326 = vshll.u32 %v845, 16
      %v1328 = vrot.slane %v1326, 1
      %v1329 = vor.u32 %v1324, %v1328
      %v1331 = vshrl.u32 %v846, 16
      %v1333 = vshll.u32 %v846, 16
      %v1335 = vrot.slane %v1333, 1
      %v1336 = vor.u32 %v1331, %v1335
      %v1338 = vshrl.u32 %v847, 16
      %v1340 = vshll.u32 %v847, 16
      %v1342 = vrot.slane %v1340, 1
      %v1343 = vor.u32 %v1338, %v1342
      %v1345 = vshrl.u32 %v848, 16
      %v1347 = vshll.u32 %v848, 16
      %v1349 = vrot.slane %v1347, 1
      %v1350 = vor.u32 %v1345, %v1349
      %v1352 = vshrl.u32 %v849, 16
      %v1354 = vshll.u32 %v849, 16
      %v1356 = vrot.slane %v1354, 1
      %v1357 = vor.u32 %v1352, %v1356
      %v1359 = vshrl.u32 %v850, 16
      %v1361 = vshll.u32 %v850, 16
      %v1363 = vrot.slane %v1361, 1
      %v1364 = vor.u32 %v1359, %v1363
      %v1366 = vshrl.u32 %v851, 16
      %v1368 = vshll.u32 %v851, 16
      %v1370 = vrot.slane %v1368, 1
      %v1371 = vor.u32 %v1366, %v1370
      %v1373 = vshrl.u32 %v852, 16
      %v1375 = vshll.u32 %v852, 16
      %v1377 = vrot.slane %v1375, 1
      %v1378 = vor.u32 %v1373, %v1377
      %v1380 = vshrl.u32 %v853, 16
      %v1382 = vshll.u32 %v853, 16
      %v1384 = vrot.slane %v1382, 1
      %v1385 = vor.u32 %v1380, %v1384
      %v1387 = vshrl.u32 %v854, 16
      %v1389 = vshll.u32 %v854, 16
      %v1391 = vrot.slane %v1389, 1
      %v1392 = vor.u32 %v1387, %v1391
      %v1394 = vshrl.u32 %v855, 16
      %v1396 = vshll.u32 %v855, 16
      %v1398 = vrot.slane %v1396, 1
      %v1399 = vor.u32 %v1394, %v1398
      %v1401 = vshrl.u32 %v856, 16
      %v1403 = vshll.u32 %v856, 16
      %v1405 = vrot.slane %v1403, 1
      %v1406 = vor.u32 %v1401, %v1405
      %v1408 = vshrl.u32 %v857, 16
      %v1410 = vshll.u32 %v857, 16
      %v1412 = vrot.slane %v1410, 1
      %v1413 = vor.u32 %v1408, %v1412
      %v1415 = vshrl.u32 %v858, 16
      %v1417 = vshll.u32 %v858, 16
      %v1419 = vrot.slane %v1417, 1
      %v1420 = vor.u32 %v1415, %v1419
      %v1422 = vshrl.u32 %v859, 16
      %v1424 = vshll.u32 %v859, 16
      %v1426 = vrot.slane %v1424, 1
      %v1427 = vor.u32 %v1422, %v1426
      %v1429 = vshrl.u32 %v860, 16
      %v1431 = vshll.u32 %v860, 16
      %v1433 = vrot.slane %v1431, 1
      %v1434 = vor.u32 %v1429, %v1433
      %v1436 = vshrl.u32 %v861, 16
      %v1438 = vshll.u32 %v861, 16
      %v1440 = vrot.slane %v1438, 1
      %v1441 = vor.u32 %v1436, %v1440
      %v1443 = vshrl.u32 %v862, 16
      %v1445 = vshll.u32 %v862, 16
      %v1447 = vrot.slane %v1445, 1
      %v1448 = vor.u32 %v1443, %v1447
      %v1450 = vshrl.u32 %v863, 16
      %v1452 = vshll.u32 %v863, 16
      %v1454 = vrot.slane %v1452, 1
      %v1455 = vor.u32 %v1450, %v1454
      %v1457 = vshrl.u32 %v864, 16
      %v1459 = vshll.u32 %v864, 16
      %v1461 = vrot.slane %v1459, 1
      %v1462 = vor.u32 %v1457, %v1461
      %v1464 = vshrl.u32 %v865, 16
      %v1466 = vshll.u32 %v865, 16
      %v1468 = vrot.slane %v1466, 1
      %v1469 = vor.u32 %v1464, %v1468
      %v1471 = vshrl.u32 %v866, 16
      %v1473 = vshll.u32 %v866, 16
      %v1475 = vrot.slane %v1473, 1
      %v1476 = vor.u32 %v1471, %v1475
      %v1478 = vshrl.u32 %v867, 16
      %v1480 = vshll.u32 %v867, 16
      %v1482 = vrot.slane %v1480, 1
      %v1483 = vor.u32 %v1478, %v1482
      %v1485 = vshrl.u32 %v868, 16
      %v1487 = vshll.u32 %v868, 16
      %v1489 = vrot.slane %v1487, 1
      %v1490 = vor.u32 %v1485, %v1489
      %v1492 = vshrl.u32 %v869, 16
      %v1494 = vshll.u32 %v869, 16
      %v1496 = vrot.slane %v1494, 1
      %v1497 = vor.u32 %v1492, %v1496
      %v1499 = vshrl.u32 %v870, 16
      %v1501 = vshll.u32 %v870, 16
      %v1503 = vrot.slane %v1501, 1
      %v1504 = vor.u32 %v1499, %v1503
      %v1506 = vshrl.u32 %v871, 16
      %v1508 = vshll.u32 %v871, 16
      %v1510 = vrot.slane %v1508, 1
      %v1511 = vor.u32 %v1506, %v1510
      %v1513 = vshrl.u32 %v872, 16
      %v1515 = vshll.u32 %v872, 16
      %v1517 = vrot.slane %v1515, 1
      %v1518 = vor.u32 %v1513, %v1517
      %v1520 = vshrl.u32 %v873, 16
      %v1522 = vshll.u32 %v873, 16
      %v1524 = vrot.slane %v1522, 1
      %v1525 = vor.u32 %v1520, %v1524
      %v1527 = vshrl.u32 %v874, 16
      %v1529 = vshll.u32 %v874, 16
      %v1531 = vrot.slane %v1529, 1
      %v1532 = vor.u32 %v1527, %v1531
      %v1534 = vshrl.u32 %v875, 16
      %v1536 = vshll.u32 %v875, 16
      %v1538 = vrot.slane %v1536, 1
      %v1539 = vor.u32 %v1534, %v1538
      %v1541 = vshrl.u32 %v876, 16
      %v1543 = vshll.u32 %v876, 16
      %v1545 = vrot.slane %v1543, 1
      %v1546 = vor.u32 %v1541, %v1545
      %v1548 = vshrl.u32 %v877, 16
      %v1550 = vshll.u32 %v877, 16
      %v1552 = vrot.slane %v1550, 1
      %v1553 = vor.u32 %v1548, %v1552
      %v1555 = vshrl.u32 %v878, 16
      %v1557 = vshll.u32 %v878, 16
      %v1559 = vrot.slane %v1557, 1
      %v1560 = vor.u32 %v1555, %v1559
      %v1562 = vshrl.u32 %v879, 16
      %v1564 = vshll.u32 %v879, 16
      %v1566 = vrot.slane %v1564, 1
      %v1567 = vor.u32 %v1562, %v1566
      %v1569 = vshrl.u32 %v880, 16
      %v1571 = vshll.u32 %v880, 16
      %v1573 = vrot.slane %v1571, 1
      %v1574 = vor.u32 %v1569, %v1573
      %v1576 = vshrl.u32 %v881, 16
      %v1578 = vshll.u32 %v881, 16
      %v1580 = vrot.slane %v1578, 1
      %v1581 = vor.u32 %v1576, %v1580
      %v1582 = vrot.slane %v782, 1
      %v1583 = vrot.slane %v783, 1
      %v1584 = vrot.slane %v784, 1
      %v1585 = vrot.slane %v785, 1
      %v1586 = vrot.slane %v786, 1
      %v1587 = vrot.slane %v787, 1
      %v1588 = vrot.slane %v788, 1
      %v1589 = vrot.slane %v789, 1
      %v1590 = vrot.slane %v790, 1
      %v1591 = vrot.slane %v791, 1
      %v1592 = vrot.slane %v792, 1
      %v1593 = vrot.slane %v793, 1
      %v1594 = vrot.slane %v794, 1
      %v1595 = vrot.slane %v795, 1
      %v1596 = vrot.slane %v796, 1
      %v1597 = vrot.slane %v797, 1
      %v1598 = vrot.slane %v798, 1
      %v1599 = vrot.slane %v799, 1
      %v1600 = vrot.slane %v800, 1
      %v1601 = vrot.slane %v801, 1
      %v1602 = vrot.slane %v802, 1
      %v1603 = vrot.slane %v803, 1
      %v1604 = vrot.slane %v804, 1
      %v1605 = vrot.slane %v805, 1
      %v1606 = vrot.slane %v806, 1
      %v1607 = vrot.slane %v807, 1
      %v1608 = vrot.slane %v808, 1
      %v1609 = vrot.slane %v809, 1
      %v1610 = vrot.slane %v810, 1
      %v1611 = vrot.slane %v811, 1
      %v1612 = vrot.slane %v812, 1
      %v1613 = vrot.slane %v813, 1
      %v1614 = vrot.slane %v814, 1
      %v1615 = vrot.slane %v815, 1
      %v1616 = vrot.slane %v816, 1
      %v1617 = vrot.slane %v817, 1
      %v1618 = vrot.slane %v818, 1
      %v1619 = vrot.slane %v819, 1
      %v1620 = vrot.slane %v820, 1
      %v1621 = vrot.slane %v821, 1
      %v1622 = vrot.slane %v822, 1
      %v1623 = vrot.slane %v823, 1
      %v1624 = vrot.slane %v824, 1
      %v1625 = vrot.slane %v825, 1
      %v1626 = vrot.slane %v826, 1
      %v1627 = vrot.slane %v827, 1
      %v1628 = vrot.slane %v828, 1
      %v1629 = vrot.slane %v829, 1
      %v1630 = vrot.slane %v830, 1
      %v1631 = vrot.slane %v831, 1
      %v1632 = vrot.slane %v832, 1
      %v1633 = vrot.slane %v833, 1
      %v1634 = vrot.slane %v834, 1
      %v1635 = vrot.slane %v835, 1
      %v1636 = vrot.slane %v836, 1
      %v1637 = vrot.slane %v837, 1
      %v1638 = vrot.slane %v838, 1
      %v1639 = vrot.slane %v839, 1
      %v1640 = vrot.slane %v840, 1
      %v1641 = vrot.slane %v841, 1
      %v1642 = vrot.slane %v842, 1
      %v1643 = vrot.slane %v843, 1
      %v1644 = vrot.slane %v844, 1
      %v1645 = vrot.slane %v845, 1
      %v1646 = vrot.slane %v846, 1
      %v1647 = vrot.slane %v847, 1
      %v1648 = vrot.slane %v848, 1
      %v1649 = vrot.slane %v849, 1
      %v1650 = vrot.slane %v850, 1
      %v1651 = vrot.slane %v851, 1
      %v1652 = vrot.slane %v852, 1
      %v1653 = vrot.slane %v853, 1
      %v1654 = vrot.slane %v854, 1
      %v1655 = vrot.slane %v855, 1
      %v1656 = vrot.slane %v856, 1
      %v1657 = vrot.slane %v857, 1
      %v1658 = vrot.slane %v858, 1
      %v1659 = vrot.slane %v859, 1
      %v1660 = vrot.slane %v860, 1
      %v1661 = vrot.slane %v861, 1
      %v1662 = vrot.slane %v862, 1
      %v1663 = vrot.slane %v863, 1
      %v1664 = vrot.slane %v864, 1
      %v1665 = vrot.slane %v865, 1
      %v1666 = vrot.slane %v866, 1
      %v1667 = vrot.slane %v867, 1
      %v1668 = vrot.slane %v868, 1
      %v1669 = vrot.slane %v869, 1
      %v1670 = vrot.slane %v870, 1
      %v1671 = vrot.slane %v871, 1
      %v1672 = vrot.slane %v872, 1
      %v1673 = vrot.slane %v873, 1
      %v1674 = vrot.slane %v874, 1
      %v1675 = vrot.slane %v875, 1
      %v1676 = vrot.slane %v876, 1
      %v1677 = vrot.slane %v877, 1
      %v1678 = vrot.slane %v878, 1
      %v1679 = vrot.slane %v879, 1
      %v1680 = vrot.slane %v880, 1
      %v1681 = vrot.slane %v881, 1
      %v1682 = vunpack.c.l.b16 %v888
      %v1683 = vunpack.c.l.b16 %v1582
      %v1684 = vunpack.c.l.b16 %v895
      %v1685 = vunpack.c.l.b16 %v1583
      %v1686 = vunpack.c.l.b16 %v902
      %v1687 = vunpack.c.l.b16 %v1584
      %v1688 = vunpack.c.l.b16 %v909
      %v1689 = vunpack.c.l.b16 %v1585
      %v1690 = vunpack.c.l.b16 %v916
      %v1691 = vunpack.c.l.b16 %v1586
      %v1692 = vunpack.c.l.b16 %v923
      %v1693 = vunpack.c.l.b16 %v1587
      %v1694 = vunpack.c.l.b16 %v930
      %v1695 = vunpack.c.l.b16 %v1588
      %v1696 = vunpack.c.l.b16 %v937
      %v1697 = vunpack.c.l.b16 %v1589
      %v1698 = vunpack.c.l.b16 %v958
      %v1699 = vunpack.c.l.b16 %v1592
      %v1700 = vunpack.c.l.b16 %v965
      %v1701 = vunpack.c.l.b16 %v1593
      %v1702 = vunpack.c.l.b16 %v972
      %v1703 = vunpack.c.l.b16 %v1594
      %v1704 = vunpack.c.l.b16 %v979
      %v1705 = vunpack.c.l.b16 %v1595
      %v1706 = vunpack.c.l.b16 %v986
      %v1707 = vunpack.c.l.b16 %v1596
      %v1708 = vunpack.c.l.b16 %v993
      %v1709 = vunpack.c.l.b16 %v1597
      %v1710 = vunpack.c.l.b16 %v1000
      %v1711 = vunpack.c.l.b16 %v1598
      %v1712 = vunpack.c.l.b16 %v1007
      %v1713 = vunpack.c.l.b16 %v1599
      %v1714 = vunpack.c.l.b16 %v1028
      %v1715 = vunpack.c.l.b16 %v1602
      %v1716 = vunpack.c.l.b16 %v1035
      %v1717 = vunpack.c.l.b16 %v1603
      %v1718 = vunpack.c.l.b16 %v1042
      %v1719 = vunpack.c.l.b16 %v1604
      %v1720 = vunpack.c.l.b16 %v1049
      %v1721 = vunpack.c.l.b16 %v1605
      %v1722 = vunpack.c.l.b16 %v1056
      %v1723 = vunpack.c.l.b16 %v1606
      %v1724 = vunpack.c.l.b16 %v1063
      %v1725 = vunpack.c.l.b16 %v1607
      %v1726 = vunpack.c.l.b16 %v1070
      %v1727 = vunpack.c.l.b16 %v1608
      %v1728 = vunpack.c.l.b16 %v1077
      %v1729 = vunpack.c.l.b16 %v1609
      %v1730 = vunpack.c.l.b16 %v1098
      %v1731 = vunpack.c.l.b16 %v1612
      %v1732 = vunpack.c.l.b16 %v1105
      %v1733 = vunpack.c.l.b16 %v1613
      %v1734 = vunpack.c.l.b16 %v1112
      %v1735 = vunpack.c.l.b16 %v1614
      %v1736 = vunpack.c.l.b16 %v1119
      %v1737 = vunpack.c.l.b16 %v1615
      %v1738 = vunpack.c.l.b16 %v1126
      %v1739 = vunpack.c.l.b16 %v1616
      %v1740 = vunpack.c.l.b16 %v1133
      %v1741 = vunpack.c.l.b16 %v1617
      %v1742 = vunpack.c.l.b16 %v1140
      %v1743 = vunpack.c.l.b16 %v1618
      %v1744 = vunpack.c.l.b16 %v1147
      %v1745 = vunpack.c.l.b16 %v1619
      %v1746 = vunpack.c.l.b16 %v1168
      %v1747 = vunpack.c.l.b16 %v1622
      %v1748 = vunpack.c.l.b16 %v1175
      %v1749 = vunpack.c.l.b16 %v1623
      %v1750 = vunpack.c.l.b16 %v1182
      %v1751 = vunpack.c.l.b16 %v1624
      %v1752 = vunpack.c.l.b16 %v1189
      %v1753 = vunpack.c.l.b16 %v1625
      %v1754 = vunpack.c.l.b16 %v1196
      %v1755 = vunpack.c.l.b16 %v1626
      %v1756 = vunpack.c.l.b16 %v1203
      %v1757 = vunpack.c.l.b16 %v1627
      %v1758 = vunpack.c.l.b16 %v1210
      %v1759 = vunpack.c.l.b16 %v1628
      %v1760 = vunpack.c.l.b16 %v1217
      %v1761 = vunpack.c.l.b16 %v1629
      %v1762 = vunpack.c.l.b16 %v1238
      %v1763 = vunpack.c.l.b16 %v1632
      %v1764 = vunpack.c.l.b16 %v1245
      %v1765 = vunpack.c.l.b16 %v1633
      %v1766 = vunpack.c.l.b16 %v1252
      %v1767 = vunpack.c.l.b16 %v1634
      %v1768 = vunpack.c.l.b16 %v1259
      %v1769 = vunpack.c.l.b16 %v1635
      %v1770 = vunpack.c.l.b16 %v1266
      %v1771 = vunpack.c.l.b16 %v1636
      %v1772 = vunpack.c.l.b16 %v1273
      %v1773 = vunpack.c.l.b16 %v1637
      %v1774 = vunpack.c.l.b16 %v1280
      %v1775 = vunpack.c.l.b16 %v1638
      %v1776 = vunpack.c.l.b16 %v1287
      %v1777 = vunpack.c.l.b16 %v1639
      %v1778 = vunpack.c.l.b16 %v1308
      %v1779 = vunpack.c.l.b16 %v1642
      %v1780 = vunpack.c.l.b16 %v1315
      %v1781 = vunpack.c.l.b16 %v1643
      %v1782 = vunpack.c.l.b16 %v1322
      %v1783 = vunpack.c.l.b16 %v1644
      %v1784 = vunpack.c.l.b16 %v1329
      %v1785 = vunpack.c.l.b16 %v1645
      %v1786 = vunpack.c.l.b16 %v1336
      %v1787 = vunpack.c.l.b16 %v1646
      %v1788 = vunpack.c.l.b16 %v1343
      %v1789 = vunpack.c.l.b16 %v1647
      %v1790 = vunpack.c.l.b16 %v1350
      %v1791 = vunpack.c.l.b16 %v1648
      %v1792 = vunpack.c.l.b16 %v1357
      %v1793 = vunpack.c.l.b16 %v1649
      %v1794 = vunpack.c.l.b16 %v1378
      %v1795 = vunpack.c.l.b16 %v1652
      %v1796 = vunpack.c.l.b16 %v1385
      %v1797 = vunpack.c.l.b16 %v1653
      %v1798 = vunpack.c.l.b16 %v1392
      %v1799 = vunpack.c.l.b16 %v1654
      %v1800 = vunpack.c.l.b16 %v1399
      %v1801 = vunpack.c.l.b16 %v1655
      %v1802 = vunpack.c.l.b16 %v1406
      %v1803 = vunpack.c.l.b16 %v1656
      %v1804 = vunpack.c.l.b16 %v1413
      %v1805 = vunpack.c.l.b16 %v1657
      %v1806 = vunpack.c.l.b16 %v1420
      %v1807 = vunpack.c.l.b16 %v1658
      %v1808 = vunpack.c.l.b16 %v1427
      %v1809 = vunpack.c.l.b16 %v1659
      %v1810 = vld [vmem:[%s1] sm:$0xf]
      %v1811 = vld [vmem:[%s1 + $0x4] sm:$0xf]
      %v1812 = vld [vmem:[%s1 + $0x8] sm:$0xf]
      %v1813 = vld [vmem:[%s1 + $0xc] sm:$0xf]
      %v1814 = vld [vmem:[%s1 + $0x10] sm:$0xf]
      %v1815 = vld [vmem:[%s1 + $0x14] sm:$0xf]
      %v1816 = vld [vmem:[%s1 + $0x18] sm:$0xf]
      %v1817 = vld [vmem:[%s1 + $0x1c] sm:$0xf]
      %v1818 = vld [vmem:[%s1 + $0x20] sm:$0xf]
      %v1819 = vld [vmem:[%s1 + $0x24] sm:$0xf]
      %v1820 = vld [vmem:[%s1 + $0x28] sm:$0xf]
      %v1821 = vld [vmem:[%s1 + $0x2c] sm:$0xf]
      %v1822 = vld [vmem:[%s1 + $0x30] sm:$0xf]
      %v1823 = vld [vmem:[%s1 + $0x34] sm:$0xf]
      %v1824 = vld [vmem:[%s1 + $0x38] sm:$0xf]
      %v1825 = vld [vmem:[%s1 + $0x3c] sm:$0xf]
      %v1826 = vld [vmem:[%s1 + $0x40] sm:$0xf]
      %v1827 = vld [vmem:[%s1 + $0x44] sm:$0xf]
      %v1828 = vld [vmem:[%s1 + $0x48] sm:$0xf]
      %v1829 = vld [vmem:[%s1 + $0x4c] sm:$0xf]
      %v1830 = vld [vmem:[%s1 + $0x50] sm:$0xf]
      %v1831 = vld [vmem:[%s1 + $0x54] sm:$0xf]
      %v1832 = vld [vmem:[%s1 + $0x58] sm:$0xf]
      %v1833 = vld [vmem:[%s1 + $0x5c] sm:$0xf]
      %v1834 = vld [vmem:[%s1 + $0x60] sm:$0xf]
      %v1835 = vld [vmem:[%s1 + $0x64] sm:$0xf]
      %v1836 = vld [vmem:[%s1 + $0x68] sm:$0xf]
      %v1837 = vld [vmem:[%s1 + $0x6c] sm:$0xf]
      %v1838 = vld [vmem:[%s1 + $0x70] sm:$0xf]
      %v1839 = vld [vmem:[%s1 + $0x74] sm:$0xf]
      %v1840 = vld [vmem:[%s1 + $0x78] sm:$0xf]
      %v1841 = vld [vmem:[%s1 + $0x7c] sm:$0xf]
      %v1842 = vld [vmem:[%s1 + $0x80] sm:$0xf]
      %v1843 = vld [vmem:[%s1 + $0x84] sm:$0xf]
      %v1844 = vld [vmem:[%s1 + $0x88] sm:$0xf]
      %v1845 = vld [vmem:[%s1 + $0x8c] sm:$0xf]
      %v1846 = vld [vmem:[%s1 + $0x90] sm:$0xf]
      %v1847 = vld [vmem:[%s1 + $0x94] sm:$0xf]
      %v1848 = vld [vmem:[%s1 + $0x98] sm:$0xf]
      %v1849 = vld [vmem:[%s1 + $0x9c] sm:$0xf]
      %v1850 = vld [vmem:[%s1 + $0xa0] sm:$0xf]
      %v1851 = vld [vmem:[%s1 + $0xa4] sm:$0xf]
      %v1852 = vld [vmem:[%s1 + $0xa8] sm:$0xf]
      %v1853 = vld [vmem:[%s1 + $0xac] sm:$0xf]
      %v1854 = vld [vmem:[%s1 + $0xb0] sm:$0xf]
      %v1855 = vld [vmem:[%s1 + $0xb4] sm:$0xf]
      %v1856 = vld [vmem:[%s1 + $0xb8] sm:$0xf]
      %v1857 = vld [vmem:[%s1 + $0xbc] sm:$0xf]
      %v1858 = vunpack.c.l.b16 %v944
      %v1859 = vunpack.c.l.b16 %v1590
      %v1860 = vunpack.c.l.b16 %v1014
      %v1861 = vunpack.c.l.b16 %v1600
      %v1862 = vunpack.c.l.b16 %v1084
      %v1863 = vunpack.c.l.b16 %v1610
      %v1864 = vunpack.c.l.b16 %v1154
      %v1865 = vunpack.c.l.b16 %v1620
      %v1866 = vunpack.c.l.b16 %v1224
      %v1867 = vunpack.c.l.b16 %v1630
      %v1868 = vunpack.c.l.b16 %v1294
      %v1869 = vunpack.c.l.b16 %v1640
      %v1870 = vunpack.c.l.b16 %v1364
      %v1871 = vunpack.c.l.b16 %v1650
      %v1872 = vunpack.c.l.b16 %v1434
      %v1873 = vunpack.c.l.b16 %v1660
      %s1874 = scalar_lea.vmem %s1, 192
      %v1875 = vld [vmem:[%s1874] sm:$0xf]
      %v1876 = vld [vmem:[%s1874 + $0x4] sm:$0xf]
      %v1877 = vld [vmem:[%s1874 + $0x8] sm:$0xf]
      %v1878 = vld [vmem:[%s1874 + $0xc] sm:$0xf]
      %v1879 = vld [vmem:[%s1874 + $0x10] sm:$0xf]
      %v1880 = vld [vmem:[%s1874 + $0x14] sm:$0xf]
      %v1881 = vld [vmem:[%s1874 + $0x18] sm:$0xf]
      %v1882 = vld [vmem:[%s1874 + $0x1c] sm:$0xf]
      %v1883 = vld [vmem:[%s1874 + $0x20] sm:$0xf]
      %v1884 = vld [vmem:[%s1874 + $0x24] sm:$0xf]
      %v1885 = vld [vmem:[%s1874 + $0x28] sm:$0xf]
      %v1886 = vld [vmem:[%s1874 + $0x2c] sm:$0xf]
      %v1887 = vld [vmem:[%s1874 + $0x30] sm:$0xf]
      %v1888 = vld [vmem:[%s1874 + $0x34] sm:$0xf]
      %v1889 = vld [vmem:[%s1874 + $0x38] sm:$0xf]
      %v1890 = vld [vmem:[%s1874 + $0x3c] sm:$0xf]
      %v1891 = vld [vmem:[%s1874 + $0x40] sm:$0xf]
      %v1892 = vld [vmem:[%s1874 + $0x44] sm:$0xf]
      %v1893 = vld [vmem:[%s1874 + $0x48] sm:$0xf]
      %v1894 = vld [vmem:[%s1874 + $0x4c] sm:$0xf]
      %v1895 = vld [vmem:[%s1874 + $0x50] sm:$0xf]
      %v1896 = vld [vmem:[%s1874 + $0x54] sm:$0xf]
      %v1897 = vld [vmem:[%s1874 + $0x58] sm:$0xf]
      %v1898 = vld [vmem:[%s1874 + $0x5c] sm:$0xf]
      %v1899 = vld [vmem:[%s1874 + $0x60] sm:$0xf]
      %v1900 = vld [vmem:[%s1874 + $0x64] sm:$0xf]
      %v1901 = vld [vmem:[%s1874 + $0x68] sm:$0xf]
      %v1902 = vld [vmem:[%s1874 + $0x6c] sm:$0xf]
      %v1903 = vld [vmem:[%s1874 + $0x70] sm:$0xf]
      %v1904 = vld [vmem:[%s1874 + $0x74] sm:$0xf]
      %v1905 = vld [vmem:[%s1874 + $0x78] sm:$0xf]
      %v1906 = vld [vmem:[%s1874 + $0x7c] sm:$0xf]
      %v1907 = vld [vmem:[%s1874 + $0x80] sm:$0xf]
      %v1908 = vld [vmem:[%s1874 + $0x84] sm:$0xf]
      %v1909 = vld [vmem:[%s1874 + $0x88] sm:$0xf]
      %v1910 = vld [vmem:[%s1874 + $0x8c] sm:$0xf]
      %v1911 = vld [vmem:[%s1874 + $0x90] sm:$0xf]
      %v1912 = vld [vmem:[%s1874 + $0x94] sm:$0xf]
      %v1913 = vld [vmem:[%s1874 + $0x98] sm:$0xf]
      %v1914 = vld [vmem:[%s1874 + $0x9c] sm:$0xf]
      %v1915 = vld [vmem:[%s1874 + $0xa0] sm:$0xf]
      %v1916 = vld [vmem:[%s1874 + $0xa4] sm:$0xf]
      %v1917 = vld [vmem:[%s1874 + $0xa8] sm:$0xf]
      %v1918 = vld [vmem:[%s1874 + $0xac] sm:$0xf]
      %v1919 = vld [vmem:[%s1874 + $0xb0] sm:$0xf]
      %v1920 = vld [vmem:[%s1874 + $0xb4] sm:$0xf]
      %v1921 = vld [vmem:[%s1874 + $0xb8] sm:$0xf]
      %v1922 = vld [vmem:[%s1874 + $0xbc] sm:$0xf]
      %v1923 = vpack.c.b16 %v586, %v584
      %v1924 = vpack.c.b16 %v1686, %v1684
      %v1925 = vpack.c.b16 %v1687, %v1685
      %v1926 = vpack.c.b16 %v590, %v588
      %v1927 = vpack.c.b16 %v1690, %v1688
      %v1928 = vpack.c.b16 %v1691, %v1689
      %v1929 = vpack.c.b16 %v594, %v592
      %v1930 = vpack.c.b16 %v1694, %v1692
      %v1931 = vpack.c.b16 %v1695, %v1693
      %v1932 = vpack.c.b16 %v598, %v596
      %v1933 = vpack.c.b16 %v1858, %v1696
      %v1934 = vpack.c.b16 %v1859, %v1697
      %v1935 = vpack.c.b16 %v606, %v604
      %v1936 = vpack.c.b16 %v1702, %v1700
      %v1937 = vpack.c.b16 %v1703, %v1701
      %v1938 = vpack.c.b16 %v610, %v608
      %v1939 = vpack.c.b16 %v1706, %v1704
      %v1940 = vpack.c.b16 %v1707, %v1705
      %v1941 = vpack.c.b16 %v614, %v612
      %v1942 = vpack.c.b16 %v1710, %v1708
      %v1943 = vpack.c.b16 %v1711, %v1709
      %v1944 = vpack.c.b16 %v618, %v616
      %v1945 = vpack.c.b16 %v1860, %v1712
      %v1946 = vpack.c.b16 %v1861, %v1713
      %v1947 = vpack.c.b16 %v626, %v624
      %v1948 = vpack.c.b16 %v1718, %v1716
      %v1949 = vpack.c.b16 %v1719, %v1717
      %v1950 = vpack.c.b16 %v630, %v628
      %v1951 = vpack.c.b16 %v1722, %v1720
      %v1952 = vpack.c.b16 %v1723, %v1721
      %v1953 = vpack.c.b16 %v634, %v632
      %v1954 = vpack.c.b16 %v1726, %v1724
      %v1955 = vpack.c.b16 %v1727, %v1725
      %v1956 = vpack.c.b16 %v638, %v636
      %v1957 = vpack.c.b16 %v1862, %v1728
      %v1958 = vpack.c.b16 %v1863, %v1729
      %v1959 = vpack.c.b16 %v646, %v644
      %v1960 = vpack.c.b16 %v1734, %v1732
      %v1961 = vpack.c.b16 %v1735, %v1733
      %v1962 = vpack.c.b16 %v650, %v648
      %v1963 = vpack.c.b16 %v1738, %v1736
      %v1964 = vpack.c.b16 %v1739, %v1737
      %v1965 = vpack.c.b16 %v654, %v652
      %v1966 = vpack.c.b16 %v1742, %v1740
      %v1967 = vpack.c.b16 %v1743, %v1741
      %v1968 = vpack.c.b16 %v658, %v656
      %v1969 = vpack.c.b16 %v1864, %v1744
      %v1970 = vpack.c.b16 %v1865, %v1745
      %v1971 = vpack.c.b16 %v666, %v664
      %v1972 = vpack.c.b16 %v1750, %v1748
      %v1973 = vpack.c.b16 %v1751, %v1749
      %v1974 = vpack.c.b16 %v670, %v668
      %v1975 = vpack.c.b16 %v1754, %v1752
      %v1976 = vpack.c.b16 %v1755, %v1753
      %v1977 = vpack.c.b16 %v674, %v672
      %v1978 = vpack.c.b16 %v1758, %v1756
      %v1979 = vpack.c.b16 %v1759, %v1757
      %v1980 = vpack.c.b16 %v678, %v676
      %v1981 = vpack.c.b16 %v1866, %v1760
      %v1982 = vpack.c.b16 %v1867, %v1761
      %v1983 = vpack.c.b16 %v686, %v684
      %v1984 = vpack.c.b16 %v1766, %v1764
      %v1985 = vpack.c.b16 %v1767, %v1765
      %v1986 = vpack.c.b16 %v690, %v688
      %v1987 = vpack.c.b16 %v1770, %v1768
      %v1988 = vpack.c.b16 %v1771, %v1769
      %v1989 = vpack.c.b16 %v694, %v692
      %v1990 = vpack.c.b16 %v1774, %v1772
      %v1991 = vpack.c.b16 %v1775, %v1773
      %v1992 = vpack.c.b16 %v698, %v696
      %v1993 = vpack.c.b16 %v1868, %v1776
      %v1994 = vpack.c.b16 %v1869, %v1777
      %v1995 = vpack.c.b16 %v706, %v704
      %v1996 = vpack.c.b16 %v1782, %v1780
      %v1997 = vpack.c.b16 %v1783, %v1781
      %v1998 = vpack.c.b16 %v710, %v708
      %v1999 = vpack.c.b16 %v1786, %v1784
      %v2000 = vpack.c.b16 %v1787, %v1785
      %v2001 = vpack.c.b16 %v714, %v712
      %v2002 = vpack.c.b16 %v1790, %v1788
      %v2003 = vpack.c.b16 %v1791, %v1789
      %v2004 = vpack.c.b16 %v718, %v716
      %v2005 = vpack.c.b16 %v1870, %v1792
      %v2006 = vpack.c.b16 %v1871, %v1793
      %v2007 = vpack.c.b16 %v726, %v724
      %v2008 = vpack.c.b16 %v1798, %v1796
      %v2009 = vpack.c.b16 %v1799, %v1797
      %v2010 = vpack.c.b16 %v730, %v728
      %v2011 = vpack.c.b16 %v1802, %v1800
      %v2012 = vpack.c.b16 %v1803, %v1801
      %v2013 = vpack.c.b16 %v734, %v732
      %v2014 = vpack.c.b16 %v1806, %v1804
      %v2015 = vpack.c.b16 %v1807, %v1805
      %v2016 = vpack.c.b16 %v738, %v736
      %v2017 = vpack.c.b16 %v1872, %v1808
      %v2018 = vpack.c.b16 %v1873, %v1809
      %v2163 = vunpack.c.l.b16 %v1875
      %v2164 = vunpack.c.l.b16 %v1876
      %v2165 = vunpack.c.l.b16 %v1877
      %v2166 = vunpack.c.l.b16 %v1878
      %v2167 = vunpack.c.l.b16 %v1879
      %v2168 = vunpack.c.l.b16 %v1880
      %v2169 = vunpack.c.l.b16 %v1881
      %v2170 = vunpack.c.l.b16 %v1882
      %v2171 = vunpack.c.l.b16 %v1883
      %v2172 = vunpack.c.l.b16 %v1884
      %v2173 = vunpack.c.l.b16 %v1885
      %v2174 = vunpack.c.l.b16 %v1886
      %v2175 = vunpack.c.l.b16 %v1887
      %v2176 = vunpack.c.l.b16 %v1888
      %v2177 = vunpack.c.l.b16 %v1889
      %v2178 = vunpack.c.l.b16 %v1890
      %v2179 = vunpack.c.l.b16 %v1891
      %v2180 = vunpack.c.l.b16 %v1892
      %v2181 = vunpack.c.l.b16 %v1893
      %v2182 = vunpack.c.l.b16 %v1894
      %v2183 = vunpack.c.l.b16 %v1895
      %v2184 = vunpack.c.l.b16 %v1896
      %v2185 = vunpack.c.l.b16 %v1897
      %v2186 = vunpack.c.l.b16 %v1898
      %v2187 = vunpack.c.l.b16 %v1899
      %v2188 = vunpack.c.l.b16 %v1900
      %v2189 = vunpack.c.l.b16 %v1901
      %v2190 = vunpack.c.l.b16 %v1902
      %v2191 = vunpack.c.l.b16 %v1903
      %v2192 = vunpack.c.l.b16 %v1904
      %v2193 = vunpack.c.l.b16 %v1905
      %v2194 = vunpack.c.l.b16 %v1906
      %v2195 = vunpack.c.l.b16 %v1907
      %v2196 = vunpack.c.l.b16 %v1908
      %v2197 = vunpack.c.l.b16 %v1909
      %v2198 = vunpack.c.l.b16 %v1910
      %v2199 = vunpack.c.l.b16 %v1911
      %v2200 = vunpack.c.l.b16 %v1912
      %v2201 = vunpack.c.l.b16 %v1913
      %v2202 = vunpack.c.l.b16 %v1914
      %v2203 = vunpack.c.l.b16 %v1915
      %v2204 = vunpack.c.l.b16 %v1916
      %v2205 = vunpack.c.l.b16 %v1917
      %v2206 = vunpack.c.l.b16 %v1918
      %v2207 = vunpack.c.l.b16 %v1919
      %v2208 = vunpack.c.l.b16 %v1920
      %v2209 = vunpack.c.l.b16 %v1921
      %v2210 = vunpack.c.l.b16 %v1922
      %v2211 = vpack.c.b16 %v2164, %v2163
      %v2212 = vpack.c.b16 %v2166, %v2165
      %v2213 = vpack.c.b16 %v2168, %v2167
      %v2214 = vpack.c.b16 %v2170, %v2169
      %v2215 = vpack.c.b16 %v2172, %v2171
      %v2216 = vpack.c.b16 %v2174, %v2173
      %v2217 = vpack.c.b16 %v2176, %v2175
      %v2218 = vpack.c.b16 %v2178, %v2177
      %v2219 = vpack.c.b16 %v2180, %v2179
      %v2220 = vpack.c.b16 %v2182, %v2181
      %v2221 = vpack.c.b16 %v2184, %v2183
      %v2222 = vpack.c.b16 %v2186, %v2185
      %v2223 = vpack.c.b16 %v2188, %v2187
      %v2224 = vpack.c.b16 %v2190, %v2189
      %v2225 = vpack.c.b16 %v2192, %v2191
      %v2226 = vpack.c.b16 %v2194, %v2193
      %v2227 = vpack.c.b16 %v2196, %v2195
      %v2228 = vpack.c.b16 %v2198, %v2197
      %v2229 = vpack.c.b16 %v2200, %v2199
      %v2230 = vpack.c.b16 %v2202, %v2201
      %v2231 = vpack.c.b16 %v2204, %v2203
      %v2232 = vpack.c.b16 %v2206, %v2205
      %v2233 = vpack.c.b16 %v2208, %v2207
      %v2234 = vpack.c.b16 %v2210, %v2209
      %2259 = vmatpush.bf16.msra.mxu0 %v2218
      %2260 = vmatpush.bf16.msra.mxu0 %v2217
      %2261 = vmatpush.bf16.msra.mxu0 %v2216
      %2262 = vmatpush.bf16.msra.mxu0 %v2215
      %2263 = vmatpush.bf16.msra.mxu0 %v2214
      %2264 = vmatpush.bf16.msra.mxu0 %v2213
      %2265 = vmatpush.bf16.msra.mxu0 %v2212
      %2266 = vmatpush.bf16.msra.mxu0 %v2211
      %2267 = vmatmul.bf16.gmra.mxu0 %v1923
      %v2268 = vpop.f32.mrf.mxu0
      %v2269 = vadd.f32 0.0, %v2268
      %v2270 = vpop.f32.mrf.mxu0
      %v2271 = vadd.f32 0.0, %v2270
      %2272 = vmatmul.bf16.gmra.mxu0 %v1926
      %v2273 = vpop.f32.mrf.mxu0
      %v2274 = vadd.f32 0.0, %v2273
      %v2275 = vpop.f32.mrf.mxu0
      %v2276 = vadd.f32 0.0, %v2275
      %2277 = vmatmul.bf16.gmra.mxu0 %v1929
      %v2278 = vpop.f32.mrf.mxu0
      %v2279 = vadd.f32 0.0, %v2278
      %v2280 = vpop.f32.mrf.mxu0
      %v2281 = vadd.f32 0.0, %v2280
      %2282 = vmatmul.bf16.gmra.mxu0 %v1932
      %v2283 = vpop.f32.mrf.mxu0
      %v2284 = vadd.f32 0.0, %v2283
      %v2285 = vpop.f32.mrf.mxu0
      %v2286 = vadd.f32 0.0, %v2285
      %2287 = vmatmul.bf16.gmra.mxu0 %v1935
      %v2288 = vpop.f32.mrf.mxu0
      %v2289 = vadd.f32 0.0, %v2288
      %v2290 = vpop.f32.mrf.mxu0
      %v2291 = vadd.f32 0.0, %v2290
      %2292 = vmatmul.bf16.gmra.mxu0 %v1938
      %v2293 = vpop.f32.mrf.mxu0
      %v2294 = vadd.f32 0.0, %v2293
      %v2295 = vpop.f32.mrf.mxu0
      %v2296 = vadd.f32 0.0, %v2295
      %2297 = vmatmul.bf16.gmra.mxu0 %v1941
      %v2298 = vpop.f32.mrf.mxu0
      %v2299 = vadd.f32 0.0, %v2298
      %v2300 = vpop.f32.mrf.mxu0
      %v2301 = vadd.f32 0.0, %v2300
      %2302 = vmatmul.bf16.gmra.mxu0 %v1944
      %v2303 = vpop.f32.mrf.mxu0
      %v2304 = vadd.f32 0.0, %v2303
      %v2305 = vpop.f32.mrf.mxu0
      %v2306 = vadd.f32 0.0, %v2305
      %2307 = vmatmul.bf16.gmra.mxu0 %v1947
      %v2308 = vpop.f32.mrf.mxu0
      %v2309 = vadd.f32 0.0, %v2308
      %v2310 = vpop.f32.mrf.mxu0
      %v2311 = vadd.f32 0.0, %v2310
      %2312 = vmatmul.bf16.gmra.mxu0 %v1950
      %v2313 = vpop.f32.mrf.mxu0
      %v2314 = vadd.f32 0.0, %v2313
      %v2315 = vpop.f32.mrf.mxu0
      %v2316 = vadd.f32 0.0, %v2315
      %2317 = vmatmul.bf16.gmra.mxu0 %v1953
      %v2318 = vpop.f32.mrf.mxu0
      %v2319 = vadd.f32 0.0, %v2318
      %v2320 = vpop.f32.mrf.mxu0
      %v2321 = vadd.f32 0.0, %v2320
      %2322 = vmatmul.bf16.gmra.mxu0 %v1956
      %v2323 = vpop.f32.mrf.mxu0
      %v2324 = vadd.f32 0.0, %v2323
      %v2325 = vpop.f32.mrf.mxu0
      %v2326 = vadd.f32 0.0, %v2325
      %2327 = vmatmul.bf16.gmra.mxu0 %v1959
      %v2328 = vpop.f32.mrf.mxu0
      %v2329 = vadd.f32 0.0, %v2328
      %v2330 = vpop.f32.mrf.mxu0
      %v2331 = vadd.f32 0.0, %v2330
      %2332 = vmatmul.bf16.gmra.mxu0 %v1962
      %v2333 = vpop.f32.mrf.mxu0
      %v2334 = vadd.f32 0.0, %v2333
      %v2335 = vpop.f32.mrf.mxu0
      %v2336 = vadd.f32 0.0, %v2335
      %2337 = vmatmul.bf16.gmra.mxu0 %v1965
      %v2338 = vpop.f32.mrf.mxu0
      %v2339 = vadd.f32 0.0, %v2338
      %v2340 = vpop.f32.mrf.mxu0
      %v2341 = vadd.f32 0.0, %v2340
      %2342 = vmatmul.bf16.gmra.mxu0 %v1968
      %v2343 = vpop.f32.mrf.mxu0
      %v2344 = vadd.f32 0.0, %v2343
      %v2345 = vpop.f32.mrf.mxu0
      %v2346 = vadd.f32 0.0, %v2345
      %2347 = vmatmul.bf16.gmra.mxu0 %v1971
      %v2348 = vpop.f32.mrf.mxu0
      %v2349 = vadd.f32 0.0, %v2348
      %v2350 = vpop.f32.mrf.mxu0
      %v2351 = vadd.f32 0.0, %v2350
      %2352 = vmatmul.bf16.gmra.mxu0 %v1974
      %v2353 = vpop.f32.mrf.mxu0
      %v2354 = vadd.f32 0.0, %v2353
      %v2355 = vpop.f32.mrf.mxu0
      %v2356 = vadd.f32 0.0, %v2355
      %2357 = vmatmul.bf16.gmra.mxu0 %v1977
      %v2358 = vpop.f32.mrf.mxu0
      %v2359 = vadd.f32 0.0, %v2358
      %v2360 = vpop.f32.mrf.mxu0
      %v2361 = vadd.f32 0.0, %v2360
      %2362 = vmatmul.bf16.gmra.mxu0 %v1980
      %v2363 = vpop.f32.mrf.mxu0
      %v2364 = vadd.f32 0.0, %v2363
      %v2365 = vpop.f32.mrf.mxu0
      %v2366 = vadd.f32 0.0, %v2365
      %2367 = vmatmul.bf16.gmra.mxu0 %v1983
      %v2368 = vpop.f32.mrf.mxu0
      %v2369 = vadd.f32 0.0, %v2368
      %v2370 = vpop.f32.mrf.mxu0
      %v2371 = vadd.f32 0.0, %v2370
      %2372 = vmatmul.bf16.gmra.mxu0 %v1986
      %v2373 = vpop.f32.mrf.mxu0
      %v2374 = vadd.f32 0.0, %v2373
      %v2375 = vpop.f32.mrf.mxu0
      %v2376 = vadd.f32 0.0, %v2375
      %2377 = vmatmul.bf16.gmra.mxu0 %v1989
      %v2378 = vpop.f32.mrf.mxu0
      %v2379 = vadd.f32 0.0, %v2378
      %v2380 = vpop.f32.mrf.mxu0
      %v2381 = vadd.f32 0.0, %v2380
      %2382 = vmatmul.bf16.gmra.mxu0 %v1992
      %v2383 = vpop.f32.mrf.mxu0
      %v2384 = vadd.f32 0.0, %v2383
      %v2385 = vpop.f32.mrf.mxu0
      %v2386 = vadd.f32 0.0, %v2385
      %2387 = vmatmul.bf16.gmra.mxu0 %v1995
      %v2388 = vpop.f32.mrf.mxu0
      %v2389 = vadd.f32 0.0, %v2388
      %v2390 = vpop.f32.mrf.mxu0
      %v2391 = vadd.f32 0.0, %v2390
      %2392 = vmatmul.bf16.gmra.mxu0 %v1998
      %v2393 = vpop.f32.mrf.mxu0
      %v2394 = vadd.f32 0.0, %v2393
      %v2395 = vpop.f32.mrf.mxu0
      %v2396 = vadd.f32 0.0, %v2395
      %2397 = vmatmul.bf16.gmra.mxu0 %v2001
      %v2398 = vpop.f32.mrf.mxu0
      %v2399 = vadd.f32 0.0, %v2398
      %v2400 = vpop.f32.mrf.mxu0
      %v2401 = vadd.f32 0.0, %v2400
      %2402 = vmatmul.bf16.gmra.mxu0 %v2004
      %v2403 = vpop.f32.mrf.mxu0
      %v2404 = vadd.f32 0.0, %v2403
      %v2405 = vpop.f32.mrf.mxu0
      %v2406 = vadd.f32 0.0, %v2405
      %2407 = vmatmul.bf16.gmra.mxu0 %v2007
      %v2408 = vpop.f32.mrf.mxu0
      %v2409 = vadd.f32 0.0, %v2408
      %v2410 = vpop.f32.mrf.mxu0
      %v2411 = vadd.f32 0.0, %v2410
      %2412 = vmatmul.bf16.gmra.mxu0 %v2010
      %v2413 = vpop.f32.mrf.mxu0
      %v2414 = vadd.f32 0.0, %v2413
      %v2415 = vpop.f32.mrf.mxu0
      %v2416 = vadd.f32 0.0, %v2415
      %2417 = vmatmul.bf16.gmra.mxu0 %v2013
      %v2418 = vpop.f32.mrf.mxu0
      %v2419 = vadd.f32 0.0, %v2418
      %v2420 = vpop.f32.mrf.mxu0
      %v2421 = vadd.f32 0.0, %v2420
      %2422 = vmatmul.bf16.gmra.mxu0 %v2016
      %v2423 = vpop.f32.mrf.mxu0
      %v2424 = vadd.f32 0.0, %v2423
      %v2425 = vpop.f32.mrf.mxu0
      %v2426 = vadd.f32 0.0, %v2425
      %2427 = vdwg.mxu0
      %2428 = vmatpush.bf16.msra.mxu0 %v2226
      %2429 = vmatpush.bf16.msra.mxu0 %v2225
      %2430 = vmatpush.bf16.msra.mxu0 %v2224
      %2431 = vmatpush.bf16.msra.mxu0 %v2223
      %2432 = vmatpush.bf16.msra.mxu0 %v2222
      %2433 = vmatpush.bf16.msra.mxu0 %v2221
      %2434 = vmatpush.bf16.msra.mxu0 %v2220
      %2435 = vmatpush.bf16.msra.mxu0 %v2219
      %2436 = vmatmul.bf16.gmra.mxu0 %v1924
      %v2437 = vpop.f32.mrf.mxu0
      %v2438 = vadd.f32 %v2269, %v2437
      %v2439 = vpop.f32.mrf.mxu0
      %v2440 = vadd.f32 %v2271, %v2439
      %2441 = vmatmul.bf16.gmra.mxu0 %v1927
      %v2442 = vpop.f32.mrf.mxu0
      %v2443 = vadd.f32 %v2274, %v2442
      %v2444 = vpop.f32.mrf.mxu0
      %v2445 = vadd.f32 %v2276, %v2444
      %2446 = vmatmul.bf16.gmra.mxu0 %v1930
      %v2447 = vpop.f32.mrf.mxu0
      %v2448 = vadd.f32 %v2279, %v2447
      %v2449 = vpop.f32.mrf.mxu0
      %v2450 = vadd.f32 %v2281, %v2449
      %2451 = vmatmul.bf16.gmra.mxu0 %v1933
      %v2452 = vpop.f32.mrf.mxu0
      %v2453 = vadd.f32 %v2284, %v2452
      %v2454 = vpop.f32.mrf.mxu0
      %v2455 = vadd.f32 %v2286, %v2454
      %2456 = vmatmul.bf16.gmra.mxu0 %v1936
      %v2457 = vpop.f32.mrf.mxu0
      %v2458 = vadd.f32 %v2289, %v2457
      %v2459 = vpop.f32.mrf.mxu0
      %v2460 = vadd.f32 %v2291, %v2459
      %2461 = vmatmul.bf16.gmra.mxu0 %v1939
      %v2462 = vpop.f32.mrf.mxu0
      %v2463 = vadd.f32 %v2294, %v2462
      %v2464 = vpop.f32.mrf.mxu0
      %v2465 = vadd.f32 %v2296, %v2464
      %2466 = vmatmul.bf16.gmra.mxu0 %v1942
      %v2467 = vpop.f32.mrf.mxu0
      %v2468 = vadd.f32 %v2299, %v2467
      %v2469 = vpop.f32.mrf.mxu0
      %v2470 = vadd.f32 %v2301, %v2469
      %2471 = vmatmul.bf16.gmra.mxu0 %v1945
      %v2472 = vpop.f32.mrf.mxu0
      %v2473 = vadd.f32 %v2304, %v2472
      %v2474 = vpop.f32.mrf.mxu0
      %v2475 = vadd.f32 %v2306, %v2474
      %2476 = vmatmul.bf16.gmra.mxu0 %v1948
      %v2477 = vpop.f32.mrf.mxu0
      %v2478 = vadd.f32 %v2309, %v2477
      %v2479 = vpop.f32.mrf.mxu0
      %v2480 = vadd.f32 %v2311, %v2479
      %2481 = vmatmul.bf16.gmra.mxu0 %v1951
      %v2482 = vpop.f32.mrf.mxu0
      %v2483 = vadd.f32 %v2314, %v2482
      %v2484 = vpop.f32.mrf.mxu0
      %v2485 = vadd.f32 %v2316, %v2484
      %2486 = vmatmul.bf16.gmra.mxu0 %v1954
      %v2487 = vpop.f32.mrf.mxu0
      %v2488 = vadd.f32 %v2319, %v2487
      %v2489 = vpop.f32.mrf.mxu0
      %v2490 = vadd.f32 %v2321, %v2489
      %2491 = vmatmul.bf16.gmra.mxu0 %v1957
      %v2492 = vpop.f32.mrf.mxu0
      %v2493 = vadd.f32 %v2324, %v2492
      %v2494 = vpop.f32.mrf.mxu0
      %v2495 = vadd.f32 %v2326, %v2494
      %2496 = vmatmul.bf16.gmra.mxu0 %v1960
      %v2497 = vpop.f32.mrf.mxu0
      %v2498 = vadd.f32 %v2329, %v2497
      %v2499 = vpop.f32.mrf.mxu0
      %v2500 = vadd.f32 %v2331, %v2499
      %2501 = vmatmul.bf16.gmra.mxu0 %v1963
      %v2502 = vpop.f32.mrf.mxu0
      %v2503 = vadd.f32 %v2334, %v2502
      %v2504 = vpop.f32.mrf.mxu0
      %v2505 = vadd.f32 %v2336, %v2504
      %2506 = vmatmul.bf16.gmra.mxu0 %v1966
      %v2507 = vpop.f32.mrf.mxu0
      %v2508 = vadd.f32 %v2339, %v2507
      %v2509 = vpop.f32.mrf.mxu0
      %v2510 = vadd.f32 %v2341, %v2509
      %2511 = vmatmul.bf16.gmra.mxu0 %v1969
      %v2512 = vpop.f32.mrf.mxu0
      %v2513 = vadd.f32 %v2344, %v2512
      %v2514 = vpop.f32.mrf.mxu0
      %v2515 = vadd.f32 %v2346, %v2514
      %2516 = vmatmul.bf16.gmra.mxu0 %v1972
      %v2517 = vpop.f32.mrf.mxu0
      %v2518 = vadd.f32 %v2349, %v2517
      %v2519 = vpop.f32.mrf.mxu0
      %v2520 = vadd.f32 %v2351, %v2519
      %2521 = vmatmul.bf16.gmra.mxu0 %v1975
      %v2522 = vpop.f32.mrf.mxu0
      %v2523 = vadd.f32 %v2354, %v2522
      %v2524 = vpop.f32.mrf.mxu0
      %v2525 = vadd.f32 %v2356, %v2524
      %2526 = vmatmul.bf16.gmra.mxu0 %v1978
      %v2527 = vpop.f32.mrf.mxu0
      %v2528 = vadd.f32 %v2359, %v2527
      %v2529 = vpop.f32.mrf.mxu0
      %v2530 = vadd.f32 %v2361, %v2529
      %2531 = vmatmul.bf16.gmra.mxu0 %v1981
      %v2532 = vpop.f32.mrf.mxu0
      %v2533 = vadd.f32 %v2364, %v2532
      %v2534 = vpop.f32.mrf.mxu0
      %v2535 = vadd.f32 %v2366, %v2534
      %2536 = vmatmul.bf16.gmra.mxu0 %v1984
      %v2537 = vpop.f32.mrf.mxu0
      %v2538 = vadd.f32 %v2369, %v2537
      %v2539 = vpop.f32.mrf.mxu0
      %v2540 = vadd.f32 %v2371, %v2539
      %2541 = vmatmul.bf16.gmra.mxu0 %v1987
      %v2542 = vpop.f32.mrf.mxu0
      %v2543 = vadd.f32 %v2374, %v2542
      %v2544 = vpop.f32.mrf.mxu0
      %v2545 = vadd.f32 %v2376, %v2544
      %2546 = vmatmul.bf16.gmra.mxu0 %v1990
      %v2547 = vpop.f32.mrf.mxu0
      %v2548 = vadd.f32 %v2379, %v2547
      %v2549 = vpop.f32.mrf.mxu0
      %v2550 = vadd.f32 %v2381, %v2549
      %2551 = vmatmul.bf16.gmra.mxu0 %v1993
      %v2552 = vpop.f32.mrf.mxu0
      %v2553 = vadd.f32 %v2384, %v2552
      %v2554 = vpop.f32.mrf.mxu0
      %v2555 = vadd.f32 %v2386, %v2554
      %2556 = vmatmul.bf16.gmra.mxu0 %v1996
      %v2557 = vpop.f32.mrf.mxu0
      %v2558 = vadd.f32 %v2389, %v2557
      %v2559 = vpop.f32.mrf.mxu0
      %v2560 = vadd.f32 %v2391, %v2559
      %2561 = vmatmul.bf16.gmra.mxu0 %v1999
      %v2562 = vpop.f32.mrf.mxu0
      %v2563 = vadd.f32 %v2394, %v2562
      %v2564 = vpop.f32.mrf.mxu0
      %v2565 = vadd.f32 %v2396, %v2564
      %2566 = vmatmul.bf16.gmra.mxu0 %v2002
      %v2567 = vpop.f32.mrf.mxu0
      %v2568 = vadd.f32 %v2399, %v2567
      %v2569 = vpop.f32.mrf.mxu0
      %v2570 = vadd.f32 %v2401, %v2569
      %2571 = vmatmul.bf16.gmra.mxu0 %v2005
      %v2572 = vpop.f32.mrf.mxu0
      %v2573 = vadd.f32 %v2404, %v2572
      %v2574 = vpop.f32.mrf.mxu0
      %v2575 = vadd.f32 %v2406, %v2574
      %2576 = vmatmul.bf16.gmra.mxu0 %v2008
      %v2577 = vpop.f32.mrf.mxu0
      %v2578 = vadd.f32 %v2409, %v2577
      %v2579 = vpop.f32.mrf.mxu0
      %v2580 = vadd.f32 %v2411, %v2579
      %2581 = vmatmul.bf16.gmra.mxu0 %v2011
      %v2582 = vpop.f32.mrf.mxu0
      %v2583 = vadd.f32 %v2414, %v2582
      %v2584 = vpop.f32.mrf.mxu0
      %v2585 = vadd.f32 %v2416, %v2584
      %2586 = vmatmul.bf16.gmra.mxu0 %v2014
      %v2587 = vpop.f32.mrf.mxu0
      %v2588 = vadd.f32 %v2419, %v2587
      %v2589 = vpop.f32.mrf.mxu0
      %v2590 = vadd.f32 %v2421, %v2589
      %2591 = vmatmul.bf16.gmra.mxu0 %v2017
      %v2592 = vpop.f32.mrf.mxu0
      %v2593 = vadd.f32 %v2424, %v2592
      %v2594 = vpop.f32.mrf.mxu0
      %v2595 = vadd.f32 %v2426, %v2594
      %2596 = vdwg.mxu0
      %2597 = vmatpush.bf16.msra.mxu0 %v2234
      %2598 = vmatpush.bf16.msra.mxu0 %v2233
      %2599 = vmatpush.bf16.msra.mxu0 %v2232
      %2600 = vmatpush.bf16.msra.mxu0 %v2231
      %2601 = vmatpush.bf16.msra.mxu0 %v2230
      %2602 = vmatpush.bf16.msra.mxu0 %v2229
      %2603 = vmatpush.bf16.msra.mxu0 %v2228
      %2604 = vmatpush.bf16.msra.mxu0 %v2227
      %2605 = vmatmul.bf16.gmra.mxu0 %v1925
      %v2606 = vpop.f32.mrf.mxu0
      %v2607 = vadd.f32 %v2438, %v2606
      %v2608 = vpop.f32.mrf.mxu0
      %v2609 = vadd.f32 %v2440, %v2608
      %2610 = vmatmul.bf16.gmra.mxu0 %v1928
      %v2611 = vpop.f32.mrf.mxu0
      %v2612 = vadd.f32 %v2443, %v2611
      %v2613 = vpop.f32.mrf.mxu0
      %v2614 = vadd.f32 %v2445, %v2613
      %2615 = vmatmul.bf16.gmra.mxu0 %v1931
      %v2616 = vpop.f32.mrf.mxu0
      %v2617 = vadd.f32 %v2448, %v2616
      %v2618 = vpop.f32.mrf.mxu0
      %v2619 = vadd.f32 %v2450, %v2618
      %2620 = vmatmul.bf16.gmra.mxu0 %v1934
      %v2621 = vpop.f32.mrf.mxu0
      %v2622 = vadd.f32 %v2453, %v2621
      %v2623 = vpop.f32.mrf.mxu0
      %v2624 = vadd.f32 %v2455, %v2623
      %2625 = vmatmul.bf16.gmra.mxu0 %v1937
      %v2626 = vpop.f32.mrf.mxu0
      %v2627 = vadd.f32 %v2458, %v2626
      %v2628 = vpop.f32.mrf.mxu0
      %v2629 = vadd.f32 %v2460, %v2628
      %2630 = vmatmul.bf16.gmra.mxu0 %v1940
      %v2631 = vpop.f32.mrf.mxu0
      %v2632 = vadd.f32 %v2463, %v2631
      %v2633 = vpop.f32.mrf.mxu0
      %v2634 = vadd.f32 %v2465, %v2633
      %2635 = vmatmul.bf16.gmra.mxu0 %v1943
      %v2636 = vpop.f32.mrf.mxu0
      %v2637 = vadd.f32 %v2468, %v2636
      %v2638 = vpop.f32.mrf.mxu0
      %v2639 = vadd.f32 %v2470, %v2638
      %2640 = vmatmul.bf16.gmra.mxu0 %v1946
      %v2641 = vpop.f32.mrf.mxu0
      %v2642 = vadd.f32 %v2473, %v2641
      %v2643 = vpop.f32.mrf.mxu0
      %v2644 = vadd.f32 %v2475, %v2643
      %2645 = vmatmul.bf16.gmra.mxu0 %v1949
      %v2646 = vpop.f32.mrf.mxu0
      %v2647 = vadd.f32 %v2478, %v2646
      %v2648 = vpop.f32.mrf.mxu0
      %v2649 = vadd.f32 %v2480, %v2648
      %2650 = vmatmul.bf16.gmra.mxu0 %v1952
      %v2651 = vpop.f32.mrf.mxu0
      %v2652 = vadd.f32 %v2483, %v2651
      %v2653 = vpop.f32.mrf.mxu0
      %v2654 = vadd.f32 %v2485, %v2653
      %2655 = vmatmul.bf16.gmra.mxu0 %v1955
      %v2656 = vpop.f32.mrf.mxu0
      %v2657 = vadd.f32 %v2488, %v2656
      %v2658 = vpop.f32.mrf.mxu0
      %v2659 = vadd.f32 %v2490, %v2658
      %2660 = vmatmul.bf16.gmra.mxu0 %v1958
      %v2661 = vpop.f32.mrf.mxu0
      %v2662 = vadd.f32 %v2493, %v2661
      %v2663 = vpop.f32.mrf.mxu0
      %v2664 = vadd.f32 %v2495, %v2663
      %2665 = vmatmul.bf16.gmra.mxu0 %v1961
      %v2666 = vpop.f32.mrf.mxu0
      %v2667 = vadd.f32 %v2498, %v2666
      %v2668 = vpop.f32.mrf.mxu0
      %v2669 = vadd.f32 %v2500, %v2668
      %2670 = vmatmul.bf16.gmra.mxu0 %v1964
      %v2671 = vpop.f32.mrf.mxu0
      %v2672 = vadd.f32 %v2503, %v2671
      %v2673 = vpop.f32.mrf.mxu0
      %v2674 = vadd.f32 %v2505, %v2673
      %2675 = vmatmul.bf16.gmra.mxu0 %v1967
      %v2676 = vpop.f32.mrf.mxu0
      %v2677 = vadd.f32 %v2508, %v2676
      %v2678 = vpop.f32.mrf.mxu0
      %v2679 = vadd.f32 %v2510, %v2678
      %2680 = vmatmul.bf16.gmra.mxu0 %v1970
      %v2681 = vpop.f32.mrf.mxu0
      %v2682 = vadd.f32 %v2513, %v2681
      %v2683 = vpop.f32.mrf.mxu0
      %v2684 = vadd.f32 %v2515, %v2683
      %2685 = vmatmul.bf16.gmra.mxu0 %v1973
      %v2686 = vpop.f32.mrf.mxu0
      %v2687 = vadd.f32 %v2518, %v2686
      %v2688 = vpop.f32.mrf.mxu0
      %v2689 = vadd.f32 %v2520, %v2688
      %2690 = vmatmul.bf16.gmra.mxu0 %v1976
      %v2691 = vpop.f32.mrf.mxu0
      %v2692 = vadd.f32 %v2523, %v2691
      %v2693 = vpop.f32.mrf.mxu0
      %v2694 = vadd.f32 %v2525, %v2693
      %2695 = vmatmul.bf16.gmra.mxu0 %v1979
      %v2696 = vpop.f32.mrf.mxu0
      %v2697 = vadd.f32 %v2528, %v2696
      %v2698 = vpop.f32.mrf.mxu0
      %v2699 = vadd.f32 %v2530, %v2698
      %2700 = vmatmul.bf16.gmra.mxu0 %v1982
      %v2701 = vpop.f32.mrf.mxu0
      %v2702 = vadd.f32 %v2533, %v2701
      %v2703 = vpop.f32.mrf.mxu0
      %v2704 = vadd.f32 %v2535, %v2703
      %2705 = vmatmul.bf16.gmra.mxu0 %v1985
      %v2706 = vpop.f32.mrf.mxu0
      %v2707 = vadd.f32 %v2538, %v2706
      %v2708 = vpop.f32.mrf.mxu0
      %v2709 = vadd.f32 %v2540, %v2708
      %2710 = vmatmul.bf16.gmra.mxu0 %v1988
      %v2711 = vpop.f32.mrf.mxu0
      %v2712 = vadd.f32 %v2543, %v2711
      %v2713 = vpop.f32.mrf.mxu0
      %v2714 = vadd.f32 %v2545, %v2713
      %2715 = vmatmul.bf16.gmra.mxu0 %v1991
      %v2716 = vpop.f32.mrf.mxu0
      %v2717 = vadd.f32 %v2548, %v2716
      %v2718 = vpop.f32.mrf.mxu0
      %v2719 = vadd.f32 %v2550, %v2718
      %2720 = vmatmul.bf16.gmra.mxu0 %v1994
      %v2721 = vpop.f32.mrf.mxu0
      %v2722 = vadd.f32 %v2553, %v2721
      %v2723 = vpop.f32.mrf.mxu0
      %v2724 = vadd.f32 %v2555, %v2723
      %2725 = vmatmul.bf16.gmra.mxu0 %v1997
      %v2726 = vpop.f32.mrf.mxu0
      %v2727 = vadd.f32 %v2558, %v2726
      %v2728 = vpop.f32.mrf.mxu0
      %v2729 = vadd.f32 %v2560, %v2728
      %2730 = vmatmul.bf16.gmra.mxu0 %v2000
      %v2731 = vpop.f32.mrf.mxu0
      %v2732 = vadd.f32 %v2563, %v2731
      %v2733 = vpop.f32.mrf.mxu0
      %v2734 = vadd.f32 %v2565, %v2733
      %2735 = vmatmul.bf16.gmra.mxu0 %v2003
      %v2736 = vpop.f32.mrf.mxu0
      %v2737 = vadd.f32 %v2568, %v2736
      %v2738 = vpop.f32.mrf.mxu0
      %v2739 = vadd.f32 %v2570, %v2738
      %2740 = vmatmul.bf16.gmra.mxu0 %v2006
      %v2741 = vpop.f32.mrf.mxu0
      %v2742 = vadd.f32 %v2573, %v2741
      %v2743 = vpop.f32.mrf.mxu0
      %v2744 = vadd.f32 %v2575, %v2743
      %2745 = vmatmul.bf16.gmra.mxu0 %v2009
      %v2746 = vpop.f32.mrf.mxu0
      %v2747 = vadd.f32 %v2578, %v2746
      %v2748 = vpop.f32.mrf.mxu0
      %v2749 = vadd.f32 %v2580, %v2748
      %2750 = vmatmul.bf16.gmra.mxu0 %v2012
      %v2751 = vpop.f32.mrf.mxu0
      %v2752 = vadd.f32 %v2583, %v2751
      %v2753 = vpop.f32.mrf.mxu0
      %v2754 = vadd.f32 %v2585, %v2753
      %2755 = vmatmul.bf16.gmra.mxu0 %v2015
      %v2756 = vpop.f32.mrf.mxu0
      %v2757 = vadd.f32 %v2588, %v2756
      %v2758 = vpop.f32.mrf.mxu0
      %v2759 = vadd.f32 %v2590, %v2758
      %2760 = vmatmul.bf16.gmra.mxu0 %v2018
      %v2761 = vpop.f32.mrf.mxu0
      %v2762 = vadd.f32 %v2593, %v2761
      %v2763 = vpop.f32.mrf.mxu0
      %v2764 = vadd.f32 %v2595, %v2763
      %2765 = vdwg.mxu0
      %v2766 = vpack.c.b16 %v584, %v582
      %v2767 = vpack.c.b16 %v1684, %v1682
      %v2768 = vpack.c.b16 %v1685, %v1683
      %v2769 = vpack.c.b16 %v588, %v586
      %v2770 = vpack.c.b16 %v1688, %v1686
      %v2771 = vpack.c.b16 %v1689, %v1687
      %v2772 = vpack.c.b16 %v592, %v590
      %v2773 = vpack.c.b16 %v1692, %v1690
      %v2774 = vpack.c.b16 %v1693, %v1691
      %v2775 = vpack.c.b16 %v596, %v594
      %v2776 = vpack.c.b16 %v1696, %v1694
      %v2777 = vpack.c.b16 %v1697, %v1695
      %v2778 = vpack.c.b16 %v604, %v602
      %v2779 = vpack.c.b16 %v1700, %v1698
      %v2780 = vpack.c.b16 %v1701, %v1699
      %v2781 = vpack.c.b16 %v608, %v606
      %v2782 = vpack.c.b16 %v1704, %v1702
      %v2783 = vpack.c.b16 %v1705, %v1703
      %v2784 = vpack.c.b16 %v612, %v610
      %v2785 = vpack.c.b16 %v1708, %v1706
      %v2786 = vpack.c.b16 %v1709, %v1707
      %v2787 = vpack.c.b16 %v616, %v614
      %v2788 = vpack.c.b16 %v1712, %v1710
      %v2789 = vpack.c.b16 %v1713, %v1711
      %v2790 = vpack.c.b16 %v624, %v622
      %v2791 = vpack.c.b16 %v1716, %v1714
      %v2792 = vpack.c.b16 %v1717, %v1715
      %v2793 = vpack.c.b16 %v628, %v626
      %v2794 = vpack.c.b16 %v1720, %v1718
      %v2795 = vpack.c.b16 %v1721, %v1719
      %v2796 = vpack.c.b16 %v632, %v630
      %v2797 = vpack.c.b16 %v1724, %v1722
      %v2798 = vpack.c.b16 %v1725, %v1723
      %v2799 = vpack.c.b16 %v636, %v634
      %v2800 = vpack.c.b16 %v1728, %v1726
      %v2801 = vpack.c.b16 %v1729, %v1727
      %v2802 = vpack.c.b16 %v644, %v642
      %v2803 = vpack.c.b16 %v1732, %v1730
      %v2804 = vpack.c.b16 %v1733, %v1731
      %v2805 = vpack.c.b16 %v648, %v646
      %v2806 = vpack.c.b16 %v1736, %v1734
      %v2807 = vpack.c.b16 %v1737, %v1735
      %v2808 = vpack.c.b16 %v652, %v650
      %v2809 = vpack.c.b16 %v1740, %v1738
      %v2810 = vpack.c.b16 %v1741, %v1739
      %v2811 = vpack.c.b16 %v656, %v654
      %v2812 = vpack.c.b16 %v1744, %v1742
      %v2813 = vpack.c.b16 %v1745, %v1743
      %v2814 = vpack.c.b16 %v664, %v662
      %v2815 = vpack.c.b16 %v1748, %v1746
      %v2816 = vpack.c.b16 %v1749, %v1747
      %v2817 = vpack.c.b16 %v668, %v666
      %v2818 = vpack.c.b16 %v1752, %v1750
      %v2819 = vpack.c.b16 %v1753, %v1751
      %v2820 = vpack.c.b16 %v672, %v670
      %v2821 = vpack.c.b16 %v1756, %v1754
      %v2822 = vpack.c.b16 %v1757, %v1755
      %v2823 = vpack.c.b16 %v676, %v674
      %v2824 = vpack.c.b16 %v1760, %v1758
      %v2825 = vpack.c.b16 %v1761, %v1759
      %v2826 = vpack.c.b16 %v684, %v682
      %v2827 = vpack.c.b16 %v1764, %v1762
      %v2828 = vpack.c.b16 %v1765, %v1763
      %v2829 = vpack.c.b16 %v688, %v686
      %v2830 = vpack.c.b16 %v1768, %v1766
      %v2831 = vpack.c.b16 %v1769, %v1767
      %v2832 = vpack.c.b16 %v692, %v690
      %v2833 = vpack.c.b16 %v1772, %v1770
      %v2834 = vpack.c.b16 %v1773, %v1771
      %v2835 = vpack.c.b16 %v696, %v694
      %v2836 = vpack.c.b16 %v1776, %v1774
      %v2837 = vpack.c.b16 %v1777, %v1775
      %v2838 = vpack.c.b16 %v704, %v702
      %v2839 = vpack.c.b16 %v1780, %v1778
      %v2840 = vpack.c.b16 %v1781, %v1779
      %v2841 = vpack.c.b16 %v708, %v706
      %v2842 = vpack.c.b16 %v1784, %v1782
      %v2843 = vpack.c.b16 %v1785, %v1783
      %v2844 = vpack.c.b16 %v712, %v710
      %v2845 = vpack.c.b16 %v1788, %v1786
      %v2846 = vpack.c.b16 %v1789, %v1787
      %v2847 = vpack.c.b16 %v716, %v714
      %v2848 = vpack.c.b16 %v1792, %v1790
      %v2849 = vpack.c.b16 %v1793, %v1791
      %v2850 = vpack.c.b16 %v724, %v722
      %v2851 = vpack.c.b16 %v1796, %v1794
      %v2852 = vpack.c.b16 %v1797, %v1795
      %v2853 = vpack.c.b16 %v728, %v726
      %v2854 = vpack.c.b16 %v1800, %v1798
      %v2855 = vpack.c.b16 %v1801, %v1799
      %v2856 = vpack.c.b16 %v732, %v730
      %v2857 = vpack.c.b16 %v1804, %v1802
      %v2858 = vpack.c.b16 %v1805, %v1803
      %v2859 = vpack.c.b16 %v736, %v734
      %v2860 = vpack.c.b16 %v1808, %v1806
      %v2861 = vpack.c.b16 %v1809, %v1807
      %v3006 = vunpack.c.l.b16 %v1810
      %v3007 = vunpack.c.l.b16 %v1811
      %v3008 = vunpack.c.l.b16 %v1812
      %v3009 = vunpack.c.l.b16 %v1813
      %v3010 = vunpack.c.l.b16 %v1814
      %v3011 = vunpack.c.l.b16 %v1815
      %v3012 = vunpack.c.l.b16 %v1816
      %v3013 = vunpack.c.l.b16 %v1817
      %v3014 = vunpack.c.l.b16 %v1818
      %v3015 = vunpack.c.l.b16 %v1819
      %v3016 = vunpack.c.l.b16 %v1820
      %v3017 = vunpack.c.l.b16 %v1821
      %v3018 = vunpack.c.l.b16 %v1822
      %v3019 = vunpack.c.l.b16 %v1823
      %v3020 = vunpack.c.l.b16 %v1824
      %v3021 = vunpack.c.l.b16 %v1825
      %v3022 = vunpack.c.l.b16 %v1826
      %v3023 = vunpack.c.l.b16 %v1827
      %v3024 = vunpack.c.l.b16 %v1828
      %v3025 = vunpack.c.l.b16 %v1829
      %v3026 = vunpack.c.l.b16 %v1830
      %v3027 = vunpack.c.l.b16 %v1831
      %v3028 = vunpack.c.l.b16 %v1832
      %v3029 = vunpack.c.l.b16 %v1833
      %v3030 = vunpack.c.l.b16 %v1834
      %v3031 = vunpack.c.l.b16 %v1835
      %v3032 = vunpack.c.l.b16 %v1836
      %v3033 = vunpack.c.l.b16 %v1837
      %v3034 = vunpack.c.l.b16 %v1838
      %v3035 = vunpack.c.l.b16 %v1839
      %v3036 = vunpack.c.l.b16 %v1840
      %v3037 = vunpack.c.l.b16 %v1841
      %v3038 = vunpack.c.l.b16 %v1842
      %v3039 = vunpack.c.l.b16 %v1843
      %v3040 = vunpack.c.l.b16 %v1844
      %v3041 = vunpack.c.l.b16 %v1845
      %v3042 = vunpack.c.l.b16 %v1846
      %v3043 = vunpack.c.l.b16 %v1847
      %v3044 = vunpack.c.l.b16 %v1848
      %v3045 = vunpack.c.l.b16 %v1849
      %v3046 = vunpack.c.l.b16 %v1850
      %v3047 = vunpack.c.l.b16 %v1851
      %v3048 = vunpack.c.l.b16 %v1852
      %v3049 = vunpack.c.l.b16 %v1853
      %v3050 = vunpack.c.l.b16 %v1854
      %v3051 = vunpack.c.l.b16 %v1855
      %v3052 = vunpack.c.l.b16 %v1856
      %v3053 = vunpack.c.l.b16 %v1857
      %v3054 = vpack.c.b16 %v3007, %v3006
      %v3055 = vpack.c.b16 %v3009, %v3008
      %v3056 = vpack.c.b16 %v3011, %v3010
      %v3057 = vpack.c.b16 %v3013, %v3012
      %v3058 = vpack.c.b16 %v3015, %v3014
      %v3059 = vpack.c.b16 %v3017, %v3016
      %v3060 = vpack.c.b16 %v3019, %v3018
      %v3061 = vpack.c.b16 %v3021, %v3020
      %v3062 = vpack.c.b16 %v3023, %v3022
      %v3063 = vpack.c.b16 %v3025, %v3024
      %v3064 = vpack.c.b16 %v3027, %v3026
      %v3065 = vpack.c.b16 %v3029, %v3028
      %v3066 = vpack.c.b16 %v3031, %v3030
      %v3067 = vpack.c.b16 %v3033, %v3032
      %v3068 = vpack.c.b16 %v3035, %v3034
      %v3069 = vpack.c.b16 %v3037, %v3036
      %v3070 = vpack.c.b16 %v3039, %v3038
      %v3071 = vpack.c.b16 %v3041, %v3040
      %v3072 = vpack.c.b16 %v3043, %v3042
      %v3073 = vpack.c.b16 %v3045, %v3044
      %v3074 = vpack.c.b16 %v3047, %v3046
      %v3075 = vpack.c.b16 %v3049, %v3048
      %v3076 = vpack.c.b16 %v3051, %v3050
      %v3077 = vpack.c.b16 %v3053, %v3052
      %3102 = vmatpush.bf16.msra.mxu0 %v3061
      %3103 = vmatpush.bf16.msra.mxu0 %v3060
      %3104 = vmatpush.bf16.msra.mxu0 %v3059
      %3105 = vmatpush.bf16.msra.mxu0 %v3058
      %3106 = vmatpush.bf16.msra.mxu0 %v3057
      %3107 = vmatpush.bf16.msra.mxu0 %v3056
      %3108 = vmatpush.bf16.msra.mxu0 %v3055
      %3109 = vmatpush.bf16.msra.mxu0 %v3054
      %3110 = vmatmul.bf16.gmra.mxu0 %v2766
      %v3111 = vpop.f32.mrf.mxu0
      %v3112 = vadd.f32 %v2607, %v3111
      %v3113 = vpop.f32.mrf.mxu0
      %v3114 = vadd.f32 %v2609, %v3113
      %3115 = vmatmul.bf16.gmra.mxu0 %v2769
      %v3116 = vpop.f32.mrf.mxu0
      %v3117 = vadd.f32 %v2612, %v3116
      %v3118 = vpop.f32.mrf.mxu0
      %v3119 = vadd.f32 %v2614, %v3118
      %3120 = vmatmul.bf16.gmra.mxu0 %v2772
      %v3121 = vpop.f32.mrf.mxu0
      %v3122 = vadd.f32 %v2617, %v3121
      %v3123 = vpop.f32.mrf.mxu0
      %v3124 = vadd.f32 %v2619, %v3123
      %3125 = vmatmul.bf16.gmra.mxu0 %v2775
      %v3126 = vpop.f32.mrf.mxu0
      %v3127 = vadd.f32 %v2622, %v3126
      %v3128 = vpop.f32.mrf.mxu0
      %v3129 = vadd.f32 %v2624, %v3128
      %3130 = vmatmul.bf16.gmra.mxu0 %v2778
      %v3131 = vpop.f32.mrf.mxu0
      %v3132 = vadd.f32 %v2627, %v3131
      %v3133 = vpop.f32.mrf.mxu0
      %v3134 = vadd.f32 %v2629, %v3133
      %3135 = vmatmul.bf16.gmra.mxu0 %v2781
      %v3136 = vpop.f32.mrf.mxu0
      %v3137 = vadd.f32 %v2632, %v3136
      %v3138 = vpop.f32.mrf.mxu0
      %v3139 = vadd.f32 %v2634, %v3138
      %3140 = vmatmul.bf16.gmra.mxu0 %v2784
      %v3141 = vpop.f32.mrf.mxu0
      %v3142 = vadd.f32 %v2637, %v3141
      %v3143 = vpop.f32.mrf.mxu0
      %v3144 = vadd.f32 %v2639, %v3143
      %3145 = vmatmul.bf16.gmra.mxu0 %v2787
      %v3146 = vpop.f32.mrf.mxu0
      %v3147 = vadd.f32 %v2642, %v3146
      %v3148 = vpop.f32.mrf.mxu0
      %v3149 = vadd.f32 %v2644, %v3148
      %3150 = vmatmul.bf16.gmra.mxu0 %v2790
      %v3151 = vpop.f32.mrf.mxu0
      %v3152 = vadd.f32 %v2647, %v3151
      %v3153 = vpop.f32.mrf.mxu0
      %v3154 = vadd.f32 %v2649, %v3153
      %3155 = vmatmul.bf16.gmra.mxu0 %v2793
      %v3156 = vpop.f32.mrf.mxu0
      %v3157 = vadd.f32 %v2652, %v3156
      %v3158 = vpop.f32.mrf.mxu0
      %v3159 = vadd.f32 %v2654, %v3158
      %3160 = vmatmul.bf16.gmra.mxu0 %v2796
      %v3161 = vpop.f32.mrf.mxu0
      %v3162 = vadd.f32 %v2657, %v3161
      %v3163 = vpop.f32.mrf.mxu0
      %v3164 = vadd.f32 %v2659, %v3163
      %3165 = vmatmul.bf16.gmra.mxu0 %v2799
      %v3166 = vpop.f32.mrf.mxu0
      %v3167 = vadd.f32 %v2662, %v3166
      %v3168 = vpop.f32.mrf.mxu0
      %v3169 = vadd.f32 %v2664, %v3168
      %3170 = vmatmul.bf16.gmra.mxu0 %v2802
      %v3171 = vpop.f32.mrf.mxu0
      %v3172 = vadd.f32 %v2667, %v3171
      %v3173 = vpop.f32.mrf.mxu0
      %v3174 = vadd.f32 %v2669, %v3173
      %3175 = vmatmul.bf16.gmra.mxu0 %v2805
      %v3176 = vpop.f32.mrf.mxu0
      %v3177 = vadd.f32 %v2672, %v3176
      %v3178 = vpop.f32.mrf.mxu0
      %v3179 = vadd.f32 %v2674, %v3178
      %3180 = vmatmul.bf16.gmra.mxu0 %v2808
      %v3181 = vpop.f32.mrf.mxu0
      %v3182 = vadd.f32 %v2677, %v3181
      %v3183 = vpop.f32.mrf.mxu0
      %v3184 = vadd.f32 %v2679, %v3183
      %3185 = vmatmul.bf16.gmra.mxu0 %v2811
      %v3186 = vpop.f32.mrf.mxu0
      %v3187 = vadd.f32 %v2682, %v3186
      %v3188 = vpop.f32.mrf.mxu0
      %v3189 = vadd.f32 %v2684, %v3188
      %3190 = vmatmul.bf16.gmra.mxu0 %v2814
      %v3191 = vpop.f32.mrf.mxu0
      %v3192 = vadd.f32 %v2687, %v3191
      %v3193 = vpop.f32.mrf.mxu0
      %v3194 = vadd.f32 %v2689, %v3193
      %3195 = vmatmul.bf16.gmra.mxu0 %v2817
      %v3196 = vpop.f32.mrf.mxu0
      %v3197 = vadd.f32 %v2692, %v3196
      %v3198 = vpop.f32.mrf.mxu0
      %v3199 = vadd.f32 %v2694, %v3198
      %3200 = vmatmul.bf16.gmra.mxu0 %v2820
      %v3201 = vpop.f32.mrf.mxu0
      %v3202 = vadd.f32 %v2697, %v3201
      %v3203 = vpop.f32.mrf.mxu0
      %v3204 = vadd.f32 %v2699, %v3203
      %3205 = vmatmul.bf16.gmra.mxu0 %v2823
      %v3206 = vpop.f32.mrf.mxu0
      %v3207 = vadd.f32 %v2702, %v3206
      %v3208 = vpop.f32.mrf.mxu0
      %v3209 = vadd.f32 %v2704, %v3208
      %3210 = vmatmul.bf16.gmra.mxu0 %v2826
      %v3211 = vpop.f32.mrf.mxu0
      %v3212 = vadd.f32 %v2707, %v3211
      %v3213 = vpop.f32.mrf.mxu0
      %v3214 = vadd.f32 %v2709, %v3213
      %3215 = vmatmul.bf16.gmra.mxu0 %v2829
      %v3216 = vpop.f32.mrf.mxu0
      %v3217 = vadd.f32 %v2712, %v3216
      %v3218 = vpop.f32.mrf.mxu0
      %v3219 = vadd.f32 %v2714, %v3218
      %3220 = vmatmul.bf16.gmra.mxu0 %v2832
      %v3221 = vpop.f32.mrf.mxu0
      %v3222 = vadd.f32 %v2717, %v3221
      %v3223 = vpop.f32.mrf.mxu0
      %v3224 = vadd.f32 %v2719, %v3223
      %3225 = vmatmul.bf16.gmra.mxu0 %v2835
      %v3226 = vpop.f32.mrf.mxu0
      %v3227 = vadd.f32 %v2722, %v3226
      %v3228 = vpop.f32.mrf.mxu0
      %v3229 = vadd.f32 %v2724, %v3228
      %3230 = vmatmul.bf16.gmra.mxu0 %v2838
      %v3231 = vpop.f32.mrf.mxu0
      %v3232 = vadd.f32 %v2727, %v3231
      %v3233 = vpop.f32.mrf.mxu0
      %v3234 = vadd.f32 %v2729, %v3233
      %3235 = vmatmul.bf16.gmra.mxu0 %v2841
      %v3236 = vpop.f32.mrf.mxu0
      %v3237 = vadd.f32 %v2732, %v3236
      %v3238 = vpop.f32.mrf.mxu0
      %v3239 = vadd.f32 %v2734, %v3238
      %3240 = vmatmul.bf16.gmra.mxu0 %v2844
      %v3241 = vpop.f32.mrf.mxu0
      %v3242 = vadd.f32 %v2737, %v3241
      %v3243 = vpop.f32.mrf.mxu0
      %v3244 = vadd.f32 %v2739, %v3243
      %3245 = vmatmul.bf16.gmra.mxu0 %v2847
      %v3246 = vpop.f32.mrf.mxu0
      %v3247 = vadd.f32 %v2742, %v3246
      %v3248 = vpop.f32.mrf.mxu0
      %v3249 = vadd.f32 %v2744, %v3248
      %3250 = vmatmul.bf16.gmra.mxu0 %v2850
      %v3251 = vpop.f32.mrf.mxu0
      %v3252 = vadd.f32 %v2747, %v3251
      %v3253 = vpop.f32.mrf.mxu0
      %v3254 = vadd.f32 %v2749, %v3253
      %3255 = vmatmul.bf16.gmra.mxu0 %v2853
      %v3256 = vpop.f32.mrf.mxu0
      %v3257 = vadd.f32 %v2752, %v3256
      %v3258 = vpop.f32.mrf.mxu0
      %v3259 = vadd.f32 %v2754, %v3258
      %3260 = vmatmul.bf16.gmra.mxu0 %v2856
      %v3261 = vpop.f32.mrf.mxu0
      %v3262 = vadd.f32 %v2757, %v3261
      %v3263 = vpop.f32.mrf.mxu0
      %v3264 = vadd.f32 %v2759, %v3263
      %3265 = vmatmul.bf16.gmra.mxu0 %v2859
      %v3266 = vpop.f32.mrf.mxu0
      %v3267 = vadd.f32 %v2762, %v3266
      %v3268 = vpop.f32.mrf.mxu0
      %v3269 = vadd.f32 %v2764, %v3268
      %3270 = vdwg.mxu0
      %3271 = vmatpush.bf16.msra.mxu0 %v3069
      %3272 = vmatpush.bf16.msra.mxu0 %v3068
      %3273 = vmatpush.bf16.msra.mxu0 %v3067
      %3274 = vmatpush.bf16.msra.mxu0 %v3066
      %3275 = vmatpush.bf16.msra.mxu0 %v3065
      %3276 = vmatpush.bf16.msra.mxu0 %v3064
      %3277 = vmatpush.bf16.msra.mxu0 %v3063
      %3278 = vmatpush.bf16.msra.mxu0 %v3062
      %3279 = vmatmul.bf16.gmra.mxu0 %v2767
      %v3280 = vpop.f32.mrf.mxu0
      %v3281 = vadd.f32 %v3112, %v3280
      %v3282 = vpop.f32.mrf.mxu0
      %v3283 = vadd.f32 %v3114, %v3282
      %3284 = vmatmul.bf16.gmra.mxu0 %v2770
      %v3285 = vpop.f32.mrf.mxu0
      %v3286 = vadd.f32 %v3117, %v3285
      %v3287 = vpop.f32.mrf.mxu0
      %v3288 = vadd.f32 %v3119, %v3287
      %3289 = vmatmul.bf16.gmra.mxu0 %v2773
      %v3290 = vpop.f32.mrf.mxu0
      %v3291 = vadd.f32 %v3122, %v3290
      %v3292 = vpop.f32.mrf.mxu0
      %v3293 = vadd.f32 %v3124, %v3292
      %3294 = vmatmul.bf16.gmra.mxu0 %v2776
      %v3295 = vpop.f32.mrf.mxu0
      %v3296 = vadd.f32 %v3127, %v3295
      %v3297 = vpop.f32.mrf.mxu0
      %v3298 = vadd.f32 %v3129, %v3297
      %3299 = vmatmul.bf16.gmra.mxu0 %v2779
      %v3300 = vpop.f32.mrf.mxu0
      %v3301 = vadd.f32 %v3132, %v3300
      %v3302 = vpop.f32.mrf.mxu0
      %v3303 = vadd.f32 %v3134, %v3302
      %3304 = vmatmul.bf16.gmra.mxu0 %v2782
      %v3305 = vpop.f32.mrf.mxu0
      %v3306 = vadd.f32 %v3137, %v3305
      %v3307 = vpop.f32.mrf.mxu0
      %v3308 = vadd.f32 %v3139, %v3307
      %3309 = vmatmul.bf16.gmra.mxu0 %v2785
      %v3310 = vpop.f32.mrf.mxu0
      %v3311 = vadd.f32 %v3142, %v3310
      %v3312 = vpop.f32.mrf.mxu0
      %v3313 = vadd.f32 %v3144, %v3312
      %3314 = vmatmul.bf16.gmra.mxu0 %v2788
      %v3315 = vpop.f32.mrf.mxu0
      %v3316 = vadd.f32 %v3147, %v3315
      %v3317 = vpop.f32.mrf.mxu0
      %v3318 = vadd.f32 %v3149, %v3317
      %3319 = vmatmul.bf16.gmra.mxu0 %v2791
      %v3320 = vpop.f32.mrf.mxu0
      %v3321 = vadd.f32 %v3152, %v3320
      %v3322 = vpop.f32.mrf.mxu0
      %v3323 = vadd.f32 %v3154, %v3322
      %3324 = vmatmul.bf16.gmra.mxu0 %v2794
      %v3325 = vpop.f32.mrf.mxu0
      %v3326 = vadd.f32 %v3157, %v3325
      %v3327 = vpop.f32.mrf.mxu0
      %v3328 = vadd.f32 %v3159, %v3327
      %3329 = vmatmul.bf16.gmra.mxu0 %v2797
      %v3330 = vpop.f32.mrf.mxu0
      %v3331 = vadd.f32 %v3162, %v3330
      %v3332 = vpop.f32.mrf.mxu0
      %v3333 = vadd.f32 %v3164, %v3332
      %3334 = vmatmul.bf16.gmra.mxu0 %v2800
      %v3335 = vpop.f32.mrf.mxu0
      %v3336 = vadd.f32 %v3167, %v3335
      %v3337 = vpop.f32.mrf.mxu0
      %v3338 = vadd.f32 %v3169, %v3337
      %3339 = vmatmul.bf16.gmra.mxu0 %v2803
      %v3340 = vpop.f32.mrf.mxu0
      %v3341 = vadd.f32 %v3172, %v3340
      %v3342 = vpop.f32.mrf.mxu0
      %v3343 = vadd.f32 %v3174, %v3342
      %3344 = vmatmul.bf16.gmra.mxu0 %v2806
      %v3345 = vpop.f32.mrf.mxu0
      %v3346 = vadd.f32 %v3177, %v3345
      %v3347 = vpop.f32.mrf.mxu0
      %v3348 = vadd.f32 %v3179, %v3347
      %3349 = vmatmul.bf16.gmra.mxu0 %v2809
      %v3350 = vpop.f32.mrf.mxu0
      %v3351 = vadd.f32 %v3182, %v3350
      %v3352 = vpop.f32.mrf.mxu0
      %v3353 = vadd.f32 %v3184, %v3352
      %3354 = vmatmul.bf16.gmra.mxu0 %v2812
      %v3355 = vpop.f32.mrf.mxu0
      %v3356 = vadd.f32 %v3187, %v3355
      %v3357 = vpop.f32.mrf.mxu0
      %v3358 = vadd.f32 %v3189, %v3357
      %3359 = vmatmul.bf16.gmra.mxu0 %v2815
      %v3360 = vpop.f32.mrf.mxu0
      %v3361 = vadd.f32 %v3192, %v3360
      %v3362 = vpop.f32.mrf.mxu0
      %v3363 = vadd.f32 %v3194, %v3362
      %3364 = vmatmul.bf16.gmra.mxu0 %v2818
      %v3365 = vpop.f32.mrf.mxu0
      %v3366 = vadd.f32 %v3197, %v3365
      %v3367 = vpop.f32.mrf.mxu0
      %v3368 = vadd.f32 %v3199, %v3367
      %3369 = vmatmul.bf16.gmra.mxu0 %v2821
      %v3370 = vpop.f32.mrf.mxu0
      %v3371 = vadd.f32 %v3202, %v3370
      %v3372 = vpop.f32.mrf.mxu0
      %v3373 = vadd.f32 %v3204, %v3372
      %3374 = vmatmul.bf16.gmra.mxu0 %v2824
      %v3375 = vpop.f32.mrf.mxu0
      %v3376 = vadd.f32 %v3207, %v3375
      %v3377 = vpop.f32.mrf.mxu0
      %v3378 = vadd.f32 %v3209, %v3377
      %3379 = vmatmul.bf16.gmra.mxu0 %v2827
      %v3380 = vpop.f32.mrf.mxu0
      %v3381 = vadd.f32 %v3212, %v3380
      %v3382 = vpop.f32.mrf.mxu0
      %v3383 = vadd.f32 %v3214, %v3382
      %3384 = vmatmul.bf16.gmra.mxu0 %v2830
      %v3385 = vpop.f32.mrf.mxu0
      %v3386 = vadd.f32 %v3217, %v3385
      %v3387 = vpop.f32.mrf.mxu0
      %v3388 = vadd.f32 %v3219, %v3387
      %3389 = vmatmul.bf16.gmra.mxu0 %v2833
      %v3390 = vpop.f32.mrf.mxu0
      %v3391 = vadd.f32 %v3222, %v3390
      %v3392 = vpop.f32.mrf.mxu0
      %v3393 = vadd.f32 %v3224, %v3392
      %3394 = vmatmul.bf16.gmra.mxu0 %v2836
      %v3395 = vpop.f32.mrf.mxu0
      %v3396 = vadd.f32 %v3227, %v3395
      %v3397 = vpop.f32.mrf.mxu0
      %v3398 = vadd.f32 %v3229, %v3397
      %3399 = vmatmul.bf16.gmra.mxu0 %v2839
      %v3400 = vpop.f32.mrf.mxu0
      %v3401 = vadd.f32 %v3232, %v3400
      %v3402 = vpop.f32.mrf.mxu0
      %v3403 = vadd.f32 %v3234, %v3402
      %3404 = vmatmul.bf16.gmra.mxu0 %v2842
      %v3405 = vpop.f32.mrf.mxu0
      %v3406 = vadd.f32 %v3237, %v3405
      %v3407 = vpop.f32.mrf.mxu0
      %v3408 = vadd.f32 %v3239, %v3407
      %3409 = vmatmul.bf16.gmra.mxu0 %v2845
      %v3410 = vpop.f32.mrf.mxu0
      %v3411 = vadd.f32 %v3242, %v3410
      %v3412 = vpop.f32.mrf.mxu0
      %v3413 = vadd.f32 %v3244, %v3412
      %3414 = vmatmul.bf16.gmra.mxu0 %v2848
      %v3415 = vpop.f32.mrf.mxu0
      %v3416 = vadd.f32 %v3247, %v3415
      %v3417 = vpop.f32.mrf.mxu0
      %v3418 = vadd.f32 %v3249, %v3417
      %3419 = vmatmul.bf16.gmra.mxu0 %v2851
      %v3420 = vpop.f32.mrf.mxu0
      %v3421 = vadd.f32 %v3252, %v3420
      %v3422 = vpop.f32.mrf.mxu0
      %v3423 = vadd.f32 %v3254, %v3422
      %3424 = vmatmul.bf16.gmra.mxu0 %v2854
      %v3425 = vpop.f32.mrf.mxu0
      %v3426 = vadd.f32 %v3257, %v3425
      %v3427 = vpop.f32.mrf.mxu0
      %v3428 = vadd.f32 %v3259, %v3427
      %3429 = vmatmul.bf16.gmra.mxu0 %v2857
      %v3430 = vpop.f32.mrf.mxu0
      %v3431 = vadd.f32 %v3262, %v3430
      %v3432 = vpop.f32.mrf.mxu0
      %v3433 = vadd.f32 %v3264, %v3432
      %3434 = vmatmul.bf16.gmra.mxu0 %v2860
      %v3435 = vpop.f32.mrf.mxu0
      %v3436 = vadd.f32 %v3267, %v3435
      %v3437 = vpop.f32.mrf.mxu0
      %v3438 = vadd.f32 %v3269, %v3437
      %3439 = vdwg.mxu0
      %3440 = vmatpush.bf16.msra.mxu0 %v3077
      %3441 = vmatpush.bf16.msra.mxu0 %v3076
      %3442 = vmatpush.bf16.msra.mxu0 %v3075
      %3443 = vmatpush.bf16.msra.mxu0 %v3074
      %3444 = vmatpush.bf16.msra.mxu0 %v3073
      %3445 = vmatpush.bf16.msra.mxu0 %v3072
      %3446 = vmatpush.bf16.msra.mxu0 %v3071
      %3447 = vmatpush.bf16.msra.mxu0 %v3070
      %3448 = vmatmul.bf16.gmra.mxu0 %v2768
      %v3449 = vpop.f32.mrf.mxu0
      %v3450 = vadd.f32 %v3281, %v3449
      %v3451 = vpop.f32.mrf.mxu0
      %v3452 = vadd.f32 %v3283, %v3451
      %3453 = vmatmul.bf16.gmra.mxu0 %v2771
      %v3454 = vpop.f32.mrf.mxu0
      %v3455 = vadd.f32 %v3286, %v3454
      %v3456 = vpop.f32.mrf.mxu0
      %v3457 = vadd.f32 %v3288, %v3456
      %3458 = vmatmul.bf16.gmra.mxu0 %v2774
      %v3459 = vpop.f32.mrf.mxu0
      %v3460 = vadd.f32 %v3291, %v3459
      %v3461 = vpop.f32.mrf.mxu0
      %v3462 = vadd.f32 %v3293, %v3461
      %3463 = vmatmul.bf16.gmra.mxu0 %v2777
      %v3464 = vpop.f32.mrf.mxu0
      %v3465 = vadd.f32 %v3296, %v3464
      %v3466 = vpop.f32.mrf.mxu0
      %v3467 = vadd.f32 %v3298, %v3466
      %3468 = vmatmul.bf16.gmra.mxu0 %v2780
      %v3469 = vpop.f32.mrf.mxu0
      %v3470 = vadd.f32 %v3301, %v3469
      %v3471 = vpop.f32.mrf.mxu0
      %v3472 = vadd.f32 %v3303, %v3471
      %3473 = vmatmul.bf16.gmra.mxu0 %v2783
      %v3474 = vpop.f32.mrf.mxu0
      %v3475 = vadd.f32 %v3306, %v3474
      %v3476 = vpop.f32.mrf.mxu0
      %v3477 = vadd.f32 %v3308, %v3476
      %3478 = vmatmul.bf16.gmra.mxu0 %v2786
      %v3479 = vpop.f32.mrf.mxu0
      %v3480 = vadd.f32 %v3311, %v3479
      %v3481 = vpop.f32.mrf.mxu0
      %v3482 = vadd.f32 %v3313, %v3481
      %3483 = vmatmul.bf16.gmra.mxu0 %v2789
      %v3484 = vpop.f32.mrf.mxu0
      %v3485 = vadd.f32 %v3316, %v3484
      %v3486 = vpop.f32.mrf.mxu0
      %v3487 = vadd.f32 %v3318, %v3486
      %3488 = vmatmul.bf16.gmra.mxu0 %v2792
      %v3489 = vpop.f32.mrf.mxu0
      %v3490 = vadd.f32 %v3321, %v3489
      %v3491 = vpop.f32.mrf.mxu0
      %v3492 = vadd.f32 %v3323, %v3491
      %3493 = vmatmul.bf16.gmra.mxu0 %v2795
      %v3494 = vpop.f32.mrf.mxu0
      %v3495 = vadd.f32 %v3326, %v3494
      %v3496 = vpop.f32.mrf.mxu0
      %v3497 = vadd.f32 %v3328, %v3496
      %3498 = vmatmul.bf16.gmra.mxu0 %v2798
      %v3499 = vpop.f32.mrf.mxu0
      %v3500 = vadd.f32 %v3331, %v3499
      %v3501 = vpop.f32.mrf.mxu0
      %v3502 = vadd.f32 %v3333, %v3501
      %3503 = vmatmul.bf16.gmra.mxu0 %v2801
      %v3504 = vpop.f32.mrf.mxu0
      %v3505 = vadd.f32 %v3336, %v3504
      %v3506 = vpop.f32.mrf.mxu0
      %v3507 = vadd.f32 %v3338, %v3506
      %3508 = vmatmul.bf16.gmra.mxu0 %v2804
      %v3509 = vpop.f32.mrf.mxu0
      %v3510 = vadd.f32 %v3341, %v3509
      %v3511 = vpop.f32.mrf.mxu0
      %v3512 = vadd.f32 %v3343, %v3511
      %3513 = vmatmul.bf16.gmra.mxu0 %v2807
      %v3514 = vpop.f32.mrf.mxu0
      %v3515 = vadd.f32 %v3346, %v3514
      %v3516 = vpop.f32.mrf.mxu0
      %v3517 = vadd.f32 %v3348, %v3516
      %3518 = vmatmul.bf16.gmra.mxu0 %v2810
      %v3519 = vpop.f32.mrf.mxu0
      %v3520 = vadd.f32 %v3351, %v3519
      %v3521 = vpop.f32.mrf.mxu0
      %v3522 = vadd.f32 %v3353, %v3521
      %3523 = vmatmul.bf16.gmra.mxu0 %v2813
      %v3524 = vpop.f32.mrf.mxu0
      %v3525 = vadd.f32 %v3356, %v3524
      %v3526 = vpop.f32.mrf.mxu0
      %v3527 = vadd.f32 %v3358, %v3526
      %3528 = vmatmul.bf16.gmra.mxu0 %v2816
      %v3529 = vpop.f32.mrf.mxu0
      %v3530 = vadd.f32 %v3361, %v3529
      %v3531 = vpop.f32.mrf.mxu0
      %v3532 = vadd.f32 %v3363, %v3531
      %3533 = vmatmul.bf16.gmra.mxu0 %v2819
      %v3534 = vpop.f32.mrf.mxu0
      %v3535 = vadd.f32 %v3366, %v3534
      %v3536 = vpop.f32.mrf.mxu0
      %v3537 = vadd.f32 %v3368, %v3536
      %3538 = vmatmul.bf16.gmra.mxu0 %v2822
      %v3539 = vpop.f32.mrf.mxu0
      %v3540 = vadd.f32 %v3371, %v3539
      %v3541 = vpop.f32.mrf.mxu0
      %v3542 = vadd.f32 %v3373, %v3541
      %3543 = vmatmul.bf16.gmra.mxu0 %v2825
      %v3544 = vpop.f32.mrf.mxu0
      %v3545 = vadd.f32 %v3376, %v3544
      %v3546 = vpop.f32.mrf.mxu0
      %v3547 = vadd.f32 %v3378, %v3546
      %3548 = vmatmul.bf16.gmra.mxu0 %v2828
      %v3549 = vpop.f32.mrf.mxu0
      %v3550 = vadd.f32 %v3381, %v3549
      %v3551 = vpop.f32.mrf.mxu0
      %v3552 = vadd.f32 %v3383, %v3551
      %3553 = vmatmul.bf16.gmra.mxu0 %v2831
      %v3554 = vpop.f32.mrf.mxu0
      %v3555 = vadd.f32 %v3386, %v3554
      %v3556 = vpop.f32.mrf.mxu0
      %v3557 = vadd.f32 %v3388, %v3556
      %3558 = vmatmul.bf16.gmra.mxu0 %v2834
      %v3559 = vpop.f32.mrf.mxu0
      %v3560 = vadd.f32 %v3391, %v3559
      %v3561 = vpop.f32.mrf.mxu0
      %v3562 = vadd.f32 %v3393, %v3561
      %3563 = vmatmul.bf16.gmra.mxu0 %v2837
      %v3564 = vpop.f32.mrf.mxu0
      %v3565 = vadd.f32 %v3396, %v3564
      %v3566 = vpop.f32.mrf.mxu0
      %v3567 = vadd.f32 %v3398, %v3566
      %3568 = vmatmul.bf16.gmra.mxu0 %v2840
      %v3569 = vpop.f32.mrf.mxu0
      %v3570 = vadd.f32 %v3401, %v3569
      %v3571 = vpop.f32.mrf.mxu0
      %v3572 = vadd.f32 %v3403, %v3571
      %3573 = vmatmul.bf16.gmra.mxu0 %v2843
      %v3574 = vpop.f32.mrf.mxu0
      %v3575 = vadd.f32 %v3406, %v3574
      %v3576 = vpop.f32.mrf.mxu0
      %v3577 = vadd.f32 %v3408, %v3576
      %3578 = vmatmul.bf16.gmra.mxu0 %v2846
      %v3579 = vpop.f32.mrf.mxu0
      %v3580 = vadd.f32 %v3411, %v3579
      %v3581 = vpop.f32.mrf.mxu0
      %v3582 = vadd.f32 %v3413, %v3581
      %3583 = vmatmul.bf16.gmra.mxu0 %v2849
      %v3584 = vpop.f32.mrf.mxu0
      %v3585 = vadd.f32 %v3416, %v3584
      %v3586 = vpop.f32.mrf.mxu0
      %v3587 = vadd.f32 %v3418, %v3586
      %3588 = vmatmul.bf16.gmra.mxu0 %v2852
      %v3589 = vpop.f32.mrf.mxu0
      %v3590 = vadd.f32 %v3421, %v3589
      %v3591 = vpop.f32.mrf.mxu0
      %v3592 = vadd.f32 %v3423, %v3591
      %3593 = vmatmul.bf16.gmra.mxu0 %v2855
      %v3594 = vpop.f32.mrf.mxu0
      %v3595 = vadd.f32 %v3426, %v3594
      %v3596 = vpop.f32.mrf.mxu0
      %v3597 = vadd.f32 %v3428, %v3596
      %3598 = vmatmul.bf16.gmra.mxu0 %v2858
      %v3599 = vpop.f32.mrf.mxu0
      %v3600 = vadd.f32 %v3431, %v3599
      %v3601 = vpop.f32.mrf.mxu0
      %v3602 = vadd.f32 %v3433, %v3601
      %3603 = vmatmul.bf16.gmra.mxu0 %v2861
      %v3604 = vpop.f32.mrf.mxu0
      %v3605 = vadd.f32 %v3436, %v3604
      %v3606 = vpop.f32.mrf.mxu0
      %v3607 = vadd.f32 %v3438, %v3606
      %3608 = vdwg.mxu0
      %v3609 = vunpack.c.l.b16 %v951
      %v3610 = vunpack.c.l.b16 %v1591
      %v3611 = vunpack.c.l.b16 %v1021
      %v3612 = vunpack.c.l.b16 %v1601
      %v3613 = vunpack.c.l.b16 %v1091
      %v3614 = vunpack.c.l.b16 %v1611
      %v3615 = vunpack.c.l.b16 %v1161
      %v3616 = vunpack.c.l.b16 %v1621
      %v3617 = vunpack.c.l.b16 %v1231
      %v3618 = vunpack.c.l.b16 %v1631
      %v3619 = vunpack.c.l.b16 %v1301
      %v3620 = vunpack.c.l.b16 %v1641
      %v3621 = vunpack.c.l.b16 %v1371
      %v3622 = vunpack.c.l.b16 %v1651
      %v3623 = vunpack.c.l.b16 %v1441
      %v3624 = vunpack.c.l.b16 %v1661
      %s3625 = scalar_lea.vmem %s1, 384
      %v3626 = vld [vmem:[%s3625] sm:$0xf]
      %v3627 = vld [vmem:[%s3625 + $0x4] sm:$0xf]
      %v3628 = vld [vmem:[%s3625 + $0x8] sm:$0xf]
      %v3629 = vld [vmem:[%s3625 + $0xc] sm:$0xf]
      %v3630 = vld [vmem:[%s3625 + $0x10] sm:$0xf]
      %v3631 = vld [vmem:[%s3625 + $0x14] sm:$0xf]
      %v3632 = vld [vmem:[%s3625 + $0x18] sm:$0xf]
      %v3633 = vld [vmem:[%s3625 + $0x1c] sm:$0xf]
      %v3634 = vld [vmem:[%s3625 + $0x20] sm:$0xf]
      %v3635 = vld [vmem:[%s3625 + $0x24] sm:$0xf]
      %v3636 = vld [vmem:[%s3625 + $0x28] sm:$0xf]
      %v3637 = vld [vmem:[%s3625 + $0x2c] sm:$0xf]
      %v3638 = vld [vmem:[%s3625 + $0x30] sm:$0xf]
      %v3639 = vld [vmem:[%s3625 + $0x34] sm:$0xf]
      %v3640 = vld [vmem:[%s3625 + $0x38] sm:$0xf]
      %v3641 = vld [vmem:[%s3625 + $0x3c] sm:$0xf]
      %v3642 = vld [vmem:[%s3625 + $0x40] sm:$0xf]
      %v3643 = vld [vmem:[%s3625 + $0x44] sm:$0xf]
      %v3644 = vld [vmem:[%s3625 + $0x48] sm:$0xf]
      %v3645 = vld [vmem:[%s3625 + $0x4c] sm:$0xf]
      %v3646 = vld [vmem:[%s3625 + $0x50] sm:$0xf]
      %v3647 = vld [vmem:[%s3625 + $0x54] sm:$0xf]
      %v3648 = vld [vmem:[%s3625 + $0x58] sm:$0xf]
      %v3649 = vld [vmem:[%s3625 + $0x5c] sm:$0xf]
      %v3650 = vld [vmem:[%s3625 + $0x60] sm:$0xf]
      %v3651 = vld [vmem:[%s3625 + $0x64] sm:$0xf]
      %v3652 = vld [vmem:[%s3625 + $0x68] sm:$0xf]
      %v3653 = vld [vmem:[%s3625 + $0x6c] sm:$0xf]
      %v3654 = vld [vmem:[%s3625 + $0x70] sm:$0xf]
      %v3655 = vld [vmem:[%s3625 + $0x74] sm:$0xf]
      %v3656 = vld [vmem:[%s3625 + $0x78] sm:$0xf]
      %v3657 = vld [vmem:[%s3625 + $0x7c] sm:$0xf]
      %v3658 = vld [vmem:[%s3625 + $0x80] sm:$0xf]
      %v3659 = vld [vmem:[%s3625 + $0x84] sm:$0xf]
      %v3660 = vld [vmem:[%s3625 + $0x88] sm:$0xf]
      %v3661 = vld [vmem:[%s3625 + $0x8c] sm:$0xf]
      %v3662 = vld [vmem:[%s3625 + $0x90] sm:$0xf]
      %v3663 = vld [vmem:[%s3625 + $0x94] sm:$0xf]
      %v3664 = vld [vmem:[%s3625 + $0x98] sm:$0xf]
      %v3665 = vld [vmem:[%s3625 + $0x9c] sm:$0xf]
      %v3666 = vld [vmem:[%s3625 + $0xa0] sm:$0xf]
      %v3667 = vld [vmem:[%s3625 + $0xa4] sm:$0xf]
      %v3668 = vld [vmem:[%s3625 + $0xa8] sm:$0xf]
      %v3669 = vld [vmem:[%s3625 + $0xac] sm:$0xf]
      %v3670 = vld [vmem:[%s3625 + $0xb0] sm:$0xf]
      %v3671 = vld [vmem:[%s3625 + $0xb4] sm:$0xf]
      %v3672 = vld [vmem:[%s3625 + $0xb8] sm:$0xf]
      %v3673 = vld [vmem:[%s3625 + $0xbc] sm:$0xf]
      %v3674 = vpack.c.b16 %v600, %v598
      %v3675 = vpack.c.b16 %v3609, %v1858
      %v3676 = vpack.c.b16 %v3610, %v1859
      %v3677 = vpack.c.b16 %v620, %v618
      %v3678 = vpack.c.b16 %v3611, %v1860
      %v3679 = vpack.c.b16 %v3612, %v1861
      %v3680 = vpack.c.b16 %v640, %v638
      %v3681 = vpack.c.b16 %v3613, %v1862
      %v3682 = vpack.c.b16 %v3614, %v1863
      %v3683 = vpack.c.b16 %v660, %v658
      %v3684 = vpack.c.b16 %v3615, %v1864
      %v3685 = vpack.c.b16 %v3616, %v1865
      %v3686 = vpack.c.b16 %v680, %v678
      %v3687 = vpack.c.b16 %v3617, %v1866
      %v3688 = vpack.c.b16 %v3618, %v1867
      %v3689 = vpack.c.b16 %v700, %v698
      %v3690 = vpack.c.b16 %v3619, %v1868
      %v3691 = vpack.c.b16 %v3620, %v1869
      %v3692 = vpack.c.b16 %v720, %v718
      %v3693 = vpack.c.b16 %v3621, %v1870
      %v3694 = vpack.c.b16 %v3622, %v1871
      %v3695 = vpack.c.b16 %v740, %v738
      %v3696 = vpack.c.b16 %v3623, %v1872
      %v3697 = vpack.c.b16 %v3624, %v1873
      %v3770 = vunpack.c.l.b16 %v3626
      %v3771 = vunpack.c.l.b16 %v3627
      %v3772 = vunpack.c.l.b16 %v3628
      %v3773 = vunpack.c.l.b16 %v3629
      %v3774 = vunpack.c.l.b16 %v3630
      %v3775 = vunpack.c.l.b16 %v3631
      %v3776 = vunpack.c.l.b16 %v3632
      %v3777 = vunpack.c.l.b16 %v3633
      %v3778 = vunpack.c.l.b16 %v3634
      %v3779 = vunpack.c.l.b16 %v3635
      %v3780 = vunpack.c.l.b16 %v3636
      %v3781 = vunpack.c.l.b16 %v3637
      %v3782 = vunpack.c.l.b16 %v3638
      %v3783 = vunpack.c.l.b16 %v3639
      %v3784 = vunpack.c.l.b16 %v3640
      %v3785 = vunpack.c.l.b16 %v3641
      %v3786 = vunpack.c.l.b16 %v3642
      %v3787 = vunpack.c.l.b16 %v3643
      %v3788 = vunpack.c.l.b16 %v3644
      %v3789 = vunpack.c.l.b16 %v3645
      %v3790 = vunpack.c.l.b16 %v3646
      %v3791 = vunpack.c.l.b16 %v3647
      %v3792 = vunpack.c.l.b16 %v3648
      %v3793 = vunpack.c.l.b16 %v3649
      %v3794 = vunpack.c.l.b16 %v3650
      %v3795 = vunpack.c.l.b16 %v3651
      %v3796 = vunpack.c.l.b16 %v3652
      %v3797 = vunpack.c.l.b16 %v3653
      %v3798 = vunpack.c.l.b16 %v3654
      %v3799 = vunpack.c.l.b16 %v3655
      %v3800 = vunpack.c.l.b16 %v3656
      %v3801 = vunpack.c.l.b16 %v3657
      %v3802 = vunpack.c.l.b16 %v3658
      %v3803 = vunpack.c.l.b16 %v3659
      %v3804 = vunpack.c.l.b16 %v3660
      %v3805 = vunpack.c.l.b16 %v3661
      %v3806 = vunpack.c.l.b16 %v3662
      %v3807 = vunpack.c.l.b16 %v3663
      %v3808 = vunpack.c.l.b16 %v3664
      %v3809 = vunpack.c.l.b16 %v3665
      %v3810 = vunpack.c.l.b16 %v3666
      %v3811 = vunpack.c.l.b16 %v3667
      %v3812 = vunpack.c.l.b16 %v3668
      %v3813 = vunpack.c.l.b16 %v3669
      %v3814 = vunpack.c.l.b16 %v3670
      %v3815 = vunpack.c.l.b16 %v3671
      %v3816 = vunpack.c.l.b16 %v3672
      %v3817 = vunpack.c.l.b16 %v3673
      %v3818 = vpack.c.b16 %v3771, %v3770
      %v3819 = vpack.c.b16 %v3773, %v3772
      %v3820 = vpack.c.b16 %v3775, %v3774
      %v3821 = vpack.c.b16 %v3777, %v3776
      %v3822 = vpack.c.b16 %v3779, %v3778
      %v3823 = vpack.c.b16 %v3781, %v3780
      %v3824 = vpack.c.b16 %v3783, %v3782
      %v3825 = vpack.c.b16 %v3785, %v3784
      %v3826 = vpack.c.b16 %v3787, %v3786
      %v3827 = vpack.c.b16 %v3789, %v3788
      %v3828 = vpack.c.b16 %v3791, %v3790
      %v3829 = vpack.c.b16 %v3793, %v3792
      %v3830 = vpack.c.b16 %v3795, %v3794
      %v3831 = vpack.c.b16 %v3797, %v3796
      %v3832 = vpack.c.b16 %v3799, %v3798
      %v3833 = vpack.c.b16 %v3801, %v3800
      %v3834 = vpack.c.b16 %v3803, %v3802
      %v3835 = vpack.c.b16 %v3805, %v3804
      %v3836 = vpack.c.b16 %v3807, %v3806
      %v3837 = vpack.c.b16 %v3809, %v3808
      %v3838 = vpack.c.b16 %v3811, %v3810
      %v3839 = vpack.c.b16 %v3813, %v3812
      %v3840 = vpack.c.b16 %v3815, %v3814
      %v3841 = vpack.c.b16 %v3817, %v3816
      %3866 = vmatpush.bf16.msra.mxu0 %v3825
      %3867 = vmatpush.bf16.msra.mxu0 %v3824
      %3868 = vmatpush.bf16.msra.mxu0 %v3823
      %3869 = vmatpush.bf16.msra.mxu0 %v3822
      %3870 = vmatpush.bf16.msra.mxu0 %v3821
      %3871 = vmatpush.bf16.msra.mxu0 %v3820
      %3872 = vmatpush.bf16.msra.mxu0 %v3819
      %3873 = vmatpush.bf16.msra.mxu0 %v3818
      %3874 = vmatmul.bf16.gmra.mxu0 %v2769
      %v3875 = vpop.f32.mrf.mxu0
      %v3876 = vadd.f32 0.0, %v3875
      %v3877 = vpop.f32.mrf.mxu0
      %v3878 = vadd.f32 0.0, %v3877
      %3879 = vmatmul.bf16.gmra.mxu0 %v2772
      %v3880 = vpop.f32.mrf.mxu0
      %v3881 = vadd.f32 0.0, %v3880
      %v3882 = vpop.f32.mrf.mxu0
      %v3883 = vadd.f32 0.0, %v3882
      %3884 = vmatmul.bf16.gmra.mxu0 %v2775
      %v3885 = vpop.f32.mrf.mxu0
      %v3886 = vadd.f32 0.0, %v3885
      %v3887 = vpop.f32.mrf.mxu0
      %v3888 = vadd.f32 0.0, %v3887
      %3889 = vmatmul.bf16.gmra.mxu0 %v3674
      %v3890 = vpop.f32.mrf.mxu0
      %v3891 = vadd.f32 0.0, %v3890
      %v3892 = vpop.f32.mrf.mxu0
      %v3893 = vadd.f32 0.0, %v3892
      %3894 = vmatmul.bf16.gmra.mxu0 %v2781
      %v3895 = vpop.f32.mrf.mxu0
      %v3896 = vadd.f32 0.0, %v3895
      %v3897 = vpop.f32.mrf.mxu0
      %v3898 = vadd.f32 0.0, %v3897
      %3899 = vmatmul.bf16.gmra.mxu0 %v2784
      %v3900 = vpop.f32.mrf.mxu0
      %v3901 = vadd.f32 0.0, %v3900
      %v3902 = vpop.f32.mrf.mxu0
      %v3903 = vadd.f32 0.0, %v3902
      %3904 = vmatmul.bf16.gmra.mxu0 %v2787
      %v3905 = vpop.f32.mrf.mxu0
      %v3906 = vadd.f32 0.0, %v3905
      %v3907 = vpop.f32.mrf.mxu0
      %v3908 = vadd.f32 0.0, %v3907
      %3909 = vmatmul.bf16.gmra.mxu0 %v3677
      %v3910 = vpop.f32.mrf.mxu0
      %v3911 = vadd.f32 0.0, %v3910
      %v3912 = vpop.f32.mrf.mxu0
      %v3913 = vadd.f32 0.0, %v3912
      %3914 = vmatmul.bf16.gmra.mxu0 %v2793
      %v3915 = vpop.f32.mrf.mxu0
      %v3916 = vadd.f32 0.0, %v3915
      %v3917 = vpop.f32.mrf.mxu0
      %v3918 = vadd.f32 0.0, %v3917
      %3919 = vmatmul.bf16.gmra.mxu0 %v2796
      %v3920 = vpop.f32.mrf.mxu0
      %v3921 = vadd.f32 0.0, %v3920
      %v3922 = vpop.f32.mrf.mxu0
      %v3923 = vadd.f32 0.0, %v3922
      %3924 = vmatmul.bf16.gmra.mxu0 %v2799
      %v3925 = vpop.f32.mrf.mxu0
      %v3926 = vadd.f32 0.0, %v3925
      %v3927 = vpop.f32.mrf.mxu0
      %v3928 = vadd.f32 0.0, %v3927
      %3929 = vmatmul.bf16.gmra.mxu0 %v3680
      %v3930 = vpop.f32.mrf.mxu0
      %v3931 = vadd.f32 0.0, %v3930
      %v3932 = vpop.f32.mrf.mxu0
      %v3933 = vadd.f32 0.0, %v3932
      %3934 = vmatmul.bf16.gmra.mxu0 %v2805
      %v3935 = vpop.f32.mrf.mxu0
      %v3936 = vadd.f32 0.0, %v3935
      %v3937 = vpop.f32.mrf.mxu0
      %v3938 = vadd.f32 0.0, %v3937
      %3939 = vmatmul.bf16.gmra.mxu0 %v2808
      %v3940 = vpop.f32.mrf.mxu0
      %v3941 = vadd.f32 0.0, %v3940
      %v3942 = vpop.f32.mrf.mxu0
      %v3943 = vadd.f32 0.0, %v3942
      %3944 = vmatmul.bf16.gmra.mxu0 %v2811
      %v3945 = vpop.f32.mrf.mxu0
      %v3946 = vadd.f32 0.0, %v3945
      %v3947 = vpop.f32.mrf.mxu0
      %v3948 = vadd.f32 0.0, %v3947
      %3949 = vmatmul.bf16.gmra.mxu0 %v3683
      %v3950 = vpop.f32.mrf.mxu0
      %v3951 = vadd.f32 0.0, %v3950
      %v3952 = vpop.f32.mrf.mxu0
      %v3953 = vadd.f32 0.0, %v3952
      %3954 = vmatmul.bf16.gmra.mxu0 %v2817
      %v3955 = vpop.f32.mrf.mxu0
      %v3956 = vadd.f32 0.0, %v3955
      %v3957 = vpop.f32.mrf.mxu0
      %v3958 = vadd.f32 0.0, %v3957
      %3959 = vmatmul.bf16.gmra.mxu0 %v2820
      %v3960 = vpop.f32.mrf.mxu0
      %v3961 = vadd.f32 0.0, %v3960
      %v3962 = vpop.f32.mrf.mxu0
      %v3963 = vadd.f32 0.0, %v3962
      %3964 = vmatmul.bf16.gmra.mxu0 %v2823
      %v3965 = vpop.f32.mrf.mxu0
      %v3966 = vadd.f32 0.0, %v3965
      %v3967 = vpop.f32.mrf.mxu0
      %v3968 = vadd.f32 0.0, %v3967
      %3969 = vmatmul.bf16.gmra.mxu0 %v3686
      %v3970 = vpop.f32.mrf.mxu0
      %v3971 = vadd.f32 0.0, %v3970
      %v3972 = vpop.f32.mrf.mxu0
      %v3973 = vadd.f32 0.0, %v3972
      %3974 = vmatmul.bf16.gmra.mxu0 %v2829
      %v3975 = vpop.f32.mrf.mxu0
      %v3976 = vadd.f32 0.0, %v3975
      %v3977 = vpop.f32.mrf.mxu0
      %v3978 = vadd.f32 0.0, %v3977
      %3979 = vmatmul.bf16.gmra.mxu0 %v2832
      %v3980 = vpop.f32.mrf.mxu0
      %v3981 = vadd.f32 0.0, %v3980
      %v3982 = vpop.f32.mrf.mxu0
      %v3983 = vadd.f32 0.0, %v3982
      %3984 = vmatmul.bf16.gmra.mxu0 %v2835
      %v3985 = vpop.f32.mrf.mxu0
      %v3986 = vadd.f32 0.0, %v3985
      %v3987 = vpop.f32.mrf.mxu0
      %v3988 = vadd.f32 0.0, %v3987
      %3989 = vmatmul.bf16.gmra.mxu0 %v3689
      %v3990 = vpop.f32.mrf.mxu0
      %v3991 = vadd.f32 0.0, %v3990
      %v3992 = vpop.f32.mrf.mxu0
      %v3993 = vadd.f32 0.0, %v3992
      %3994 = vmatmul.bf16.gmra.mxu0 %v2841
      %v3995 = vpop.f32.mrf.mxu0
      %v3996 = vadd.f32 0.0, %v3995
      %v3997 = vpop.f32.mrf.mxu0
      %v3998 = vadd.f32 0.0, %v3997
      %3999 = vmatmul.bf16.gmra.mxu0 %v2844
      %v4000 = vpop.f32.mrf.mxu0
      %v4001 = vadd.f32 0.0, %v4000
      %v4002 = vpop.f32.mrf.mxu0
      %v4003 = vadd.f32 0.0, %v4002
      %4004 = vmatmul.bf16.gmra.mxu0 %v2847
      %v4005 = vpop.f32.mrf.mxu0
      %v4006 = vadd.f32 0.0, %v4005
      %v4007 = vpop.f32.mrf.mxu0
      %v4008 = vadd.f32 0.0, %v4007
      %4009 = vmatmul.bf16.gmra.mxu0 %v3692
      %v4010 = vpop.f32.mrf.mxu0
      %v4011 = vadd.f32 0.0, %v4010
      %v4012 = vpop.f32.mrf.mxu0
      %v4013 = vadd.f32 0.0, %v4012
      %4014 = vmatmul.bf16.gmra.mxu0 %v2853
      %v4015 = vpop.f32.mrf.mxu0
      %v4016 = vadd.f32 0.0, %v4015
      %v4017 = vpop.f32.mrf.mxu0
      %v4018 = vadd.f32 0.0, %v4017
      %4019 = vmatmul.bf16.gmra.mxu0 %v2856
      %v4020 = vpop.f32.mrf.mxu0
      %v4021 = vadd.f32 0.0, %v4020
      %v4022 = vpop.f32.mrf.mxu0
      %v4023 = vadd.f32 0.0, %v4022
      %4024 = vmatmul.bf16.gmra.mxu0 %v2859
      %v4025 = vpop.f32.mrf.mxu0
      %v4026 = vadd.f32 0.0, %v4025
      %v4027 = vpop.f32.mrf.mxu0
      %v4028 = vadd.f32 0.0, %v4027
      %4029 = vmatmul.bf16.gmra.mxu0 %v3695
      %v4030 = vpop.f32.mrf.mxu0
      %v4031 = vadd.f32 0.0, %v4030
      %v4032 = vpop.f32.mrf.mxu0
      %v4033 = vadd.f32 0.0, %v4032
      %4034 = vdwg.mxu0
      %4035 = vmatpush.bf16.msra.mxu0 %v3833
      %4036 = vmatpush.bf16.msra.mxu0 %v3832
      %4037 = vmatpush.bf16.msra.mxu0 %v3831
      %4038 = vmatpush.bf16.msra.mxu0 %v3830
      %4039 = vmatpush.bf16.msra.mxu0 %v3829
      %4040 = vmatpush.bf16.msra.mxu0 %v3828
      %4041 = vmatpush.bf16.msra.mxu0 %v3827
      %4042 = vmatpush.bf16.msra.mxu0 %v3826
      %4043 = vmatmul.bf16.gmra.mxu0 %v2770
      %v4044 = vpop.f32.mrf.mxu0
      %v4045 = vadd.f32 %v3876, %v4044
      %v4046 = vpop.f32.mrf.mxu0
      %v4047 = vadd.f32 %v3878, %v4046
      %4048 = vmatmul.bf16.gmra.mxu0 %v2773
      %v4049 = vpop.f32.mrf.mxu0
      %v4050 = vadd.f32 %v3881, %v4049
      %v4051 = vpop.f32.mrf.mxu0
      %v4052 = vadd.f32 %v3883, %v4051
      %4053 = vmatmul.bf16.gmra.mxu0 %v2776
      %v4054 = vpop.f32.mrf.mxu0
      %v4055 = vadd.f32 %v3886, %v4054
      %v4056 = vpop.f32.mrf.mxu0
      %v4057 = vadd.f32 %v3888, %v4056
      %4058 = vmatmul.bf16.gmra.mxu0 %v3675
      %v4059 = vpop.f32.mrf.mxu0
      %v4060 = vadd.f32 %v3891, %v4059
      %v4061 = vpop.f32.mrf.mxu0
      %v4062 = vadd.f32 %v3893, %v4061
      %4063 = vmatmul.bf16.gmra.mxu0 %v2782
      %v4064 = vpop.f32.mrf.mxu0
      %v4065 = vadd.f32 %v3896, %v4064
      %v4066 = vpop.f32.mrf.mxu0
      %v4067 = vadd.f32 %v3898, %v4066
      %4068 = vmatmul.bf16.gmra.mxu0 %v2785
      %v4069 = vpop.f32.mrf.mxu0
      %v4070 = vadd.f32 %v3901, %v4069
      %v4071 = vpop.f32.mrf.mxu0
      %v4072 = vadd.f32 %v3903, %v4071
      %4073 = vmatmul.bf16.gmra.mxu0 %v2788
      %v4074 = vpop.f32.mrf.mxu0
      %v4075 = vadd.f32 %v3906, %v4074
      %v4076 = vpop.f32.mrf.mxu0
      %v4077 = vadd.f32 %v3908, %v4076
      %4078 = vmatmul.bf16.gmra.mxu0 %v3678
      %v4079 = vpop.f32.mrf.mxu0
      %v4080 = vadd.f32 %v3911, %v4079
      %v4081 = vpop.f32.mrf.mxu0
      %v4082 = vadd.f32 %v3913, %v4081
      %4083 = vmatmul.bf16.gmra.mxu0 %v2794
      %v4084 = vpop.f32.mrf.mxu0
      %v4085 = vadd.f32 %v3916, %v4084
      %v4086 = vpop.f32.mrf.mxu0
      %v4087 = vadd.f32 %v3918, %v4086
      %4088 = vmatmul.bf16.gmra.mxu0 %v2797
      %v4089 = vpop.f32.mrf.mxu0
      %v4090 = vadd.f32 %v3921, %v4089
      %v4091 = vpop.f32.mrf.mxu0
      %v4092 = vadd.f32 %v3923, %v4091
      %4093 = vmatmul.bf16.gmra.mxu0 %v2800
      %v4094 = vpop.f32.mrf.mxu0
      %v4095 = vadd.f32 %v3926, %v4094
      %v4096 = vpop.f32.mrf.mxu0
      %v4097 = vadd.f32 %v3928, %v4096
      %4098 = vmatmul.bf16.gmra.mxu0 %v3681
      %v4099 = vpop.f32.mrf.mxu0
      %v4100 = vadd.f32 %v3931, %v4099
      %v4101 = vpop.f32.mrf.mxu0
      %v4102 = vadd.f32 %v3933, %v4101
      %4103 = vmatmul.bf16.gmra.mxu0 %v2806
      %v4104 = vpop.f32.mrf.mxu0
      %v4105 = vadd.f32 %v3936, %v4104
      %v4106 = vpop.f32.mrf.mxu0
      %v4107 = vadd.f32 %v3938, %v4106
      %4108 = vmatmul.bf16.gmra.mxu0 %v2809
      %v4109 = vpop.f32.mrf.mxu0
      %v4110 = vadd.f32 %v3941, %v4109
      %v4111 = vpop.f32.mrf.mxu0
      %v4112 = vadd.f32 %v3943, %v4111
      %4113 = vmatmul.bf16.gmra.mxu0 %v2812
      %v4114 = vpop.f32.mrf.mxu0
      %v4115 = vadd.f32 %v3946, %v4114
      %v4116 = vpop.f32.mrf.mxu0
      %v4117 = vadd.f32 %v3948, %v4116
      %4118 = vmatmul.bf16.gmra.mxu0 %v3684
      %v4119 = vpop.f32.mrf.mxu0
      %v4120 = vadd.f32 %v3951, %v4119
      %v4121 = vpop.f32.mrf.mxu0
      %v4122 = vadd.f32 %v3953, %v4121
      %4123 = vmatmul.bf16.gmra.mxu0 %v2818
      %v4124 = vpop.f32.mrf.mxu0
      %v4125 = vadd.f32 %v3956, %v4124
      %v4126 = vpop.f32.mrf.mxu0
      %v4127 = vadd.f32 %v3958, %v4126
      %4128 = vmatmul.bf16.gmra.mxu0 %v2821
      %v4129 = vpop.f32.mrf.mxu0
      %v4130 = vadd.f32 %v3961, %v4129
      %v4131 = vpop.f32.mrf.mxu0
      %v4132 = vadd.f32 %v3963, %v4131
      %4133 = vmatmul.bf16.gmra.mxu0 %v2824
      %v4134 = vpop.f32.mrf.mxu0
      %v4135 = vadd.f32 %v3966, %v4134
      %v4136 = vpop.f32.mrf.mxu0
      %v4137 = vadd.f32 %v3968, %v4136
      %4138 = vmatmul.bf16.gmra.mxu0 %v3687
      %v4139 = vpop.f32.mrf.mxu0
      %v4140 = vadd.f32 %v3971, %v4139
      %v4141 = vpop.f32.mrf.mxu0
      %v4142 = vadd.f32 %v3973, %v4141
      %4143 = vmatmul.bf16.gmra.mxu0 %v2830
      %v4144 = vpop.f32.mrf.mxu0
      %v4145 = vadd.f32 %v3976, %v4144
      %v4146 = vpop.f32.mrf.mxu0
      %v4147 = vadd.f32 %v3978, %v4146
      %4148 = vmatmul.bf16.gmra.mxu0 %v2833
      %v4149 = vpop.f32.mrf.mxu0
      %v4150 = vadd.f32 %v3981, %v4149
      %v4151 = vpop.f32.mrf.mxu0
      %v4152 = vadd.f32 %v3983, %v4151
      %4153 = vmatmul.bf16.gmra.mxu0 %v2836
      %v4154 = vpop.f32.mrf.mxu0
      %v4155 = vadd.f32 %v3986, %v4154
      %v4156 = vpop.f32.mrf.mxu0
      %v4157 = vadd.f32 %v3988, %v4156
      %4158 = vmatmul.bf16.gmra.mxu0 %v3690
      %v4159 = vpop.f32.mrf.mxu0
      %v4160 = vadd.f32 %v3991, %v4159
      %v4161 = vpop.f32.mrf.mxu0
      %v4162 = vadd.f32 %v3993, %v4161
      %4163 = vmatmul.bf16.gmra.mxu0 %v2842
      %v4164 = vpop.f32.mrf.mxu0
      %v4165 = vadd.f32 %v3996, %v4164
      %v4166 = vpop.f32.mrf.mxu0
      %v4167 = vadd.f32 %v3998, %v4166
      %4168 = vmatmul.bf16.gmra.mxu0 %v2845
      %v4169 = vpop.f32.mrf.mxu0
      %v4170 = vadd.f32 %v4001, %v4169
      %v4171 = vpop.f32.mrf.mxu0
      %v4172 = vadd.f32 %v4003, %v4171
      %4173 = vmatmul.bf16.gmra.mxu0 %v2848
      %v4174 = vpop.f32.mrf.mxu0
      %v4175 = vadd.f32 %v4006, %v4174
      %v4176 = vpop.f32.mrf.mxu0
      %v4177 = vadd.f32 %v4008, %v4176
      %4178 = vmatmul.bf16.gmra.mxu0 %v3693
      %v4179 = vpop.f32.mrf.mxu0
      %v4180 = vadd.f32 %v4011, %v4179
      %v4181 = vpop.f32.mrf.mxu0
      %v4182 = vadd.f32 %v4013, %v4181
      %4183 = vmatmul.bf16.gmra.mxu0 %v2854
      %v4184 = vpop.f32.mrf.mxu0
      %v4185 = vadd.f32 %v4016, %v4184
      %v4186 = vpop.f32.mrf.mxu0
      %v4187 = vadd.f32 %v4018, %v4186
      %4188 = vmatmul.bf16.gmra.mxu0 %v2857
      %v4189 = vpop.f32.mrf.mxu0
      %v4190 = vadd.f32 %v4021, %v4189
      %v4191 = vpop.f32.mrf.mxu0
      %v4192 = vadd.f32 %v4023, %v4191
      %4193 = vmatmul.bf16.gmra.mxu0 %v2860
      %v4194 = vpop.f32.mrf.mxu0
      %v4195 = vadd.f32 %v4026, %v4194
      %v4196 = vpop.f32.mrf.mxu0
      %v4197 = vadd.f32 %v4028, %v4196
      %4198 = vmatmul.bf16.gmra.mxu0 %v3696
      %v4199 = vpop.f32.mrf.mxu0
      %v4200 = vadd.f32 %v4031, %v4199
      %v4201 = vpop.f32.mrf.mxu0
      %v4202 = vadd.f32 %v4033, %v4201
      %4203 = vdwg.mxu0
      %4204 = vmatpush.bf16.msra.mxu0 %v3841
      %4205 = vmatpush.bf16.msra.mxu0 %v3840
      %4206 = vmatpush.bf16.msra.mxu0 %v3839
      %4207 = vmatpush.bf16.msra.mxu0 %v3838
      %4208 = vmatpush.bf16.msra.mxu0 %v3837
      %4209 = vmatpush.bf16.msra.mxu0 %v3836
      %4210 = vmatpush.bf16.msra.mxu0 %v3835
      %4211 = vmatpush.bf16.msra.mxu0 %v3834
      %4212 = vmatmul.bf16.gmra.mxu0 %v2771
      %v4213 = vpop.f32.mrf.mxu0
      %v4214 = vadd.f32 %v4045, %v4213
      %v4215 = vpop.f32.mrf.mxu0
      %v4216 = vadd.f32 %v4047, %v4215
      %4217 = vmatmul.bf16.gmra.mxu0 %v2774
      %v4218 = vpop.f32.mrf.mxu0
      %v4219 = vadd.f32 %v4050, %v4218
      %v4220 = vpop.f32.mrf.mxu0
      %v4221 = vadd.f32 %v4052, %v4220
      %4222 = vmatmul.bf16.gmra.mxu0 %v2777
      %v4223 = vpop.f32.mrf.mxu0
      %v4224 = vadd.f32 %v4055, %v4223
      %v4225 = vpop.f32.mrf.mxu0
      %v4226 = vadd.f32 %v4057, %v4225
      %4227 = vmatmul.bf16.gmra.mxu0 %v3676
      %v4228 = vpop.f32.mrf.mxu0
      %v4229 = vadd.f32 %v4060, %v4228
      %v4230 = vpop.f32.mrf.mxu0
      %v4231 = vadd.f32 %v4062, %v4230
      %4232 = vmatmul.bf16.gmra.mxu0 %v2783
      %v4233 = vpop.f32.mrf.mxu0
      %v4234 = vadd.f32 %v4065, %v4233
      %v4235 = vpop.f32.mrf.mxu0
      %v4236 = vadd.f32 %v4067, %v4235
      %4237 = vmatmul.bf16.gmra.mxu0 %v2786
      %v4238 = vpop.f32.mrf.mxu0
      %v4239 = vadd.f32 %v4070, %v4238
      %v4240 = vpop.f32.mrf.mxu0
      %v4241 = vadd.f32 %v4072, %v4240
      %4242 = vmatmul.bf16.gmra.mxu0 %v2789
      %v4243 = vpop.f32.mrf.mxu0
      %v4244 = vadd.f32 %v4075, %v4243
      %v4245 = vpop.f32.mrf.mxu0
      %v4246 = vadd.f32 %v4077, %v4245
      %4247 = vmatmul.bf16.gmra.mxu0 %v3679
      %v4248 = vpop.f32.mrf.mxu0
      %v4249 = vadd.f32 %v4080, %v4248
      %v4250 = vpop.f32.mrf.mxu0
      %v4251 = vadd.f32 %v4082, %v4250
      %4252 = vmatmul.bf16.gmra.mxu0 %v2795
      %v4253 = vpop.f32.mrf.mxu0
      %v4254 = vadd.f32 %v4085, %v4253
      %v4255 = vpop.f32.mrf.mxu0
      %v4256 = vadd.f32 %v4087, %v4255
      %4257 = vmatmul.bf16.gmra.mxu0 %v2798
      %v4258 = vpop.f32.mrf.mxu0
      %v4259 = vadd.f32 %v4090, %v4258
      %v4260 = vpop.f32.mrf.mxu0
      %v4261 = vadd.f32 %v4092, %v4260
      %4262 = vmatmul.bf16.gmra.mxu0 %v2801
      %v4263 = vpop.f32.mrf.mxu0
      %v4264 = vadd.f32 %v4095, %v4263
      %v4265 = vpop.f32.mrf.mxu0
      %v4266 = vadd.f32 %v4097, %v4265
      %4267 = vmatmul.bf16.gmra.mxu0 %v3682
      %v4268 = vpop.f32.mrf.mxu0
      %v4269 = vadd.f32 %v4100, %v4268
      %v4270 = vpop.f32.mrf.mxu0
      %v4271 = vadd.f32 %v4102, %v4270
      %4272 = vmatmul.bf16.gmra.mxu0 %v2807
      %v4273 = vpop.f32.mrf.mxu0
      %v4274 = vadd.f32 %v4105, %v4273
      %v4275 = vpop.f32.mrf.mxu0
      %v4276 = vadd.f32 %v4107, %v4275
      %4277 = vmatmul.bf16.gmra.mxu0 %v2810
      %v4278 = vpop.f32.mrf.mxu0
      %v4279 = vadd.f32 %v4110, %v4278
      %v4280 = vpop.f32.mrf.mxu0
      %v4281 = vadd.f32 %v4112, %v4280
      %4282 = vmatmul.bf16.gmra.mxu0 %v2813
      %v4283 = vpop.f32.mrf.mxu0
      %v4284 = vadd.f32 %v4115, %v4283
      %v4285 = vpop.f32.mrf.mxu0
      %v4286 = vadd.f32 %v4117, %v4285
      %4287 = vmatmul.bf16.gmra.mxu0 %v3685
      %v4288 = vpop.f32.mrf.mxu0
      %v4289 = vadd.f32 %v4120, %v4288
      %v4290 = vpop.f32.mrf.mxu0
      %v4291 = vadd.f32 %v4122, %v4290
      %4292 = vmatmul.bf16.gmra.mxu0 %v2819
      %v4293 = vpop.f32.mrf.mxu0
      %v4294 = vadd.f32 %v4125, %v4293
      %v4295 = vpop.f32.mrf.mxu0
      %v4296 = vadd.f32 %v4127, %v4295
      %4297 = vmatmul.bf16.gmra.mxu0 %v2822
      %v4298 = vpop.f32.mrf.mxu0
      %v4299 = vadd.f32 %v4130, %v4298
      %v4300 = vpop.f32.mrf.mxu0
      %v4301 = vadd.f32 %v4132, %v4300
      %4302 = vmatmul.bf16.gmra.mxu0 %v2825
      %v4303 = vpop.f32.mrf.mxu0
      %v4304 = vadd.f32 %v4135, %v4303
      %v4305 = vpop.f32.mrf.mxu0
      %v4306 = vadd.f32 %v4137, %v4305
      %4307 = vmatmul.bf16.gmra.mxu0 %v3688
      %v4308 = vpop.f32.mrf.mxu0
      %v4309 = vadd.f32 %v4140, %v4308
      %v4310 = vpop.f32.mrf.mxu0
      %v4311 = vadd.f32 %v4142, %v4310
      %4312 = vmatmul.bf16.gmra.mxu0 %v2831
      %v4313 = vpop.f32.mrf.mxu0
      %v4314 = vadd.f32 %v4145, %v4313
      %v4315 = vpop.f32.mrf.mxu0
      %v4316 = vadd.f32 %v4147, %v4315
      %4317 = vmatmul.bf16.gmra.mxu0 %v2834
      %v4318 = vpop.f32.mrf.mxu0
      %v4319 = vadd.f32 %v4150, %v4318
      %v4320 = vpop.f32.mrf.mxu0
      %v4321 = vadd.f32 %v4152, %v4320
      %4322 = vmatmul.bf16.gmra.mxu0 %v2837
      %v4323 = vpop.f32.mrf.mxu0
      %v4324 = vadd.f32 %v4155, %v4323
      %v4325 = vpop.f32.mrf.mxu0
      %v4326 = vadd.f32 %v4157, %v4325
      %4327 = vmatmul.bf16.gmra.mxu0 %v3691
      %v4328 = vpop.f32.mrf.mxu0
      %v4329 = vadd.f32 %v4160, %v4328
      %v4330 = vpop.f32.mrf.mxu0
      %v4331 = vadd.f32 %v4162, %v4330
      %4332 = vmatmul.bf16.gmra.mxu0 %v2843
      %v4333 = vpop.f32.mrf.mxu0
      %v4334 = vadd.f32 %v4165, %v4333
      %v4335 = vpop.f32.mrf.mxu0
      %v4336 = vadd.f32 %v4167, %v4335
      %4337 = vmatmul.bf16.gmra.mxu0 %v2846
      %v4338 = vpop.f32.mrf.mxu0
      %v4339 = vadd.f32 %v4170, %v4338
      %v4340 = vpop.f32.mrf.mxu0
      %v4341 = vadd.f32 %v4172, %v4340
      %4342 = vmatmul.bf16.gmra.mxu0 %v2849
      %v4343 = vpop.f32.mrf.mxu0
      %v4344 = vadd.f32 %v4175, %v4343
      %v4345 = vpop.f32.mrf.mxu0
      %v4346 = vadd.f32 %v4177, %v4345
      %4347 = vmatmul.bf16.gmra.mxu0 %v3694
      %v4348 = vpop.f32.mrf.mxu0
      %v4349 = vadd.f32 %v4180, %v4348
      %v4350 = vpop.f32.mrf.mxu0
      %v4351 = vadd.f32 %v4182, %v4350
      %4352 = vmatmul.bf16.gmra.mxu0 %v2855
      %v4353 = vpop.f32.mrf.mxu0
      %v4354 = vadd.f32 %v4185, %v4353
      %v4355 = vpop.f32.mrf.mxu0
      %v4356 = vadd.f32 %v4187, %v4355
      %4357 = vmatmul.bf16.gmra.mxu0 %v2858
      %v4358 = vpop.f32.mrf.mxu0
      %v4359 = vadd.f32 %v4190, %v4358
      %v4360 = vpop.f32.mrf.mxu0
      %v4361 = vadd.f32 %v4192, %v4360
      %4362 = vmatmul.bf16.gmra.mxu0 %v2861
      %v4363 = vpop.f32.mrf.mxu0
      %v4364 = vadd.f32 %v4195, %v4363
      %v4365 = vpop.f32.mrf.mxu0
      %v4366 = vadd.f32 %v4197, %v4365
      %4367 = vmatmul.bf16.gmra.mxu0 %v3697
      %v4368 = vpop.f32.mrf.mxu0
      %v4369 = vadd.f32 %v4200, %v4368
      %v4370 = vpop.f32.mrf.mxu0
      %v4371 = vadd.f32 %v4202, %v4370
      %4372 = vdwg.mxu0
      %v4373 = vadd.f32 %v3450, %v4214
      %v4374 = vadd.f32 %v3452, %v4216
      %v4375 = vadd.f32 %v3455, %v4219
      %v4376 = vadd.f32 %v3457, %v4221
      %v4377 = vadd.f32 %v3460, %v4224
      %v4378 = vadd.f32 %v3462, %v4226
      %v4379 = vadd.f32 %v3465, %v4229
      %v4380 = vadd.f32 %v3467, %v4231
      %v4381 = vadd.f32 %v3470, %v4234
      %v4382 = vadd.f32 %v3472, %v4236
      %v4383 = vadd.f32 %v3475, %v4239
      %v4384 = vadd.f32 %v3477, %v4241
      %v4385 = vadd.f32 %v3480, %v4244
      %v4386 = vadd.f32 %v3482, %v4246
      %v4387 = vadd.f32 %v3485, %v4249
      %v4388 = vadd.f32 %v3487, %v4251
      %v4389 = vadd.f32 %v3490, %v4254
      %v4390 = vadd.f32 %v3492, %v4256
      %v4391 = vadd.f32 %v3495, %v4259
      %v4392 = vadd.f32 %v3497, %v4261
      %v4393 = vadd.f32 %v3500, %v4264
      %v4394 = vadd.f32 %v3502, %v4266
      %v4395 = vadd.f32 %v3505, %v4269
      %v4396 = vadd.f32 %v3507, %v4271
      %v4397 = vadd.f32 %v3510, %v4274
      %v4398 = vadd.f32 %v3512, %v4276
      %v4399 = vadd.f32 %v3515, %v4279
      %v4400 = vadd.f32 %v3517, %v4281
      %v4401 = vadd.f32 %v3520, %v4284
      %v4402 = vadd.f32 %v3522, %v4286
      %v4403 = vadd.f32 %v3525, %v4289
      %v4404 = vadd.f32 %v3527, %v4291
      %v4405 = vadd.f32 %v3530, %v4294
      %v4406 = vadd.f32 %v3532, %v4296
      %v4407 = vadd.f32 %v3535, %v4299
      %v4408 = vadd.f32 %v3537, %v4301
      %v4409 = vadd.f32 %v3540, %v4304
      %v4410 = vadd.f32 %v3542, %v4306
      %v4411 = vadd.f32 %v3545, %v4309
      %v4412 = vadd.f32 %v3547, %v4311
      %v4413 = vadd.f32 %v3550, %v4314
      %v4414 = vadd.f32 %v3552, %v4316
      %v4415 = vadd.f32 %v3555, %v4319
      %v4416 = vadd.f32 %v3557, %v4321
      %v4417 = vadd.f32 %v3560, %v4324
      %v4418 = vadd.f32 %v3562, %v4326
      %v4419 = vadd.f32 %v3565, %v4329
      %v4420 = vadd.f32 %v3567, %v4331
      %v4421 = vadd.f32 %v3570, %v4334
      %v4422 = vadd.f32 %v3572, %v4336
      %v4423 = vadd.f32 %v3575, %v4339
      %v4424 = vadd.f32 %v3577, %v4341
      %v4425 = vadd.f32 %v3580, %v4344
      %v4426 = vadd.f32 %v3582, %v4346
      %v4427 = vadd.f32 %v3585, %v4349
      %v4428 = vadd.f32 %v3587, %v4351
      %v4429 = vadd.f32 %v3590, %v4354
      %v4430 = vadd.f32 %v3592, %v4356
      %v4431 = vadd.f32 %v3595, %v4359
      %v4432 = vadd.f32 %v3597, %v4361
      %v4433 = vadd.f32 %v3600, %v4364
      %v4434 = vadd.f32 %v3602, %v4366
      %v4435 = vadd.f32 %v3605, %v4369
      %v4436 = vadd.f32 %v3607, %v4371
      %v4437 = vunpack.c.l.b16 %v1448
      %v4438 = vunpack.c.l.b16 %v1662
      %v4439 = vunpack.c.l.b16 %v1455
      %v4440 = vunpack.c.l.b16 %v1663
      %v4441 = vunpack.c.l.b16 %v1462
      %v4442 = vunpack.c.l.b16 %v1664
      %v4443 = vunpack.c.l.b16 %v1469
      %v4444 = vunpack.c.l.b16 %v1665
      %v4445 = vunpack.c.l.b16 %v1476
      %v4446 = vunpack.c.l.b16 %v1666
      %v4447 = vunpack.c.l.b16 %v1483
      %v4448 = vunpack.c.l.b16 %v1667
      %v4449 = vunpack.c.l.b16 %v1490
      %v4450 = vunpack.c.l.b16 %v1668
      %v4451 = vunpack.c.l.b16 %v1497
      %v4452 = vunpack.c.l.b16 %v1669
      %s4453 = scalar_lea.vmem %s1, 576
      %v4454 = vld [vmem:[%s4453] sm:$0xf]
      %v4455 = vld [vmem:[%s4453 + $0x4] sm:$0xf]
      %v4456 = vld [vmem:[%s4453 + $0x8] sm:$0xf]
      %v4457 = vld [vmem:[%s4453 + $0xc] sm:$0xf]
      %v4458 = vld [vmem:[%s4453 + $0x10] sm:$0xf]
      %v4459 = vld [vmem:[%s4453 + $0x14] sm:$0xf]
      %v4460 = vld [vmem:[%s4453 + $0x18] sm:$0xf]
      %v4461 = vld [vmem:[%s4453 + $0x1c] sm:$0xf]
      %v4462 = vld [vmem:[%s4453 + $0x20] sm:$0xf]
      %v4463 = vld [vmem:[%s4453 + $0x24] sm:$0xf]
      %v4464 = vld [vmem:[%s4453 + $0x28] sm:$0xf]
      %v4465 = vld [vmem:[%s4453 + $0x2c] sm:$0xf]
      %v4466 = vld [vmem:[%s4453 + $0x30] sm:$0xf]
      %v4467 = vld [vmem:[%s4453 + $0x34] sm:$0xf]
      %v4468 = vld [vmem:[%s4453 + $0x38] sm:$0xf]
      %v4469 = vld [vmem:[%s4453 + $0x3c] sm:$0xf]
      %v4470 = vld [vmem:[%s4453 + $0x40] sm:$0xf]
      %v4471 = vld [vmem:[%s4453 + $0x44] sm:$0xf]
      %v4472 = vld [vmem:[%s4453 + $0x48] sm:$0xf]
      %v4473 = vld [vmem:[%s4453 + $0x4c] sm:$0xf]
      %v4474 = vld [vmem:[%s4453 + $0x50] sm:$0xf]
      %v4475 = vld [vmem:[%s4453 + $0x54] sm:$0xf]
      %v4476 = vld [vmem:[%s4453 + $0x58] sm:$0xf]
      %v4477 = vld [vmem:[%s4453 + $0x5c] sm:$0xf]
      %v4478 = vld [vmem:[%s4453 + $0x60] sm:$0xf]
      %v4479 = vld [vmem:[%s4453 + $0x64] sm:$0xf]
      %v4480 = vld [vmem:[%s4453 + $0x68] sm:$0xf]
      %v4481 = vld [vmem:[%s4453 + $0x6c] sm:$0xf]
      %v4482 = vld [vmem:[%s4453 + $0x70] sm:$0xf]
      %v4483 = vld [vmem:[%s4453 + $0x74] sm:$0xf]
      %v4484 = vld [vmem:[%s4453 + $0x78] sm:$0xf]
      %v4485 = vld [vmem:[%s4453 + $0x7c] sm:$0xf]
      %v4486 = vld [vmem:[%s4453 + $0x80] sm:$0xf]
      %v4487 = vld [vmem:[%s4453 + $0x84] sm:$0xf]
      %v4488 = vld [vmem:[%s4453 + $0x88] sm:$0xf]
      %v4489 = vld [vmem:[%s4453 + $0x8c] sm:$0xf]
      %v4490 = vld [vmem:[%s4453 + $0x90] sm:$0xf]
      %v4491 = vld [vmem:[%s4453 + $0x94] sm:$0xf]
      %v4492 = vld [vmem:[%s4453 + $0x98] sm:$0xf]
      %v4493 = vld [vmem:[%s4453 + $0x9c] sm:$0xf]
      %v4494 = vld [vmem:[%s4453 + $0xa0] sm:$0xf]
      %v4495 = vld [vmem:[%s4453 + $0xa4] sm:$0xf]
      %v4496 = vld [vmem:[%s4453 + $0xa8] sm:$0xf]
      %v4497 = vld [vmem:[%s4453 + $0xac] sm:$0xf]
      %v4498 = vld [vmem:[%s4453 + $0xb0] sm:$0xf]
      %v4499 = vld [vmem:[%s4453 + $0xb4] sm:$0xf]
      %v4500 = vld [vmem:[%s4453 + $0xb8] sm:$0xf]
      %v4501 = vld [vmem:[%s4453 + $0xbc] sm:$0xf]
      %v4502 = vpack.c.b16 %v744, %v742
      %v4503 = vpack.c.b16 %v4439, %v4437
      %v4504 = vpack.c.b16 %v4440, %v4438
      %v4505 = vpack.c.b16 %v748, %v746
      %v4506 = vpack.c.b16 %v4443, %v4441
      %v4507 = vpack.c.b16 %v4444, %v4442
      %v4508 = vpack.c.b16 %v752, %v750
      %v4509 = vpack.c.b16 %v4447, %v4445
      %v4510 = vpack.c.b16 %v4448, %v4446
      %v4511 = vpack.c.b16 %v756, %v754
      %v4512 = vpack.c.b16 %v4451, %v4449
      %v4513 = vpack.c.b16 %v4452, %v4450
      %v4574 = vunpack.c.l.b16 %v4454
      %v4575 = vunpack.c.l.b16 %v4455
      %v4576 = vunpack.c.l.b16 %v4456
      %v4577 = vunpack.c.l.b16 %v4457
      %v4578 = vunpack.c.l.b16 %v4458
      %v4579 = vunpack.c.l.b16 %v4459
      %v4580 = vunpack.c.l.b16 %v4460
      %v4581 = vunpack.c.l.b16 %v4461
      %v4582 = vunpack.c.l.b16 %v4462
      %v4583 = vunpack.c.l.b16 %v4463
      %v4584 = vunpack.c.l.b16 %v4464
      %v4585 = vunpack.c.l.b16 %v4465
      %v4586 = vunpack.c.l.b16 %v4466
      %v4587 = vunpack.c.l.b16 %v4467
      %v4588 = vunpack.c.l.b16 %v4468
      %v4589 = vunpack.c.l.b16 %v4469
      %v4590 = vunpack.c.l.b16 %v4470
      %v4591 = vunpack.c.l.b16 %v4471
      %v4592 = vunpack.c.l.b16 %v4472
      %v4593 = vunpack.c.l.b16 %v4473
      %v4594 = vunpack.c.l.b16 %v4474
      %v4595 = vunpack.c.l.b16 %v4475
      %v4596 = vunpack.c.l.b16 %v4476
      %v4597 = vunpack.c.l.b16 %v4477
      %v4598 = vunpack.c.l.b16 %v4478
      %v4599 = vunpack.c.l.b16 %v4479
      %v4600 = vunpack.c.l.b16 %v4480
      %v4601 = vunpack.c.l.b16 %v4481
      %v4602 = vunpack.c.l.b16 %v4482
      %v4603 = vunpack.c.l.b16 %v4483
      %v4604 = vunpack.c.l.b16 %v4484
      %v4605 = vunpack.c.l.b16 %v4485
      %v4606 = vunpack.c.l.b16 %v4486
      %v4607 = vunpack.c.l.b16 %v4487
      %v4608 = vunpack.c.l.b16 %v4488
      %v4609 = vunpack.c.l.b16 %v4489
      %v4610 = vunpack.c.l.b16 %v4490
      %v4611 = vunpack.c.l.b16 %v4491
      %v4612 = vunpack.c.l.b16 %v4492
      %v4613 = vunpack.c.l.b16 %v4493
      %v4614 = vunpack.c.l.b16 %v4494
      %v4615 = vunpack.c.l.b16 %v4495
      %v4616 = vunpack.c.l.b16 %v4496
      %v4617 = vunpack.c.l.b16 %v4497
      %v4618 = vunpack.c.l.b16 %v4498
      %v4619 = vunpack.c.l.b16 %v4499
      %v4620 = vunpack.c.l.b16 %v4500
      %v4621 = vunpack.c.l.b16 %v4501
      %v4622 = vpack.c.b16 %v4575, %v4574
      %v4623 = vpack.c.b16 %v4577, %v4576
      %v4624 = vpack.c.b16 %v4579, %v4578
      %v4625 = vpack.c.b16 %v4581, %v4580
      %v4626 = vpack.c.b16 %v4583, %v4582
      %v4627 = vpack.c.b16 %v4585, %v4584
      %v4628 = vpack.c.b16 %v4587, %v4586
      %v4629 = vpack.c.b16 %v4589, %v4588
      %v4630 = vpack.c.b16 %v4591, %v4590
      %v4631 = vpack.c.b16 %v4593, %v4592
      %v4632 = vpack.c.b16 %v4595, %v4594
      %v4633 = vpack.c.b16 %v4597, %v4596
      %v4634 = vpack.c.b16 %v4599, %v4598
      %v4635 = vpack.c.b16 %v4601, %v4600
      %v4636 = vpack.c.b16 %v4603, %v4602
      %v4637 = vpack.c.b16 %v4605, %v4604
      %v4638 = vpack.c.b16 %v4607, %v4606
      %v4639 = vpack.c.b16 %v4609, %v4608
      %v4640 = vpack.c.b16 %v4611, %v4610
      %v4641 = vpack.c.b16 %v4613, %v4612
      %v4642 = vpack.c.b16 %v4615, %v4614
      %v4643 = vpack.c.b16 %v4617, %v4616
      %v4644 = vpack.c.b16 %v4619, %v4618
      %v4645 = vpack.c.b16 %v4621, %v4620
      %4670 = vmatpush.bf16.msra.mxu0 %v4629
      %4671 = vmatpush.bf16.msra.mxu0 %v4628
      %4672 = vmatpush.bf16.msra.mxu0 %v4627
      %4673 = vmatpush.bf16.msra.mxu0 %v4626
      %4674 = vmatpush.bf16.msra.mxu0 %v4625
      %4675 = vmatpush.bf16.msra.mxu0 %v4624
      %4676 = vmatpush.bf16.msra.mxu0 %v4623
      %4677 = vmatpush.bf16.msra.mxu0 %v4622
      %4678 = vmatmul.bf16.gmra.mxu0 %v2778
      %v4679 = vpop.f32.mrf.mxu0
      %v4680 = vadd.f32 0.0, %v4679
      %v4681 = vpop.f32.mrf.mxu0
      %v4682 = vadd.f32 0.0, %v4681
      %4683 = vmatmul.bf16.gmra.mxu0 %v2781
      %v4684 = vpop.f32.mrf.mxu0
      %v4685 = vadd.f32 0.0, %v4684
      %v4686 = vpop.f32.mrf.mxu0
      %v4687 = vadd.f32 0.0, %v4686
      %4688 = vmatmul.bf16.gmra.mxu0 %v2784
      %v4689 = vpop.f32.mrf.mxu0
      %v4690 = vadd.f32 0.0, %v4689
      %v4691 = vpop.f32.mrf.mxu0
      %v4692 = vadd.f32 0.0, %v4691
      %4693 = vmatmul.bf16.gmra.mxu0 %v2787
      %v4694 = vpop.f32.mrf.mxu0
      %v4695 = vadd.f32 0.0, %v4694
      %v4696 = vpop.f32.mrf.mxu0
      %v4697 = vadd.f32 0.0, %v4696
      %4698 = vmatmul.bf16.gmra.mxu0 %v2790
      %v4699 = vpop.f32.mrf.mxu0
      %v4700 = vadd.f32 0.0, %v4699
      %v4701 = vpop.f32.mrf.mxu0
      %v4702 = vadd.f32 0.0, %v4701
      %4703 = vmatmul.bf16.gmra.mxu0 %v2793
      %v4704 = vpop.f32.mrf.mxu0
      %v4705 = vadd.f32 0.0, %v4704
      %v4706 = vpop.f32.mrf.mxu0
      %v4707 = vadd.f32 0.0, %v4706
      %4708 = vmatmul.bf16.gmra.mxu0 %v2796
      %v4709 = vpop.f32.mrf.mxu0
      %v4710 = vadd.f32 0.0, %v4709
      %v4711 = vpop.f32.mrf.mxu0
      %v4712 = vadd.f32 0.0, %v4711
      %4713 = vmatmul.bf16.gmra.mxu0 %v2799
      %v4714 = vpop.f32.mrf.mxu0
      %v4715 = vadd.f32 0.0, %v4714
      %v4716 = vpop.f32.mrf.mxu0
      %v4717 = vadd.f32 0.0, %v4716
      %4718 = vmatmul.bf16.gmra.mxu0 %v2802
      %v4719 = vpop.f32.mrf.mxu0
      %v4720 = vadd.f32 0.0, %v4719
      %v4721 = vpop.f32.mrf.mxu0
      %v4722 = vadd.f32 0.0, %v4721
      %4723 = vmatmul.bf16.gmra.mxu0 %v2805
      %v4724 = vpop.f32.mrf.mxu0
      %v4725 = vadd.f32 0.0, %v4724
      %v4726 = vpop.f32.mrf.mxu0
      %v4727 = vadd.f32 0.0, %v4726
      %4728 = vmatmul.bf16.gmra.mxu0 %v2808
      %v4729 = vpop.f32.mrf.mxu0
      %v4730 = vadd.f32 0.0, %v4729
      %v4731 = vpop.f32.mrf.mxu0
      %v4732 = vadd.f32 0.0, %v4731
      %4733 = vmatmul.bf16.gmra.mxu0 %v2811
      %v4734 = vpop.f32.mrf.mxu0
      %v4735 = vadd.f32 0.0, %v4734
      %v4736 = vpop.f32.mrf.mxu0
      %v4737 = vadd.f32 0.0, %v4736
      %4738 = vmatmul.bf16.gmra.mxu0 %v2814
      %v4739 = vpop.f32.mrf.mxu0
      %v4740 = vadd.f32 0.0, %v4739
      %v4741 = vpop.f32.mrf.mxu0
      %v4742 = vadd.f32 0.0, %v4741
      %4743 = vmatmul.bf16.gmra.mxu0 %v2817
      %v4744 = vpop.f32.mrf.mxu0
      %v4745 = vadd.f32 0.0, %v4744
      %v4746 = vpop.f32.mrf.mxu0
      %v4747 = vadd.f32 0.0, %v4746
      %4748 = vmatmul.bf16.gmra.mxu0 %v2820
      %v4749 = vpop.f32.mrf.mxu0
      %v4750 = vadd.f32 0.0, %v4749
      %v4751 = vpop.f32.mrf.mxu0
      %v4752 = vadd.f32 0.0, %v4751
      %4753 = vmatmul.bf16.gmra.mxu0 %v2823
      %v4754 = vpop.f32.mrf.mxu0
      %v4755 = vadd.f32 0.0, %v4754
      %v4756 = vpop.f32.mrf.mxu0
      %v4757 = vadd.f32 0.0, %v4756
      %4758 = vmatmul.bf16.gmra.mxu0 %v2826
      %v4759 = vpop.f32.mrf.mxu0
      %v4760 = vadd.f32 0.0, %v4759
      %v4761 = vpop.f32.mrf.mxu0
      %v4762 = vadd.f32 0.0, %v4761
      %4763 = vmatmul.bf16.gmra.mxu0 %v2829
      %v4764 = vpop.f32.mrf.mxu0
      %v4765 = vadd.f32 0.0, %v4764
      %v4766 = vpop.f32.mrf.mxu0
      %v4767 = vadd.f32 0.0, %v4766
      %4768 = vmatmul.bf16.gmra.mxu0 %v2832
      %v4769 = vpop.f32.mrf.mxu0
      %v4770 = vadd.f32 0.0, %v4769
      %v4771 = vpop.f32.mrf.mxu0
      %v4772 = vadd.f32 0.0, %v4771
      %4773 = vmatmul.bf16.gmra.mxu0 %v2835
      %v4774 = vpop.f32.mrf.mxu0
      %v4775 = vadd.f32 0.0, %v4774
      %v4776 = vpop.f32.mrf.mxu0
      %v4777 = vadd.f32 0.0, %v4776
      %4778 = vmatmul.bf16.gmra.mxu0 %v2838
      %v4779 = vpop.f32.mrf.mxu0
      %v4780 = vadd.f32 0.0, %v4779
      %v4781 = vpop.f32.mrf.mxu0
      %v4782 = vadd.f32 0.0, %v4781
      %4783 = vmatmul.bf16.gmra.mxu0 %v2841
      %v4784 = vpop.f32.mrf.mxu0
      %v4785 = vadd.f32 0.0, %v4784
      %v4786 = vpop.f32.mrf.mxu0
      %v4787 = vadd.f32 0.0, %v4786
      %4788 = vmatmul.bf16.gmra.mxu0 %v2844
      %v4789 = vpop.f32.mrf.mxu0
      %v4790 = vadd.f32 0.0, %v4789
      %v4791 = vpop.f32.mrf.mxu0
      %v4792 = vadd.f32 0.0, %v4791
      %4793 = vmatmul.bf16.gmra.mxu0 %v2847
      %v4794 = vpop.f32.mrf.mxu0
      %v4795 = vadd.f32 0.0, %v4794
      %v4796 = vpop.f32.mrf.mxu0
      %v4797 = vadd.f32 0.0, %v4796
      %4798 = vmatmul.bf16.gmra.mxu0 %v2850
      %v4799 = vpop.f32.mrf.mxu0
      %v4800 = vadd.f32 0.0, %v4799
      %v4801 = vpop.f32.mrf.mxu0
      %v4802 = vadd.f32 0.0, %v4801
      %4803 = vmatmul.bf16.gmra.mxu0 %v2853
      %v4804 = vpop.f32.mrf.mxu0
      %v4805 = vadd.f32 0.0, %v4804
      %v4806 = vpop.f32.mrf.mxu0
      %v4807 = vadd.f32 0.0, %v4806
      %4808 = vmatmul.bf16.gmra.mxu0 %v2856
      %v4809 = vpop.f32.mrf.mxu0
      %v4810 = vadd.f32 0.0, %v4809
      %v4811 = vpop.f32.mrf.mxu0
      %v4812 = vadd.f32 0.0, %v4811
      %4813 = vmatmul.bf16.gmra.mxu0 %v2859
      %v4814 = vpop.f32.mrf.mxu0
      %v4815 = vadd.f32 0.0, %v4814
      %v4816 = vpop.f32.mrf.mxu0
      %v4817 = vadd.f32 0.0, %v4816
      %4818 = vmatmul.bf16.gmra.mxu0 %v4502
      %v4819 = vpop.f32.mrf.mxu0
      %v4820 = vadd.f32 0.0, %v4819
      %v4821 = vpop.f32.mrf.mxu0
      %v4822 = vadd.f32 0.0, %v4821
      %4823 = vmatmul.bf16.gmra.mxu0 %v4505
      %v4824 = vpop.f32.mrf.mxu0
      %v4825 = vadd.f32 0.0, %v4824
      %v4826 = vpop.f32.mrf.mxu0
      %v4827 = vadd.f32 0.0, %v4826
      %4828 = vmatmul.bf16.gmra.mxu0 %v4508
      %v4829 = vpop.f32.mrf.mxu0
      %v4830 = vadd.f32 0.0, %v4829
      %v4831 = vpop.f32.mrf.mxu0
      %v4832 = vadd.f32 0.0, %v4831
      %4833 = vmatmul.bf16.gmra.mxu0 %v4511
      %v4834 = vpop.f32.mrf.mxu0
      %v4835 = vadd.f32 0.0, %v4834
      %v4836 = vpop.f32.mrf.mxu0
      %v4837 = vadd.f32 0.0, %v4836
      %4838 = vdwg.mxu0
      %4839 = vmatpush.bf16.msra.mxu0 %v4637
      %4840 = vmatpush.bf16.msra.mxu0 %v4636
      %4841 = vmatpush.bf16.msra.mxu0 %v4635
      %4842 = vmatpush.bf16.msra.mxu0 %v4634
      %4843 = vmatpush.bf16.msra.mxu0 %v4633
      %4844 = vmatpush.bf16.msra.mxu0 %v4632
      %4845 = vmatpush.bf16.msra.mxu0 %v4631
      %4846 = vmatpush.bf16.msra.mxu0 %v4630
      %4847 = vmatmul.bf16.gmra.mxu0 %v2779
      %v4848 = vpop.f32.mrf.mxu0
      %v4849 = vadd.f32 %v4680, %v4848
      %v4850 = vpop.f32.mrf.mxu0
      %v4851 = vadd.f32 %v4682, %v4850
      %4852 = vmatmul.bf16.gmra.mxu0 %v2782
      %v4853 = vpop.f32.mrf.mxu0
      %v4854 = vadd.f32 %v4685, %v4853
      %v4855 = vpop.f32.mrf.mxu0
      %v4856 = vadd.f32 %v4687, %v4855
      %4857 = vmatmul.bf16.gmra.mxu0 %v2785
      %v4858 = vpop.f32.mrf.mxu0
      %v4859 = vadd.f32 %v4690, %v4858
      %v4860 = vpop.f32.mrf.mxu0
      %v4861 = vadd.f32 %v4692, %v4860
      %4862 = vmatmul.bf16.gmra.mxu0 %v2788
      %v4863 = vpop.f32.mrf.mxu0
      %v4864 = vadd.f32 %v4695, %v4863
      %v4865 = vpop.f32.mrf.mxu0
      %v4866 = vadd.f32 %v4697, %v4865
      %4867 = vmatmul.bf16.gmra.mxu0 %v2791
      %v4868 = vpop.f32.mrf.mxu0
      %v4869 = vadd.f32 %v4700, %v4868
      %v4870 = vpop.f32.mrf.mxu0
      %v4871 = vadd.f32 %v4702, %v4870
      %4872 = vmatmul.bf16.gmra.mxu0 %v2794
      %v4873 = vpop.f32.mrf.mxu0
      %v4874 = vadd.f32 %v4705, %v4873
      %v4875 = vpop.f32.mrf.mxu0
      %v4876 = vadd.f32 %v4707, %v4875
      %4877 = vmatmul.bf16.gmra.mxu0 %v2797
      %v4878 = vpop.f32.mrf.mxu0
      %v4879 = vadd.f32 %v4710, %v4878
      %v4880 = vpop.f32.mrf.mxu0
      %v4881 = vadd.f32 %v4712, %v4880
      %4882 = vmatmul.bf16.gmra.mxu0 %v2800
      %v4883 = vpop.f32.mrf.mxu0
      %v4884 = vadd.f32 %v4715, %v4883
      %v4885 = vpop.f32.mrf.mxu0
      %v4886 = vadd.f32 %v4717, %v4885
      %4887 = vmatmul.bf16.gmra.mxu0 %v2803
      %v4888 = vpop.f32.mrf.mxu0
      %v4889 = vadd.f32 %v4720, %v4888
      %v4890 = vpop.f32.mrf.mxu0
      %v4891 = vadd.f32 %v4722, %v4890
      %4892 = vmatmul.bf16.gmra.mxu0 %v2806
      %v4893 = vpop.f32.mrf.mxu0
      %v4894 = vadd.f32 %v4725, %v4893
      %v4895 = vpop.f32.mrf.mxu0
      %v4896 = vadd.f32 %v4727, %v4895
      %4897 = vmatmul.bf16.gmra.mxu0 %v2809
      %v4898 = vpop.f32.mrf.mxu0
      %v4899 = vadd.f32 %v4730, %v4898
      %v4900 = vpop.f32.mrf.mxu0
      %v4901 = vadd.f32 %v4732, %v4900
      %4902 = vmatmul.bf16.gmra.mxu0 %v2812
      %v4903 = vpop.f32.mrf.mxu0
      %v4904 = vadd.f32 %v4735, %v4903
      %v4905 = vpop.f32.mrf.mxu0
      %v4906 = vadd.f32 %v4737, %v4905
      %4907 = vmatmul.bf16.gmra.mxu0 %v2815
      %v4908 = vpop.f32.mrf.mxu0
      %v4909 = vadd.f32 %v4740, %v4908
      %v4910 = vpop.f32.mrf.mxu0
      %v4911 = vadd.f32 %v4742, %v4910
      %4912 = vmatmul.bf16.gmra.mxu0 %v2818
      %v4913 = vpop.f32.mrf.mxu0
      %v4914 = vadd.f32 %v4745, %v4913
      %v4915 = vpop.f32.mrf.mxu0
      %v4916 = vadd.f32 %v4747, %v4915
      %4917 = vmatmul.bf16.gmra.mxu0 %v2821
      %v4918 = vpop.f32.mrf.mxu0
      %v4919 = vadd.f32 %v4750, %v4918
      %v4920 = vpop.f32.mrf.mxu0
      %v4921 = vadd.f32 %v4752, %v4920
      %4922 = vmatmul.bf16.gmra.mxu0 %v2824
      %v4923 = vpop.f32.mrf.mxu0
      %v4924 = vadd.f32 %v4755, %v4923
      %v4925 = vpop.f32.mrf.mxu0
      %v4926 = vadd.f32 %v4757, %v4925
      %4927 = vmatmul.bf16.gmra.mxu0 %v2827
      %v4928 = vpop.f32.mrf.mxu0
      %v4929 = vadd.f32 %v4760, %v4928
      %v4930 = vpop.f32.mrf.mxu0
      %v4931 = vadd.f32 %v4762, %v4930
      %4932 = vmatmul.bf16.gmra.mxu0 %v2830
      %v4933 = vpop.f32.mrf.mxu0
      %v4934 = vadd.f32 %v4765, %v4933
      %v4935 = vpop.f32.mrf.mxu0
      %v4936 = vadd.f32 %v4767, %v4935
      %4937 = vmatmul.bf16.gmra.mxu0 %v2833
      %v4938 = vpop.f32.mrf.mxu0
      %v4939 = vadd.f32 %v4770, %v4938
      %v4940 = vpop.f32.mrf.mxu0
      %v4941 = vadd.f32 %v4772, %v4940
      %4942 = vmatmul.bf16.gmra.mxu0 %v2836
      %v4943 = vpop.f32.mrf.mxu0
      %v4944 = vadd.f32 %v4775, %v4943
      %v4945 = vpop.f32.mrf.mxu0
      %v4946 = vadd.f32 %v4777, %v4945
      %4947 = vmatmul.bf16.gmra.mxu0 %v2839
      %v4948 = vpop.f32.mrf.mxu0
      %v4949 = vadd.f32 %v4780, %v4948
      %v4950 = vpop.f32.mrf.mxu0
      %v4951 = vadd.f32 %v4782, %v4950
      %4952 = vmatmul.bf16.gmra.mxu0 %v2842
      %v4953 = vpop.f32.mrf.mxu0
      %v4954 = vadd.f32 %v4785, %v4953
      %v4955 = vpop.f32.mrf.mxu0
      %v4956 = vadd.f32 %v4787, %v4955
      %4957 = vmatmul.bf16.gmra.mxu0 %v2845
      %v4958 = vpop.f32.mrf.mxu0
      %v4959 = vadd.f32 %v4790, %v4958
      %v4960 = vpop.f32.mrf.mxu0
      %v4961 = vadd.f32 %v4792, %v4960
      %4962 = vmatmul.bf16.gmra.mxu0 %v2848
      %v4963 = vpop.f32.mrf.mxu0
      %v4964 = vadd.f32 %v4795, %v4963
      %v4965 = vpop.f32.mrf.mxu0
      %v4966 = vadd.f32 %v4797, %v4965
      %4967 = vmatmul.bf16.gmra.mxu0 %v2851
      %v4968 = vpop.f32.mrf.mxu0
      %v4969 = vadd.f32 %v4800, %v4968
      %v4970 = vpop.f32.mrf.mxu0
      %v4971 = vadd.f32 %v4802, %v4970
      %4972 = vmatmul.bf16.gmra.mxu0 %v2854
      %v4973 = vpop.f32.mrf.mxu0
      %v4974 = vadd.f32 %v4805, %v4973
      %v4975 = vpop.f32.mrf.mxu0
      %v4976 = vadd.f32 %v4807, %v4975
      %4977 = vmatmul.bf16.gmra.mxu0 %v2857
      %v4978 = vpop.f32.mrf.mxu0
      %v4979 = vadd.f32 %v4810, %v4978
      %v4980 = vpop.f32.mrf.mxu0
      %v4981 = vadd.f32 %v4812, %v4980
      %4982 = vmatmul.bf16.gmra.mxu0 %v2860
      %v4983 = vpop.f32.mrf.mxu0
      %v4984 = vadd.f32 %v4815, %v4983
      %v4985 = vpop.f32.mrf.mxu0
      %v4986 = vadd.f32 %v4817, %v4985
      %4987 = vmatmul.bf16.gmra.mxu0 %v4503
      %v4988 = vpop.f32.mrf.mxu0
      %v4989 = vadd.f32 %v4820, %v4988
      %v4990 = vpop.f32.mrf.mxu0
      %v4991 = vadd.f32 %v4822, %v4990
      %4992 = vmatmul.bf16.gmra.mxu0 %v4506
      %v4993 = vpop.f32.mrf.mxu0
      %v4994 = vadd.f32 %v4825, %v4993
      %v4995 = vpop.f32.mrf.mxu0
      %v4996 = vadd.f32 %v4827, %v4995
      %4997 = vmatmul.bf16.gmra.mxu0 %v4509
      %v4998 = vpop.f32.mrf.mxu0
      %v4999 = vadd.f32 %v4830, %v4998
      %v5000 = vpop.f32.mrf.mxu0
      %v5001 = vadd.f32 %v4832, %v5000
      %5002 = vmatmul.bf16.gmra.mxu0 %v4512
      %v5003 = vpop.f32.mrf.mxu0
      %v5004 = vadd.f32 %v4835, %v5003
      %v5005 = vpop.f32.mrf.mxu0
      %v5006 = vadd.f32 %v4837, %v5005
      %5007 = vdwg.mxu0
      %5008 = vmatpush.bf16.msra.mxu0 %v4645
      %5009 = vmatpush.bf16.msra.mxu0 %v4644
      %5010 = vmatpush.bf16.msra.mxu0 %v4643
      %5011 = vmatpush.bf16.msra.mxu0 %v4642
      %5012 = vmatpush.bf16.msra.mxu0 %v4641
      %5013 = vmatpush.bf16.msra.mxu0 %v4640
      %5014 = vmatpush.bf16.msra.mxu0 %v4639
      %5015 = vmatpush.bf16.msra.mxu0 %v4638
      %5016 = vmatmul.bf16.gmra.mxu0 %v2780
      %v5017 = vpop.f32.mrf.mxu0
      %v5018 = vadd.f32 %v4849, %v5017
      %v5019 = vpop.f32.mrf.mxu0
      %v5020 = vadd.f32 %v4851, %v5019
      %5021 = vmatmul.bf16.gmra.mxu0 %v2783
      %v5022 = vpop.f32.mrf.mxu0
      %v5023 = vadd.f32 %v4854, %v5022
      %v5024 = vpop.f32.mrf.mxu0
      %v5025 = vadd.f32 %v4856, %v5024
      %5026 = vmatmul.bf16.gmra.mxu0 %v2786
      %v5027 = vpop.f32.mrf.mxu0
      %v5028 = vadd.f32 %v4859, %v5027
      %v5029 = vpop.f32.mrf.mxu0
      %v5030 = vadd.f32 %v4861, %v5029
      %5031 = vmatmul.bf16.gmra.mxu0 %v2789
      %v5032 = vpop.f32.mrf.mxu0
      %v5033 = vadd.f32 %v4864, %v5032
      %v5034 = vpop.f32.mrf.mxu0
      %v5035 = vadd.f32 %v4866, %v5034
      %5036 = vmatmul.bf16.gmra.mxu0 %v2792
      %v5037 = vpop.f32.mrf.mxu0
      %v5038 = vadd.f32 %v4869, %v5037
      %v5039 = vpop.f32.mrf.mxu0
      %v5040 = vadd.f32 %v4871, %v5039
      %5041 = vmatmul.bf16.gmra.mxu0 %v2795
      %v5042 = vpop.f32.mrf.mxu0
      %v5043 = vadd.f32 %v4874, %v5042
      %v5044 = vpop.f32.mrf.mxu0
      %v5045 = vadd.f32 %v4876, %v5044
      %5046 = vmatmul.bf16.gmra.mxu0 %v2798
      %v5047 = vpop.f32.mrf.mxu0
      %v5048 = vadd.f32 %v4879, %v5047
      %v5049 = vpop.f32.mrf.mxu0
      %v5050 = vadd.f32 %v4881, %v5049
      %5051 = vmatmul.bf16.gmra.mxu0 %v2801
      %v5052 = vpop.f32.mrf.mxu0
      %v5053 = vadd.f32 %v4884, %v5052
      %v5054 = vpop.f32.mrf.mxu0
      %v5055 = vadd.f32 %v4886, %v5054
      %5056 = vmatmul.bf16.gmra.mxu0 %v2804
      %v5057 = vpop.f32.mrf.mxu0
      %v5058 = vadd.f32 %v4889, %v5057
      %v5059 = vpop.f32.mrf.mxu0
      %v5060 = vadd.f32 %v4891, %v5059
      %5061 = vmatmul.bf16.gmra.mxu0 %v2807
      %v5062 = vpop.f32.mrf.mxu0
      %v5063 = vadd.f32 %v4894, %v5062
      %v5064 = vpop.f32.mrf.mxu0
      %v5065 = vadd.f32 %v4896, %v5064
      %5066 = vmatmul.bf16.gmra.mxu0 %v2810
      %v5067 = vpop.f32.mrf.mxu0
      %v5068 = vadd.f32 %v4899, %v5067
      %v5069 = vpop.f32.mrf.mxu0
      %v5070 = vadd.f32 %v4901, %v5069
      %5071 = vmatmul.bf16.gmra.mxu0 %v2813
      %v5072 = vpop.f32.mrf.mxu0
      %v5073 = vadd.f32 %v4904, %v5072
      %v5074 = vpop.f32.mrf.mxu0
      %v5075 = vadd.f32 %v4906, %v5074
      %5076 = vmatmul.bf16.gmra.mxu0 %v2816
      %v5077 = vpop.f32.mrf.mxu0
      %v5078 = vadd.f32 %v4909, %v5077
      %v5079 = vpop.f32.mrf.mxu0
      %v5080 = vadd.f32 %v4911, %v5079
      %5081 = vmatmul.bf16.gmra.mxu0 %v2819
      %v5082 = vpop.f32.mrf.mxu0
      %v5083 = vadd.f32 %v4914, %v5082
      %v5084 = vpop.f32.mrf.mxu0
      %v5085 = vadd.f32 %v4916, %v5084
      %5086 = vmatmul.bf16.gmra.mxu0 %v2822
      %v5087 = vpop.f32.mrf.mxu0
      %v5088 = vadd.f32 %v4919, %v5087
      %v5089 = vpop.f32.mrf.mxu0
      %v5090 = vadd.f32 %v4921, %v5089
      %5091 = vmatmul.bf16.gmra.mxu0 %v2825
      %v5092 = vpop.f32.mrf.mxu0
      %v5093 = vadd.f32 %v4924, %v5092
      %v5094 = vpop.f32.mrf.mxu0
      %v5095 = vadd.f32 %v4926, %v5094
      %5096 = vmatmul.bf16.gmra.mxu0 %v2828
      %v5097 = vpop.f32.mrf.mxu0
      %v5098 = vadd.f32 %v4929, %v5097
      %v5099 = vpop.f32.mrf.mxu0
      %v5100 = vadd.f32 %v4931, %v5099
      %5101 = vmatmul.bf16.gmra.mxu0 %v2831
      %v5102 = vpop.f32.mrf.mxu0
      %v5103 = vadd.f32 %v4934, %v5102
      %v5104 = vpop.f32.mrf.mxu0
      %v5105 = vadd.f32 %v4936, %v5104
      %5106 = vmatmul.bf16.gmra.mxu0 %v2834
      %v5107 = vpop.f32.mrf.mxu0
      %v5108 = vadd.f32 %v4939, %v5107
      %v5109 = vpop.f32.mrf.mxu0
      %v5110 = vadd.f32 %v4941, %v5109
      %5111 = vmatmul.bf16.gmra.mxu0 %v2837
      %v5112 = vpop.f32.mrf.mxu0
      %v5113 = vadd.f32 %v4944, %v5112
      %v5114 = vpop.f32.mrf.mxu0
      %v5115 = vadd.f32 %v4946, %v5114
      %5116 = vmatmul.bf16.gmra.mxu0 %v2840
      %v5117 = vpop.f32.mrf.mxu0
      %v5118 = vadd.f32 %v4949, %v5117
      %v5119 = vpop.f32.mrf.mxu0
      %v5120 = vadd.f32 %v4951, %v5119
      %5121 = vmatmul.bf16.gmra.mxu0 %v2843
      %v5122 = vpop.f32.mrf.mxu0
      %v5123 = vadd.f32 %v4954, %v5122
      %v5124 = vpop.f32.mrf.mxu0
      %v5125 = vadd.f32 %v4956, %v5124
      %5126 = vmatmul.bf16.gmra.mxu0 %v2846
      %v5127 = vpop.f32.mrf.mxu0
      %v5128 = vadd.f32 %v4959, %v5127
      %v5129 = vpop.f32.mrf.mxu0
      %v5130 = vadd.f32 %v4961, %v5129
      %5131 = vmatmul.bf16.gmra.mxu0 %v2849
      %v5132 = vpop.f32.mrf.mxu0
      %v5133 = vadd.f32 %v4964, %v5132
      %v5134 = vpop.f32.mrf.mxu0
      %v5135 = vadd.f32 %v4966, %v5134
      %5136 = vmatmul.bf16.gmra.mxu0 %v2852
      %v5137 = vpop.f32.mrf.mxu0
      %v5138 = vadd.f32 %v4969, %v5137
      %v5139 = vpop.f32.mrf.mxu0
      %v5140 = vadd.f32 %v4971, %v5139
      %5141 = vmatmul.bf16.gmra.mxu0 %v2855
      %v5142 = vpop.f32.mrf.mxu0
      %v5143 = vadd.f32 %v4974, %v5142
      %v5144 = vpop.f32.mrf.mxu0
      %v5145 = vadd.f32 %v4976, %v5144
      %5146 = vmatmul.bf16.gmra.mxu0 %v2858
      %v5147 = vpop.f32.mrf.mxu0
      %v5148 = vadd.f32 %v4979, %v5147
      %v5149 = vpop.f32.mrf.mxu0
      %v5150 = vadd.f32 %v4981, %v5149
      %5151 = vmatmul.bf16.gmra.mxu0 %v2861
      %v5152 = vpop.f32.mrf.mxu0
      %v5153 = vadd.f32 %v4984, %v5152
      %v5154 = vpop.f32.mrf.mxu0
      %v5155 = vadd.f32 %v4986, %v5154
      %5156 = vmatmul.bf16.gmra.mxu0 %v4504
      %v5157 = vpop.f32.mrf.mxu0
      %v5158 = vadd.f32 %v4989, %v5157
      %v5159 = vpop.f32.mrf.mxu0
      %v5160 = vadd.f32 %v4991, %v5159
      %5161 = vmatmul.bf16.gmra.mxu0 %v4507
      %v5162 = vpop.f32.mrf.mxu0
      %v5163 = vadd.f32 %v4994, %v5162
      %v5164 = vpop.f32.mrf.mxu0
      %v5165 = vadd.f32 %v4996, %v5164
      %5166 = vmatmul.bf16.gmra.mxu0 %v4510
      %v5167 = vpop.f32.mrf.mxu0
      %v5168 = vadd.f32 %v4999, %v5167
      %v5169 = vpop.f32.mrf.mxu0
      %v5170 = vadd.f32 %v5001, %v5169
      %5171 = vmatmul.bf16.gmra.mxu0 %v4513
      %v5172 = vpop.f32.mrf.mxu0
      %v5173 = vadd.f32 %v5004, %v5172
      %v5174 = vpop.f32.mrf.mxu0
      %v5175 = vadd.f32 %v5006, %v5174
      %5176 = vdwg.mxu0
      %v5177 = vadd.f32 %v4373, %v5018
      %v5178 = vadd.f32 %v4374, %v5020
      %v5179 = vadd.f32 %v4375, %v5023
      %v5180 = vadd.f32 %v4376, %v5025
      %v5181 = vadd.f32 %v4377, %v5028
      %v5182 = vadd.f32 %v4378, %v5030
      %v5183 = vadd.f32 %v4379, %v5033
      %v5184 = vadd.f32 %v4380, %v5035
      %v5185 = vadd.f32 %v4381, %v5038
      %v5186 = vadd.f32 %v4382, %v5040
      %v5187 = vadd.f32 %v4383, %v5043
      %v5188 = vadd.f32 %v4384, %v5045
      %v5189 = vadd.f32 %v4385, %v5048
      %v5190 = vadd.f32 %v4386, %v5050
      %v5191 = vadd.f32 %v4387, %v5053
      %v5192 = vadd.f32 %v4388, %v5055
      %v5193 = vadd.f32 %v4389, %v5058
      %v5194 = vadd.f32 %v4390, %v5060
      %v5195 = vadd.f32 %v4391, %v5063
      %v5196 = vadd.f32 %v4392, %v5065
      %v5197 = vadd.f32 %v4393, %v5068
      %v5198 = vadd.f32 %v4394, %v5070
      %v5199 = vadd.f32 %v4395, %v5073
      %v5200 = vadd.f32 %v4396, %v5075
      %v5201 = vadd.f32 %v4397, %v5078
      %v5202 = vadd.f32 %v4398, %v5080
      %v5203 = vadd.f32 %v4399, %v5083
      %v5204 = vadd.f32 %v4400, %v5085
      %v5205 = vadd.f32 %v4401, %v5088
      %v5206 = vadd.f32 %v4402, %v5090
      %v5207 = vadd.f32 %v4403, %v5093
      %v5208 = vadd.f32 %v4404, %v5095
      %v5209 = vadd.f32 %v4405, %v5098
      %v5210 = vadd.f32 %v4406, %v5100
      %v5211 = vadd.f32 %v4407, %v5103
      %v5212 = vadd.f32 %v4408, %v5105
      %v5213 = vadd.f32 %v4409, %v5108
      %v5214 = vadd.f32 %v4410, %v5110
      %v5215 = vadd.f32 %v4411, %v5113
      %v5216 = vadd.f32 %v4412, %v5115
      %v5217 = vadd.f32 %v4413, %v5118
      %v5218 = vadd.f32 %v4414, %v5120
      %v5219 = vadd.f32 %v4415, %v5123
      %v5220 = vadd.f32 %v4416, %v5125
      %v5221 = vadd.f32 %v4417, %v5128
      %v5222 = vadd.f32 %v4418, %v5130
      %v5223 = vadd.f32 %v4419, %v5133
      %v5224 = vadd.f32 %v4420, %v5135
      %v5225 = vadd.f32 %v4421, %v5138
      %v5226 = vadd.f32 %v4422, %v5140
      %v5227 = vadd.f32 %v4423, %v5143
      %v5228 = vadd.f32 %v4424, %v5145
      %v5229 = vadd.f32 %v4425, %v5148
      %v5230 = vadd.f32 %v4426, %v5150
      %v5231 = vadd.f32 %v4427, %v5153
      %v5232 = vadd.f32 %v4428, %v5155
      %v5233 = vadd.f32 %v4429, %v5158
      %v5234 = vadd.f32 %v4430, %v5160
      %v5235 = vadd.f32 %v4431, %v5163
      %v5236 = vadd.f32 %v4432, %v5165
      %v5237 = vadd.f32 %v4433, %v5168
      %v5238 = vadd.f32 %v4434, %v5170
      %v5239 = vadd.f32 %v4435, %v5173
      %v5240 = vadd.f32 %v4436, %v5175
      %v5241 = vunpack.c.l.b16 %v1504
      %v5242 = vunpack.c.l.b16 %v1670
      %s5243 = scalar_lea.vmem %s1, 768
      %v5244 = vld [vmem:[%s5243] sm:$0xf]
      %v5245 = vld [vmem:[%s5243 + $0x4] sm:$0xf]
      %v5246 = vld [vmem:[%s5243 + $0x8] sm:$0xf]
      %v5247 = vld [vmem:[%s5243 + $0xc] sm:$0xf]
      %v5248 = vld [vmem:[%s5243 + $0x10] sm:$0xf]
      %v5249 = vld [vmem:[%s5243 + $0x14] sm:$0xf]
      %v5250 = vld [vmem:[%s5243 + $0x18] sm:$0xf]
      %v5251 = vld [vmem:[%s5243 + $0x1c] sm:$0xf]
      %v5252 = vld [vmem:[%s5243 + $0x20] sm:$0xf]
      %v5253 = vld [vmem:[%s5243 + $0x24] sm:$0xf]
      %v5254 = vld [vmem:[%s5243 + $0x28] sm:$0xf]
      %v5255 = vld [vmem:[%s5243 + $0x2c] sm:$0xf]
      %v5256 = vld [vmem:[%s5243 + $0x30] sm:$0xf]
      %v5257 = vld [vmem:[%s5243 + $0x34] sm:$0xf]
      %v5258 = vld [vmem:[%s5243 + $0x38] sm:$0xf]
      %v5259 = vld [vmem:[%s5243 + $0x3c] sm:$0xf]
      %v5260 = vld [vmem:[%s5243 + $0x40] sm:$0xf]
      %v5261 = vld [vmem:[%s5243 + $0x44] sm:$0xf]
      %v5262 = vld [vmem:[%s5243 + $0x48] sm:$0xf]
      %v5263 = vld [vmem:[%s5243 + $0x4c] sm:$0xf]
      %v5264 = vld [vmem:[%s5243 + $0x50] sm:$0xf]
      %v5265 = vld [vmem:[%s5243 + $0x54] sm:$0xf]
      %v5266 = vld [vmem:[%s5243 + $0x58] sm:$0xf]
      %v5267 = vld [vmem:[%s5243 + $0x5c] sm:$0xf]
      %v5268 = vld [vmem:[%s5243 + $0x60] sm:$0xf]
      %v5269 = vld [vmem:[%s5243 + $0x64] sm:$0xf]
      %v5270 = vld [vmem:[%s5243 + $0x68] sm:$0xf]
      %v5271 = vld [vmem:[%s5243 + $0x6c] sm:$0xf]
      %v5272 = vld [vmem:[%s5243 + $0x70] sm:$0xf]
      %v5273 = vld [vmem:[%s5243 + $0x74] sm:$0xf]
      %v5274 = vld [vmem:[%s5243 + $0x78] sm:$0xf]
      %v5275 = vld [vmem:[%s5243 + $0x7c] sm:$0xf]
      %v5276 = vld [vmem:[%s5243 + $0x80] sm:$0xf]
      %v5277 = vld [vmem:[%s5243 + $0x84] sm:$0xf]
      %v5278 = vld [vmem:[%s5243 + $0x88] sm:$0xf]
      %v5279 = vld [vmem:[%s5243 + $0x8c] sm:$0xf]
      %v5280 = vld [vmem:[%s5243 + $0x90] sm:$0xf]
      %v5281 = vld [vmem:[%s5243 + $0x94] sm:$0xf]
      %v5282 = vld [vmem:[%s5243 + $0x98] sm:$0xf]
      %v5283 = vld [vmem:[%s5243 + $0x9c] sm:$0xf]
      %v5284 = vld [vmem:[%s5243 + $0xa0] sm:$0xf]
      %v5285 = vld [vmem:[%s5243 + $0xa4] sm:$0xf]
      %v5286 = vld [vmem:[%s5243 + $0xa8] sm:$0xf]
      %v5287 = vld [vmem:[%s5243 + $0xac] sm:$0xf]
      %v5288 = vld [vmem:[%s5243 + $0xb0] sm:$0xf]
      %v5289 = vld [vmem:[%s5243 + $0xb4] sm:$0xf]
      %v5290 = vld [vmem:[%s5243 + $0xb8] sm:$0xf]
      %v5291 = vld [vmem:[%s5243 + $0xbc] sm:$0xf]
      %v5292 = vpack.c.b16 %v746, %v744
      %v5293 = vpack.c.b16 %v4441, %v4439
      %v5294 = vpack.c.b16 %v4442, %v4440
      %v5295 = vpack.c.b16 %v750, %v748
      %v5296 = vpack.c.b16 %v4445, %v4443
      %v5297 = vpack.c.b16 %v4446, %v4444
      %v5298 = vpack.c.b16 %v754, %v752
      %v5299 = vpack.c.b16 %v4449, %v4447
      %v5300 = vpack.c.b16 %v4450, %v4448
      %v5301 = vpack.c.b16 %v758, %v756
      %v5302 = vpack.c.b16 %v5241, %v4451
      %v5303 = vpack.c.b16 %v5242, %v4452
      %v5364 = vunpack.c.l.b16 %v5244
      %v5365 = vunpack.c.l.b16 %v5245
      %v5366 = vunpack.c.l.b16 %v5246
      %v5367 = vunpack.c.l.b16 %v5247
      %v5368 = vunpack.c.l.b16 %v5248
      %v5369 = vunpack.c.l.b16 %v5249
      %v5370 = vunpack.c.l.b16 %v5250
      %v5371 = vunpack.c.l.b16 %v5251
      %v5372 = vunpack.c.l.b16 %v5252
      %v5373 = vunpack.c.l.b16 %v5253
      %v5374 = vunpack.c.l.b16 %v5254
      %v5375 = vunpack.c.l.b16 %v5255
      %v5376 = vunpack.c.l.b16 %v5256
      %v5377 = vunpack.c.l.b16 %v5257
      %v5378 = vunpack.c.l.b16 %v5258
      %v5379 = vunpack.c.l.b16 %v5259
      %v5380 = vunpack.c.l.b16 %v5260
      %v5381 = vunpack.c.l.b16 %v5261
      %v5382 = vunpack.c.l.b16 %v5262
      %v5383 = vunpack.c.l.b16 %v5263
      %v5384 = vunpack.c.l.b16 %v5264
      %v5385 = vunpack.c.l.b16 %v5265
      %v5386 = vunpack.c.l.b16 %v5266
      %v5387 = vunpack.c.l.b16 %v5267
      %v5388 = vunpack.c.l.b16 %v5268
      %v5389 = vunpack.c.l.b16 %v5269
      %v5390 = vunpack.c.l.b16 %v5270
      %v5391 = vunpack.c.l.b16 %v5271
      %v5392 = vunpack.c.l.b16 %v5272
      %v5393 = vunpack.c.l.b16 %v5273
      %v5394 = vunpack.c.l.b16 %v5274
      %v5395 = vunpack.c.l.b16 %v5275
      %v5396 = vunpack.c.l.b16 %v5276
      %v5397 = vunpack.c.l.b16 %v5277
      %v5398 = vunpack.c.l.b16 %v5278
      %v5399 = vunpack.c.l.b16 %v5279
      %v5400 = vunpack.c.l.b16 %v5280
      %v5401 = vunpack.c.l.b16 %v5281
      %v5402 = vunpack.c.l.b16 %v5282
      %v5403 = vunpack.c.l.b16 %v5283
      %v5404 = vunpack.c.l.b16 %v5284
      %v5405 = vunpack.c.l.b16 %v5285
      %v5406 = vunpack.c.l.b16 %v5286
      %v5407 = vunpack.c.l.b16 %v5287
      %v5408 = vunpack.c.l.b16 %v5288
      %v5409 = vunpack.c.l.b16 %v5289
      %v5410 = vunpack.c.l.b16 %v5290
      %v5411 = vunpack.c.l.b16 %v5291
      %v5412 = vpack.c.b16 %v5365, %v5364
      %v5413 = vpack.c.b16 %v5367, %v5366
      %v5414 = vpack.c.b16 %v5369, %v5368
      %v5415 = vpack.c.b16 %v5371, %v5370
      %v5416 = vpack.c.b16 %v5373, %v5372
      %v5417 = vpack.c.b16 %v5375, %v5374
      %v5418 = vpack.c.b16 %v5377, %v5376
      %v5419 = vpack.c.b16 %v5379, %v5378
      %v5420 = vpack.c.b16 %v5381, %v5380
      %v5421 = vpack.c.b16 %v5383, %v5382
      %v5422 = vpack.c.b16 %v5385, %v5384
      %v5423 = vpack.c.b16 %v5387, %v5386
      %v5424 = vpack.c.b16 %v5389, %v5388
      %v5425 = vpack.c.b16 %v5391, %v5390
      %v5426 = vpack.c.b16 %v5393, %v5392
      %v5427 = vpack.c.b16 %v5395, %v5394
      %v5428 = vpack.c.b16 %v5397, %v5396
      %v5429 = vpack.c.b16 %v5399, %v5398
      %v5430 = vpack.c.b16 %v5401, %v5400
      %v5431 = vpack.c.b16 %v5403, %v5402
      %v5432 = vpack.c.b16 %v5405, %v5404
      %v5433 = vpack.c.b16 %v5407, %v5406
      %v5434 = vpack.c.b16 %v5409, %v5408
      %v5435 = vpack.c.b16 %v5411, %v5410
      %5460 = vmatpush.bf16.msra.mxu0 %v5419
      %5461 = vmatpush.bf16.msra.mxu0 %v5418
      %5462 = vmatpush.bf16.msra.mxu0 %v5417
      %5463 = vmatpush.bf16.msra.mxu0 %v5416
      %5464 = vmatpush.bf16.msra.mxu0 %v5415
      %5465 = vmatpush.bf16.msra.mxu0 %v5414
      %5466 = vmatpush.bf16.msra.mxu0 %v5413
      %5467 = vmatpush.bf16.msra.mxu0 %v5412
      %5468 = vmatmul.bf16.gmra.mxu0 %v1935
      %v5469 = vpop.f32.mrf.mxu0
      %v5470 = vadd.f32 0.0, %v5469
      %v5471 = vpop.f32.mrf.mxu0
      %v5472 = vadd.f32 0.0, %v5471
      %5473 = vmatmul.bf16.gmra.mxu0 %v1938
      %v5474 = vpop.f32.mrf.mxu0
      %v5475 = vadd.f32 0.0, %v5474
      %v5476 = vpop.f32.mrf.mxu0
      %v5477 = vadd.f32 0.0, %v5476
      %5478 = vmatmul.bf16.gmra.mxu0 %v1941
      %v5479 = vpop.f32.mrf.mxu0
      %v5480 = vadd.f32 0.0, %v5479
      %v5481 = vpop.f32.mrf.mxu0
      %v5482 = vadd.f32 0.0, %v5481
      %5483 = vmatmul.bf16.gmra.mxu0 %v1944
      %v5484 = vpop.f32.mrf.mxu0
      %v5485 = vadd.f32 0.0, %v5484
      %v5486 = vpop.f32.mrf.mxu0
      %v5487 = vadd.f32 0.0, %v5486
      %5488 = vmatmul.bf16.gmra.mxu0 %v1947
      %v5489 = vpop.f32.mrf.mxu0
      %v5490 = vadd.f32 0.0, %v5489
      %v5491 = vpop.f32.mrf.mxu0
      %v5492 = vadd.f32 0.0, %v5491
      %5493 = vmatmul.bf16.gmra.mxu0 %v1950
      %v5494 = vpop.f32.mrf.mxu0
      %v5495 = vadd.f32 0.0, %v5494
      %v5496 = vpop.f32.mrf.mxu0
      %v5497 = vadd.f32 0.0, %v5496
      %5498 = vmatmul.bf16.gmra.mxu0 %v1953
      %v5499 = vpop.f32.mrf.mxu0
      %v5500 = vadd.f32 0.0, %v5499
      %v5501 = vpop.f32.mrf.mxu0
      %v5502 = vadd.f32 0.0, %v5501
      %5503 = vmatmul.bf16.gmra.mxu0 %v1956
      %v5504 = vpop.f32.mrf.mxu0
      %v5505 = vadd.f32 0.0, %v5504
      %v5506 = vpop.f32.mrf.mxu0
      %v5507 = vadd.f32 0.0, %v5506
      %5508 = vmatmul.bf16.gmra.mxu0 %v1959
      %v5509 = vpop.f32.mrf.mxu0
      %v5510 = vadd.f32 0.0, %v5509
      %v5511 = vpop.f32.mrf.mxu0
      %v5512 = vadd.f32 0.0, %v5511
      %5513 = vmatmul.bf16.gmra.mxu0 %v1962
      %v5514 = vpop.f32.mrf.mxu0
      %v5515 = vadd.f32 0.0, %v5514
      %v5516 = vpop.f32.mrf.mxu0
      %v5517 = vadd.f32 0.0, %v5516
      %5518 = vmatmul.bf16.gmra.mxu0 %v1965
      %v5519 = vpop.f32.mrf.mxu0
      %v5520 = vadd.f32 0.0, %v5519
      %v5521 = vpop.f32.mrf.mxu0
      %v5522 = vadd.f32 0.0, %v5521
      %5523 = vmatmul.bf16.gmra.mxu0 %v1968
      %v5524 = vpop.f32.mrf.mxu0
      %v5525 = vadd.f32 0.0, %v5524
      %v5526 = vpop.f32.mrf.mxu0
      %v5527 = vadd.f32 0.0, %v5526
      %5528 = vmatmul.bf16.gmra.mxu0 %v1971
      %v5529 = vpop.f32.mrf.mxu0
      %v5530 = vadd.f32 0.0, %v5529
      %v5531 = vpop.f32.mrf.mxu0
      %v5532 = vadd.f32 0.0, %v5531
      %5533 = vmatmul.bf16.gmra.mxu0 %v1974
      %v5534 = vpop.f32.mrf.mxu0
      %v5535 = vadd.f32 0.0, %v5534
      %v5536 = vpop.f32.mrf.mxu0
      %v5537 = vadd.f32 0.0, %v5536
      %5538 = vmatmul.bf16.gmra.mxu0 %v1977
      %v5539 = vpop.f32.mrf.mxu0
      %v5540 = vadd.f32 0.0, %v5539
      %v5541 = vpop.f32.mrf.mxu0
      %v5542 = vadd.f32 0.0, %v5541
      %5543 = vmatmul.bf16.gmra.mxu0 %v1980
      %v5544 = vpop.f32.mrf.mxu0
      %v5545 = vadd.f32 0.0, %v5544
      %v5546 = vpop.f32.mrf.mxu0
      %v5547 = vadd.f32 0.0, %v5546
      %5548 = vmatmul.bf16.gmra.mxu0 %v1983
      %v5549 = vpop.f32.mrf.mxu0
      %v5550 = vadd.f32 0.0, %v5549
      %v5551 = vpop.f32.mrf.mxu0
      %v5552 = vadd.f32 0.0, %v5551
      %5553 = vmatmul.bf16.gmra.mxu0 %v1986
      %v5554 = vpop.f32.mrf.mxu0
      %v5555 = vadd.f32 0.0, %v5554
      %v5556 = vpop.f32.mrf.mxu0
      %v5557 = vadd.f32 0.0, %v5556
      %5558 = vmatmul.bf16.gmra.mxu0 %v1989
      %v5559 = vpop.f32.mrf.mxu0
      %v5560 = vadd.f32 0.0, %v5559
      %v5561 = vpop.f32.mrf.mxu0
      %v5562 = vadd.f32 0.0, %v5561
      %5563 = vmatmul.bf16.gmra.mxu0 %v1992
      %v5564 = vpop.f32.mrf.mxu0
      %v5565 = vadd.f32 0.0, %v5564
      %v5566 = vpop.f32.mrf.mxu0
      %v5567 = vadd.f32 0.0, %v5566
      %5568 = vmatmul.bf16.gmra.mxu0 %v1995
      %v5569 = vpop.f32.mrf.mxu0
      %v5570 = vadd.f32 0.0, %v5569
      %v5571 = vpop.f32.mrf.mxu0
      %v5572 = vadd.f32 0.0, %v5571
      %5573 = vmatmul.bf16.gmra.mxu0 %v1998
      %v5574 = vpop.f32.mrf.mxu0
      %v5575 = vadd.f32 0.0, %v5574
      %v5576 = vpop.f32.mrf.mxu0
      %v5577 = vadd.f32 0.0, %v5576
      %5578 = vmatmul.bf16.gmra.mxu0 %v2001
      %v5579 = vpop.f32.mrf.mxu0
      %v5580 = vadd.f32 0.0, %v5579
      %v5581 = vpop.f32.mrf.mxu0
      %v5582 = vadd.f32 0.0, %v5581
      %5583 = vmatmul.bf16.gmra.mxu0 %v2004
      %v5584 = vpop.f32.mrf.mxu0
      %v5585 = vadd.f32 0.0, %v5584
      %v5586 = vpop.f32.mrf.mxu0
      %v5587 = vadd.f32 0.0, %v5586
      %5588 = vmatmul.bf16.gmra.mxu0 %v2007
      %v5589 = vpop.f32.mrf.mxu0
      %v5590 = vadd.f32 0.0, %v5589
      %v5591 = vpop.f32.mrf.mxu0
      %v5592 = vadd.f32 0.0, %v5591
      %5593 = vmatmul.bf16.gmra.mxu0 %v2010
      %v5594 = vpop.f32.mrf.mxu0
      %v5595 = vadd.f32 0.0, %v5594
      %v5596 = vpop.f32.mrf.mxu0
      %v5597 = vadd.f32 0.0, %v5596
      %5598 = vmatmul.bf16.gmra.mxu0 %v2013
      %v5599 = vpop.f32.mrf.mxu0
      %v5600 = vadd.f32 0.0, %v5599
      %v5601 = vpop.f32.mrf.mxu0
      %v5602 = vadd.f32 0.0, %v5601
      %5603 = vmatmul.bf16.gmra.mxu0 %v2016
      %v5604 = vpop.f32.mrf.mxu0
      %v5605 = vadd.f32 0.0, %v5604
      %v5606 = vpop.f32.mrf.mxu0
      %v5607 = vadd.f32 0.0, %v5606
      %5608 = vmatmul.bf16.gmra.mxu0 %v5292
      %v5609 = vpop.f32.mrf.mxu0
      %v5610 = vadd.f32 0.0, %v5609
      %v5611 = vpop.f32.mrf.mxu0
      %v5612 = vadd.f32 0.0, %v5611
      %5613 = vmatmul.bf16.gmra.mxu0 %v5295
      %v5614 = vpop.f32.mrf.mxu0
      %v5615 = vadd.f32 0.0, %v5614
      %v5616 = vpop.f32.mrf.mxu0
      %v5617 = vadd.f32 0.0, %v5616
      %5618 = vmatmul.bf16.gmra.mxu0 %v5298
      %v5619 = vpop.f32.mrf.mxu0
      %v5620 = vadd.f32 0.0, %v5619
      %v5621 = vpop.f32.mrf.mxu0
      %v5622 = vadd.f32 0.0, %v5621
      %5623 = vmatmul.bf16.gmra.mxu0 %v5301
      %v5624 = vpop.f32.mrf.mxu0
      %v5625 = vadd.f32 0.0, %v5624
      %v5626 = vpop.f32.mrf.mxu0
      %v5627 = vadd.f32 0.0, %v5626
      %5628 = vdwg.mxu0
      %5629 = vmatpush.bf16.msra.mxu0 %v5427
      %5630 = vmatpush.bf16.msra.mxu0 %v5426
      %5631 = vmatpush.bf16.msra.mxu0 %v5425
      %5632 = vmatpush.bf16.msra.mxu0 %v5424
      %5633 = vmatpush.bf16.msra.mxu0 %v5423
      %5634 = vmatpush.bf16.msra.mxu0 %v5422
      %5635 = vmatpush.bf16.msra.mxu0 %v5421
      %5636 = vmatpush.bf16.msra.mxu0 %v5420
      %5637 = vmatmul.bf16.gmra.mxu0 %v1936
      %v5638 = vpop.f32.mrf.mxu0
      %v5639 = vadd.f32 %v5470, %v5638
      %v5640 = vpop.f32.mrf.mxu0
      %v5641 = vadd.f32 %v5472, %v5640
      %5642 = vmatmul.bf16.gmra.mxu0 %v1939
      %v5643 = vpop.f32.mrf.mxu0
      %v5644 = vadd.f32 %v5475, %v5643
      %v5645 = vpop.f32.mrf.mxu0
      %v5646 = vadd.f32 %v5477, %v5645
      %5647 = vmatmul.bf16.gmra.mxu0 %v1942
      %v5648 = vpop.f32.mrf.mxu0
      %v5649 = vadd.f32 %v5480, %v5648
      %v5650 = vpop.f32.mrf.mxu0
      %v5651 = vadd.f32 %v5482, %v5650
      %5652 = vmatmul.bf16.gmra.mxu0 %v1945
      %v5653 = vpop.f32.mrf.mxu0
      %v5654 = vadd.f32 %v5485, %v5653
      %v5655 = vpop.f32.mrf.mxu0
      %v5656 = vadd.f32 %v5487, %v5655
      %5657 = vmatmul.bf16.gmra.mxu0 %v1948
      %v5658 = vpop.f32.mrf.mxu0
      %v5659 = vadd.f32 %v5490, %v5658
      %v5660 = vpop.f32.mrf.mxu0
      %v5661 = vadd.f32 %v5492, %v5660
      %5662 = vmatmul.bf16.gmra.mxu0 %v1951
      %v5663 = vpop.f32.mrf.mxu0
      %v5664 = vadd.f32 %v5495, %v5663
      %v5665 = vpop.f32.mrf.mxu0
      %v5666 = vadd.f32 %v5497, %v5665
      %5667 = vmatmul.bf16.gmra.mxu0 %v1954
      %v5668 = vpop.f32.mrf.mxu0
      %v5669 = vadd.f32 %v5500, %v5668
      %v5670 = vpop.f32.mrf.mxu0
      %v5671 = vadd.f32 %v5502, %v5670
      %5672 = vmatmul.bf16.gmra.mxu0 %v1957
      %v5673 = vpop.f32.mrf.mxu0
      %v5674 = vadd.f32 %v5505, %v5673
      %v5675 = vpop.f32.mrf.mxu0
      %v5676 = vadd.f32 %v5507, %v5675
      %5677 = vmatmul.bf16.gmra.mxu0 %v1960
      %v5678 = vpop.f32.mrf.mxu0
      %v5679 = vadd.f32 %v5510, %v5678
      %v5680 = vpop.f32.mrf.mxu0
      %v5681 = vadd.f32 %v5512, %v5680
      %5682 = vmatmul.bf16.gmra.mxu0 %v1963
      %v5683 = vpop.f32.mrf.mxu0
      %v5684 = vadd.f32 %v5515, %v5683
      %v5685 = vpop.f32.mrf.mxu0
      %v5686 = vadd.f32 %v5517, %v5685
      %5687 = vmatmul.bf16.gmra.mxu0 %v1966
      %v5688 = vpop.f32.mrf.mxu0
      %v5689 = vadd.f32 %v5520, %v5688
      %v5690 = vpop.f32.mrf.mxu0
      %v5691 = vadd.f32 %v5522, %v5690
      %5692 = vmatmul.bf16.gmra.mxu0 %v1969
      %v5693 = vpop.f32.mrf.mxu0
      %v5694 = vadd.f32 %v5525, %v5693
      %v5695 = vpop.f32.mrf.mxu0
      %v5696 = vadd.f32 %v5527, %v5695
      %5697 = vmatmul.bf16.gmra.mxu0 %v1972
      %v5698 = vpop.f32.mrf.mxu0
      %v5699 = vadd.f32 %v5530, %v5698
      %v5700 = vpop.f32.mrf.mxu0
      %v5701 = vadd.f32 %v5532, %v5700
      %5702 = vmatmul.bf16.gmra.mxu0 %v1975
      %v5703 = vpop.f32.mrf.mxu0
      %v5704 = vadd.f32 %v5535, %v5703
      %v5705 = vpop.f32.mrf.mxu0
      %v5706 = vadd.f32 %v5537, %v5705
      %5707 = vmatmul.bf16.gmra.mxu0 %v1978
      %v5708 = vpop.f32.mrf.mxu0
      %v5709 = vadd.f32 %v5540, %v5708
      %v5710 = vpop.f32.mrf.mxu0
      %v5711 = vadd.f32 %v5542, %v5710
      %5712 = vmatmul.bf16.gmra.mxu0 %v1981
      %v5713 = vpop.f32.mrf.mxu0
      %v5714 = vadd.f32 %v5545, %v5713
      %v5715 = vpop.f32.mrf.mxu0
      %v5716 = vadd.f32 %v5547, %v5715
      %5717 = vmatmul.bf16.gmra.mxu0 %v1984
      %v5718 = vpop.f32.mrf.mxu0
      %v5719 = vadd.f32 %v5550, %v5718
      %v5720 = vpop.f32.mrf.mxu0
      %v5721 = vadd.f32 %v5552, %v5720
      %5722 = vmatmul.bf16.gmra.mxu0 %v1987
      %v5723 = vpop.f32.mrf.mxu0
      %v5724 = vadd.f32 %v5555, %v5723
      %v5725 = vpop.f32.mrf.mxu0
      %v5726 = vadd.f32 %v5557, %v5725
      %5727 = vmatmul.bf16.gmra.mxu0 %v1990
      %v5728 = vpop.f32.mrf.mxu0
      %v5729 = vadd.f32 %v5560, %v5728
      %v5730 = vpop.f32.mrf.mxu0
      %v5731 = vadd.f32 %v5562, %v5730
      %5732 = vmatmul.bf16.gmra.mxu0 %v1993
      %v5733 = vpop.f32.mrf.mxu0
      %v5734 = vadd.f32 %v5565, %v5733
      %v5735 = vpop.f32.mrf.mxu0
      %v5736 = vadd.f32 %v5567, %v5735
      %5737 = vmatmul.bf16.gmra.mxu0 %v1996
      %v5738 = vpop.f32.mrf.mxu0
      %v5739 = vadd.f32 %v5570, %v5738
      %v5740 = vpop.f32.mrf.mxu0
      %v5741 = vadd.f32 %v5572, %v5740
      %5742 = vmatmul.bf16.gmra.mxu0 %v1999
      %v5743 = vpop.f32.mrf.mxu0
      %v5744 = vadd.f32 %v5575, %v5743
      %v5745 = vpop.f32.mrf.mxu0
      %v5746 = vadd.f32 %v5577, %v5745
      %5747 = vmatmul.bf16.gmra.mxu0 %v2002
      %v5748 = vpop.f32.mrf.mxu0
      %v5749 = vadd.f32 %v5580, %v5748
      %v5750 = vpop.f32.mrf.mxu0
      %v5751 = vadd.f32 %v5582, %v5750
      %5752 = vmatmul.bf16.gmra.mxu0 %v2005
      %v5753 = vpop.f32.mrf.mxu0
      %v5754 = vadd.f32 %v5585, %v5753
      %v5755 = vpop.f32.mrf.mxu0
      %v5756 = vadd.f32 %v5587, %v5755
      %5757 = vmatmul.bf16.gmra.mxu0 %v2008
      %v5758 = vpop.f32.mrf.mxu0
      %v5759 = vadd.f32 %v5590, %v5758
      %v5760 = vpop.f32.mrf.mxu0
      %v5761 = vadd.f32 %v5592, %v5760
      %5762 = vmatmul.bf16.gmra.mxu0 %v2011
      %v5763 = vpop.f32.mrf.mxu0
      %v5764 = vadd.f32 %v5595, %v5763
      %v5765 = vpop.f32.mrf.mxu0
      %v5766 = vadd.f32 %v5597, %v5765
      %5767 = vmatmul.bf16.gmra.mxu0 %v2014
      %v5768 = vpop.f32.mrf.mxu0
      %v5769 = vadd.f32 %v5600, %v5768
      %v5770 = vpop.f32.mrf.mxu0
      %v5771 = vadd.f32 %v5602, %v5770
      %5772 = vmatmul.bf16.gmra.mxu0 %v2017
      %v5773 = vpop.f32.mrf.mxu0
      %v5774 = vadd.f32 %v5605, %v5773
      %v5775 = vpop.f32.mrf.mxu0
      %v5776 = vadd.f32 %v5607, %v5775
      %5777 = vmatmul.bf16.gmra.mxu0 %v5293
      %v5778 = vpop.f32.mrf.mxu0
      %v5779 = vadd.f32 %v5610, %v5778
      %v5780 = vpop.f32.mrf.mxu0
      %v5781 = vadd.f32 %v5612, %v5780
      %5782 = vmatmul.bf16.gmra.mxu0 %v5296
      %v5783 = vpop.f32.mrf.mxu0
      %v5784 = vadd.f32 %v5615, %v5783
      %v5785 = vpop.f32.mrf.mxu0
      %v5786 = vadd.f32 %v5617, %v5785
      %5787 = vmatmul.bf16.gmra.mxu0 %v5299
      %v5788 = vpop.f32.mrf.mxu0
      %v5789 = vadd.f32 %v5620, %v5788
      %v5790 = vpop.f32.mrf.mxu0
      %v5791 = vadd.f32 %v5622, %v5790
      %5792 = vmatmul.bf16.gmra.mxu0 %v5302
      %v5793 = vpop.f32.mrf.mxu0
      %v5794 = vadd.f32 %v5625, %v5793
      %v5795 = vpop.f32.mrf.mxu0
      %v5796 = vadd.f32 %v5627, %v5795
      %5797 = vdwg.mxu0
      %5798 = vmatpush.bf16.msra.mxu0 %v5435
      %5799 = vmatpush.bf16.msra.mxu0 %v5434
      %5800 = vmatpush.bf16.msra.mxu0 %v5433
      %5801 = vmatpush.bf16.msra.mxu0 %v5432
      %5802 = vmatpush.bf16.msra.mxu0 %v5431
      %5803 = vmatpush.bf16.msra.mxu0 %v5430
      %5804 = vmatpush.bf16.msra.mxu0 %v5429
      %5805 = vmatpush.bf16.msra.mxu0 %v5428
      %5806 = vmatmul.bf16.gmra.mxu0 %v1937
      %v5807 = vpop.f32.mrf.mxu0
      %v5808 = vadd.f32 %v5639, %v5807
      %v5809 = vpop.f32.mrf.mxu0
      %v5810 = vadd.f32 %v5641, %v5809
      %5811 = vmatmul.bf16.gmra.mxu0 %v1940
      %v5812 = vpop.f32.mrf.mxu0
      %v5813 = vadd.f32 %v5644, %v5812
      %v5814 = vpop.f32.mrf.mxu0
      %v5815 = vadd.f32 %v5646, %v5814
      %5816 = vmatmul.bf16.gmra.mxu0 %v1943
      %v5817 = vpop.f32.mrf.mxu0
      %v5818 = vadd.f32 %v5649, %v5817
      %v5819 = vpop.f32.mrf.mxu0
      %v5820 = vadd.f32 %v5651, %v5819
      %5821 = vmatmul.bf16.gmra.mxu0 %v1946
      %v5822 = vpop.f32.mrf.mxu0
      %v5823 = vadd.f32 %v5654, %v5822
      %v5824 = vpop.f32.mrf.mxu0
      %v5825 = vadd.f32 %v5656, %v5824
      %5826 = vmatmul.bf16.gmra.mxu0 %v1949
      %v5827 = vpop.f32.mrf.mxu0
      %v5828 = vadd.f32 %v5659, %v5827
      %v5829 = vpop.f32.mrf.mxu0
      %v5830 = vadd.f32 %v5661, %v5829
      %5831 = vmatmul.bf16.gmra.mxu0 %v1952
      %v5832 = vpop.f32.mrf.mxu0
      %v5833 = vadd.f32 %v5664, %v5832
      %v5834 = vpop.f32.mrf.mxu0
      %v5835 = vadd.f32 %v5666, %v5834
      %5836 = vmatmul.bf16.gmra.mxu0 %v1955
      %v5837 = vpop.f32.mrf.mxu0
      %v5838 = vadd.f32 %v5669, %v5837
      %v5839 = vpop.f32.mrf.mxu0
      %v5840 = vadd.f32 %v5671, %v5839
      %5841 = vmatmul.bf16.gmra.mxu0 %v1958
      %v5842 = vpop.f32.mrf.mxu0
      %v5843 = vadd.f32 %v5674, %v5842
      %v5844 = vpop.f32.mrf.mxu0
      %v5845 = vadd.f32 %v5676, %v5844
      %5846 = vmatmul.bf16.gmra.mxu0 %v1961
      %v5847 = vpop.f32.mrf.mxu0
      %v5848 = vadd.f32 %v5679, %v5847
      %v5849 = vpop.f32.mrf.mxu0
      %v5850 = vadd.f32 %v5681, %v5849
      %5851 = vmatmul.bf16.gmra.mxu0 %v1964
      %v5852 = vpop.f32.mrf.mxu0
      %v5853 = vadd.f32 %v5684, %v5852
      %v5854 = vpop.f32.mrf.mxu0
      %v5855 = vadd.f32 %v5686, %v5854
      %5856 = vmatmul.bf16.gmra.mxu0 %v1967
      %v5857 = vpop.f32.mrf.mxu0
      %v5858 = vadd.f32 %v5689, %v5857
      %v5859 = vpop.f32.mrf.mxu0
      %v5860 = vadd.f32 %v5691, %v5859
      %5861 = vmatmul.bf16.gmra.mxu0 %v1970
      %v5862 = vpop.f32.mrf.mxu0
      %v5863 = vadd.f32 %v5694, %v5862
      %v5864 = vpop.f32.mrf.mxu0
      %v5865 = vadd.f32 %v5696, %v5864
      %5866 = vmatmul.bf16.gmra.mxu0 %v1973
      %v5867 = vpop.f32.mrf.mxu0
      %v5868 = vadd.f32 %v5699, %v5867
      %v5869 = vpop.f32.mrf.mxu0
      %v5870 = vadd.f32 %v5701, %v5869
      %5871 = vmatmul.bf16.gmra.mxu0 %v1976
      %v5872 = vpop.f32.mrf.mxu0
      %v5873 = vadd.f32 %v5704, %v5872
      %v5874 = vpop.f32.mrf.mxu0
      %v5875 = vadd.f32 %v5706, %v5874
      %5876 = vmatmul.bf16.gmra.mxu0 %v1979
      %v5877 = vpop.f32.mrf.mxu0
      %v5878 = vadd.f32 %v5709, %v5877
      %v5879 = vpop.f32.mrf.mxu0
      %v5880 = vadd.f32 %v5711, %v5879
      %5881 = vmatmul.bf16.gmra.mxu0 %v1982
      %v5882 = vpop.f32.mrf.mxu0
      %v5883 = vadd.f32 %v5714, %v5882
      %v5884 = vpop.f32.mrf.mxu0
      %v5885 = vadd.f32 %v5716, %v5884
      %5886 = vmatmul.bf16.gmra.mxu0 %v1985
      %v5887 = vpop.f32.mrf.mxu0
      %v5888 = vadd.f32 %v5719, %v5887
      %v5889 = vpop.f32.mrf.mxu0
      %v5890 = vadd.f32 %v5721, %v5889
      %5891 = vmatmul.bf16.gmra.mxu0 %v1988
      %v5892 = vpop.f32.mrf.mxu0
      %v5893 = vadd.f32 %v5724, %v5892
      %v5894 = vpop.f32.mrf.mxu0
      %v5895 = vadd.f32 %v5726, %v5894
      %5896 = vmatmul.bf16.gmra.mxu0 %v1991
      %v5897 = vpop.f32.mrf.mxu0
      %v5898 = vadd.f32 %v5729, %v5897
      %v5899 = vpop.f32.mrf.mxu0
      %v5900 = vadd.f32 %v5731, %v5899
      %5901 = vmatmul.bf16.gmra.mxu0 %v1994
      %v5902 = vpop.f32.mrf.mxu0
      %v5903 = vadd.f32 %v5734, %v5902
      %v5904 = vpop.f32.mrf.mxu0
      %v5905 = vadd.f32 %v5736, %v5904
      %5906 = vmatmul.bf16.gmra.mxu0 %v1997
      %v5907 = vpop.f32.mrf.mxu0
      %v5908 = vadd.f32 %v5739, %v5907
      %v5909 = vpop.f32.mrf.mxu0
      %v5910 = vadd.f32 %v5741, %v5909
      %5911 = vmatmul.bf16.gmra.mxu0 %v2000
      %v5912 = vpop.f32.mrf.mxu0
      %v5913 = vadd.f32 %v5744, %v5912
      %v5914 = vpop.f32.mrf.mxu0
      %v5915 = vadd.f32 %v5746, %v5914
      %5916 = vmatmul.bf16.gmra.mxu0 %v2003
      %v5917 = vpop.f32.mrf.mxu0
      %v5918 = vadd.f32 %v5749, %v5917
      %v5919 = vpop.f32.mrf.mxu0
      %v5920 = vadd.f32 %v5751, %v5919
      %5921 = vmatmul.bf16.gmra.mxu0 %v2006
      %v5922 = vpop.f32.mrf.mxu0
      %v5923 = vadd.f32 %v5754, %v5922
      %v5924 = vpop.f32.mrf.mxu0
      %v5925 = vadd.f32 %v5756, %v5924
      %5926 = vmatmul.bf16.gmra.mxu0 %v2009
      %v5927 = vpop.f32.mrf.mxu0
      %v5928 = vadd.f32 %v5759, %v5927
      %v5929 = vpop.f32.mrf.mxu0
      %v5930 = vadd.f32 %v5761, %v5929
      %5931 = vmatmul.bf16.gmra.mxu0 %v2012
      %v5932 = vpop.f32.mrf.mxu0
      %v5933 = vadd.f32 %v5764, %v5932
      %v5934 = vpop.f32.mrf.mxu0
      %v5935 = vadd.f32 %v5766, %v5934
      %5936 = vmatmul.bf16.gmra.mxu0 %v2015
      %v5937 = vpop.f32.mrf.mxu0
      %v5938 = vadd.f32 %v5769, %v5937
      %v5939 = vpop.f32.mrf.mxu0
      %v5940 = vadd.f32 %v5771, %v5939
      %5941 = vmatmul.bf16.gmra.mxu0 %v2018
      %v5942 = vpop.f32.mrf.mxu0
      %v5943 = vadd.f32 %v5774, %v5942
      %v5944 = vpop.f32.mrf.mxu0
      %v5945 = vadd.f32 %v5776, %v5944
      %5946 = vmatmul.bf16.gmra.mxu0 %v5294
      %v5947 = vpop.f32.mrf.mxu0
      %v5948 = vadd.f32 %v5779, %v5947
      %v5949 = vpop.f32.mrf.mxu0
      %v5950 = vadd.f32 %v5781, %v5949
      %5951 = vmatmul.bf16.gmra.mxu0 %v5297
      %v5952 = vpop.f32.mrf.mxu0
      %v5953 = vadd.f32 %v5784, %v5952
      %v5954 = vpop.f32.mrf.mxu0
      %v5955 = vadd.f32 %v5786, %v5954
      %5956 = vmatmul.bf16.gmra.mxu0 %v5300
      %v5957 = vpop.f32.mrf.mxu0
      %v5958 = vadd.f32 %v5789, %v5957
      %v5959 = vpop.f32.mrf.mxu0
      %v5960 = vadd.f32 %v5791, %v5959
      %5961 = vmatmul.bf16.gmra.mxu0 %v5303
      %v5962 = vpop.f32.mrf.mxu0
      %v5963 = vadd.f32 %v5794, %v5962
      %v5964 = vpop.f32.mrf.mxu0
      %v5965 = vadd.f32 %v5796, %v5964
      %5966 = vdwg.mxu0
      %v5967 = vadd.f32 %v5177, %v5808
      %v5968 = vadd.f32 %v5178, %v5810
      %v5969 = vadd.f32 %v5179, %v5813
      %v5970 = vadd.f32 %v5180, %v5815
      %v5971 = vadd.f32 %v5181, %v5818
      %v5972 = vadd.f32 %v5182, %v5820
      %v5973 = vadd.f32 %v5183, %v5823
      %v5974 = vadd.f32 %v5184, %v5825
      %v5975 = vadd.f32 %v5185, %v5828
      %v5976 = vadd.f32 %v5186, %v5830
      %v5977 = vadd.f32 %v5187, %v5833
      %v5978 = vadd.f32 %v5188, %v5835
      %v5979 = vadd.f32 %v5189, %v5838
      %v5980 = vadd.f32 %v5190, %v5840
      %v5981 = vadd.f32 %v5191, %v5843
      %v5982 = vadd.f32 %v5192, %v5845
      %v5983 = vadd.f32 %v5193, %v5848
      %v5984 = vadd.f32 %v5194, %v5850
      %v5985 = vadd.f32 %v5195, %v5853
      %v5986 = vadd.f32 %v5196, %v5855
      %v5987 = vadd.f32 %v5197, %v5858
      %v5988 = vadd.f32 %v5198, %v5860
      %v5989 = vadd.f32 %v5199, %v5863
      %v5990 = vadd.f32 %v5200, %v5865
      %v5991 = vadd.f32 %v5201, %v5868
      %v5992 = vadd.f32 %v5202, %v5870
      %v5993 = vadd.f32 %v5203, %v5873
      %v5994 = vadd.f32 %v5204, %v5875
      %v5995 = vadd.f32 %v5205, %v5878
      %v5996 = vadd.f32 %v5206, %v5880
      %v5997 = vadd.f32 %v5207, %v5883
      %v5998 = vadd.f32 %v5208, %v5885
      %v5999 = vadd.f32 %v5209, %v5888
      %v6000 = vadd.f32 %v5210, %v5890
      %v6001 = vadd.f32 %v5211, %v5893
      %v6002 = vadd.f32 %v5212, %v5895
      %v6003 = vadd.f32 %v5213, %v5898
      %v6004 = vadd.f32 %v5214, %v5900
      %v6005 = vadd.f32 %v5215, %v5903
      %v6006 = vadd.f32 %v5216, %v5905
      %v6007 = vadd.f32 %v5217, %v5908
      %v6008 = vadd.f32 %v5218, %v5910
      %v6009 = vadd.f32 %v5219, %v5913
      %v6010 = vadd.f32 %v5220, %v5915
      %v6011 = vadd.f32 %v5221, %v5918
      %v6012 = vadd.f32 %v5222, %v5920
      %v6013 = vadd.f32 %v5223, %v5923
      %v6014 = vadd.f32 %v5224, %v5925
      %v6015 = vadd.f32 %v5225, %v5928
      %v6016 = vadd.f32 %v5226, %v5930
      %v6017 = vadd.f32 %v5227, %v5933
      %v6018 = vadd.f32 %v5228, %v5935
      %v6019 = vadd.f32 %v5229, %v5938
      %v6020 = vadd.f32 %v5230, %v5940
      %v6021 = vadd.f32 %v5231, %v5943
      %v6022 = vadd.f32 %v5232, %v5945
      %v6023 = vadd.f32 %v5233, %v5948
      %v6024 = vadd.f32 %v5234, %v5950
      %v6025 = vadd.f32 %v5235, %v5953
      %v6026 = vadd.f32 %v5236, %v5955
      %v6027 = vadd.f32 %v5237, %v5958
      %v6028 = vadd.f32 %v5238, %v5960
      %v6029 = vadd.f32 %v5239, %v5963
      %v6030 = vadd.f32 %v5240, %v5965
      %v6031 = vunpack.c.l.b16 %v1511
      %v6032 = vunpack.c.l.b16 %v1671
      %s6033 = scalar_lea.vmem %s1, 960
      %v6034 = vld [vmem:[%s6033] sm:$0xf]
      %v6035 = vld [vmem:[%s6033 + $0x4] sm:$0xf]
      %v6036 = vld [vmem:[%s6033 + $0x8] sm:$0xf]
      %v6037 = vld [vmem:[%s6033 + $0xc] sm:$0xf]
      %v6038 = vld [vmem:[%s6033 + $0x10] sm:$0xf]
      %v6039 = vld [vmem:[%s6033 + $0x14] sm:$0xf]
      %v6040 = vld [vmem:[%s6033 + $0x18] sm:$0xf]
      %v6041 = vld [vmem:[%s6033 + $0x1c] sm:$0xf]
      %v6042 = vld [vmem:[%s6033 + $0x20] sm:$0xf]
      %v6043 = vld [vmem:[%s6033 + $0x24] sm:$0xf]
      %v6044 = vld [vmem:[%s6033 + $0x28] sm:$0xf]
      %v6045 = vld [vmem:[%s6033 + $0x2c] sm:$0xf]
      %v6046 = vld [vmem:[%s6033 + $0x30] sm:$0xf]
      %v6047 = vld [vmem:[%s6033 + $0x34] sm:$0xf]
      %v6048 = vld [vmem:[%s6033 + $0x38] sm:$0xf]
      %v6049 = vld [vmem:[%s6033 + $0x3c] sm:$0xf]
      %v6050 = vld [vmem:[%s6033 + $0x40] sm:$0xf]
      %v6051 = vld [vmem:[%s6033 + $0x44] sm:$0xf]
      %v6052 = vld [vmem:[%s6033 + $0x48] sm:$0xf]
      %v6053 = vld [vmem:[%s6033 + $0x4c] sm:$0xf]
      %v6054 = vld [vmem:[%s6033 + $0x50] sm:$0xf]
      %v6055 = vld [vmem:[%s6033 + $0x54] sm:$0xf]
      %v6056 = vld [vmem:[%s6033 + $0x58] sm:$0xf]
      %v6057 = vld [vmem:[%s6033 + $0x5c] sm:$0xf]
      %v6058 = vld [vmem:[%s6033 + $0x60] sm:$0xf]
      %v6059 = vld [vmem:[%s6033 + $0x64] sm:$0xf]
      %v6060 = vld [vmem:[%s6033 + $0x68] sm:$0xf]
      %v6061 = vld [vmem:[%s6033 + $0x6c] sm:$0xf]
      %v6062 = vld [vmem:[%s6033 + $0x70] sm:$0xf]
      %v6063 = vld [vmem:[%s6033 + $0x74] sm:$0xf]
      %v6064 = vld [vmem:[%s6033 + $0x78] sm:$0xf]
      %v6065 = vld [vmem:[%s6033 + $0x7c] sm:$0xf]
      %v6066 = vld [vmem:[%s6033 + $0x80] sm:$0xf]
      %v6067 = vld [vmem:[%s6033 + $0x84] sm:$0xf]
      %v6068 = vld [vmem:[%s6033 + $0x88] sm:$0xf]
      %v6069 = vld [vmem:[%s6033 + $0x8c] sm:$0xf]
      %v6070 = vld [vmem:[%s6033 + $0x90] sm:$0xf]
      %v6071 = vld [vmem:[%s6033 + $0x94] sm:$0xf]
      %v6072 = vld [vmem:[%s6033 + $0x98] sm:$0xf]
      %v6073 = vld [vmem:[%s6033 + $0x9c] sm:$0xf]
      %v6074 = vld [vmem:[%s6033 + $0xa0] sm:$0xf]
      %v6075 = vld [vmem:[%s6033 + $0xa4] sm:$0xf]
      %v6076 = vld [vmem:[%s6033 + $0xa8] sm:$0xf]
      %v6077 = vld [vmem:[%s6033 + $0xac] sm:$0xf]
      %v6078 = vld [vmem:[%s6033 + $0xb0] sm:$0xf]
      %v6079 = vld [vmem:[%s6033 + $0xb4] sm:$0xf]
      %v6080 = vld [vmem:[%s6033 + $0xb8] sm:$0xf]
      %v6081 = vld [vmem:[%s6033 + $0xbc] sm:$0xf]
      %v6082 = vpack.c.b16 %v760, %v758
      %v6083 = vpack.c.b16 %v6031, %v5241
      %v6084 = vpack.c.b16 %v6032, %v5242
      %v6136 = vunpack.c.l.b16 %v6034
      %v6137 = vunpack.c.l.b16 %v6035
      %v6138 = vunpack.c.l.b16 %v6036
      %v6139 = vunpack.c.l.b16 %v6037
      %v6140 = vunpack.c.l.b16 %v6038
      %v6141 = vunpack.c.l.b16 %v6039
      %v6142 = vunpack.c.l.b16 %v6040
      %v6143 = vunpack.c.l.b16 %v6041
      %v6144 = vunpack.c.l.b16 %v6042
      %v6145 = vunpack.c.l.b16 %v6043
      %v6146 = vunpack.c.l.b16 %v6044
      %v6147 = vunpack.c.l.b16 %v6045
      %v6148 = vunpack.c.l.b16 %v6046
      %v6149 = vunpack.c.l.b16 %v6047
      %v6150 = vunpack.c.l.b16 %v6048
      %v6151 = vunpack.c.l.b16 %v6049
      %v6152 = vunpack.c.l.b16 %v6050
      %v6153 = vunpack.c.l.b16 %v6051
      %v6154 = vunpack.c.l.b16 %v6052
      %v6155 = vunpack.c.l.b16 %v6053
      %v6156 = vunpack.c.l.b16 %v6054
      %v6157 = vunpack.c.l.b16 %v6055
      %v6158 = vunpack.c.l.b16 %v6056
      %v6159 = vunpack.c.l.b16 %v6057
      %v6160 = vunpack.c.l.b16 %v6058
      %v6161 = vunpack.c.l.b16 %v6059
      %v6162 = vunpack.c.l.b16 %v6060
      %v6163 = vunpack.c.l.b16 %v6061
      %v6164 = vunpack.c.l.b16 %v6062
      %v6165 = vunpack.c.l.b16 %v6063
      %v6166 = vunpack.c.l.b16 %v6064
      %v6167 = vunpack.c.l.b16 %v6065
      %v6168 = vunpack.c.l.b16 %v6066
      %v6169 = vunpack.c.l.b16 %v6067
      %v6170 = vunpack.c.l.b16 %v6068
      %v6171 = vunpack.c.l.b16 %v6069
      %v6172 = vunpack.c.l.b16 %v6070
      %v6173 = vunpack.c.l.b16 %v6071
      %v6174 = vunpack.c.l.b16 %v6072
      %v6175 = vunpack.c.l.b16 %v6073
      %v6176 = vunpack.c.l.b16 %v6074
      %v6177 = vunpack.c.l.b16 %v6075
      %v6178 = vunpack.c.l.b16 %v6076
      %v6179 = vunpack.c.l.b16 %v6077
      %v6180 = vunpack.c.l.b16 %v6078
      %v6181 = vunpack.c.l.b16 %v6079
      %v6182 = vunpack.c.l.b16 %v6080
      %v6183 = vunpack.c.l.b16 %v6081
      %v6184 = vpack.c.b16 %v6137, %v6136
      %v6185 = vpack.c.b16 %v6139, %v6138
      %v6186 = vpack.c.b16 %v6141, %v6140
      %v6187 = vpack.c.b16 %v6143, %v6142
      %v6188 = vpack.c.b16 %v6145, %v6144
      %v6189 = vpack.c.b16 %v6147, %v6146
      %v6190 = vpack.c.b16 %v6149, %v6148
      %v6191 = vpack.c.b16 %v6151, %v6150
      %v6192 = vpack.c.b16 %v6153, %v6152
      %v6193 = vpack.c.b16 %v6155, %v6154
      %v6194 = vpack.c.b16 %v6157, %v6156
      %v6195 = vpack.c.b16 %v6159, %v6158
      %v6196 = vpack.c.b16 %v6161, %v6160
      %v6197 = vpack.c.b16 %v6163, %v6162
      %v6198 = vpack.c.b16 %v6165, %v6164
      %v6199 = vpack.c.b16 %v6167, %v6166
      %v6200 = vpack.c.b16 %v6169, %v6168
      %v6201 = vpack.c.b16 %v6171, %v6170
      %v6202 = vpack.c.b16 %v6173, %v6172
      %v6203 = vpack.c.b16 %v6175, %v6174
      %v6204 = vpack.c.b16 %v6177, %v6176
      %v6205 = vpack.c.b16 %v6179, %v6178
      %v6206 = vpack.c.b16 %v6181, %v6180
      %v6207 = vpack.c.b16 %v6183, %v6182
      %6232 = vmatpush.bf16.msra.mxu0 %v6191
      %6233 = vmatpush.bf16.msra.mxu0 %v6190
      %6234 = vmatpush.bf16.msra.mxu0 %v6189
      %6235 = vmatpush.bf16.msra.mxu0 %v6188
      %6236 = vmatpush.bf16.msra.mxu0 %v6187
      %6237 = vmatpush.bf16.msra.mxu0 %v6186
      %6238 = vmatpush.bf16.msra.mxu0 %v6185
      %6239 = vmatpush.bf16.msra.mxu0 %v6184
      %6240 = vmatmul.bf16.gmra.mxu0 %v2781
      %v6241 = vpop.f32.mrf.mxu0
      %v6242 = vadd.f32 0.0, %v6241
      %v6243 = vpop.f32.mrf.mxu0
      %v6244 = vadd.f32 0.0, %v6243
      %6245 = vmatmul.bf16.gmra.mxu0 %v2784
      %v6246 = vpop.f32.mrf.mxu0
      %v6247 = vadd.f32 0.0, %v6246
      %v6248 = vpop.f32.mrf.mxu0
      %v6249 = vadd.f32 0.0, %v6248
      %6250 = vmatmul.bf16.gmra.mxu0 %v2787
      %v6251 = vpop.f32.mrf.mxu0
      %v6252 = vadd.f32 0.0, %v6251
      %v6253 = vpop.f32.mrf.mxu0
      %v6254 = vadd.f32 0.0, %v6253
      %6255 = vmatmul.bf16.gmra.mxu0 %v3677
      %v6256 = vpop.f32.mrf.mxu0
      %v6257 = vadd.f32 0.0, %v6256
      %v6258 = vpop.f32.mrf.mxu0
      %v6259 = vadd.f32 0.0, %v6258
      %6260 = vmatmul.bf16.gmra.mxu0 %v2793
      %v6261 = vpop.f32.mrf.mxu0
      %v6262 = vadd.f32 0.0, %v6261
      %v6263 = vpop.f32.mrf.mxu0
      %v6264 = vadd.f32 0.0, %v6263
      %6265 = vmatmul.bf16.gmra.mxu0 %v2796
      %v6266 = vpop.f32.mrf.mxu0
      %v6267 = vadd.f32 0.0, %v6266
      %v6268 = vpop.f32.mrf.mxu0
      %v6269 = vadd.f32 0.0, %v6268
      %6270 = vmatmul.bf16.gmra.mxu0 %v2799
      %v6271 = vpop.f32.mrf.mxu0
      %v6272 = vadd.f32 0.0, %v6271
      %v6273 = vpop.f32.mrf.mxu0
      %v6274 = vadd.f32 0.0, %v6273
      %6275 = vmatmul.bf16.gmra.mxu0 %v3680
      %v6276 = vpop.f32.mrf.mxu0
      %v6277 = vadd.f32 0.0, %v6276
      %v6278 = vpop.f32.mrf.mxu0
      %v6279 = vadd.f32 0.0, %v6278
      %6280 = vmatmul.bf16.gmra.mxu0 %v2805
      %v6281 = vpop.f32.mrf.mxu0
      %v6282 = vadd.f32 0.0, %v6281
      %v6283 = vpop.f32.mrf.mxu0
      %v6284 = vadd.f32 0.0, %v6283
      %6285 = vmatmul.bf16.gmra.mxu0 %v2808
      %v6286 = vpop.f32.mrf.mxu0
      %v6287 = vadd.f32 0.0, %v6286
      %v6288 = vpop.f32.mrf.mxu0
      %v6289 = vadd.f32 0.0, %v6288
      %6290 = vmatmul.bf16.gmra.mxu0 %v2811
      %v6291 = vpop.f32.mrf.mxu0
      %v6292 = vadd.f32 0.0, %v6291
      %v6293 = vpop.f32.mrf.mxu0
      %v6294 = vadd.f32 0.0, %v6293
      %6295 = vmatmul.bf16.gmra.mxu0 %v3683
      %v6296 = vpop.f32.mrf.mxu0
      %v6297 = vadd.f32 0.0, %v6296
      %v6298 = vpop.f32.mrf.mxu0
      %v6299 = vadd.f32 0.0, %v6298
      %6300 = vmatmul.bf16.gmra.mxu0 %v2817
      %v6301 = vpop.f32.mrf.mxu0
      %v6302 = vadd.f32 0.0, %v6301
      %v6303 = vpop.f32.mrf.mxu0
      %v6304 = vadd.f32 0.0, %v6303
      %6305 = vmatmul.bf16.gmra.mxu0 %v2820
      %v6306 = vpop.f32.mrf.mxu0
      %v6307 = vadd.f32 0.0, %v6306
      %v6308 = vpop.f32.mrf.mxu0
      %v6309 = vadd.f32 0.0, %v6308
      %6310 = vmatmul.bf16.gmra.mxu0 %v2823
      %v6311 = vpop.f32.mrf.mxu0
      %v6312 = vadd.f32 0.0, %v6311
      %v6313 = vpop.f32.mrf.mxu0
      %v6314 = vadd.f32 0.0, %v6313
      %6315 = vmatmul.bf16.gmra.mxu0 %v3686
      %v6316 = vpop.f32.mrf.mxu0
      %v6317 = vadd.f32 0.0, %v6316
      %v6318 = vpop.f32.mrf.mxu0
      %v6319 = vadd.f32 0.0, %v6318
      %6320 = vmatmul.bf16.gmra.mxu0 %v2829
      %v6321 = vpop.f32.mrf.mxu0
      %v6322 = vadd.f32 0.0, %v6321
      %v6323 = vpop.f32.mrf.mxu0
      %v6324 = vadd.f32 0.0, %v6323
      %6325 = vmatmul.bf16.gmra.mxu0 %v2832
      %v6326 = vpop.f32.mrf.mxu0
      %v6327 = vadd.f32 0.0, %v6326
      %v6328 = vpop.f32.mrf.mxu0
      %v6329 = vadd.f32 0.0, %v6328
      %6330 = vmatmul.bf16.gmra.mxu0 %v2835
      %v6331 = vpop.f32.mrf.mxu0
      %v6332 = vadd.f32 0.0, %v6331
      %v6333 = vpop.f32.mrf.mxu0
      %v6334 = vadd.f32 0.0, %v6333
      %6335 = vmatmul.bf16.gmra.mxu0 %v3689
      %v6336 = vpop.f32.mrf.mxu0
      %v6337 = vadd.f32 0.0, %v6336
      %v6338 = vpop.f32.mrf.mxu0
      %v6339 = vadd.f32 0.0, %v6338
      %6340 = vmatmul.bf16.gmra.mxu0 %v2841
      %v6341 = vpop.f32.mrf.mxu0
      %v6342 = vadd.f32 0.0, %v6341
      %v6343 = vpop.f32.mrf.mxu0
      %v6344 = vadd.f32 0.0, %v6343
      %6345 = vmatmul.bf16.gmra.mxu0 %v2844
      %v6346 = vpop.f32.mrf.mxu0
      %v6347 = vadd.f32 0.0, %v6346
      %v6348 = vpop.f32.mrf.mxu0
      %v6349 = vadd.f32 0.0, %v6348
      %6350 = vmatmul.bf16.gmra.mxu0 %v2847
      %v6351 = vpop.f32.mrf.mxu0
      %v6352 = vadd.f32 0.0, %v6351
      %v6353 = vpop.f32.mrf.mxu0
      %v6354 = vadd.f32 0.0, %v6353
      %6355 = vmatmul.bf16.gmra.mxu0 %v3692
      %v6356 = vpop.f32.mrf.mxu0
      %v6357 = vadd.f32 0.0, %v6356
      %v6358 = vpop.f32.mrf.mxu0
      %v6359 = vadd.f32 0.0, %v6358
      %6360 = vmatmul.bf16.gmra.mxu0 %v2853
      %v6361 = vpop.f32.mrf.mxu0
      %v6362 = vadd.f32 0.0, %v6361
      %v6363 = vpop.f32.mrf.mxu0
      %v6364 = vadd.f32 0.0, %v6363
      %6365 = vmatmul.bf16.gmra.mxu0 %v2856
      %v6366 = vpop.f32.mrf.mxu0
      %v6367 = vadd.f32 0.0, %v6366
      %v6368 = vpop.f32.mrf.mxu0
      %v6369 = vadd.f32 0.0, %v6368
      %6370 = vmatmul.bf16.gmra.mxu0 %v2859
      %v6371 = vpop.f32.mrf.mxu0
      %v6372 = vadd.f32 0.0, %v6371
      %v6373 = vpop.f32.mrf.mxu0
      %v6374 = vadd.f32 0.0, %v6373
      %6375 = vmatmul.bf16.gmra.mxu0 %v3695
      %v6376 = vpop.f32.mrf.mxu0
      %v6377 = vadd.f32 0.0, %v6376
      %v6378 = vpop.f32.mrf.mxu0
      %v6379 = vadd.f32 0.0, %v6378
      %6380 = vmatmul.bf16.gmra.mxu0 %v4505
      %v6381 = vpop.f32.mrf.mxu0
      %v6382 = vadd.f32 0.0, %v6381
      %v6383 = vpop.f32.mrf.mxu0
      %v6384 = vadd.f32 0.0, %v6383
      %6385 = vmatmul.bf16.gmra.mxu0 %v4508
      %v6386 = vpop.f32.mrf.mxu0
      %v6387 = vadd.f32 0.0, %v6386
      %v6388 = vpop.f32.mrf.mxu0
      %v6389 = vadd.f32 0.0, %v6388
      %6390 = vmatmul.bf16.gmra.mxu0 %v4511
      %v6391 = vpop.f32.mrf.mxu0
      %v6392 = vadd.f32 0.0, %v6391
      %v6393 = vpop.f32.mrf.mxu0
      %v6394 = vadd.f32 0.0, %v6393
      %6395 = vmatmul.bf16.gmra.mxu0 %v6082
      %v6396 = vpop.f32.mrf.mxu0
      %v6397 = vadd.f32 0.0, %v6396
      %v6398 = vpop.f32.mrf.mxu0
      %v6399 = vadd.f32 0.0, %v6398
      %6400 = vdwg.mxu0
      %6401 = vmatpush.bf16.msra.mxu0 %v6199
      %6402 = vmatpush.bf16.msra.mxu0 %v6198
      %6403 = vmatpush.bf16.msra.mxu0 %v6197
      %6404 = vmatpush.bf16.msra.mxu0 %v6196
      %6405 = vmatpush.bf16.msra.mxu0 %v6195
      %6406 = vmatpush.bf16.msra.mxu0 %v6194
      %6407 = vmatpush.bf16.msra.mxu0 %v6193
      %6408 = vmatpush.bf16.msra.mxu0 %v6192
      %6409 = vmatmul.bf16.gmra.mxu0 %v2782
      %v6410 = vpop.f32.mrf.mxu0
      %v6411 = vadd.f32 %v6242, %v6410
      %v6412 = vpop.f32.mrf.mxu0
      %v6413 = vadd.f32 %v6244, %v6412
      %6414 = vmatmul.bf16.gmra.mxu0 %v2785
      %v6415 = vpop.f32.mrf.mxu0
      %v6416 = vadd.f32 %v6247, %v6415
      %v6417 = vpop.f32.mrf.mxu0
      %v6418 = vadd.f32 %v6249, %v6417
      %6419 = vmatmul.bf16.gmra.mxu0 %v2788
      %v6420 = vpop.f32.mrf.mxu0
      %v6421 = vadd.f32 %v6252, %v6420
      %v6422 = vpop.f32.mrf.mxu0
      %v6423 = vadd.f32 %v6254, %v6422
      %6424 = vmatmul.bf16.gmra.mxu0 %v3678
      %v6425 = vpop.f32.mrf.mxu0
      %v6426 = vadd.f32 %v6257, %v6425
      %v6427 = vpop.f32.mrf.mxu0
      %v6428 = vadd.f32 %v6259, %v6427
      %6429 = vmatmul.bf16.gmra.mxu0 %v2794
      %v6430 = vpop.f32.mrf.mxu0
      %v6431 = vadd.f32 %v6262, %v6430
      %v6432 = vpop.f32.mrf.mxu0
      %v6433 = vadd.f32 %v6264, %v6432
      %6434 = vmatmul.bf16.gmra.mxu0 %v2797
      %v6435 = vpop.f32.mrf.mxu0
      %v6436 = vadd.f32 %v6267, %v6435
      %v6437 = vpop.f32.mrf.mxu0
      %v6438 = vadd.f32 %v6269, %v6437
      %6439 = vmatmul.bf16.gmra.mxu0 %v2800
      %v6440 = vpop.f32.mrf.mxu0
      %v6441 = vadd.f32 %v6272, %v6440
      %v6442 = vpop.f32.mrf.mxu0
      %v6443 = vadd.f32 %v6274, %v6442
      %6444 = vmatmul.bf16.gmra.mxu0 %v3681
      %v6445 = vpop.f32.mrf.mxu0
      %v6446 = vadd.f32 %v6277, %v6445
      %v6447 = vpop.f32.mrf.mxu0
      %v6448 = vadd.f32 %v6279, %v6447
      %6449 = vmatmul.bf16.gmra.mxu0 %v2806
      %v6450 = vpop.f32.mrf.mxu0
      %v6451 = vadd.f32 %v6282, %v6450
      %v6452 = vpop.f32.mrf.mxu0
      %v6453 = vadd.f32 %v6284, %v6452
      %6454 = vmatmul.bf16.gmra.mxu0 %v2809
      %v6455 = vpop.f32.mrf.mxu0
      %v6456 = vadd.f32 %v6287, %v6455
      %v6457 = vpop.f32.mrf.mxu0
      %v6458 = vadd.f32 %v6289, %v6457
      %6459 = vmatmul.bf16.gmra.mxu0 %v2812
      %v6460 = vpop.f32.mrf.mxu0
      %v6461 = vadd.f32 %v6292, %v6460
      %v6462 = vpop.f32.mrf.mxu0
      %v6463 = vadd.f32 %v6294, %v6462
      %6464 = vmatmul.bf16.gmra.mxu0 %v3684
      %v6465 = vpop.f32.mrf.mxu0
      %v6466 = vadd.f32 %v6297, %v6465
      %v6467 = vpop.f32.mrf.mxu0
      %v6468 = vadd.f32 %v6299, %v6467
      %6469 = vmatmul.bf16.gmra.mxu0 %v2818
      %v6470 = vpop.f32.mrf.mxu0
      %v6471 = vadd.f32 %v6302, %v6470
      %v6472 = vpop.f32.mrf.mxu0
      %v6473 = vadd.f32 %v6304, %v6472
      %6474 = vmatmul.bf16.gmra.mxu0 %v2821
      %v6475 = vpop.f32.mrf.mxu0
      %v6476 = vadd.f32 %v6307, %v6475
      %v6477 = vpop.f32.mrf.mxu0
      %v6478 = vadd.f32 %v6309, %v6477
      %6479 = vmatmul.bf16.gmra.mxu0 %v2824
      %v6480 = vpop.f32.mrf.mxu0
      %v6481 = vadd.f32 %v6312, %v6480
      %v6482 = vpop.f32.mrf.mxu0
      %v6483 = vadd.f32 %v6314, %v6482
      %6484 = vmatmul.bf16.gmra.mxu0 %v3687
      %v6485 = vpop.f32.mrf.mxu0
      %v6486 = vadd.f32 %v6317, %v6485
      %v6487 = vpop.f32.mrf.mxu0
      %v6488 = vadd.f32 %v6319, %v6487
      %6489 = vmatmul.bf16.gmra.mxu0 %v2830
      %v6490 = vpop.f32.mrf.mxu0
      %v6491 = vadd.f32 %v6322, %v6490
      %v6492 = vpop.f32.mrf.mxu0
      %v6493 = vadd.f32 %v6324, %v6492
      %6494 = vmatmul.bf16.gmra.mxu0 %v2833
      %v6495 = vpop.f32.mrf.mxu0
      %v6496 = vadd.f32 %v6327, %v6495
      %v6497 = vpop.f32.mrf.mxu0
      %v6498 = vadd.f32 %v6329, %v6497
      %6499 = vmatmul.bf16.gmra.mxu0 %v2836
      %v6500 = vpop.f32.mrf.mxu0
      %v6501 = vadd.f32 %v6332, %v6500
      %v6502 = vpop.f32.mrf.mxu0
      %v6503 = vadd.f32 %v6334, %v6502
      %6504 = vmatmul.bf16.gmra.mxu0 %v3690
      %v6505 = vpop.f32.mrf.mxu0
      %v6506 = vadd.f32 %v6337, %v6505
      %v6507 = vpop.f32.mrf.mxu0
      %v6508 = vadd.f32 %v6339, %v6507
      %6509 = vmatmul.bf16.gmra.mxu0 %v2842
      %v6510 = vpop.f32.mrf.mxu0
      %v6511 = vadd.f32 %v6342, %v6510
      %v6512 = vpop.f32.mrf.mxu0
      %v6513 = vadd.f32 %v6344, %v6512
      %6514 = vmatmul.bf16.gmra.mxu0 %v2845
      %v6515 = vpop.f32.mrf.mxu0
      %v6516 = vadd.f32 %v6347, %v6515
      %v6517 = vpop.f32.mrf.mxu0
      %v6518 = vadd.f32 %v6349, %v6517
      %6519 = vmatmul.bf16.gmra.mxu0 %v2848
      %v6520 = vpop.f32.mrf.mxu0
      %v6521 = vadd.f32 %v6352, %v6520
      %v6522 = vpop.f32.mrf.mxu0
      %v6523 = vadd.f32 %v6354, %v6522
      %6524 = vmatmul.bf16.gmra.mxu0 %v3693
      %v6525 = vpop.f32.mrf.mxu0
      %v6526 = vadd.f32 %v6357, %v6525
      %v6527 = vpop.f32.mrf.mxu0
      %v6528 = vadd.f32 %v6359, %v6527
      %6529 = vmatmul.bf16.gmra.mxu0 %v2854
      %v6530 = vpop.f32.mrf.mxu0
      %v6531 = vadd.f32 %v6362, %v6530
      %v6532 = vpop.f32.mrf.mxu0
      %v6533 = vadd.f32 %v6364, %v6532
      %6534 = vmatmul.bf16.gmra.mxu0 %v2857
      %v6535 = vpop.f32.mrf.mxu0
      %v6536 = vadd.f32 %v6367, %v6535
      %v6537 = vpop.f32.mrf.mxu0
      %v6538 = vadd.f32 %v6369, %v6537
      %6539 = vmatmul.bf16.gmra.mxu0 %v2860
      %v6540 = vpop.f32.mrf.mxu0
      %v6541 = vadd.f32 %v6372, %v6540
      %v6542 = vpop.f32.mrf.mxu0
      %v6543 = vadd.f32 %v6374, %v6542
      %6544 = vmatmul.bf16.gmra.mxu0 %v3696
      %v6545 = vpop.f32.mrf.mxu0
      %v6546 = vadd.f32 %v6377, %v6545
      %v6547 = vpop.f32.mrf.mxu0
      %v6548 = vadd.f32 %v6379, %v6547
      %6549 = vmatmul.bf16.gmra.mxu0 %v4506
      %v6550 = vpop.f32.mrf.mxu0
      %v6551 = vadd.f32 %v6382, %v6550
      %v6552 = vpop.f32.mrf.mxu0
      %v6553 = vadd.f32 %v6384, %v6552
      %6554 = vmatmul.bf16.gmra.mxu0 %v4509
      %v6555 = vpop.f32.mrf.mxu0
      %v6556 = vadd.f32 %v6387, %v6555
      %v6557 = vpop.f32.mrf.mxu0
      %v6558 = vadd.f32 %v6389, %v6557
      %6559 = vmatmul.bf16.gmra.mxu0 %v4512
      %v6560 = vpop.f32.mrf.mxu0
      %v6561 = vadd.f32 %v6392, %v6560
      %v6562 = vpop.f32.mrf.mxu0
      %v6563 = vadd.f32 %v6394, %v6562
      %6564 = vmatmul.bf16.gmra.mxu0 %v6083
      %v6565 = vpop.f32.mrf.mxu0
      %v6566 = vadd.f32 %v6397, %v6565
      %v6567 = vpop.f32.mrf.mxu0
      %v6568 = vadd.f32 %v6399, %v6567
      %6569 = vdwg.mxu0
      %6570 = vmatpush.bf16.msra.mxu0 %v6207
      %6571 = vmatpush.bf16.msra.mxu0 %v6206
      %6572 = vmatpush.bf16.msra.mxu0 %v6205
      %6573 = vmatpush.bf16.msra.mxu0 %v6204
      %6574 = vmatpush.bf16.msra.mxu0 %v6203
      %6575 = vmatpush.bf16.msra.mxu0 %v6202
      %6576 = vmatpush.bf16.msra.mxu0 %v6201
      %6577 = vmatpush.bf16.msra.mxu0 %v6200
      %6578 = vmatmul.bf16.gmra.mxu0 %v2783
      %v6579 = vpop.f32.mrf.mxu0
      %v6580 = vadd.f32 %v6411, %v6579
      %v6581 = vpop.f32.mrf.mxu0
      %v6582 = vadd.f32 %v6413, %v6581
      %6583 = vmatmul.bf16.gmra.mxu0 %v2786
      %v6584 = vpop.f32.mrf.mxu0
      %v6585 = vadd.f32 %v6416, %v6584
      %v6586 = vpop.f32.mrf.mxu0
      %v6587 = vadd.f32 %v6418, %v6586
      %6588 = vmatmul.bf16.gmra.mxu0 %v2789
      %v6589 = vpop.f32.mrf.mxu0
      %v6590 = vadd.f32 %v6421, %v6589
      %v6591 = vpop.f32.mrf.mxu0
      %v6592 = vadd.f32 %v6423, %v6591
      %6593 = vmatmul.bf16.gmra.mxu0 %v3679
      %v6594 = vpop.f32.mrf.mxu0
      %v6595 = vadd.f32 %v6426, %v6594
      %v6596 = vpop.f32.mrf.mxu0
      %v6597 = vadd.f32 %v6428, %v6596
      %6598 = vmatmul.bf16.gmra.mxu0 %v2795
      %v6599 = vpop.f32.mrf.mxu0
      %v6600 = vadd.f32 %v6431, %v6599
      %v6601 = vpop.f32.mrf.mxu0
      %v6602 = vadd.f32 %v6433, %v6601
      %6603 = vmatmul.bf16.gmra.mxu0 %v2798
      %v6604 = vpop.f32.mrf.mxu0
      %v6605 = vadd.f32 %v6436, %v6604
      %v6606 = vpop.f32.mrf.mxu0
      %v6607 = vadd.f32 %v6438, %v6606
      %6608 = vmatmul.bf16.gmra.mxu0 %v2801
      %v6609 = vpop.f32.mrf.mxu0
      %v6610 = vadd.f32 %v6441, %v6609
      %v6611 = vpop.f32.mrf.mxu0
      %v6612 = vadd.f32 %v6443, %v6611
      %6613 = vmatmul.bf16.gmra.mxu0 %v3682
      %v6614 = vpop.f32.mrf.mxu0
      %v6615 = vadd.f32 %v6446, %v6614
      %v6616 = vpop.f32.mrf.mxu0
      %v6617 = vadd.f32 %v6448, %v6616
      %6618 = vmatmul.bf16.gmra.mxu0 %v2807
      %v6619 = vpop.f32.mrf.mxu0
      %v6620 = vadd.f32 %v6451, %v6619
      %v6621 = vpop.f32.mrf.mxu0
      %v6622 = vadd.f32 %v6453, %v6621
      %6623 = vmatmul.bf16.gmra.mxu0 %v2810
      %v6624 = vpop.f32.mrf.mxu0
      %v6625 = vadd.f32 %v6456, %v6624
      %v6626 = vpop.f32.mrf.mxu0
      %v6627 = vadd.f32 %v6458, %v6626
      %6628 = vmatmul.bf16.gmra.mxu0 %v2813
      %v6629 = vpop.f32.mrf.mxu0
      %v6630 = vadd.f32 %v6461, %v6629
      %v6631 = vpop.f32.mrf.mxu0
      %v6632 = vadd.f32 %v6463, %v6631
      %6633 = vmatmul.bf16.gmra.mxu0 %v3685
      %v6634 = vpop.f32.mrf.mxu0
      %v6635 = vadd.f32 %v6466, %v6634
      %v6636 = vpop.f32.mrf.mxu0
      %v6637 = vadd.f32 %v6468, %v6636
      %6638 = vmatmul.bf16.gmra.mxu0 %v2819
      %v6639 = vpop.f32.mrf.mxu0
      %v6640 = vadd.f32 %v6471, %v6639
      %v6641 = vpop.f32.mrf.mxu0
      %v6642 = vadd.f32 %v6473, %v6641
      %6643 = vmatmul.bf16.gmra.mxu0 %v2822
      %v6644 = vpop.f32.mrf.mxu0
      %v6645 = vadd.f32 %v6476, %v6644
      %v6646 = vpop.f32.mrf.mxu0
      %v6647 = vadd.f32 %v6478, %v6646
      %6648 = vmatmul.bf16.gmra.mxu0 %v2825
      %v6649 = vpop.f32.mrf.mxu0
      %v6650 = vadd.f32 %v6481, %v6649
      %v6651 = vpop.f32.mrf.mxu0
      %v6652 = vadd.f32 %v6483, %v6651
      %6653 = vmatmul.bf16.gmra.mxu0 %v3688
      %v6654 = vpop.f32.mrf.mxu0
      %v6655 = vadd.f32 %v6486, %v6654
      %v6656 = vpop.f32.mrf.mxu0
      %v6657 = vadd.f32 %v6488, %v6656
      %6658 = vmatmul.bf16.gmra.mxu0 %v2831
      %v6659 = vpop.f32.mrf.mxu0
      %v6660 = vadd.f32 %v6491, %v6659
      %v6661 = vpop.f32.mrf.mxu0
      %v6662 = vadd.f32 %v6493, %v6661
      %6663 = vmatmul.bf16.gmra.mxu0 %v2834
      %v6664 = vpop.f32.mrf.mxu0
      %v6665 = vadd.f32 %v6496, %v6664
      %v6666 = vpop.f32.mrf.mxu0
      %v6667 = vadd.f32 %v6498, %v6666
      %6668 = vmatmul.bf16.gmra.mxu0 %v2837
      %v6669 = vpop.f32.mrf.mxu0
      %v6670 = vadd.f32 %v6501, %v6669
      %v6671 = vpop.f32.mrf.mxu0
      %v6672 = vadd.f32 %v6503, %v6671
      %6673 = vmatmul.bf16.gmra.mxu0 %v3691
      %v6674 = vpop.f32.mrf.mxu0
      %v6675 = vadd.f32 %v6506, %v6674
      %v6676 = vpop.f32.mrf.mxu0
      %v6677 = vadd.f32 %v6508, %v6676
      %6678 = vmatmul.bf16.gmra.mxu0 %v2843
      %v6679 = vpop.f32.mrf.mxu0
      %v6680 = vadd.f32 %v6511, %v6679
      %v6681 = vpop.f32.mrf.mxu0
      %v6682 = vadd.f32 %v6513, %v6681
      %6683 = vmatmul.bf16.gmra.mxu0 %v2846
      %v6684 = vpop.f32.mrf.mxu0
      %v6685 = vadd.f32 %v6516, %v6684
      %v6686 = vpop.f32.mrf.mxu0
      %v6687 = vadd.f32 %v6518, %v6686
      %6688 = vmatmul.bf16.gmra.mxu0 %v2849
      %v6689 = vpop.f32.mrf.mxu0
      %v6690 = vadd.f32 %v6521, %v6689
      %v6691 = vpop.f32.mrf.mxu0
      %v6692 = vadd.f32 %v6523, %v6691
      %6693 = vmatmul.bf16.gmra.mxu0 %v3694
      %v6694 = vpop.f32.mrf.mxu0
      %v6695 = vadd.f32 %v6526, %v6694
      %v6696 = vpop.f32.mrf.mxu0
      %v6697 = vadd.f32 %v6528, %v6696
      %6698 = vmatmul.bf16.gmra.mxu0 %v2855
      %v6699 = vpop.f32.mrf.mxu0
      %v6700 = vadd.f32 %v6531, %v6699
      %v6701 = vpop.f32.mrf.mxu0
      %v6702 = vadd.f32 %v6533, %v6701
      %6703 = vmatmul.bf16.gmra.mxu0 %v2858
      %v6704 = vpop.f32.mrf.mxu0
      %v6705 = vadd.f32 %v6536, %v6704
      %v6706 = vpop.f32.mrf.mxu0
      %v6707 = vadd.f32 %v6538, %v6706
      %6708 = vmatmul.bf16.gmra.mxu0 %v2861
      %v6709 = vpop.f32.mrf.mxu0
      %v6710 = vadd.f32 %v6541, %v6709
      %v6711 = vpop.f32.mrf.mxu0
      %v6712 = vadd.f32 %v6543, %v6711
      %6713 = vmatmul.bf16.gmra.mxu0 %v3697
      %v6714 = vpop.f32.mrf.mxu0
      %v6715 = vadd.f32 %v6546, %v6714
      %v6716 = vpop.f32.mrf.mxu0
      %v6717 = vadd.f32 %v6548, %v6716
      %6718 = vmatmul.bf16.gmra.mxu0 %v4507
      %v6719 = vpop.f32.mrf.mxu0
      %v6720 = vadd.f32 %v6551, %v6719
      %v6721 = vpop.f32.mrf.mxu0
      %v6722 = vadd.f32 %v6553, %v6721
      %6723 = vmatmul.bf16.gmra.mxu0 %v4510
      %v6724 = vpop.f32.mrf.mxu0
      %v6725 = vadd.f32 %v6556, %v6724
      %v6726 = vpop.f32.mrf.mxu0
      %v6727 = vadd.f32 %v6558, %v6726
      %6728 = vmatmul.bf16.gmra.mxu0 %v4513
      %v6729 = vpop.f32.mrf.mxu0
      %v6730 = vadd.f32 %v6561, %v6729
      %v6731 = vpop.f32.mrf.mxu0
      %v6732 = vadd.f32 %v6563, %v6731
      %6733 = vmatmul.bf16.gmra.mxu0 %v6084
      %v6734 = vpop.f32.mrf.mxu0
      %v6735 = vadd.f32 %v6566, %v6734
      %v6736 = vpop.f32.mrf.mxu0
      %v6737 = vadd.f32 %v6568, %v6736
      %6738 = vdwg.mxu0
      %v6739 = vadd.f32 %v5967, %v6580
      %v6740 = vadd.f32 %v5968, %v6582
      %v6741 = vadd.f32 %v5969, %v6585
      %v6742 = vadd.f32 %v5970, %v6587
      %v6743 = vadd.f32 %v5971, %v6590
      %v6744 = vadd.f32 %v5972, %v6592
      %v6745 = vadd.f32 %v5973, %v6595
      %v6746 = vadd.f32 %v5974, %v6597
      %v6747 = vadd.f32 %v5975, %v6600
      %v6748 = vadd.f32 %v5976, %v6602
      %v6749 = vadd.f32 %v5977, %v6605
      %v6750 = vadd.f32 %v5978, %v6607
      %v6751 = vadd.f32 %v5979, %v6610
      %v6752 = vadd.f32 %v5980, %v6612
      %v6753 = vadd.f32 %v5981, %v6615
      %v6754 = vadd.f32 %v5982, %v6617
      %v6755 = vadd.f32 %v5983, %v6620
      %v6756 = vadd.f32 %v5984, %v6622
      %v6757 = vadd.f32 %v5985, %v6625
      %v6758 = vadd.f32 %v5986, %v6627
      %v6759 = vadd.f32 %v5987, %v6630
      %v6760 = vadd.f32 %v5988, %v6632
      %v6761 = vadd.f32 %v5989, %v6635
      %v6762 = vadd.f32 %v5990, %v6637
      %v6763 = vadd.f32 %v5991, %v6640
      %v6764 = vadd.f32 %v5992, %v6642
      %v6765 = vadd.f32 %v5993, %v6645
      %v6766 = vadd.f32 %v5994, %v6647
      %v6767 = vadd.f32 %v5995, %v6650
      %v6768 = vadd.f32 %v5996, %v6652
      %v6769 = vadd.f32 %v5997, %v6655
      %v6770 = vadd.f32 %v5998, %v6657
      %v6771 = vadd.f32 %v5999, %v6660
      %v6772 = vadd.f32 %v6000, %v6662
      %v6773 = vadd.f32 %v6001, %v6665
      %v6774 = vadd.f32 %v6002, %v6667
      %v6775 = vadd.f32 %v6003, %v6670
      %v6776 = vadd.f32 %v6004, %v6672
      %v6777 = vadd.f32 %v6005, %v6675
      %v6778 = vadd.f32 %v6006, %v6677
      %v6779 = vadd.f32 %v6007, %v6680
      %v6780 = vadd.f32 %v6008, %v6682
      %v6781 = vadd.f32 %v6009, %v6685
      %v6782 = vadd.f32 %v6010, %v6687
      %v6783 = vadd.f32 %v6011, %v6690
      %v6784 = vadd.f32 %v6012, %v6692
      %v6785 = vadd.f32 %v6013, %v6695
      %v6786 = vadd.f32 %v6014, %v6697
      %v6787 = vadd.f32 %v6015, %v6700
      %v6788 = vadd.f32 %v6016, %v6702
      %v6789 = vadd.f32 %v6017, %v6705
      %v6790 = vadd.f32 %v6018, %v6707
      %v6791 = vadd.f32 %v6019, %v6710
      %v6792 = vadd.f32 %v6020, %v6712
      %v6793 = vadd.f32 %v6021, %v6715
      %v6794 = vadd.f32 %v6022, %v6717
      %v6795 = vadd.f32 %v6023, %v6720
      %v6796 = vadd.f32 %v6024, %v6722
      %v6797 = vadd.f32 %v6025, %v6725
      %v6798 = vadd.f32 %v6026, %v6727
      %v6799 = vadd.f32 %v6027, %v6730
      %v6800 = vadd.f32 %v6028, %v6732
      %v6801 = vadd.f32 %v6029, %v6735
      %v6802 = vadd.f32 %v6030, %v6737
      %v6803 = vunpack.c.l.b16 %v1518
      %v6804 = vunpack.c.l.b16 %v1672
      %v6805 = vunpack.c.l.b16 %v1525
      %v6806 = vunpack.c.l.b16 %v1673
      %v6807 = vunpack.c.l.b16 %v1532
      %v6808 = vunpack.c.l.b16 %v1674
      %v6809 = vunpack.c.l.b16 %v1539
      %v6810 = vunpack.c.l.b16 %v1675
      %v6811 = vunpack.c.l.b16 %v1546
      %v6812 = vunpack.c.l.b16 %v1676
      %v6813 = vunpack.c.l.b16 %v1553
      %v6814 = vunpack.c.l.b16 %v1677
      %v6815 = vunpack.c.l.b16 %v1560
      %v6816 = vunpack.c.l.b16 %v1678
      %v6817 = vunpack.c.l.b16 %v1567
      %v6818 = vunpack.c.l.b16 %v1679
      %s6819 = scalar_lea.vmem %s1, 1152
      %v6820 = vld [vmem:[%s6819] sm:$0xf]
      %v6821 = vld [vmem:[%s6819 + $0x4] sm:$0xf]
      %v6822 = vld [vmem:[%s6819 + $0x8] sm:$0xf]
      %v6823 = vld [vmem:[%s6819 + $0xc] sm:$0xf]
      %v6824 = vld [vmem:[%s6819 + $0x10] sm:$0xf]
      %v6825 = vld [vmem:[%s6819 + $0x14] sm:$0xf]
      %v6826 = vld [vmem:[%s6819 + $0x18] sm:$0xf]
      %v6827 = vld [vmem:[%s6819 + $0x1c] sm:$0xf]
      %v6828 = vld [vmem:[%s6819 + $0x20] sm:$0xf]
      %v6829 = vld [vmem:[%s6819 + $0x24] sm:$0xf]
      %v6830 = vld [vmem:[%s6819 + $0x28] sm:$0xf]
      %v6831 = vld [vmem:[%s6819 + $0x2c] sm:$0xf]
      %v6832 = vld [vmem:[%s6819 + $0x30] sm:$0xf]
      %v6833 = vld [vmem:[%s6819 + $0x34] sm:$0xf]
      %v6834 = vld [vmem:[%s6819 + $0x38] sm:$0xf]
      %v6835 = vld [vmem:[%s6819 + $0x3c] sm:$0xf]
      %v6836 = vld [vmem:[%s6819 + $0x40] sm:$0xf]
      %v6837 = vld [vmem:[%s6819 + $0x44] sm:$0xf]
      %v6838 = vld [vmem:[%s6819 + $0x48] sm:$0xf]
      %v6839 = vld [vmem:[%s6819 + $0x4c] sm:$0xf]
      %v6840 = vld [vmem:[%s6819 + $0x50] sm:$0xf]
      %v6841 = vld [vmem:[%s6819 + $0x54] sm:$0xf]
      %v6842 = vld [vmem:[%s6819 + $0x58] sm:$0xf]
      %v6843 = vld [vmem:[%s6819 + $0x5c] sm:$0xf]
      %v6844 = vld [vmem:[%s6819 + $0x60] sm:$0xf]
      %v6845 = vld [vmem:[%s6819 + $0x64] sm:$0xf]
      %v6846 = vld [vmem:[%s6819 + $0x68] sm:$0xf]
      %v6847 = vld [vmem:[%s6819 + $0x6c] sm:$0xf]
      %v6848 = vld [vmem:[%s6819 + $0x70] sm:$0xf]
      %v6849 = vld [vmem:[%s6819 + $0x74] sm:$0xf]
      %v6850 = vld [vmem:[%s6819 + $0x78] sm:$0xf]
      %v6851 = vld [vmem:[%s6819 + $0x7c] sm:$0xf]
      %v6852 = vld [vmem:[%s6819 + $0x80] sm:$0xf]
      %v6853 = vld [vmem:[%s6819 + $0x84] sm:$0xf]
      %v6854 = vld [vmem:[%s6819 + $0x88] sm:$0xf]
      %v6855 = vld [vmem:[%s6819 + $0x8c] sm:$0xf]
      %v6856 = vld [vmem:[%s6819 + $0x90] sm:$0xf]
      %v6857 = vld [vmem:[%s6819 + $0x94] sm:$0xf]
      %v6858 = vld [vmem:[%s6819 + $0x98] sm:$0xf]
      %v6859 = vld [vmem:[%s6819 + $0x9c] sm:$0xf]
      %v6860 = vld [vmem:[%s6819 + $0xa0] sm:$0xf]
      %v6861 = vld [vmem:[%s6819 + $0xa4] sm:$0xf]
      %v6862 = vld [vmem:[%s6819 + $0xa8] sm:$0xf]
      %v6863 = vld [vmem:[%s6819 + $0xac] sm:$0xf]
      %v6864 = vld [vmem:[%s6819 + $0xb0] sm:$0xf]
      %v6865 = vld [vmem:[%s6819 + $0xb4] sm:$0xf]
      %v6866 = vld [vmem:[%s6819 + $0xb8] sm:$0xf]
      %v6867 = vld [vmem:[%s6819 + $0xbc] sm:$0xf]
      %v6868 = vpack.c.b16 %v764, %v762
      %v6869 = vpack.c.b16 %v6805, %v6803
      %v6870 = vpack.c.b16 %v6806, %v6804
      %v6871 = vpack.c.b16 %v768, %v766
      %v6872 = vpack.c.b16 %v6809, %v6807
      %v6873 = vpack.c.b16 %v6810, %v6808
      %v6874 = vpack.c.b16 %v772, %v770
      %v6875 = vpack.c.b16 %v6813, %v6811
      %v6876 = vpack.c.b16 %v6814, %v6812
      %v6877 = vpack.c.b16 %v776, %v774
      %v6878 = vpack.c.b16 %v6817, %v6815
      %v6879 = vpack.c.b16 %v6818, %v6816
      %v6940 = vunpack.c.l.b16 %v6820
      %v6941 = vunpack.c.l.b16 %v6821
      %v6942 = vunpack.c.l.b16 %v6822
      %v6943 = vunpack.c.l.b16 %v6823
      %v6944 = vunpack.c.l.b16 %v6824
      %v6945 = vunpack.c.l.b16 %v6825
      %v6946 = vunpack.c.l.b16 %v6826
      %v6947 = vunpack.c.l.b16 %v6827
      %v6948 = vunpack.c.l.b16 %v6828
      %v6949 = vunpack.c.l.b16 %v6829
      %v6950 = vunpack.c.l.b16 %v6830
      %v6951 = vunpack.c.l.b16 %v6831
      %v6952 = vunpack.c.l.b16 %v6832
      %v6953 = vunpack.c.l.b16 %v6833
      %v6954 = vunpack.c.l.b16 %v6834
      %v6955 = vunpack.c.l.b16 %v6835
      %v6956 = vunpack.c.l.b16 %v6836
      %v6957 = vunpack.c.l.b16 %v6837
      %v6958 = vunpack.c.l.b16 %v6838
      %v6959 = vunpack.c.l.b16 %v6839
      %v6960 = vunpack.c.l.b16 %v6840
      %v6961 = vunpack.c.l.b16 %v6841
      %v6962 = vunpack.c.l.b16 %v6842
      %v6963 = vunpack.c.l.b16 %v6843
      %v6964 = vunpack.c.l.b16 %v6844
      %v6965 = vunpack.c.l.b16 %v6845
      %v6966 = vunpack.c.l.b16 %v6846
      %v6967 = vunpack.c.l.b16 %v6847
      %v6968 = vunpack.c.l.b16 %v6848
      %v6969 = vunpack.c.l.b16 %v6849
      %v6970 = vunpack.c.l.b16 %v6850
      %v6971 = vunpack.c.l.b16 %v6851
      %v6972 = vunpack.c.l.b16 %v6852
      %v6973 = vunpack.c.l.b16 %v6853
      %v6974 = vunpack.c.l.b16 %v6854
      %v6975 = vunpack.c.l.b16 %v6855
      %v6976 = vunpack.c.l.b16 %v6856
      %v6977 = vunpack.c.l.b16 %v6857
      %v6978 = vunpack.c.l.b16 %v6858
      %v6979 = vunpack.c.l.b16 %v6859
      %v6980 = vunpack.c.l.b16 %v6860
      %v6981 = vunpack.c.l.b16 %v6861
      %v6982 = vunpack.c.l.b16 %v6862
      %v6983 = vunpack.c.l.b16 %v6863
      %v6984 = vunpack.c.l.b16 %v6864
      %v6985 = vunpack.c.l.b16 %v6865
      %v6986 = vunpack.c.l.b16 %v6866
      %v6987 = vunpack.c.l.b16 %v6867
      %v6988 = vpack.c.b16 %v6941, %v6940
      %v6989 = vpack.c.b16 %v6943, %v6942
      %v6990 = vpack.c.b16 %v6945, %v6944
      %v6991 = vpack.c.b16 %v6947, %v6946
      %v6992 = vpack.c.b16 %v6949, %v6948
      %v6993 = vpack.c.b16 %v6951, %v6950
      %v6994 = vpack.c.b16 %v6953, %v6952
      %v6995 = vpack.c.b16 %v6955, %v6954
      %v6996 = vpack.c.b16 %v6957, %v6956
      %v6997 = vpack.c.b16 %v6959, %v6958
      %v6998 = vpack.c.b16 %v6961, %v6960
      %v6999 = vpack.c.b16 %v6963, %v6962
      %v7000 = vpack.c.b16 %v6965, %v6964
      %v7001 = vpack.c.b16 %v6967, %v6966
      %v7002 = vpack.c.b16 %v6969, %v6968
      %v7003 = vpack.c.b16 %v6971, %v6970
      %v7004 = vpack.c.b16 %v6973, %v6972
      %v7005 = vpack.c.b16 %v6975, %v6974
      %v7006 = vpack.c.b16 %v6977, %v6976
      %v7007 = vpack.c.b16 %v6979, %v6978
      %v7008 = vpack.c.b16 %v6981, %v6980
      %v7009 = vpack.c.b16 %v6983, %v6982
      %v7010 = vpack.c.b16 %v6985, %v6984
      %v7011 = vpack.c.b16 %v6987, %v6986
      %7036 = vmatpush.bf16.msra.mxu0 %v6995
      %7037 = vmatpush.bf16.msra.mxu0 %v6994
      %7038 = vmatpush.bf16.msra.mxu0 %v6993
      %7039 = vmatpush.bf16.msra.mxu0 %v6992
      %7040 = vmatpush.bf16.msra.mxu0 %v6991
      %7041 = vmatpush.bf16.msra.mxu0 %v6990
      %7042 = vmatpush.bf16.msra.mxu0 %v6989
      %7043 = vmatpush.bf16.msra.mxu0 %v6988
      %7044 = vmatmul.bf16.gmra.mxu0 %v2790
      %v7045 = vpop.f32.mrf.mxu0
      %v7046 = vadd.f32 0.0, %v7045
      %v7047 = vpop.f32.mrf.mxu0
      %v7048 = vadd.f32 0.0, %v7047
      %7049 = vmatmul.bf16.gmra.mxu0 %v2793
      %v7050 = vpop.f32.mrf.mxu0
      %v7051 = vadd.f32 0.0, %v7050
      %v7052 = vpop.f32.mrf.mxu0
      %v7053 = vadd.f32 0.0, %v7052
      %7054 = vmatmul.bf16.gmra.mxu0 %v2796
      %v7055 = vpop.f32.mrf.mxu0
      %v7056 = vadd.f32 0.0, %v7055
      %v7057 = vpop.f32.mrf.mxu0
      %v7058 = vadd.f32 0.0, %v7057
      %7059 = vmatmul.bf16.gmra.mxu0 %v2799
      %v7060 = vpop.f32.mrf.mxu0
      %v7061 = vadd.f32 0.0, %v7060
      %v7062 = vpop.f32.mrf.mxu0
      %v7063 = vadd.f32 0.0, %v7062
      %7064 = vmatmul.bf16.gmra.mxu0 %v2802
      %v7065 = vpop.f32.mrf.mxu0
      %v7066 = vadd.f32 0.0, %v7065
      %v7067 = vpop.f32.mrf.mxu0
      %v7068 = vadd.f32 0.0, %v7067
      %7069 = vmatmul.bf16.gmra.mxu0 %v2805
      %v7070 = vpop.f32.mrf.mxu0
      %v7071 = vadd.f32 0.0, %v7070
      %v7072 = vpop.f32.mrf.mxu0
      %v7073 = vadd.f32 0.0, %v7072
      %7074 = vmatmul.bf16.gmra.mxu0 %v2808
      %v7075 = vpop.f32.mrf.mxu0
      %v7076 = vadd.f32 0.0, %v7075
      %v7077 = vpop.f32.mrf.mxu0
      %v7078 = vadd.f32 0.0, %v7077
      %7079 = vmatmul.bf16.gmra.mxu0 %v2811
      %v7080 = vpop.f32.mrf.mxu0
      %v7081 = vadd.f32 0.0, %v7080
      %v7082 = vpop.f32.mrf.mxu0
      %v7083 = vadd.f32 0.0, %v7082
      %7084 = vmatmul.bf16.gmra.mxu0 %v2814
      %v7085 = vpop.f32.mrf.mxu0
      %v7086 = vadd.f32 0.0, %v7085
      %v7087 = vpop.f32.mrf.mxu0
      %v7088 = vadd.f32 0.0, %v7087
      %7089 = vmatmul.bf16.gmra.mxu0 %v2817
      %v7090 = vpop.f32.mrf.mxu0
      %v7091 = vadd.f32 0.0, %v7090
      %v7092 = vpop.f32.mrf.mxu0
      %v7093 = vadd.f32 0.0, %v7092
      %7094 = vmatmul.bf16.gmra.mxu0 %v2820
      %v7095 = vpop.f32.mrf.mxu0
      %v7096 = vadd.f32 0.0, %v7095
      %v7097 = vpop.f32.mrf.mxu0
      %v7098 = vadd.f32 0.0, %v7097
      %7099 = vmatmul.bf16.gmra.mxu0 %v2823
      %v7100 = vpop.f32.mrf.mxu0
      %v7101 = vadd.f32 0.0, %v7100
      %v7102 = vpop.f32.mrf.mxu0
      %v7103 = vadd.f32 0.0, %v7102
      %7104 = vmatmul.bf16.gmra.mxu0 %v2826
      %v7105 = vpop.f32.mrf.mxu0
      %v7106 = vadd.f32 0.0, %v7105
      %v7107 = vpop.f32.mrf.mxu0
      %v7108 = vadd.f32 0.0, %v7107
      %7109 = vmatmul.bf16.gmra.mxu0 %v2829
      %v7110 = vpop.f32.mrf.mxu0
      %v7111 = vadd.f32 0.0, %v7110
      %v7112 = vpop.f32.mrf.mxu0
      %v7113 = vadd.f32 0.0, %v7112
      %7114 = vmatmul.bf16.gmra.mxu0 %v2832
      %v7115 = vpop.f32.mrf.mxu0
      %v7116 = vadd.f32 0.0, %v7115
      %v7117 = vpop.f32.mrf.mxu0
      %v7118 = vadd.f32 0.0, %v7117
      %7119 = vmatmul.bf16.gmra.mxu0 %v2835
      %v7120 = vpop.f32.mrf.mxu0
      %v7121 = vadd.f32 0.0, %v7120
      %v7122 = vpop.f32.mrf.mxu0
      %v7123 = vadd.f32 0.0, %v7122
      %7124 = vmatmul.bf16.gmra.mxu0 %v2838
      %v7125 = vpop.f32.mrf.mxu0
      %v7126 = vadd.f32 0.0, %v7125
      %v7127 = vpop.f32.mrf.mxu0
      %v7128 = vadd.f32 0.0, %v7127
      %7129 = vmatmul.bf16.gmra.mxu0 %v2841
      %v7130 = vpop.f32.mrf.mxu0
      %v7131 = vadd.f32 0.0, %v7130
      %v7132 = vpop.f32.mrf.mxu0
      %v7133 = vadd.f32 0.0, %v7132
      %7134 = vmatmul.bf16.gmra.mxu0 %v2844
      %v7135 = vpop.f32.mrf.mxu0
      %v7136 = vadd.f32 0.0, %v7135
      %v7137 = vpop.f32.mrf.mxu0
      %v7138 = vadd.f32 0.0, %v7137
      %7139 = vmatmul.bf16.gmra.mxu0 %v2847
      %v7140 = vpop.f32.mrf.mxu0
      %v7141 = vadd.f32 0.0, %v7140
      %v7142 = vpop.f32.mrf.mxu0
      %v7143 = vadd.f32 0.0, %v7142
      %7144 = vmatmul.bf16.gmra.mxu0 %v2850
      %v7145 = vpop.f32.mrf.mxu0
      %v7146 = vadd.f32 0.0, %v7145
      %v7147 = vpop.f32.mrf.mxu0
      %v7148 = vadd.f32 0.0, %v7147
      %7149 = vmatmul.bf16.gmra.mxu0 %v2853
      %v7150 = vpop.f32.mrf.mxu0
      %v7151 = vadd.f32 0.0, %v7150
      %v7152 = vpop.f32.mrf.mxu0
      %v7153 = vadd.f32 0.0, %v7152
      %7154 = vmatmul.bf16.gmra.mxu0 %v2856
      %v7155 = vpop.f32.mrf.mxu0
      %v7156 = vadd.f32 0.0, %v7155
      %v7157 = vpop.f32.mrf.mxu0
      %v7158 = vadd.f32 0.0, %v7157
      %7159 = vmatmul.bf16.gmra.mxu0 %v2859
      %v7160 = vpop.f32.mrf.mxu0
      %v7161 = vadd.f32 0.0, %v7160
      %v7162 = vpop.f32.mrf.mxu0
      %v7163 = vadd.f32 0.0, %v7162
      %7164 = vmatmul.bf16.gmra.mxu0 %v4502
      %v7165 = vpop.f32.mrf.mxu0
      %v7166 = vadd.f32 0.0, %v7165
      %v7167 = vpop.f32.mrf.mxu0
      %v7168 = vadd.f32 0.0, %v7167
      %7169 = vmatmul.bf16.gmra.mxu0 %v4505
      %v7170 = vpop.f32.mrf.mxu0
      %v7171 = vadd.f32 0.0, %v7170
      %v7172 = vpop.f32.mrf.mxu0
      %v7173 = vadd.f32 0.0, %v7172
      %7174 = vmatmul.bf16.gmra.mxu0 %v4508
      %v7175 = vpop.f32.mrf.mxu0
      %v7176 = vadd.f32 0.0, %v7175
      %v7177 = vpop.f32.mrf.mxu0
      %v7178 = vadd.f32 0.0, %v7177
      %7179 = vmatmul.bf16.gmra.mxu0 %v4511
      %v7180 = vpop.f32.mrf.mxu0
      %v7181 = vadd.f32 0.0, %v7180
      %v7182 = vpop.f32.mrf.mxu0
      %v7183 = vadd.f32 0.0, %v7182
      %7184 = vmatmul.bf16.gmra.mxu0 %v6868
      %v7185 = vpop.f32.mrf.mxu0
      %v7186 = vadd.f32 0.0, %v7185
      %v7187 = vpop.f32.mrf.mxu0
      %v7188 = vadd.f32 0.0, %v7187
      %7189 = vmatmul.bf16.gmra.mxu0 %v6871
      %v7190 = vpop.f32.mrf.mxu0
      %v7191 = vadd.f32 0.0, %v7190
      %v7192 = vpop.f32.mrf.mxu0
      %v7193 = vadd.f32 0.0, %v7192
      %7194 = vmatmul.bf16.gmra.mxu0 %v6874
      %v7195 = vpop.f32.mrf.mxu0
      %v7196 = vadd.f32 0.0, %v7195
      %v7197 = vpop.f32.mrf.mxu0
      %v7198 = vadd.f32 0.0, %v7197
      %7199 = vmatmul.bf16.gmra.mxu0 %v6877
      %v7200 = vpop.f32.mrf.mxu0
      %v7201 = vadd.f32 0.0, %v7200
      %v7202 = vpop.f32.mrf.mxu0
      %v7203 = vadd.f32 0.0, %v7202
      %7204 = vdwg.mxu0
      %7205 = vmatpush.bf16.msra.mxu0 %v7003
      %7206 = vmatpush.bf16.msra.mxu0 %v7002
      %7207 = vmatpush.bf16.msra.mxu0 %v7001
      %7208 = vmatpush.bf16.msra.mxu0 %v7000
      %7209 = vmatpush.bf16.msra.mxu0 %v6999
      %7210 = vmatpush.bf16.msra.mxu0 %v6998
      %7211 = vmatpush.bf16.msra.mxu0 %v6997
      %7212 = vmatpush.bf16.msra.mxu0 %v6996
      %7213 = vmatmul.bf16.gmra.mxu0 %v2791
      %v7214 = vpop.f32.mrf.mxu0
      %v7215 = vadd.f32 %v7046, %v7214
      %v7216 = vpop.f32.mrf.mxu0
      %v7217 = vadd.f32 %v7048, %v7216
      %7218 = vmatmul.bf16.gmra.mxu0 %v2794
      %v7219 = vpop.f32.mrf.mxu0
      %v7220 = vadd.f32 %v7051, %v7219
      %v7221 = vpop.f32.mrf.mxu0
      %v7222 = vadd.f32 %v7053, %v7221
      %7223 = vmatmul.bf16.gmra.mxu0 %v2797
      %v7224 = vpop.f32.mrf.mxu0
      %v7225 = vadd.f32 %v7056, %v7224
      %v7226 = vpop.f32.mrf.mxu0
      %v7227 = vadd.f32 %v7058, %v7226
      %7228 = vmatmul.bf16.gmra.mxu0 %v2800
      %v7229 = vpop.f32.mrf.mxu0
      %v7230 = vadd.f32 %v7061, %v7229
      %v7231 = vpop.f32.mrf.mxu0
      %v7232 = vadd.f32 %v7063, %v7231
      %7233 = vmatmul.bf16.gmra.mxu0 %v2803
      %v7234 = vpop.f32.mrf.mxu0
      %v7235 = vadd.f32 %v7066, %v7234
      %v7236 = vpop.f32.mrf.mxu0
      %v7237 = vadd.f32 %v7068, %v7236
      %7238 = vmatmul.bf16.gmra.mxu0 %v2806
      %v7239 = vpop.f32.mrf.mxu0
      %v7240 = vadd.f32 %v7071, %v7239
      %v7241 = vpop.f32.mrf.mxu0
      %v7242 = vadd.f32 %v7073, %v7241
      %7243 = vmatmul.bf16.gmra.mxu0 %v2809
      %v7244 = vpop.f32.mrf.mxu0
      %v7245 = vadd.f32 %v7076, %v7244
      %v7246 = vpop.f32.mrf.mxu0
      %v7247 = vadd.f32 %v7078, %v7246
      %7248 = vmatmul.bf16.gmra.mxu0 %v2812
      %v7249 = vpop.f32.mrf.mxu0
      %v7250 = vadd.f32 %v7081, %v7249
      %v7251 = vpop.f32.mrf.mxu0
      %v7252 = vadd.f32 %v7083, %v7251
      %7253 = vmatmul.bf16.gmra.mxu0 %v2815
      %v7254 = vpop.f32.mrf.mxu0
      %v7255 = vadd.f32 %v7086, %v7254
      %v7256 = vpop.f32.mrf.mxu0
      %v7257 = vadd.f32 %v7088, %v7256
      %7258 = vmatmul.bf16.gmra.mxu0 %v2818
      %v7259 = vpop.f32.mrf.mxu0
      %v7260 = vadd.f32 %v7091, %v7259
      %v7261 = vpop.f32.mrf.mxu0
      %v7262 = vadd.f32 %v7093, %v7261
      %7263 = vmatmul.bf16.gmra.mxu0 %v2821
      %v7264 = vpop.f32.mrf.mxu0
      %v7265 = vadd.f32 %v7096, %v7264
      %v7266 = vpop.f32.mrf.mxu0
      %v7267 = vadd.f32 %v7098, %v7266
      %7268 = vmatmul.bf16.gmra.mxu0 %v2824
      %v7269 = vpop.f32.mrf.mxu0
      %v7270 = vadd.f32 %v7101, %v7269
      %v7271 = vpop.f32.mrf.mxu0
      %v7272 = vadd.f32 %v7103, %v7271
      %7273 = vmatmul.bf16.gmra.mxu0 %v2827
      %v7274 = vpop.f32.mrf.mxu0
      %v7275 = vadd.f32 %v7106, %v7274
      %v7276 = vpop.f32.mrf.mxu0
      %v7277 = vadd.f32 %v7108, %v7276
      %7278 = vmatmul.bf16.gmra.mxu0 %v2830
      %v7279 = vpop.f32.mrf.mxu0
      %v7280 = vadd.f32 %v7111, %v7279
      %v7281 = vpop.f32.mrf.mxu0
      %v7282 = vadd.f32 %v7113, %v7281
      %7283 = vmatmul.bf16.gmra.mxu0 %v2833
      %v7284 = vpop.f32.mrf.mxu0
      %v7285 = vadd.f32 %v7116, %v7284
      %v7286 = vpop.f32.mrf.mxu0
      %v7287 = vadd.f32 %v7118, %v7286
      %7288 = vmatmul.bf16.gmra.mxu0 %v2836
      %v7289 = vpop.f32.mrf.mxu0
      %v7290 = vadd.f32 %v7121, %v7289
      %v7291 = vpop.f32.mrf.mxu0
      %v7292 = vadd.f32 %v7123, %v7291
      %7293 = vmatmul.bf16.gmra.mxu0 %v2839
      %v7294 = vpop.f32.mrf.mxu0
      %v7295 = vadd.f32 %v7126, %v7294
      %v7296 = vpop.f32.mrf.mxu0
      %v7297 = vadd.f32 %v7128, %v7296
      %7298 = vmatmul.bf16.gmra.mxu0 %v2842
      %v7299 = vpop.f32.mrf.mxu0
      %v7300 = vadd.f32 %v7131, %v7299
      %v7301 = vpop.f32.mrf.mxu0
      %v7302 = vadd.f32 %v7133, %v7301
      %7303 = vmatmul.bf16.gmra.mxu0 %v2845
      %v7304 = vpop.f32.mrf.mxu0
      %v7305 = vadd.f32 %v7136, %v7304
      %v7306 = vpop.f32.mrf.mxu0
      %v7307 = vadd.f32 %v7138, %v7306
      %7308 = vmatmul.bf16.gmra.mxu0 %v2848
      %v7309 = vpop.f32.mrf.mxu0
      %v7310 = vadd.f32 %v7141, %v7309
      %v7311 = vpop.f32.mrf.mxu0
      %v7312 = vadd.f32 %v7143, %v7311
      %7313 = vmatmul.bf16.gmra.mxu0 %v2851
      %v7314 = vpop.f32.mrf.mxu0
      %v7315 = vadd.f32 %v7146, %v7314
      %v7316 = vpop.f32.mrf.mxu0
      %v7317 = vadd.f32 %v7148, %v7316
      %7318 = vmatmul.bf16.gmra.mxu0 %v2854
      %v7319 = vpop.f32.mrf.mxu0
      %v7320 = vadd.f32 %v7151, %v7319
      %v7321 = vpop.f32.mrf.mxu0
      %v7322 = vadd.f32 %v7153, %v7321
      %7323 = vmatmul.bf16.gmra.mxu0 %v2857
      %v7324 = vpop.f32.mrf.mxu0
      %v7325 = vadd.f32 %v7156, %v7324
      %v7326 = vpop.f32.mrf.mxu0
      %v7327 = vadd.f32 %v7158, %v7326
      %7328 = vmatmul.bf16.gmra.mxu0 %v2860
      %v7329 = vpop.f32.mrf.mxu0
      %v7330 = vadd.f32 %v7161, %v7329
      %v7331 = vpop.f32.mrf.mxu0
      %v7332 = vadd.f32 %v7163, %v7331
      %7333 = vmatmul.bf16.gmra.mxu0 %v4503
      %v7334 = vpop.f32.mrf.mxu0
      %v7335 = vadd.f32 %v7166, %v7334
      %v7336 = vpop.f32.mrf.mxu0
      %v7337 = vadd.f32 %v7168, %v7336
      %7338 = vmatmul.bf16.gmra.mxu0 %v4506
      %v7339 = vpop.f32.mrf.mxu0
      %v7340 = vadd.f32 %v7171, %v7339
      %v7341 = vpop.f32.mrf.mxu0
      %v7342 = vadd.f32 %v7173, %v7341
      %7343 = vmatmul.bf16.gmra.mxu0 %v4509
      %v7344 = vpop.f32.mrf.mxu0
      %v7345 = vadd.f32 %v7176, %v7344
      %v7346 = vpop.f32.mrf.mxu0
      %v7347 = vadd.f32 %v7178, %v7346
      %7348 = vmatmul.bf16.gmra.mxu0 %v4512
      %v7349 = vpop.f32.mrf.mxu0
      %v7350 = vadd.f32 %v7181, %v7349
      %v7351 = vpop.f32.mrf.mxu0
      %v7352 = vadd.f32 %v7183, %v7351
      %7353 = vmatmul.bf16.gmra.mxu0 %v6869
      %v7354 = vpop.f32.mrf.mxu0
      %v7355 = vadd.f32 %v7186, %v7354
      %v7356 = vpop.f32.mrf.mxu0
      %v7357 = vadd.f32 %v7188, %v7356
      %7358 = vmatmul.bf16.gmra.mxu0 %v6872
      %v7359 = vpop.f32.mrf.mxu0
      %v7360 = vadd.f32 %v7191, %v7359
      %v7361 = vpop.f32.mrf.mxu0
      %v7362 = vadd.f32 %v7193, %v7361
      %7363 = vmatmul.bf16.gmra.mxu0 %v6875
      %v7364 = vpop.f32.mrf.mxu0
      %v7365 = vadd.f32 %v7196, %v7364
      %v7366 = vpop.f32.mrf.mxu0
      %v7367 = vadd.f32 %v7198, %v7366
      %7368 = vmatmul.bf16.gmra.mxu0 %v6878
      %v7369 = vpop.f32.mrf.mxu0
      %v7370 = vadd.f32 %v7201, %v7369
      %v7371 = vpop.f32.mrf.mxu0
      %v7372 = vadd.f32 %v7203, %v7371
      %7373 = vdwg.mxu0
      %7374 = vmatpush.bf16.msra.mxu0 %v7011
      %7375 = vmatpush.bf16.msra.mxu0 %v7010
      %7376 = vmatpush.bf16.msra.mxu0 %v7009
      %7377 = vmatpush.bf16.msra.mxu0 %v7008
      %7378 = vmatpush.bf16.msra.mxu0 %v7007
      %7379 = vmatpush.bf16.msra.mxu0 %v7006
      %7380 = vmatpush.bf16.msra.mxu0 %v7005
      %7381 = vmatpush.bf16.msra.mxu0 %v7004
      %7382 = vmatmul.bf16.gmra.mxu0 %v2792
      %v7383 = vpop.f32.mrf.mxu0
      %v7384 = vadd.f32 %v7215, %v7383
      %v7385 = vpop.f32.mrf.mxu0
      %v7386 = vadd.f32 %v7217, %v7385
      %7387 = vmatmul.bf16.gmra.mxu0 %v2795
      %v7388 = vpop.f32.mrf.mxu0
      %v7389 = vadd.f32 %v7220, %v7388
      %v7390 = vpop.f32.mrf.mxu0
      %v7391 = vadd.f32 %v7222, %v7390
      %7392 = vmatmul.bf16.gmra.mxu0 %v2798
      %v7393 = vpop.f32.mrf.mxu0
      %v7394 = vadd.f32 %v7225, %v7393
      %v7395 = vpop.f32.mrf.mxu0
      %v7396 = vadd.f32 %v7227, %v7395
      %7397 = vmatmul.bf16.gmra.mxu0 %v2801
      %v7398 = vpop.f32.mrf.mxu0
      %v7399 = vadd.f32 %v7230, %v7398
      %v7400 = vpop.f32.mrf.mxu0
      %v7401 = vadd.f32 %v7232, %v7400
      %7402 = vmatmul.bf16.gmra.mxu0 %v2804
      %v7403 = vpop.f32.mrf.mxu0
      %v7404 = vadd.f32 %v7235, %v7403
      %v7405 = vpop.f32.mrf.mxu0
      %v7406 = vadd.f32 %v7237, %v7405
      %7407 = vmatmul.bf16.gmra.mxu0 %v2807
      %v7408 = vpop.f32.mrf.mxu0
      %v7409 = vadd.f32 %v7240, %v7408
      %v7410 = vpop.f32.mrf.mxu0
      %v7411 = vadd.f32 %v7242, %v7410
      %7412 = vmatmul.bf16.gmra.mxu0 %v2810
      %v7413 = vpop.f32.mrf.mxu0
      %v7414 = vadd.f32 %v7245, %v7413
      %v7415 = vpop.f32.mrf.mxu0
      %v7416 = vadd.f32 %v7247, %v7415
      %7417 = vmatmul.bf16.gmra.mxu0 %v2813
      %v7418 = vpop.f32.mrf.mxu0
      %v7419 = vadd.f32 %v7250, %v7418
      %v7420 = vpop.f32.mrf.mxu0
      %v7421 = vadd.f32 %v7252, %v7420
      %7422 = vmatmul.bf16.gmra.mxu0 %v2816
      %v7423 = vpop.f32.mrf.mxu0
      %v7424 = vadd.f32 %v7255, %v7423
      %v7425 = vpop.f32.mrf.mxu0
      %v7426 = vadd.f32 %v7257, %v7425
      %7427 = vmatmul.bf16.gmra.mxu0 %v2819
      %v7428 = vpop.f32.mrf.mxu0
      %v7429 = vadd.f32 %v7260, %v7428
      %v7430 = vpop.f32.mrf.mxu0
      %v7431 = vadd.f32 %v7262, %v7430
      %7432 = vmatmul.bf16.gmra.mxu0 %v2822
      %v7433 = vpop.f32.mrf.mxu0
      %v7434 = vadd.f32 %v7265, %v7433
      %v7435 = vpop.f32.mrf.mxu0
      %v7436 = vadd.f32 %v7267, %v7435
      %7437 = vmatmul.bf16.gmra.mxu0 %v2825
      %v7438 = vpop.f32.mrf.mxu0
      %v7439 = vadd.f32 %v7270, %v7438
      %v7440 = vpop.f32.mrf.mxu0
      %v7441 = vadd.f32 %v7272, %v7440
      %7442 = vmatmul.bf16.gmra.mxu0 %v2828
      %v7443 = vpop.f32.mrf.mxu0
      %v7444 = vadd.f32 %v7275, %v7443
      %v7445 = vpop.f32.mrf.mxu0
      %v7446 = vadd.f32 %v7277, %v7445
      %7447 = vmatmul.bf16.gmra.mxu0 %v2831
      %v7448 = vpop.f32.mrf.mxu0
      %v7449 = vadd.f32 %v7280, %v7448
      %v7450 = vpop.f32.mrf.mxu0
      %v7451 = vadd.f32 %v7282, %v7450
      %7452 = vmatmul.bf16.gmra.mxu0 %v2834
      %v7453 = vpop.f32.mrf.mxu0
      %v7454 = vadd.f32 %v7285, %v7453
      %v7455 = vpop.f32.mrf.mxu0
      %v7456 = vadd.f32 %v7287, %v7455
      %7457 = vmatmul.bf16.gmra.mxu0 %v2837
      %v7458 = vpop.f32.mrf.mxu0
      %v7459 = vadd.f32 %v7290, %v7458
      %v7460 = vpop.f32.mrf.mxu0
      %v7461 = vadd.f32 %v7292, %v7460
      %7462 = vmatmul.bf16.gmra.mxu0 %v2840
      %v7463 = vpop.f32.mrf.mxu0
      %v7464 = vadd.f32 %v7295, %v7463
      %v7465 = vpop.f32.mrf.mxu0
      %v7466 = vadd.f32 %v7297, %v7465
      %7467 = vmatmul.bf16.gmra.mxu0 %v2843
      %v7468 = vpop.f32.mrf.mxu0
      %v7469 = vadd.f32 %v7300, %v7468
      %v7470 = vpop.f32.mrf.mxu0
      %v7471 = vadd.f32 %v7302, %v7470
      %7472 = vmatmul.bf16.gmra.mxu0 %v2846
      %v7473 = vpop.f32.mrf.mxu0
      %v7474 = vadd.f32 %v7305, %v7473
      %v7475 = vpop.f32.mrf.mxu0
      %v7476 = vadd.f32 %v7307, %v7475
      %7477 = vmatmul.bf16.gmra.mxu0 %v2849
      %v7478 = vpop.f32.mrf.mxu0
      %v7479 = vadd.f32 %v7310, %v7478
      %v7480 = vpop.f32.mrf.mxu0
      %v7481 = vadd.f32 %v7312, %v7480
      %7482 = vmatmul.bf16.gmra.mxu0 %v2852
      %v7483 = vpop.f32.mrf.mxu0
      %v7484 = vadd.f32 %v7315, %v7483
      %v7485 = vpop.f32.mrf.mxu0
      %v7486 = vadd.f32 %v7317, %v7485
      %7487 = vmatmul.bf16.gmra.mxu0 %v2855
      %v7488 = vpop.f32.mrf.mxu0
      %v7489 = vadd.f32 %v7320, %v7488
      %v7490 = vpop.f32.mrf.mxu0
      %v7491 = vadd.f32 %v7322, %v7490
      %7492 = vmatmul.bf16.gmra.mxu0 %v2858
      %v7493 = vpop.f32.mrf.mxu0
      %v7494 = vadd.f32 %v7325, %v7493
      %v7495 = vpop.f32.mrf.mxu0
      %v7496 = vadd.f32 %v7327, %v7495
      %7497 = vmatmul.bf16.gmra.mxu0 %v2861
      %v7498 = vpop.f32.mrf.mxu0
      %v7499 = vadd.f32 %v7330, %v7498
      %v7500 = vpop.f32.mrf.mxu0
      %v7501 = vadd.f32 %v7332, %v7500
      %7502 = vmatmul.bf16.gmra.mxu0 %v4504
      %v7503 = vpop.f32.mrf.mxu0
      %v7504 = vadd.f32 %v7335, %v7503
      %v7505 = vpop.f32.mrf.mxu0
      %v7506 = vadd.f32 %v7337, %v7505
      %7507 = vmatmul.bf16.gmra.mxu0 %v4507
      %v7508 = vpop.f32.mrf.mxu0
      %v7509 = vadd.f32 %v7340, %v7508
      %v7510 = vpop.f32.mrf.mxu0
      %v7511 = vadd.f32 %v7342, %v7510
      %7512 = vmatmul.bf16.gmra.mxu0 %v4510
      %v7513 = vpop.f32.mrf.mxu0
      %v7514 = vadd.f32 %v7345, %v7513
      %v7515 = vpop.f32.mrf.mxu0
      %v7516 = vadd.f32 %v7347, %v7515
      %7517 = vmatmul.bf16.gmra.mxu0 %v4513
      %v7518 = vpop.f32.mrf.mxu0
      %v7519 = vadd.f32 %v7350, %v7518
      %v7520 = vpop.f32.mrf.mxu0
      %v7521 = vadd.f32 %v7352, %v7520
      %7522 = vmatmul.bf16.gmra.mxu0 %v6870
      %v7523 = vpop.f32.mrf.mxu0
      %v7524 = vadd.f32 %v7355, %v7523
      %v7525 = vpop.f32.mrf.mxu0
      %v7526 = vadd.f32 %v7357, %v7525
      %7527 = vmatmul.bf16.gmra.mxu0 %v6873
      %v7528 = vpop.f32.mrf.mxu0
      %v7529 = vadd.f32 %v7360, %v7528
      %v7530 = vpop.f32.mrf.mxu0
      %v7531 = vadd.f32 %v7362, %v7530
      %7532 = vmatmul.bf16.gmra.mxu0 %v6876
      %v7533 = vpop.f32.mrf.mxu0
      %v7534 = vadd.f32 %v7365, %v7533
      %v7535 = vpop.f32.mrf.mxu0
      %v7536 = vadd.f32 %v7367, %v7535
      %7537 = vmatmul.bf16.gmra.mxu0 %v6879
      %v7538 = vpop.f32.mrf.mxu0
      %v7539 = vadd.f32 %v7370, %v7538
      %v7540 = vpop.f32.mrf.mxu0
      %v7541 = vadd.f32 %v7372, %v7540
      %7542 = vdwg.mxu0
      %v7543 = vadd.f32 %v6739, %v7384
      %v7544 = vadd.f32 %v6740, %v7386
      %v7545 = vadd.f32 %v6741, %v7389
      %v7546 = vadd.f32 %v6742, %v7391
      %v7547 = vadd.f32 %v6743, %v7394
      %v7548 = vadd.f32 %v6744, %v7396
      %v7549 = vadd.f32 %v6745, %v7399
      %v7550 = vadd.f32 %v6746, %v7401
      %v7551 = vadd.f32 %v6747, %v7404
      %v7552 = vadd.f32 %v6748, %v7406
      %v7553 = vadd.f32 %v6749, %v7409
      %v7554 = vadd.f32 %v6750, %v7411
      %v7555 = vadd.f32 %v6751, %v7414
      %v7556 = vadd.f32 %v6752, %v7416
      %v7557 = vadd.f32 %v6753, %v7419
      %v7558 = vadd.f32 %v6754, %v7421
      %v7559 = vadd.f32 %v6755, %v7424
      %v7560 = vadd.f32 %v6756, %v7426
      %v7561 = vadd.f32 %v6757, %v7429
      %v7562 = vadd.f32 %v6758, %v7431
      %v7563 = vadd.f32 %v6759, %v7434
      %v7564 = vadd.f32 %v6760, %v7436
      %v7565 = vadd.f32 %v6761, %v7439
      %v7566 = vadd.f32 %v6762, %v7441
      %v7567 = vadd.f32 %v6763, %v7444
      %v7568 = vadd.f32 %v6764, %v7446
      %v7569 = vadd.f32 %v6765, %v7449
      %v7570 = vadd.f32 %v6766, %v7451
      %v7571 = vadd.f32 %v6767, %v7454
      %v7572 = vadd.f32 %v6768, %v7456
      %v7573 = vadd.f32 %v6769, %v7459
      %v7574 = vadd.f32 %v6770, %v7461
      %v7575 = vadd.f32 %v6771, %v7464
      %v7576 = vadd.f32 %v6772, %v7466
      %v7577 = vadd.f32 %v6773, %v7469
      %v7578 = vadd.f32 %v6774, %v7471
      %v7579 = vadd.f32 %v6775, %v7474
      %v7580 = vadd.f32 %v6776, %v7476
      %v7581 = vadd.f32 %v6777, %v7479
      %v7582 = vadd.f32 %v6778, %v7481
      %v7583 = vadd.f32 %v6779, %v7484
      %v7584 = vadd.f32 %v6780, %v7486
      %v7585 = vadd.f32 %v6781, %v7489
      %v7586 = vadd.f32 %v6782, %v7491
      %v7587 = vadd.f32 %v6783, %v7494
      %v7588 = vadd.f32 %v6784, %v7496
      %v7589 = vadd.f32 %v6785, %v7499
      %v7590 = vadd.f32 %v6786, %v7501
      %v7591 = vadd.f32 %v6787, %v7504
      %v7592 = vadd.f32 %v6788, %v7506
      %v7593 = vadd.f32 %v6789, %v7509
      %v7594 = vadd.f32 %v6790, %v7511
      %v7595 = vadd.f32 %v6791, %v7514
      %v7596 = vadd.f32 %v6792, %v7516
      %v7597 = vadd.f32 %v6793, %v7519
      %v7598 = vadd.f32 %v6794, %v7521
      %v7599 = vadd.f32 %v6795, %v7524
      %v7600 = vadd.f32 %v6796, %v7526
      %v7601 = vadd.f32 %v6797, %v7529
      %v7602 = vadd.f32 %v6798, %v7531
      %v7603 = vadd.f32 %v6799, %v7534
      %v7604 = vadd.f32 %v6800, %v7536
      %v7605 = vadd.f32 %v6801, %v7539
      %v7606 = vadd.f32 %v6802, %v7541
      %v7607 = vunpack.c.l.b16 %v1574
      %v7608 = vunpack.c.l.b16 %v1680
      %s7609 = scalar_lea.vmem %s1, 1344
      %v7610 = vld [vmem:[%s7609] sm:$0xf]
      %v7611 = vld [vmem:[%s7609 + $0x4] sm:$0xf]
      %v7612 = vld [vmem:[%s7609 + $0x8] sm:$0xf]
      %v7613 = vld [vmem:[%s7609 + $0xc] sm:$0xf]
      %v7614 = vld [vmem:[%s7609 + $0x10] sm:$0xf]
      %v7615 = vld [vmem:[%s7609 + $0x14] sm:$0xf]
      %v7616 = vld [vmem:[%s7609 + $0x18] sm:$0xf]
      %v7617 = vld [vmem:[%s7609 + $0x1c] sm:$0xf]
      %v7618 = vld [vmem:[%s7609 + $0x20] sm:$0xf]
      %v7619 = vld [vmem:[%s7609 + $0x24] sm:$0xf]
      %v7620 = vld [vmem:[%s7609 + $0x28] sm:$0xf]
      %v7621 = vld [vmem:[%s7609 + $0x2c] sm:$0xf]
      %v7622 = vld [vmem:[%s7609 + $0x30] sm:$0xf]
      %v7623 = vld [vmem:[%s7609 + $0x34] sm:$0xf]
      %v7624 = vld [vmem:[%s7609 + $0x38] sm:$0xf]
      %v7625 = vld [vmem:[%s7609 + $0x3c] sm:$0xf]
      %v7626 = vld [vmem:[%s7609 + $0x40] sm:$0xf]
      %v7627 = vld [vmem:[%s7609 + $0x44] sm:$0xf]
      %v7628 = vld [vmem:[%s7609 + $0x48] sm:$0xf]
      %v7629 = vld [vmem:[%s7609 + $0x4c] sm:$0xf]
      %v7630 = vld [vmem:[%s7609 + $0x50] sm:$0xf]
      %v7631 = vld [vmem:[%s7609 + $0x54] sm:$0xf]
      %v7632 = vld [vmem:[%s7609 + $0x58] sm:$0xf]
      %v7633 = vld [vmem:[%s7609 + $0x5c] sm:$0xf]
      %v7634 = vld [vmem:[%s7609 + $0x60] sm:$0xf]
      %v7635 = vld [vmem:[%s7609 + $0x64] sm:$0xf]
      %v7636 = vld [vmem:[%s7609 + $0x68] sm:$0xf]
      %v7637 = vld [vmem:[%s7609 + $0x6c] sm:$0xf]
      %v7638 = vld [vmem:[%s7609 + $0x70] sm:$0xf]
      %v7639 = vld [vmem:[%s7609 + $0x74] sm:$0xf]
      %v7640 = vld [vmem:[%s7609 + $0x78] sm:$0xf]
      %v7641 = vld [vmem:[%s7609 + $0x7c] sm:$0xf]
      %v7642 = vld [vmem:[%s7609 + $0x80] sm:$0xf]
      %v7643 = vld [vmem:[%s7609 + $0x84] sm:$0xf]
      %v7644 = vld [vmem:[%s7609 + $0x88] sm:$0xf]
      %v7645 = vld [vmem:[%s7609 + $0x8c] sm:$0xf]
      %v7646 = vld [vmem:[%s7609 + $0x90] sm:$0xf]
      %v7647 = vld [vmem:[%s7609 + $0x94] sm:$0xf]
      %v7648 = vld [vmem:[%s7609 + $0x98] sm:$0xf]
      %v7649 = vld [vmem:[%s7609 + $0x9c] sm:$0xf]
      %v7650 = vld [vmem:[%s7609 + $0xa0] sm:$0xf]
      %v7651 = vld [vmem:[%s7609 + $0xa4] sm:$0xf]
      %v7652 = vld [vmem:[%s7609 + $0xa8] sm:$0xf]
      %v7653 = vld [vmem:[%s7609 + $0xac] sm:$0xf]
      %v7654 = vld [vmem:[%s7609 + $0xb0] sm:$0xf]
      %v7655 = vld [vmem:[%s7609 + $0xb4] sm:$0xf]
      %v7656 = vld [vmem:[%s7609 + $0xb8] sm:$0xf]
      %v7657 = vld [vmem:[%s7609 + $0xbc] sm:$0xf]
      %v7658 = vpack.c.b16 %v766, %v764
      %v7659 = vpack.c.b16 %v6807, %v6805
      %v7660 = vpack.c.b16 %v6808, %v6806
      %v7661 = vpack.c.b16 %v770, %v768
      %v7662 = vpack.c.b16 %v6811, %v6809
      %v7663 = vpack.c.b16 %v6812, %v6810
      %v7664 = vpack.c.b16 %v774, %v772
      %v7665 = vpack.c.b16 %v6815, %v6813
      %v7666 = vpack.c.b16 %v6816, %v6814
      %v7667 = vpack.c.b16 %v778, %v776
      %v7668 = vpack.c.b16 %v7607, %v6817
      %v7669 = vpack.c.b16 %v7608, %v6818
      %v7730 = vunpack.c.l.b16 %v7610
      %v7731 = vunpack.c.l.b16 %v7611
      %v7732 = vunpack.c.l.b16 %v7612
      %v7733 = vunpack.c.l.b16 %v7613
      %v7734 = vunpack.c.l.b16 %v7614
      %v7735 = vunpack.c.l.b16 %v7615
      %v7736 = vunpack.c.l.b16 %v7616
      %v7737 = vunpack.c.l.b16 %v7617
      %v7738 = vunpack.c.l.b16 %v7618
      %v7739 = vunpack.c.l.b16 %v7619
      %v7740 = vunpack.c.l.b16 %v7620
      %v7741 = vunpack.c.l.b16 %v7621
      %v7742 = vunpack.c.l.b16 %v7622
      %v7743 = vunpack.c.l.b16 %v7623
      %v7744 = vunpack.c.l.b16 %v7624
      %v7745 = vunpack.c.l.b16 %v7625
      %v7746 = vunpack.c.l.b16 %v7626
      %v7747 = vunpack.c.l.b16 %v7627
      %v7748 = vunpack.c.l.b16 %v7628
      %v7749 = vunpack.c.l.b16 %v7629
      %v7750 = vunpack.c.l.b16 %v7630
      %v7751 = vunpack.c.l.b16 %v7631
      %v7752 = vunpack.c.l.b16 %v7632
      %v7753 = vunpack.c.l.b16 %v7633
      %v7754 = vunpack.c.l.b16 %v7634
      %v7755 = vunpack.c.l.b16 %v7635
      %v7756 = vunpack.c.l.b16 %v7636
      %v7757 = vunpack.c.l.b16 %v7637
      %v7758 = vunpack.c.l.b16 %v7638
      %v7759 = vunpack.c.l.b16 %v7639
      %v7760 = vunpack.c.l.b16 %v7640
      %v7761 = vunpack.c.l.b16 %v7641
      %v7762 = vunpack.c.l.b16 %v7642
      %v7763 = vunpack.c.l.b16 %v7643
      %v7764 = vunpack.c.l.b16 %v7644
      %v7765 = vunpack.c.l.b16 %v7645
      %v7766 = vunpack.c.l.b16 %v7646
      %v7767 = vunpack.c.l.b16 %v7647
      %v7768 = vunpack.c.l.b16 %v7648
      %v7769 = vunpack.c.l.b16 %v7649
      %v7770 = vunpack.c.l.b16 %v7650
      %v7771 = vunpack.c.l.b16 %v7651
      %v7772 = vunpack.c.l.b16 %v7652
      %v7773 = vunpack.c.l.b16 %v7653
      %v7774 = vunpack.c.l.b16 %v7654
      %v7775 = vunpack.c.l.b16 %v7655
      %v7776 = vunpack.c.l.b16 %v7656
      %v7777 = vunpack.c.l.b16 %v7657
      %v7778 = vpack.c.b16 %v7731, %v7730
      %v7779 = vpack.c.b16 %v7733, %v7732
      %v7780 = vpack.c.b16 %v7735, %v7734
      %v7781 = vpack.c.b16 %v7737, %v7736
      %v7782 = vpack.c.b16 %v7739, %v7738
      %v7783 = vpack.c.b16 %v7741, %v7740
      %v7784 = vpack.c.b16 %v7743, %v7742
      %v7785 = vpack.c.b16 %v7745, %v7744
      %v7786 = vpack.c.b16 %v7747, %v7746
      %v7787 = vpack.c.b16 %v7749, %v7748
      %v7788 = vpack.c.b16 %v7751, %v7750
      %v7789 = vpack.c.b16 %v7753, %v7752
      %v7790 = vpack.c.b16 %v7755, %v7754
      %v7791 = vpack.c.b16 %v7757, %v7756
      %v7792 = vpack.c.b16 %v7759, %v7758
      %v7793 = vpack.c.b16 %v7761, %v7760
      %v7794 = vpack.c.b16 %v7763, %v7762
      %v7795 = vpack.c.b16 %v7765, %v7764
      %v7796 = vpack.c.b16 %v7767, %v7766
      %v7797 = vpack.c.b16 %v7769, %v7768
      %v7798 = vpack.c.b16 %v7771, %v7770
      %v7799 = vpack.c.b16 %v7773, %v7772
      %v7800 = vpack.c.b16 %v7775, %v7774
      %v7801 = vpack.c.b16 %v7777, %v7776
      %7826 = vmatpush.bf16.msra.mxu0 %v7785
      %7827 = vmatpush.bf16.msra.mxu0 %v7784
      %7828 = vmatpush.bf16.msra.mxu0 %v7783
      %7829 = vmatpush.bf16.msra.mxu0 %v7782
      %7830 = vmatpush.bf16.msra.mxu0 %v7781
      %7831 = vmatpush.bf16.msra.mxu0 %v7780
      %7832 = vmatpush.bf16.msra.mxu0 %v7779
      %7833 = vmatpush.bf16.msra.mxu0 %v7778
      %7834 = vmatmul.bf16.gmra.mxu0 %v1947
      %v7835 = vpop.f32.mrf.mxu0
      %v7836 = vadd.f32 0.0, %v7835
      %v7837 = vpop.f32.mrf.mxu0
      %v7838 = vadd.f32 0.0, %v7837
      %7839 = vmatmul.bf16.gmra.mxu0 %v1950
      %v7840 = vpop.f32.mrf.mxu0
      %v7841 = vadd.f32 0.0, %v7840
      %v7842 = vpop.f32.mrf.mxu0
      %v7843 = vadd.f32 0.0, %v7842
      %7844 = vmatmul.bf16.gmra.mxu0 %v1953
      %v7845 = vpop.f32.mrf.mxu0
      %v7846 = vadd.f32 0.0, %v7845
      %v7847 = vpop.f32.mrf.mxu0
      %v7848 = vadd.f32 0.0, %v7847
      %7849 = vmatmul.bf16.gmra.mxu0 %v1956
      %v7850 = vpop.f32.mrf.mxu0
      %v7851 = vadd.f32 0.0, %v7850
      %v7852 = vpop.f32.mrf.mxu0
      %v7853 = vadd.f32 0.0, %v7852
      %7854 = vmatmul.bf16.gmra.mxu0 %v1959
      %v7855 = vpop.f32.mrf.mxu0
      %v7856 = vadd.f32 0.0, %v7855
      %v7857 = vpop.f32.mrf.mxu0
      %v7858 = vadd.f32 0.0, %v7857
      %7859 = vmatmul.bf16.gmra.mxu0 %v1962
      %v7860 = vpop.f32.mrf.mxu0
      %v7861 = vadd.f32 0.0, %v7860
      %v7862 = vpop.f32.mrf.mxu0
      %v7863 = vadd.f32 0.0, %v7862
      %7864 = vmatmul.bf16.gmra.mxu0 %v1965
      %v7865 = vpop.f32.mrf.mxu0
      %v7866 = vadd.f32 0.0, %v7865
      %v7867 = vpop.f32.mrf.mxu0
      %v7868 = vadd.f32 0.0, %v7867
      %7869 = vmatmul.bf16.gmra.mxu0 %v1968
      %v7870 = vpop.f32.mrf.mxu0
      %v7871 = vadd.f32 0.0, %v7870
      %v7872 = vpop.f32.mrf.mxu0
      %v7873 = vadd.f32 0.0, %v7872
      %7874 = vmatmul.bf16.gmra.mxu0 %v1971
      %v7875 = vpop.f32.mrf.mxu0
      %v7876 = vadd.f32 0.0, %v7875
      %v7877 = vpop.f32.mrf.mxu0
      %v7878 = vadd.f32 0.0, %v7877
      %7879 = vmatmul.bf16.gmra.mxu0 %v1974
      %v7880 = vpop.f32.mrf.mxu0
      %v7881 = vadd.f32 0.0, %v7880
      %v7882 = vpop.f32.mrf.mxu0
      %v7883 = vadd.f32 0.0, %v7882
      %7884 = vmatmul.bf16.gmra.mxu0 %v1977
      %v7885 = vpop.f32.mrf.mxu0
      %v7886 = vadd.f32 0.0, %v7885
      %v7887 = vpop.f32.mrf.mxu0
      %v7888 = vadd.f32 0.0, %v7887
      %7889 = vmatmul.bf16.gmra.mxu0 %v1980
      %v7890 = vpop.f32.mrf.mxu0
      %v7891 = vadd.f32 0.0, %v7890
      %v7892 = vpop.f32.mrf.mxu0
      %v7893 = vadd.f32 0.0, %v7892
      %7894 = vmatmul.bf16.gmra.mxu0 %v1983
      %v7895 = vpop.f32.mrf.mxu0
      %v7896 = vadd.f32 0.0, %v7895
      %v7897 = vpop.f32.mrf.mxu0
      %v7898 = vadd.f32 0.0, %v7897
      %7899 = vmatmul.bf16.gmra.mxu0 %v1986
      %v7900 = vpop.f32.mrf.mxu0
      %v7901 = vadd.f32 0.0, %v7900
      %v7902 = vpop.f32.mrf.mxu0
      %v7903 = vadd.f32 0.0, %v7902
      %7904 = vmatmul.bf16.gmra.mxu0 %v1989
      %v7905 = vpop.f32.mrf.mxu0
      %v7906 = vadd.f32 0.0, %v7905
      %v7907 = vpop.f32.mrf.mxu0
      %v7908 = vadd.f32 0.0, %v7907
      %7909 = vmatmul.bf16.gmra.mxu0 %v1992
      %v7910 = vpop.f32.mrf.mxu0
      %v7911 = vadd.f32 0.0, %v7910
      %v7912 = vpop.f32.mrf.mxu0
      %v7913 = vadd.f32 0.0, %v7912
      %7914 = vmatmul.bf16.gmra.mxu0 %v1995
      %v7915 = vpop.f32.mrf.mxu0
      %v7916 = vadd.f32 0.0, %v7915
      %v7917 = vpop.f32.mrf.mxu0
      %v7918 = vadd.f32 0.0, %v7917
      %7919 = vmatmul.bf16.gmra.mxu0 %v1998
      %v7920 = vpop.f32.mrf.mxu0
      %v7921 = vadd.f32 0.0, %v7920
      %v7922 = vpop.f32.mrf.mxu0
      %v7923 = vadd.f32 0.0, %v7922
      %7924 = vmatmul.bf16.gmra.mxu0 %v2001
      %v7925 = vpop.f32.mrf.mxu0
      %v7926 = vadd.f32 0.0, %v7925
      %v7927 = vpop.f32.mrf.mxu0
      %v7928 = vadd.f32 0.0, %v7927
      %7929 = vmatmul.bf16.gmra.mxu0 %v2004
      %v7930 = vpop.f32.mrf.mxu0
      %v7931 = vadd.f32 0.0, %v7930
      %v7932 = vpop.f32.mrf.mxu0
      %v7933 = vadd.f32 0.0, %v7932
      %7934 = vmatmul.bf16.gmra.mxu0 %v2007
      %v7935 = vpop.f32.mrf.mxu0
      %v7936 = vadd.f32 0.0, %v7935
      %v7937 = vpop.f32.mrf.mxu0
      %v7938 = vadd.f32 0.0, %v7937
      %7939 = vmatmul.bf16.gmra.mxu0 %v2010
      %v7940 = vpop.f32.mrf.mxu0
      %v7941 = vadd.f32 0.0, %v7940
      %v7942 = vpop.f32.mrf.mxu0
      %v7943 = vadd.f32 0.0, %v7942
      %7944 = vmatmul.bf16.gmra.mxu0 %v2013
      %v7945 = vpop.f32.mrf.mxu0
      %v7946 = vadd.f32 0.0, %v7945
      %v7947 = vpop.f32.mrf.mxu0
      %v7948 = vadd.f32 0.0, %v7947
      %7949 = vmatmul.bf16.gmra.mxu0 %v2016
      %v7950 = vpop.f32.mrf.mxu0
      %v7951 = vadd.f32 0.0, %v7950
      %v7952 = vpop.f32.mrf.mxu0
      %v7953 = vadd.f32 0.0, %v7952
      %7954 = vmatmul.bf16.gmra.mxu0 %v5292
      %v7955 = vpop.f32.mrf.mxu0
      %v7956 = vadd.f32 0.0, %v7955
      %v7957 = vpop.f32.mrf.mxu0
      %v7958 = vadd.f32 0.0, %v7957
      %7959 = vmatmul.bf16.gmra.mxu0 %v5295
      %v7960 = vpop.f32.mrf.mxu0
      %v7961 = vadd.f32 0.0, %v7960
      %v7962 = vpop.f32.mrf.mxu0
      %v7963 = vadd.f32 0.0, %v7962
      %7964 = vmatmul.bf16.gmra.mxu0 %v5298
      %v7965 = vpop.f32.mrf.mxu0
      %v7966 = vadd.f32 0.0, %v7965
      %v7967 = vpop.f32.mrf.mxu0
      %v7968 = vadd.f32 0.0, %v7967
      %7969 = vmatmul.bf16.gmra.mxu0 %v5301
      %v7970 = vpop.f32.mrf.mxu0
      %v7971 = vadd.f32 0.0, %v7970
      %v7972 = vpop.f32.mrf.mxu0
      %v7973 = vadd.f32 0.0, %v7972
      %7974 = vmatmul.bf16.gmra.mxu0 %v7658
      %v7975 = vpop.f32.mrf.mxu0
      %v7976 = vadd.f32 0.0, %v7975
      %v7977 = vpop.f32.mrf.mxu0
      %v7978 = vadd.f32 0.0, %v7977
      %7979 = vmatmul.bf16.gmra.mxu0 %v7661
      %v7980 = vpop.f32.mrf.mxu0
      %v7981 = vadd.f32 0.0, %v7980
      %v7982 = vpop.f32.mrf.mxu0
      %v7983 = vadd.f32 0.0, %v7982
      %7984 = vmatmul.bf16.gmra.mxu0 %v7664
      %v7985 = vpop.f32.mrf.mxu0
      %v7986 = vadd.f32 0.0, %v7985
      %v7987 = vpop.f32.mrf.mxu0
      %v7988 = vadd.f32 0.0, %v7987
      %7989 = vmatmul.bf16.gmra.mxu0 %v7667
      %v7990 = vpop.f32.mrf.mxu0
      %v7991 = vadd.f32 0.0, %v7990
      %v7992 = vpop.f32.mrf.mxu0
      %v7993 = vadd.f32 0.0, %v7992
      %7994 = vdwg.mxu0
      %7995 = vmatpush.bf16.msra.mxu0 %v7793
      %7996 = vmatpush.bf16.msra.mxu0 %v7792
      %7997 = vmatpush.bf16.msra.mxu0 %v7791
      %7998 = vmatpush.bf16.msra.mxu0 %v7790
      %7999 = vmatpush.bf16.msra.mxu0 %v7789
      %8000 = vmatpush.bf16.msra.mxu0 %v7788
      %8001 = vmatpush.bf16.msra.mxu0 %v7787
      %8002 = vmatpush.bf16.msra.mxu0 %v7786
      %8003 = vmatmul.bf16.gmra.mxu0 %v1948
      %v8004 = vpop.f32.mrf.mxu0
      %v8005 = vadd.f32 %v7836, %v8004
      %v8006 = vpop.f32.mrf.mxu0
      %v8007 = vadd.f32 %v7838, %v8006
      %8008 = vmatmul.bf16.gmra.mxu0 %v1951
      %v8009 = vpop.f32.mrf.mxu0
      %v8010 = vadd.f32 %v7841, %v8009
      %v8011 = vpop.f32.mrf.mxu0
      %v8012 = vadd.f32 %v7843, %v8011
      %8013 = vmatmul.bf16.gmra.mxu0 %v1954
      %v8014 = vpop.f32.mrf.mxu0
      %v8015 = vadd.f32 %v7846, %v8014
      %v8016 = vpop.f32.mrf.mxu0
      %v8017 = vadd.f32 %v7848, %v8016
      %8018 = vmatmul.bf16.gmra.mxu0 %v1957
      %v8019 = vpop.f32.mrf.mxu0
      %v8020 = vadd.f32 %v7851, %v8019
      %v8021 = vpop.f32.mrf.mxu0
      %v8022 = vadd.f32 %v7853, %v8021
      %8023 = vmatmul.bf16.gmra.mxu0 %v1960
      %v8024 = vpop.f32.mrf.mxu0
      %v8025 = vadd.f32 %v7856, %v8024
      %v8026 = vpop.f32.mrf.mxu0
      %v8027 = vadd.f32 %v7858, %v8026
      %8028 = vmatmul.bf16.gmra.mxu0 %v1963
      %v8029 = vpop.f32.mrf.mxu0
      %v8030 = vadd.f32 %v7861, %v8029
      %v8031 = vpop.f32.mrf.mxu0
      %v8032 = vadd.f32 %v7863, %v8031
      %8033 = vmatmul.bf16.gmra.mxu0 %v1966
      %v8034 = vpop.f32.mrf.mxu0
      %v8035 = vadd.f32 %v7866, %v8034
      %v8036 = vpop.f32.mrf.mxu0
      %v8037 = vadd.f32 %v7868, %v8036
      %8038 = vmatmul.bf16.gmra.mxu0 %v1969
      %v8039 = vpop.f32.mrf.mxu0
      %v8040 = vadd.f32 %v7871, %v8039
      %v8041 = vpop.f32.mrf.mxu0
      %v8042 = vadd.f32 %v7873, %v8041
      %8043 = vmatmul.bf16.gmra.mxu0 %v1972
      %v8044 = vpop.f32.mrf.mxu0
      %v8045 = vadd.f32 %v7876, %v8044
      %v8046 = vpop.f32.mrf.mxu0
      %v8047 = vadd.f32 %v7878, %v8046
      %8048 = vmatmul.bf16.gmra.mxu0 %v1975
      %v8049 = vpop.f32.mrf.mxu0
      %v8050 = vadd.f32 %v7881, %v8049
      %v8051 = vpop.f32.mrf.mxu0
      %v8052 = vadd.f32 %v7883, %v8051
      %8053 = vmatmul.bf16.gmra.mxu0 %v1978
      %v8054 = vpop.f32.mrf.mxu0
      %v8055 = vadd.f32 %v7886, %v8054
      %v8056 = vpop.f32.mrf.mxu0
      %v8057 = vadd.f32 %v7888, %v8056
      %8058 = vmatmul.bf16.gmra.mxu0 %v1981
      %v8059 = vpop.f32.mrf.mxu0
      %v8060 = vadd.f32 %v7891, %v8059
      %v8061 = vpop.f32.mrf.mxu0
      %v8062 = vadd.f32 %v7893, %v8061
      %8063 = vmatmul.bf16.gmra.mxu0 %v1984
      %v8064 = vpop.f32.mrf.mxu0
      %v8065 = vadd.f32 %v7896, %v8064
      %v8066 = vpop.f32.mrf.mxu0
      %v8067 = vadd.f32 %v7898, %v8066
      %8068 = vmatmul.bf16.gmra.mxu0 %v1987
      %v8069 = vpop.f32.mrf.mxu0
      %v8070 = vadd.f32 %v7901, %v8069
      %v8071 = vpop.f32.mrf.mxu0
      %v8072 = vadd.f32 %v7903, %v8071
      %8073 = vmatmul.bf16.gmra.mxu0 %v1990
      %v8074 = vpop.f32.mrf.mxu0
      %v8075 = vadd.f32 %v7906, %v8074
      %v8076 = vpop.f32.mrf.mxu0
      %v8077 = vadd.f32 %v7908, %v8076
      %8078 = vmatmul.bf16.gmra.mxu0 %v1993
      %v8079 = vpop.f32.mrf.mxu0
      %v8080 = vadd.f32 %v7911, %v8079
      %v8081 = vpop.f32.mrf.mxu0
      %v8082 = vadd.f32 %v7913, %v8081
      %8083 = vmatmul.bf16.gmra.mxu0 %v1996
      %v8084 = vpop.f32.mrf.mxu0
      %v8085 = vadd.f32 %v7916, %v8084
      %v8086 = vpop.f32.mrf.mxu0
      %v8087 = vadd.f32 %v7918, %v8086
      %8088 = vmatmul.bf16.gmra.mxu0 %v1999
      %v8089 = vpop.f32.mrf.mxu0
      %v8090 = vadd.f32 %v7921, %v8089
      %v8091 = vpop.f32.mrf.mxu0
      %v8092 = vadd.f32 %v7923, %v8091
      %8093 = vmatmul.bf16.gmra.mxu0 %v2002
      %v8094 = vpop.f32.mrf.mxu0
      %v8095 = vadd.f32 %v7926, %v8094
      %v8096 = vpop.f32.mrf.mxu0
      %v8097 = vadd.f32 %v7928, %v8096
      %8098 = vmatmul.bf16.gmra.mxu0 %v2005
      %v8099 = vpop.f32.mrf.mxu0
      %v8100 = vadd.f32 %v7931, %v8099
      %v8101 = vpop.f32.mrf.mxu0
      %v8102 = vadd.f32 %v7933, %v8101
      %8103 = vmatmul.bf16.gmra.mxu0 %v2008
      %v8104 = vpop.f32.mrf.mxu0
      %v8105 = vadd.f32 %v7936, %v8104
      %v8106 = vpop.f32.mrf.mxu0
      %v8107 = vadd.f32 %v7938, %v8106
      %8108 = vmatmul.bf16.gmra.mxu0 %v2011
      %v8109 = vpop.f32.mrf.mxu0
      %v8110 = vadd.f32 %v7941, %v8109
      %v8111 = vpop.f32.mrf.mxu0
      %v8112 = vadd.f32 %v7943, %v8111
      %8113 = vmatmul.bf16.gmra.mxu0 %v2014
      %v8114 = vpop.f32.mrf.mxu0
      %v8115 = vadd.f32 %v7946, %v8114
      %v8116 = vpop.f32.mrf.mxu0
      %v8117 = vadd.f32 %v7948, %v8116
      %8118 = vmatmul.bf16.gmra.mxu0 %v2017
      %v8119 = vpop.f32.mrf.mxu0
      %v8120 = vadd.f32 %v7951, %v8119
      %v8121 = vpop.f32.mrf.mxu0
      %v8122 = vadd.f32 %v7953, %v8121
      %8123 = vmatmul.bf16.gmra.mxu0 %v5293
      %v8124 = vpop.f32.mrf.mxu0
      %v8125 = vadd.f32 %v7956, %v8124
      %v8126 = vpop.f32.mrf.mxu0
      %v8127 = vadd.f32 %v7958, %v8126
      %8128 = vmatmul.bf16.gmra.mxu0 %v5296
      %v8129 = vpop.f32.mrf.mxu0
      %v8130 = vadd.f32 %v7961, %v8129
      %v8131 = vpop.f32.mrf.mxu0
      %v8132 = vadd.f32 %v7963, %v8131
      %8133 = vmatmul.bf16.gmra.mxu0 %v5299
      %v8134 = vpop.f32.mrf.mxu0
      %v8135 = vadd.f32 %v7966, %v8134
      %v8136 = vpop.f32.mrf.mxu0
      %v8137 = vadd.f32 %v7968, %v8136
      %8138 = vmatmul.bf16.gmra.mxu0 %v5302
      %v8139 = vpop.f32.mrf.mxu0
      %v8140 = vadd.f32 %v7971, %v8139
      %v8141 = vpop.f32.mrf.mxu0
      %v8142 = vadd.f32 %v7973, %v8141
      %8143 = vmatmul.bf16.gmra.mxu0 %v7659
      %v8144 = vpop.f32.mrf.mxu0
      %v8145 = vadd.f32 %v7976, %v8144
      %v8146 = vpop.f32.mrf.mxu0
      %v8147 = vadd.f32 %v7978, %v8146
      %8148 = vmatmul.bf16.gmra.mxu0 %v7662
      %v8149 = vpop.f32.mrf.mxu0
      %v8150 = vadd.f32 %v7981, %v8149
      %v8151 = vpop.f32.mrf.mxu0
      %v8152 = vadd.f32 %v7983, %v8151
      %8153 = vmatmul.bf16.gmra.mxu0 %v7665
      %v8154 = vpop.f32.mrf.mxu0
      %v8155 = vadd.f32 %v7986, %v8154
      %v8156 = vpop.f32.mrf.mxu0
      %v8157 = vadd.f32 %v7988, %v8156
      %8158 = vmatmul.bf16.gmra.mxu0 %v7668
      %v8159 = vpop.f32.mrf.mxu0
      %v8160 = vadd.f32 %v7991, %v8159
      %v8161 = vpop.f32.mrf.mxu0
      %v8162 = vadd.f32 %v7993, %v8161
      %8163 = vdwg.mxu0
      %8164 = vmatpush.bf16.msra.mxu0 %v7801
      %8165 = vmatpush.bf16.msra.mxu0 %v7800
      %8166 = vmatpush.bf16.msra.mxu0 %v7799
      %8167 = vmatpush.bf16.msra.mxu0 %v7798
      %8168 = vmatpush.bf16.msra.mxu0 %v7797
      %8169 = vmatpush.bf16.msra.mxu0 %v7796
      %8170 = vmatpush.bf16.msra.mxu0 %v7795
      %8171 = vmatpush.bf16.msra.mxu0 %v7794
      %8172 = vmatmul.bf16.gmra.mxu0 %v1949
      %v8173 = vpop.f32.mrf.mxu0
      %v8174 = vadd.f32 %v8005, %v8173
      %v8175 = vpop.f32.mrf.mxu0
      %v8176 = vadd.f32 %v8007, %v8175
      %8177 = vmatmul.bf16.gmra.mxu0 %v1952
      %v8178 = vpop.f32.mrf.mxu0
      %v8179 = vadd.f32 %v8010, %v8178
      %v8180 = vpop.f32.mrf.mxu0
      %v8181 = vadd.f32 %v8012, %v8180
      %8182 = vmatmul.bf16.gmra.mxu0 %v1955
      %v8183 = vpop.f32.mrf.mxu0
      %v8184 = vadd.f32 %v8015, %v8183
      %v8185 = vpop.f32.mrf.mxu0
      %v8186 = vadd.f32 %v8017, %v8185
      %8187 = vmatmul.bf16.gmra.mxu0 %v1958
      %v8188 = vpop.f32.mrf.mxu0
      %v8189 = vadd.f32 %v8020, %v8188
      %v8190 = vpop.f32.mrf.mxu0
      %v8191 = vadd.f32 %v8022, %v8190
      %8192 = vmatmul.bf16.gmra.mxu0 %v1961
      %v8193 = vpop.f32.mrf.mxu0
      %v8194 = vadd.f32 %v8025, %v8193
      %v8195 = vpop.f32.mrf.mxu0
      %v8196 = vadd.f32 %v8027, %v8195
      %8197 = vmatmul.bf16.gmra.mxu0 %v1964
      %v8198 = vpop.f32.mrf.mxu0
      %v8199 = vadd.f32 %v8030, %v8198
      %v8200 = vpop.f32.mrf.mxu0
      %v8201 = vadd.f32 %v8032, %v8200
      %8202 = vmatmul.bf16.gmra.mxu0 %v1967
      %v8203 = vpop.f32.mrf.mxu0
      %v8204 = vadd.f32 %v8035, %v8203
      %v8205 = vpop.f32.mrf.mxu0
      %v8206 = vadd.f32 %v8037, %v8205
      %8207 = vmatmul.bf16.gmra.mxu0 %v1970
      %v8208 = vpop.f32.mrf.mxu0
      %v8209 = vadd.f32 %v8040, %v8208
      %v8210 = vpop.f32.mrf.mxu0
      %v8211 = vadd.f32 %v8042, %v8210
      %8212 = vmatmul.bf16.gmra.mxu0 %v1973
      %v8213 = vpop.f32.mrf.mxu0
      %v8214 = vadd.f32 %v8045, %v8213
      %v8215 = vpop.f32.mrf.mxu0
      %v8216 = vadd.f32 %v8047, %v8215
      %8217 = vmatmul.bf16.gmra.mxu0 %v1976
      %v8218 = vpop.f32.mrf.mxu0
      %v8219 = vadd.f32 %v8050, %v8218
      %v8220 = vpop.f32.mrf.mxu0
      %v8221 = vadd.f32 %v8052, %v8220
      %8222 = vmatmul.bf16.gmra.mxu0 %v1979
      %v8223 = vpop.f32.mrf.mxu0
      %v8224 = vadd.f32 %v8055, %v8223
      %v8225 = vpop.f32.mrf.mxu0
      %v8226 = vadd.f32 %v8057, %v8225
      %8227 = vmatmul.bf16.gmra.mxu0 %v1982
      %v8228 = vpop.f32.mrf.mxu0
      %v8229 = vadd.f32 %v8060, %v8228
      %v8230 = vpop.f32.mrf.mxu0
      %v8231 = vadd.f32 %v8062, %v8230
      %8232 = vmatmul.bf16.gmra.mxu0 %v1985
      %v8233 = vpop.f32.mrf.mxu0
      %v8234 = vadd.f32 %v8065, %v8233
      %v8235 = vpop.f32.mrf.mxu0
      %v8236 = vadd.f32 %v8067, %v8235
      %8237 = vmatmul.bf16.gmra.mxu0 %v1988
      %v8238 = vpop.f32.mrf.mxu0
      %v8239 = vadd.f32 %v8070, %v8238
      %v8240 = vpop.f32.mrf.mxu0
      %v8241 = vadd.f32 %v8072, %v8240
      %8242 = vmatmul.bf16.gmra.mxu0 %v1991
      %v8243 = vpop.f32.mrf.mxu0
      %v8244 = vadd.f32 %v8075, %v8243
      %v8245 = vpop.f32.mrf.mxu0
      %v8246 = vadd.f32 %v8077, %v8245
      %8247 = vmatmul.bf16.gmra.mxu0 %v1994
      %v8248 = vpop.f32.mrf.mxu0
      %v8249 = vadd.f32 %v8080, %v8248
      %v8250 = vpop.f32.mrf.mxu0
      %v8251 = vadd.f32 %v8082, %v8250
      %8252 = vmatmul.bf16.gmra.mxu0 %v1997
      %v8253 = vpop.f32.mrf.mxu0
      %v8254 = vadd.f32 %v8085, %v8253
      %v8255 = vpop.f32.mrf.mxu0
      %v8256 = vadd.f32 %v8087, %v8255
      %8257 = vmatmul.bf16.gmra.mxu0 %v2000
      %v8258 = vpop.f32.mrf.mxu0
      %v8259 = vadd.f32 %v8090, %v8258
      %v8260 = vpop.f32.mrf.mxu0
      %v8261 = vadd.f32 %v8092, %v8260
      %8262 = vmatmul.bf16.gmra.mxu0 %v2003
      %v8263 = vpop.f32.mrf.mxu0
      %v8264 = vadd.f32 %v8095, %v8263
      %v8265 = vpop.f32.mrf.mxu0
      %v8266 = vadd.f32 %v8097, %v8265
      %8267 = vmatmul.bf16.gmra.mxu0 %v2006
      %v8268 = vpop.f32.mrf.mxu0
      %v8269 = vadd.f32 %v8100, %v8268
      %v8270 = vpop.f32.mrf.mxu0
      %v8271 = vadd.f32 %v8102, %v8270
      %8272 = vmatmul.bf16.gmra.mxu0 %v2009
      %v8273 = vpop.f32.mrf.mxu0
      %v8274 = vadd.f32 %v8105, %v8273
      %v8275 = vpop.f32.mrf.mxu0
      %v8276 = vadd.f32 %v8107, %v8275
      %8277 = vmatmul.bf16.gmra.mxu0 %v2012
      %v8278 = vpop.f32.mrf.mxu0
      %v8279 = vadd.f32 %v8110, %v8278
      %v8280 = vpop.f32.mrf.mxu0
      %v8281 = vadd.f32 %v8112, %v8280
      %8282 = vmatmul.bf16.gmra.mxu0 %v2015
      %v8283 = vpop.f32.mrf.mxu0
      %v8284 = vadd.f32 %v8115, %v8283
      %v8285 = vpop.f32.mrf.mxu0
      %v8286 = vadd.f32 %v8117, %v8285
      %8287 = vmatmul.bf16.gmra.mxu0 %v2018
      %v8288 = vpop.f32.mrf.mxu0
      %v8289 = vadd.f32 %v8120, %v8288
      %v8290 = vpop.f32.mrf.mxu0
      %v8291 = vadd.f32 %v8122, %v8290
      %8292 = vmatmul.bf16.gmra.mxu0 %v5294
      %v8293 = vpop.f32.mrf.mxu0
      %v8294 = vadd.f32 %v8125, %v8293
      %v8295 = vpop.f32.mrf.mxu0
      %v8296 = vadd.f32 %v8127, %v8295
      %8297 = vmatmul.bf16.gmra.mxu0 %v5297
      %v8298 = vpop.f32.mrf.mxu0
      %v8299 = vadd.f32 %v8130, %v8298
      %v8300 = vpop.f32.mrf.mxu0
      %v8301 = vadd.f32 %v8132, %v8300
      %8302 = vmatmul.bf16.gmra.mxu0 %v5300
      %v8303 = vpop.f32.mrf.mxu0
      %v8304 = vadd.f32 %v8135, %v8303
      %v8305 = vpop.f32.mrf.mxu0
      %v8306 = vadd.f32 %v8137, %v8305
      %8307 = vmatmul.bf16.gmra.mxu0 %v5303
      %v8308 = vpop.f32.mrf.mxu0
      %v8309 = vadd.f32 %v8140, %v8308
      %v8310 = vpop.f32.mrf.mxu0
      %v8311 = vadd.f32 %v8142, %v8310
      %8312 = vmatmul.bf16.gmra.mxu0 %v7660
      %v8313 = vpop.f32.mrf.mxu0
      %v8314 = vadd.f32 %v8145, %v8313
      %v8315 = vpop.f32.mrf.mxu0
      %v8316 = vadd.f32 %v8147, %v8315
      %8317 = vmatmul.bf16.gmra.mxu0 %v7663
      %v8318 = vpop.f32.mrf.mxu0
      %v8319 = vadd.f32 %v8150, %v8318
      %v8320 = vpop.f32.mrf.mxu0
      %v8321 = vadd.f32 %v8152, %v8320
      %8322 = vmatmul.bf16.gmra.mxu0 %v7666
      %v8323 = vpop.f32.mrf.mxu0
      %v8324 = vadd.f32 %v8155, %v8323
      %v8325 = vpop.f32.mrf.mxu0
      %v8326 = vadd.f32 %v8157, %v8325
      %8327 = vmatmul.bf16.gmra.mxu0 %v7669
      %v8328 = vpop.f32.mrf.mxu0
      %v8329 = vadd.f32 %v8160, %v8328
      %v8330 = vpop.f32.mrf.mxu0
      %v8331 = vadd.f32 %v8162, %v8330
      %8332 = vdwg.mxu0
      %v8333 = vadd.f32 %v7543, %v8174
      %v8334 = vadd.f32 %v7544, %v8176
      %v8335 = vadd.f32 %v7545, %v8179
      %v8336 = vadd.f32 %v7546, %v8181
      %v8337 = vadd.f32 %v7547, %v8184
      %v8338 = vadd.f32 %v7548, %v8186
      %v8339 = vadd.f32 %v7549, %v8189
      %v8340 = vadd.f32 %v7550, %v8191
      %v8341 = vadd.f32 %v7551, %v8194
      %v8342 = vadd.f32 %v7552, %v8196
      %v8343 = vadd.f32 %v7553, %v8199
      %v8344 = vadd.f32 %v7554, %v8201
      %v8345 = vadd.f32 %v7555, %v8204
      %v8346 = vadd.f32 %v7556, %v8206
      %v8347 = vadd.f32 %v7557, %v8209
      %v8348 = vadd.f32 %v7558, %v8211
      %v8349 = vadd.f32 %v7559, %v8214
      %v8350 = vadd.f32 %v7560, %v8216
      %v8351 = vadd.f32 %v7561, %v8219
      %v8352 = vadd.f32 %v7562, %v8221
      %v8353 = vadd.f32 %v7563, %v8224
      %v8354 = vadd.f32 %v7564, %v8226
      %v8355 = vadd.f32 %v7565, %v8229
      %v8356 = vadd.f32 %v7566, %v8231
      %v8357 = vadd.f32 %v7567, %v8234
      %v8358 = vadd.f32 %v7568, %v8236
      %v8359 = vadd.f32 %v7569, %v8239
      %v8360 = vadd.f32 %v7570, %v8241
      %v8361 = vadd.f32 %v7571, %v8244
      %v8362 = vadd.f32 %v7572, %v8246
      %v8363 = vadd.f32 %v7573, %v8249
      %v8364 = vadd.f32 %v7574, %v8251
      %v8365 = vadd.f32 %v7575, %v8254
      %v8366 = vadd.f32 %v7576, %v8256
      %v8367 = vadd.f32 %v7577, %v8259
      %v8368 = vadd.f32 %v7578, %v8261
      %v8369 = vadd.f32 %v7579, %v8264
      %v8370 = vadd.f32 %v7580, %v8266
      %v8371 = vadd.f32 %v7581, %v8269
      %v8372 = vadd.f32 %v7582, %v8271
      %v8373 = vadd.f32 %v7583, %v8274
      %v8374 = vadd.f32 %v7584, %v8276
      %v8375 = vadd.f32 %v7585, %v8279
      %v8376 = vadd.f32 %v7586, %v8281
      %v8377 = vadd.f32 %v7587, %v8284
      %v8378 = vadd.f32 %v7588, %v8286
      %v8379 = vadd.f32 %v7589, %v8289
      %v8380 = vadd.f32 %v7590, %v8291
      %v8381 = vadd.f32 %v7591, %v8294
      %v8382 = vadd.f32 %v7592, %v8296
      %v8383 = vadd.f32 %v7593, %v8299
      %v8384 = vadd.f32 %v7594, %v8301
      %v8385 = vadd.f32 %v7595, %v8304
      %v8386 = vadd.f32 %v7596, %v8306
      %v8387 = vadd.f32 %v7597, %v8309
      %v8388 = vadd.f32 %v7598, %v8311
      %v8389 = vadd.f32 %v7599, %v8314
      %v8390 = vadd.f32 %v7600, %v8316
      %v8391 = vadd.f32 %v7601, %v8319
      %v8392 = vadd.f32 %v7602, %v8321
      %v8393 = vadd.f32 %v7603, %v8324
      %v8394 = vadd.f32 %v7604, %v8326
      %v8395 = vadd.f32 %v7605, %v8329
      %v8396 = vadd.f32 %v7606, %v8331
      %v8397 = vunpack.c.l.b16 %v1581
      %v8398 = vunpack.c.l.b16 %v1681
      %s8399 = scalar_lea.vmem %s1, 1536
      %v8400 = vld [vmem:[%s8399] sm:$0xf]
      %v8401 = vld [vmem:[%s8399 + $0x4] sm:$0xf]
      %v8402 = vld [vmem:[%s8399 + $0x8] sm:$0xf]
      %v8403 = vld [vmem:[%s8399 + $0xc] sm:$0xf]
      %v8404 = vld [vmem:[%s8399 + $0x10] sm:$0xf]
      %v8405 = vld [vmem:[%s8399 + $0x14] sm:$0xf]
      %v8406 = vld [vmem:[%s8399 + $0x18] sm:$0xf]
      %v8407 = vld [vmem:[%s8399 + $0x1c] sm:$0xf]
      %v8408 = vld [vmem:[%s8399 + $0x20] sm:$0xf]
      %v8409 = vld [vmem:[%s8399 + $0x24] sm:$0xf]
      %v8410 = vld [vmem:[%s8399 + $0x28] sm:$0xf]
      %v8411 = vld [vmem:[%s8399 + $0x2c] sm:$0xf]
      %v8412 = vld [vmem:[%s8399 + $0x30] sm:$0xf]
      %v8413 = vld [vmem:[%s8399 + $0x34] sm:$0xf]
      %v8414 = vld [vmem:[%s8399 + $0x38] sm:$0xf]
      %v8415 = vld [vmem:[%s8399 + $0x3c] sm:$0xf]
      %v8416 = vld [vmem:[%s8399 + $0x40] sm:$0xf]
      %v8417 = vld [vmem:[%s8399 + $0x44] sm:$0xf]
      %v8418 = vld [vmem:[%s8399 + $0x48] sm:$0xf]
      %v8419 = vld [vmem:[%s8399 + $0x4c] sm:$0xf]
      %v8420 = vld [vmem:[%s8399 + $0x50] sm:$0xf]
      %v8421 = vld [vmem:[%s8399 + $0x54] sm:$0xf]
      %v8422 = vld [vmem:[%s8399 + $0x58] sm:$0xf]
      %v8423 = vld [vmem:[%s8399 + $0x5c] sm:$0xf]
      %v8424 = vld [vmem:[%s8399 + $0x60] sm:$0xf]
      %v8425 = vld [vmem:[%s8399 + $0x64] sm:$0xf]
      %v8426 = vld [vmem:[%s8399 + $0x68] sm:$0xf]
      %v8427 = vld [vmem:[%s8399 + $0x6c] sm:$0xf]
      %v8428 = vld [vmem:[%s8399 + $0x70] sm:$0xf]
      %v8429 = vld [vmem:[%s8399 + $0x74] sm:$0xf]
      %v8430 = vld [vmem:[%s8399 + $0x78] sm:$0xf]
      %v8431 = vld [vmem:[%s8399 + $0x7c] sm:$0xf]
      %v8432 = vld [vmem:[%s8399 + $0x80] sm:$0xf]
      %v8433 = vld [vmem:[%s8399 + $0x84] sm:$0xf]
      %v8434 = vld [vmem:[%s8399 + $0x88] sm:$0xf]
      %v8435 = vld [vmem:[%s8399 + $0x8c] sm:$0xf]
      %v8436 = vld [vmem:[%s8399 + $0x90] sm:$0xf]
      %v8437 = vld [vmem:[%s8399 + $0x94] sm:$0xf]
      %v8438 = vld [vmem:[%s8399 + $0x98] sm:$0xf]
      %v8439 = vld [vmem:[%s8399 + $0x9c] sm:$0xf]
      %v8440 = vld [vmem:[%s8399 + $0xa0] sm:$0xf]
      %v8441 = vld [vmem:[%s8399 + $0xa4] sm:$0xf]
      %v8442 = vld [vmem:[%s8399 + $0xa8] sm:$0xf]
      %v8443 = vld [vmem:[%s8399 + $0xac] sm:$0xf]
      %v8444 = vld [vmem:[%s8399 + $0xb0] sm:$0xf]
      %v8445 = vld [vmem:[%s8399 + $0xb4] sm:$0xf]
      %v8446 = vld [vmem:[%s8399 + $0xb8] sm:$0xf]
      %v8447 = vld [vmem:[%s8399 + $0xbc] sm:$0xf]
      %v8448 = vpack.c.b16 %v780, %v778
      %v8449 = vpack.c.b16 %v8397, %v7607
      %v8450 = vpack.c.b16 %v8398, %v7608
      %v8502 = vunpack.c.l.b16 %v8400
      %v8503 = vunpack.c.l.b16 %v8401
      %v8504 = vunpack.c.l.b16 %v8402
      %v8505 = vunpack.c.l.b16 %v8403
      %v8506 = vunpack.c.l.b16 %v8404
      %v8507 = vunpack.c.l.b16 %v8405
      %v8508 = vunpack.c.l.b16 %v8406
      %v8509 = vunpack.c.l.b16 %v8407
      %v8510 = vunpack.c.l.b16 %v8408
      %v8511 = vunpack.c.l.b16 %v8409
      %v8512 = vunpack.c.l.b16 %v8410
      %v8513 = vunpack.c.l.b16 %v8411
      %v8514 = vunpack.c.l.b16 %v8412
      %v8515 = vunpack.c.l.b16 %v8413
      %v8516 = vunpack.c.l.b16 %v8414
      %v8517 = vunpack.c.l.b16 %v8415
      %v8518 = vunpack.c.l.b16 %v8416
      %v8519 = vunpack.c.l.b16 %v8417
      %v8520 = vunpack.c.l.b16 %v8418
      %v8521 = vunpack.c.l.b16 %v8419
      %v8522 = vunpack.c.l.b16 %v8420
      %v8523 = vunpack.c.l.b16 %v8421
      %v8524 = vunpack.c.l.b16 %v8422
      %v8525 = vunpack.c.l.b16 %v8423
      %v8526 = vunpack.c.l.b16 %v8424
      %v8527 = vunpack.c.l.b16 %v8425
      %v8528 = vunpack.c.l.b16 %v8426
      %v8529 = vunpack.c.l.b16 %v8427
      %v8530 = vunpack.c.l.b16 %v8428
      %v8531 = vunpack.c.l.b16 %v8429
      %v8532 = vunpack.c.l.b16 %v8430
      %v8533 = vunpack.c.l.b16 %v8431
      %v8534 = vunpack.c.l.b16 %v8432
      %v8535 = vunpack.c.l.b16 %v8433
      %v8536 = vunpack.c.l.b16 %v8434
      %v8537 = vunpack.c.l.b16 %v8435
      %v8538 = vunpack.c.l.b16 %v8436
      %v8539 = vunpack.c.l.b16 %v8437
      %v8540 = vunpack.c.l.b16 %v8438
      %v8541 = vunpack.c.l.b16 %v8439
      %v8542 = vunpack.c.l.b16 %v8440
      %v8543 = vunpack.c.l.b16 %v8441
      %v8544 = vunpack.c.l.b16 %v8442
      %v8545 = vunpack.c.l.b16 %v8443
      %v8546 = vunpack.c.l.b16 %v8444
      %v8547 = vunpack.c.l.b16 %v8445
      %v8548 = vunpack.c.l.b16 %v8446
      %v8549 = vunpack.c.l.b16 %v8447
      %v8550 = vpack.c.b16 %v8503, %v8502
      %v8551 = vpack.c.b16 %v8505, %v8504
      %v8552 = vpack.c.b16 %v8507, %v8506
      %v8553 = vpack.c.b16 %v8509, %v8508
      %v8554 = vpack.c.b16 %v8511, %v8510
      %v8555 = vpack.c.b16 %v8513, %v8512
      %v8556 = vpack.c.b16 %v8515, %v8514
      %v8557 = vpack.c.b16 %v8517, %v8516
      %v8558 = vpack.c.b16 %v8519, %v8518
      %v8559 = vpack.c.b16 %v8521, %v8520
      %v8560 = vpack.c.b16 %v8523, %v8522
      %v8561 = vpack.c.b16 %v8525, %v8524
      %v8562 = vpack.c.b16 %v8527, %v8526
      %v8563 = vpack.c.b16 %v8529, %v8528
      %v8564 = vpack.c.b16 %v8531, %v8530
      %v8565 = vpack.c.b16 %v8533, %v8532
      %v8566 = vpack.c.b16 %v8535, %v8534
      %v8567 = vpack.c.b16 %v8537, %v8536
      %v8568 = vpack.c.b16 %v8539, %v8538
      %v8569 = vpack.c.b16 %v8541, %v8540
      %v8570 = vpack.c.b16 %v8543, %v8542
      %v8571 = vpack.c.b16 %v8545, %v8544
      %v8572 = vpack.c.b16 %v8547, %v8546
      %v8573 = vpack.c.b16 %v8549, %v8548
      %8598 = vmatpush.bf16.msra.mxu0 %v8557
      %8599 = vmatpush.bf16.msra.mxu0 %v8556
      %8600 = vmatpush.bf16.msra.mxu0 %v8555
      %8601 = vmatpush.bf16.msra.mxu0 %v8554
      %8602 = vmatpush.bf16.msra.mxu0 %v8553
      %8603 = vmatpush.bf16.msra.mxu0 %v8552
      %8604 = vmatpush.bf16.msra.mxu0 %v8551
      %8605 = vmatpush.bf16.msra.mxu0 %v8550
      %8606 = vmatmul.bf16.gmra.mxu0 %v2793
      %v8607 = vpop.f32.mrf.mxu0
      %v8608 = vadd.f32 0.0, %v8607
      %v8609 = vpop.f32.mrf.mxu0
      %v8610 = vadd.f32 0.0, %v8609
      %8611 = vmatmul.bf16.gmra.mxu0 %v2796
      %v8612 = vpop.f32.mrf.mxu0
      %v8613 = vadd.f32 0.0, %v8612
      %v8614 = vpop.f32.mrf.mxu0
      %v8615 = vadd.f32 0.0, %v8614
      %8616 = vmatmul.bf16.gmra.mxu0 %v2799
      %v8617 = vpop.f32.mrf.mxu0
      %v8618 = vadd.f32 0.0, %v8617
      %v8619 = vpop.f32.mrf.mxu0
      %v8620 = vadd.f32 0.0, %v8619
      %8621 = vmatmul.bf16.gmra.mxu0 %v3680
      %v8622 = vpop.f32.mrf.mxu0
      %v8623 = vadd.f32 0.0, %v8622
      %v8624 = vpop.f32.mrf.mxu0
      %v8625 = vadd.f32 0.0, %v8624
      %8626 = vmatmul.bf16.gmra.mxu0 %v2805
      %v8627 = vpop.f32.mrf.mxu0
      %v8628 = vadd.f32 0.0, %v8627
      %v8629 = vpop.f32.mrf.mxu0
      %v8630 = vadd.f32 0.0, %v8629
      %8631 = vmatmul.bf16.gmra.mxu0 %v2808
      %v8632 = vpop.f32.mrf.mxu0
      %v8633 = vadd.f32 0.0, %v8632
      %v8634 = vpop.f32.mrf.mxu0
      %v8635 = vadd.f32 0.0, %v8634
      %8636 = vmatmul.bf16.gmra.mxu0 %v2811
      %v8637 = vpop.f32.mrf.mxu0
      %v8638 = vadd.f32 0.0, %v8637
      %v8639 = vpop.f32.mrf.mxu0
      %v8640 = vadd.f32 0.0, %v8639
      %8641 = vmatmul.bf16.gmra.mxu0 %v3683
      %v8642 = vpop.f32.mrf.mxu0
      %v8643 = vadd.f32 0.0, %v8642
      %v8644 = vpop.f32.mrf.mxu0
      %v8645 = vadd.f32 0.0, %v8644
      %8646 = vmatmul.bf16.gmra.mxu0 %v2817
      %v8647 = vpop.f32.mrf.mxu0
      %v8648 = vadd.f32 0.0, %v8647
      %v8649 = vpop.f32.mrf.mxu0
      %v8650 = vadd.f32 0.0, %v8649
      %8651 = vmatmul.bf16.gmra.mxu0 %v2820
      %v8652 = vpop.f32.mrf.mxu0
      %v8653 = vadd.f32 0.0, %v8652
      %v8654 = vpop.f32.mrf.mxu0
      %v8655 = vadd.f32 0.0, %v8654
      %8656 = vmatmul.bf16.gmra.mxu0 %v2823
      %v8657 = vpop.f32.mrf.mxu0
      %v8658 = vadd.f32 0.0, %v8657
      %v8659 = vpop.f32.mrf.mxu0
      %v8660 = vadd.f32 0.0, %v8659
      %8661 = vmatmul.bf16.gmra.mxu0 %v3686
      %v8662 = vpop.f32.mrf.mxu0
      %v8663 = vadd.f32 0.0, %v8662
      %v8664 = vpop.f32.mrf.mxu0
      %v8665 = vadd.f32 0.0, %v8664
      %8666 = vmatmul.bf16.gmra.mxu0 %v2829
      %v8667 = vpop.f32.mrf.mxu0
      %v8668 = vadd.f32 0.0, %v8667
      %v8669 = vpop.f32.mrf.mxu0
      %v8670 = vadd.f32 0.0, %v8669
      %8671 = vmatmul.bf16.gmra.mxu0 %v2832
      %v8672 = vpop.f32.mrf.mxu0
      %v8673 = vadd.f32 0.0, %v8672
      %v8674 = vpop.f32.mrf.mxu0
      %v8675 = vadd.f32 0.0, %v8674
      %8676 = vmatmul.bf16.gmra.mxu0 %v2835
      %v8677 = vpop.f32.mrf.mxu0
      %v8678 = vadd.f32 0.0, %v8677
      %v8679 = vpop.f32.mrf.mxu0
      %v8680 = vadd.f32 0.0, %v8679
      %8681 = vmatmul.bf16.gmra.mxu0 %v3689
      %v8682 = vpop.f32.mrf.mxu0
      %v8683 = vadd.f32 0.0, %v8682
      %v8684 = vpop.f32.mrf.mxu0
      %v8685 = vadd.f32 0.0, %v8684
      %8686 = vmatmul.bf16.gmra.mxu0 %v2841
      %v8687 = vpop.f32.mrf.mxu0
      %v8688 = vadd.f32 0.0, %v8687
      %v8689 = vpop.f32.mrf.mxu0
      %v8690 = vadd.f32 0.0, %v8689
      %8691 = vmatmul.bf16.gmra.mxu0 %v2844
      %v8692 = vpop.f32.mrf.mxu0
      %v8693 = vadd.f32 0.0, %v8692
      %v8694 = vpop.f32.mrf.mxu0
      %v8695 = vadd.f32 0.0, %v8694
      %8696 = vmatmul.bf16.gmra.mxu0 %v2847
      %v8697 = vpop.f32.mrf.mxu0
      %v8698 = vadd.f32 0.0, %v8697
      %v8699 = vpop.f32.mrf.mxu0
      %v8700 = vadd.f32 0.0, %v8699
      %8701 = vmatmul.bf16.gmra.mxu0 %v3692
      %v8702 = vpop.f32.mrf.mxu0
      %v8703 = vadd.f32 0.0, %v8702
      %v8704 = vpop.f32.mrf.mxu0
      %v8705 = vadd.f32 0.0, %v8704
      %8706 = vmatmul.bf16.gmra.mxu0 %v2853
      %v8707 = vpop.f32.mrf.mxu0
      %v8708 = vadd.f32 0.0, %v8707
      %v8709 = vpop.f32.mrf.mxu0
      %v8710 = vadd.f32 0.0, %v8709
      %8711 = vmatmul.bf16.gmra.mxu0 %v2856
      %v8712 = vpop.f32.mrf.mxu0
      %v8713 = vadd.f32 0.0, %v8712
      %v8714 = vpop.f32.mrf.mxu0
      %v8715 = vadd.f32 0.0, %v8714
      %8716 = vmatmul.bf16.gmra.mxu0 %v2859
      %v8717 = vpop.f32.mrf.mxu0
      %v8718 = vadd.f32 0.0, %v8717
      %v8719 = vpop.f32.mrf.mxu0
      %v8720 = vadd.f32 0.0, %v8719
      %8721 = vmatmul.bf16.gmra.mxu0 %v3695
      %v8722 = vpop.f32.mrf.mxu0
      %v8723 = vadd.f32 0.0, %v8722
      %v8724 = vpop.f32.mrf.mxu0
      %v8725 = vadd.f32 0.0, %v8724
      %8726 = vmatmul.bf16.gmra.mxu0 %v4505
      %v8727 = vpop.f32.mrf.mxu0
      %v8728 = vadd.f32 0.0, %v8727
      %v8729 = vpop.f32.mrf.mxu0
      %v8730 = vadd.f32 0.0, %v8729
      %8731 = vmatmul.bf16.gmra.mxu0 %v4508
      %v8732 = vpop.f32.mrf.mxu0
      %v8733 = vadd.f32 0.0, %v8732
      %v8734 = vpop.f32.mrf.mxu0
      %v8735 = vadd.f32 0.0, %v8734
      %8736 = vmatmul.bf16.gmra.mxu0 %v4511
      %v8737 = vpop.f32.mrf.mxu0
      %v8738 = vadd.f32 0.0, %v8737
      %v8739 = vpop.f32.mrf.mxu0
      %v8740 = vadd.f32 0.0, %v8739
      %8741 = vmatmul.bf16.gmra.mxu0 %v6082
      %v8742 = vpop.f32.mrf.mxu0
      %v8743 = vadd.f32 0.0, %v8742
      %v8744 = vpop.f32.mrf.mxu0
      %v8745 = vadd.f32 0.0, %v8744
      %8746 = vmatmul.bf16.gmra.mxu0 %v6871
      %v8747 = vpop.f32.mrf.mxu0
      %v8748 = vadd.f32 0.0, %v8747
      %v8749 = vpop.f32.mrf.mxu0
      %v8750 = vadd.f32 0.0, %v8749
      %8751 = vmatmul.bf16.gmra.mxu0 %v6874
      %v8752 = vpop.f32.mrf.mxu0
      %v8753 = vadd.f32 0.0, %v8752
      %v8754 = vpop.f32.mrf.mxu0
      %v8755 = vadd.f32 0.0, %v8754
      %8756 = vmatmul.bf16.gmra.mxu0 %v6877
      %v8757 = vpop.f32.mrf.mxu0
      %v8758 = vadd.f32 0.0, %v8757
      %v8759 = vpop.f32.mrf.mxu0
      %v8760 = vadd.f32 0.0, %v8759
      %8761 = vmatmul.bf16.gmra.mxu0 %v8448
      %v8762 = vpop.f32.mrf.mxu0
      %v8763 = vadd.f32 0.0, %v8762
      %v8764 = vpop.f32.mrf.mxu0
      %v8765 = vadd.f32 0.0, %v8764
      %8766 = vdwg.mxu0
      %8767 = vmatpush.bf16.msra.mxu0 %v8565
      %8768 = vmatpush.bf16.msra.mxu0 %v8564
      %8769 = vmatpush.bf16.msra.mxu0 %v8563
      %8770 = vmatpush.bf16.msra.mxu0 %v8562
      %8771 = vmatpush.bf16.msra.mxu0 %v8561
      %8772 = vmatpush.bf16.msra.mxu0 %v8560
      %8773 = vmatpush.bf16.msra.mxu0 %v8559
      %8774 = vmatpush.bf16.msra.mxu0 %v8558
      %8775 = vmatmul.bf16.gmra.mxu0 %v2794
      %v8776 = vpop.f32.mrf.mxu0
      %v8777 = vadd.f32 %v8608, %v8776
      %v8778 = vpop.f32.mrf.mxu0
      %v8779 = vadd.f32 %v8610, %v8778
      %8780 = vmatmul.bf16.gmra.mxu0 %v2797
      %v8781 = vpop.f32.mrf.mxu0
      %v8782 = vadd.f32 %v8613, %v8781
      %v8783 = vpop.f32.mrf.mxu0
      %v8784 = vadd.f32 %v8615, %v8783
      %8785 = vmatmul.bf16.gmra.mxu0 %v2800
      %v8786 = vpop.f32.mrf.mxu0
      %v8787 = vadd.f32 %v8618, %v8786
      %v8788 = vpop.f32.mrf.mxu0
      %v8789 = vadd.f32 %v8620, %v8788
      %8790 = vmatmul.bf16.gmra.mxu0 %v3681
      %v8791 = vpop.f32.mrf.mxu0
      %v8792 = vadd.f32 %v8623, %v8791
      %v8793 = vpop.f32.mrf.mxu0
      %v8794 = vadd.f32 %v8625, %v8793
      %8795 = vmatmul.bf16.gmra.mxu0 %v2806
      %v8796 = vpop.f32.mrf.mxu0
      %v8797 = vadd.f32 %v8628, %v8796
      %v8798 = vpop.f32.mrf.mxu0
      %v8799 = vadd.f32 %v8630, %v8798
      %8800 = vmatmul.bf16.gmra.mxu0 %v2809
      %v8801 = vpop.f32.mrf.mxu0
      %v8802 = vadd.f32 %v8633, %v8801
      %v8803 = vpop.f32.mrf.mxu0
      %v8804 = vadd.f32 %v8635, %v8803
      %8805 = vmatmul.bf16.gmra.mxu0 %v2812
      %v8806 = vpop.f32.mrf.mxu0
      %v8807 = vadd.f32 %v8638, %v8806
      %v8808 = vpop.f32.mrf.mxu0
      %v8809 = vadd.f32 %v8640, %v8808
      %8810 = vmatmul.bf16.gmra.mxu0 %v3684
      %v8811 = vpop.f32.mrf.mxu0
      %v8812 = vadd.f32 %v8643, %v8811
      %v8813 = vpop.f32.mrf.mxu0
      %v8814 = vadd.f32 %v8645, %v8813
      %8815 = vmatmul.bf16.gmra.mxu0 %v2818
      %v8816 = vpop.f32.mrf.mxu0
      %v8817 = vadd.f32 %v8648, %v8816
      %v8818 = vpop.f32.mrf.mxu0
      %v8819 = vadd.f32 %v8650, %v8818
      %8820 = vmatmul.bf16.gmra.mxu0 %v2821
      %v8821 = vpop.f32.mrf.mxu0
      %v8822 = vadd.f32 %v8653, %v8821
      %v8823 = vpop.f32.mrf.mxu0
      %v8824 = vadd.f32 %v8655, %v8823
      %8825 = vmatmul.bf16.gmra.mxu0 %v2824
      %v8826 = vpop.f32.mrf.mxu0
      %v8827 = vadd.f32 %v8658, %v8826
      %v8828 = vpop.f32.mrf.mxu0
      %v8829 = vadd.f32 %v8660, %v8828
      %8830 = vmatmul.bf16.gmra.mxu0 %v3687
      %v8831 = vpop.f32.mrf.mxu0
      %v8832 = vadd.f32 %v8663, %v8831
      %v8833 = vpop.f32.mrf.mxu0
      %v8834 = vadd.f32 %v8665, %v8833
      %8835 = vmatmul.bf16.gmra.mxu0 %v2830
      %v8836 = vpop.f32.mrf.mxu0
      %v8837 = vadd.f32 %v8668, %v8836
      %v8838 = vpop.f32.mrf.mxu0
      %v8839 = vadd.f32 %v8670, %v8838
      %8840 = vmatmul.bf16.gmra.mxu0 %v2833
      %v8841 = vpop.f32.mrf.mxu0
      %v8842 = vadd.f32 %v8673, %v8841
      %v8843 = vpop.f32.mrf.mxu0
      %v8844 = vadd.f32 %v8675, %v8843
      %8845 = vmatmul.bf16.gmra.mxu0 %v2836
      %v8846 = vpop.f32.mrf.mxu0
      %v8847 = vadd.f32 %v8678, %v8846
      %v8848 = vpop.f32.mrf.mxu0
      %v8849 = vadd.f32 %v8680, %v8848
      %8850 = vmatmul.bf16.gmra.mxu0 %v3690
      %v8851 = vpop.f32.mrf.mxu0
      %v8852 = vadd.f32 %v8683, %v8851
      %v8853 = vpop.f32.mrf.mxu0
      %v8854 = vadd.f32 %v8685, %v8853
      %8855 = vmatmul.bf16.gmra.mxu0 %v2842
      %v8856 = vpop.f32.mrf.mxu0
      %v8857 = vadd.f32 %v8688, %v8856
      %v8858 = vpop.f32.mrf.mxu0
      %v8859 = vadd.f32 %v8690, %v8858
      %8860 = vmatmul.bf16.gmra.mxu0 %v2845
      %v8861 = vpop.f32.mrf.mxu0
      %v8862 = vadd.f32 %v8693, %v8861
      %v8863 = vpop.f32.mrf.mxu0
      %v8864 = vadd.f32 %v8695, %v8863
      %8865 = vmatmul.bf16.gmra.mxu0 %v2848
      %v8866 = vpop.f32.mrf.mxu0
      %v8867 = vadd.f32 %v8698, %v8866
      %v8868 = vpop.f32.mrf.mxu0
      %v8869 = vadd.f32 %v8700, %v8868
      %8870 = vmatmul.bf16.gmra.mxu0 %v3693
      %v8871 = vpop.f32.mrf.mxu0
      %v8872 = vadd.f32 %v8703, %v8871
      %v8873 = vpop.f32.mrf.mxu0
      %v8874 = vadd.f32 %v8705, %v8873
      %8875 = vmatmul.bf16.gmra.mxu0 %v2854
      %v8876 = vpop.f32.mrf.mxu0
      %v8877 = vadd.f32 %v8708, %v8876
      %v8878 = vpop.f32.mrf.mxu0
      %v8879 = vadd.f32 %v8710, %v8878
      %8880 = vmatmul.bf16.gmra.mxu0 %v2857
      %v8881 = vpop.f32.mrf.mxu0
      %v8882 = vadd.f32 %v8713, %v8881
      %v8883 = vpop.f32.mrf.mxu0
      %v8884 = vadd.f32 %v8715, %v8883
      %8885 = vmatmul.bf16.gmra.mxu0 %v2860
      %v8886 = vpop.f32.mrf.mxu0
      %v8887 = vadd.f32 %v8718, %v8886
      %v8888 = vpop.f32.mrf.mxu0
      %v8889 = vadd.f32 %v8720, %v8888
      %8890 = vmatmul.bf16.gmra.mxu0 %v3696
      %v8891 = vpop.f32.mrf.mxu0
      %v8892 = vadd.f32 %v8723, %v8891
      %v8893 = vpop.f32.mrf.mxu0
      %v8894 = vadd.f32 %v8725, %v8893
      %8895 = vmatmul.bf16.gmra.mxu0 %v4506
      %v8896 = vpop.f32.mrf.mxu0
      %v8897 = vadd.f32 %v8728, %v8896
      %v8898 = vpop.f32.mrf.mxu0
      %v8899 = vadd.f32 %v8730, %v8898
      %8900 = vmatmul.bf16.gmra.mxu0 %v4509
      %v8901 = vpop.f32.mrf.mxu0
      %v8902 = vadd.f32 %v8733, %v8901
      %v8903 = vpop.f32.mrf.mxu0
      %v8904 = vadd.f32 %v8735, %v8903
      %8905 = vmatmul.bf16.gmra.mxu0 %v4512
      %v8906 = vpop.f32.mrf.mxu0
      %v8907 = vadd.f32 %v8738, %v8906
      %v8908 = vpop.f32.mrf.mxu0
      %v8909 = vadd.f32 %v8740, %v8908
      %8910 = vmatmul.bf16.gmra.mxu0 %v6083
      %v8911 = vpop.f32.mrf.mxu0
      %v8912 = vadd.f32 %v8743, %v8911
      %v8913 = vpop.f32.mrf.mxu0
      %v8914 = vadd.f32 %v8745, %v8913
      %8915 = vmatmul.bf16.gmra.mxu0 %v6872
      %v8916 = vpop.f32.mrf.mxu0
      %v8917 = vadd.f32 %v8748, %v8916
      %v8918 = vpop.f32.mrf.mxu0
      %v8919 = vadd.f32 %v8750, %v8918
      %8920 = vmatmul.bf16.gmra.mxu0 %v6875
      %v8921 = vpop.f32.mrf.mxu0
      %v8922 = vadd.f32 %v8753, %v8921
      %v8923 = vpop.f32.mrf.mxu0
      %v8924 = vadd.f32 %v8755, %v8923
      %8925 = vmatmul.bf16.gmra.mxu0 %v6878
      %v8926 = vpop.f32.mrf.mxu0
      %v8927 = vadd.f32 %v8758, %v8926
      %v8928 = vpop.f32.mrf.mxu0
      %v8929 = vadd.f32 %v8760, %v8928
      %8930 = vmatmul.bf16.gmra.mxu0 %v8449
      %v8931 = vpop.f32.mrf.mxu0
      %v8932 = vadd.f32 %v8763, %v8931
      %v8933 = vpop.f32.mrf.mxu0
      %v8934 = vadd.f32 %v8765, %v8933
      %8935 = vdwg.mxu0
      %8936 = vmatpush.bf16.msra.mxu0 %v8573
      %8937 = vmatpush.bf16.msra.mxu0 %v8572
      %8938 = vmatpush.bf16.msra.mxu0 %v8571
      %8939 = vmatpush.bf16.msra.mxu0 %v8570
      %8940 = vmatpush.bf16.msra.mxu0 %v8569
      %8941 = vmatpush.bf16.msra.mxu0 %v8568
      %8942 = vmatpush.bf16.msra.mxu0 %v8567
      %8943 = vmatpush.bf16.msra.mxu0 %v8566
      %8944 = vmatmul.bf16.gmra.mxu0 %v2795
      %v8945 = vpop.f32.mrf.mxu0
      %v8946 = vadd.f32 %v8777, %v8945
      %v8947 = vpop.f32.mrf.mxu0
      %v8948 = vadd.f32 %v8779, %v8947
      %8949 = vmatmul.bf16.gmra.mxu0 %v2798
      %v8950 = vpop.f32.mrf.mxu0
      %v8951 = vadd.f32 %v8782, %v8950
      %v8952 = vpop.f32.mrf.mxu0
      %v8953 = vadd.f32 %v8784, %v8952
      %8954 = vmatmul.bf16.gmra.mxu0 %v2801
      %v8955 = vpop.f32.mrf.mxu0
      %v8956 = vadd.f32 %v8787, %v8955
      %v8957 = vpop.f32.mrf.mxu0
      %v8958 = vadd.f32 %v8789, %v8957
      %8959 = vmatmul.bf16.gmra.mxu0 %v3682
      %v8960 = vpop.f32.mrf.mxu0
      %v8961 = vadd.f32 %v8792, %v8960
      %v8962 = vpop.f32.mrf.mxu0
      %v8963 = vadd.f32 %v8794, %v8962
      %8964 = vmatmul.bf16.gmra.mxu0 %v2807
      %v8965 = vpop.f32.mrf.mxu0
      %v8966 = vadd.f32 %v8797, %v8965
      %v8967 = vpop.f32.mrf.mxu0
      %v8968 = vadd.f32 %v8799, %v8967
      %8969 = vmatmul.bf16.gmra.mxu0 %v2810
      %v8970 = vpop.f32.mrf.mxu0
      %v8971 = vadd.f32 %v8802, %v8970
      %v8972 = vpop.f32.mrf.mxu0
      %v8973 = vadd.f32 %v8804, %v8972
      %8974 = vmatmul.bf16.gmra.mxu0 %v2813
      %v8975 = vpop.f32.mrf.mxu0
      %v8976 = vadd.f32 %v8807, %v8975
      %v8977 = vpop.f32.mrf.mxu0
      %v8978 = vadd.f32 %v8809, %v8977
      %8979 = vmatmul.bf16.gmra.mxu0 %v3685
      %v8980 = vpop.f32.mrf.mxu0
      %v8981 = vadd.f32 %v8812, %v8980
      %v8982 = vpop.f32.mrf.mxu0
      %v8983 = vadd.f32 %v8814, %v8982
      %8984 = vmatmul.bf16.gmra.mxu0 %v2819
      %v8985 = vpop.f32.mrf.mxu0
      %v8986 = vadd.f32 %v8817, %v8985
      %v8987 = vpop.f32.mrf.mxu0
      %v8988 = vadd.f32 %v8819, %v8987
      %8989 = vmatmul.bf16.gmra.mxu0 %v2822
      %v8990 = vpop.f32.mrf.mxu0
      %v8991 = vadd.f32 %v8822, %v8990
      %v8992 = vpop.f32.mrf.mxu0
      %v8993 = vadd.f32 %v8824, %v8992
      %8994 = vmatmul.bf16.gmra.mxu0 %v2825
      %v8995 = vpop.f32.mrf.mxu0
      %v8996 = vadd.f32 %v8827, %v8995
      %v8997 = vpop.f32.mrf.mxu0
      %v8998 = vadd.f32 %v8829, %v8997
      %8999 = vmatmul.bf16.gmra.mxu0 %v3688
      %v9000 = vpop.f32.mrf.mxu0
      %v9001 = vadd.f32 %v8832, %v9000
      %v9002 = vpop.f32.mrf.mxu0
      %v9003 = vadd.f32 %v8834, %v9002
      %9004 = vmatmul.bf16.gmra.mxu0 %v2831
      %v9005 = vpop.f32.mrf.mxu0
      %v9006 = vadd.f32 %v8837, %v9005
      %v9007 = vpop.f32.mrf.mxu0
      %v9008 = vadd.f32 %v8839, %v9007
      %9009 = vmatmul.bf16.gmra.mxu0 %v2834
      %v9010 = vpop.f32.mrf.mxu0
      %v9011 = vadd.f32 %v8842, %v9010
      %v9012 = vpop.f32.mrf.mxu0
      %v9013 = vadd.f32 %v8844, %v9012
      %9014 = vmatmul.bf16.gmra.mxu0 %v2837
      %v9015 = vpop.f32.mrf.mxu0
      %v9016 = vadd.f32 %v8847, %v9015
      %v9017 = vpop.f32.mrf.mxu0
      %v9018 = vadd.f32 %v8849, %v9017
      %9019 = vmatmul.bf16.gmra.mxu0 %v3691
      %v9020 = vpop.f32.mrf.mxu0
      %v9021 = vadd.f32 %v8852, %v9020
      %v9022 = vpop.f32.mrf.mxu0
      %v9023 = vadd.f32 %v8854, %v9022
      %9024 = vmatmul.bf16.gmra.mxu0 %v2843
      %v9025 = vpop.f32.mrf.mxu0
      %v9026 = vadd.f32 %v8857, %v9025
      %v9027 = vpop.f32.mrf.mxu0
      %v9028 = vadd.f32 %v8859, %v9027
      %9029 = vmatmul.bf16.gmra.mxu0 %v2846
      %v9030 = vpop.f32.mrf.mxu0
      %v9031 = vadd.f32 %v8862, %v9030
      %v9032 = vpop.f32.mrf.mxu0
      %v9033 = vadd.f32 %v8864, %v9032
      %9034 = vmatmul.bf16.gmra.mxu0 %v2849
      %v9035 = vpop.f32.mrf.mxu0
      %v9036 = vadd.f32 %v8867, %v9035
      %v9037 = vpop.f32.mrf.mxu0
      %v9038 = vadd.f32 %v8869, %v9037
      %9039 = vmatmul.bf16.gmra.mxu0 %v3694
      %v9040 = vpop.f32.mrf.mxu0
      %v9041 = vadd.f32 %v8872, %v9040
      %v9042 = vpop.f32.mrf.mxu0
      %v9043 = vadd.f32 %v8874, %v9042
      %9044 = vmatmul.bf16.gmra.mxu0 %v2855
      %v9045 = vpop.f32.mrf.mxu0
      %v9046 = vadd.f32 %v8877, %v9045
      %v9047 = vpop.f32.mrf.mxu0
      %v9048 = vadd.f32 %v8879, %v9047
      %9049 = vmatmul.bf16.gmra.mxu0 %v2858
      %v9050 = vpop.f32.mrf.mxu0
      %v9051 = vadd.f32 %v8882, %v9050
      %v9052 = vpop.f32.mrf.mxu0
      %v9053 = vadd.f32 %v8884, %v9052
      %9054 = vmatmul.bf16.gmra.mxu0 %v2861
      %v9055 = vpop.f32.mrf.mxu0
      %v9056 = vadd.f32 %v8887, %v9055
      %v9057 = vpop.f32.mrf.mxu0
      %v9058 = vadd.f32 %v8889, %v9057
      %9059 = vmatmul.bf16.gmra.mxu0 %v3697
      %v9060 = vpop.f32.mrf.mxu0
      %v9061 = vadd.f32 %v8892, %v9060
      %v9062 = vpop.f32.mrf.mxu0
      %v9063 = vadd.f32 %v8894, %v9062
      %9064 = vmatmul.bf16.gmra.mxu0 %v4507
      %v9065 = vpop.f32.mrf.mxu0
      %v9066 = vadd.f32 %v8897, %v9065
      %v9067 = vpop.f32.mrf.mxu0
      %v9068 = vadd.f32 %v8899, %v9067
      %9069 = vmatmul.bf16.gmra.mxu0 %v4510
      %v9070 = vpop.f32.mrf.mxu0
      %v9071 = vadd.f32 %v8902, %v9070
      %v9072 = vpop.f32.mrf.mxu0
      %v9073 = vadd.f32 %v8904, %v9072
      %9074 = vmatmul.bf16.gmra.mxu0 %v4513
      %v9075 = vpop.f32.mrf.mxu0
      %v9076 = vadd.f32 %v8907, %v9075
      %v9077 = vpop.f32.mrf.mxu0
      %v9078 = vadd.f32 %v8909, %v9077
      %9079 = vmatmul.bf16.gmra.mxu0 %v6084
      %v9080 = vpop.f32.mrf.mxu0
      %v9081 = vadd.f32 %v8912, %v9080
      %v9082 = vpop.f32.mrf.mxu0
      %v9083 = vadd.f32 %v8914, %v9082
      %9084 = vmatmul.bf16.gmra.mxu0 %v6873
      %v9085 = vpop.f32.mrf.mxu0
      %v9086 = vadd.f32 %v8917, %v9085
      %v9087 = vpop.f32.mrf.mxu0
      %v9088 = vadd.f32 %v8919, %v9087
      %9089 = vmatmul.bf16.gmra.mxu0 %v6876
      %v9090 = vpop.f32.mrf.mxu0
      %v9091 = vadd.f32 %v8922, %v9090
      %v9092 = vpop.f32.mrf.mxu0
      %v9093 = vadd.f32 %v8924, %v9092
      %9094 = vmatmul.bf16.gmra.mxu0 %v6879
      %v9095 = vpop.f32.mrf.mxu0
      %v9096 = vadd.f32 %v8927, %v9095
      %v9097 = vpop.f32.mrf.mxu0
      %v9098 = vadd.f32 %v8929, %v9097
      %9099 = vmatmul.bf16.gmra.mxu0 %v8450
      %v9100 = vpop.f32.mrf.mxu0
      %v9101 = vadd.f32 %v8932, %v9100
      %v9102 = vpop.f32.mrf.mxu0
      %v9103 = vadd.f32 %v8934, %v9102
      %9104 = vdwg.mxu0
      %v9105 = vadd.f32 %v8333, %v8946
      %v9106 = vadd.f32 %v8334, %v8948
      %v9107 = vadd.f32 %v8335, %v8951
      %v9108 = vadd.f32 %v8336, %v8953
      %v9109 = vadd.f32 %v8337, %v8956
      %v9110 = vadd.f32 %v8338, %v8958
      %v9111 = vadd.f32 %v8339, %v8961
      %v9112 = vadd.f32 %v8340, %v8963
      %v9113 = vadd.f32 %v8341, %v8966
      %v9114 = vadd.f32 %v8342, %v8968
      %v9115 = vadd.f32 %v8343, %v8971
      %v9116 = vadd.f32 %v8344, %v8973
      %v9117 = vadd.f32 %v8345, %v8976
      %v9118 = vadd.f32 %v8346, %v8978
      %v9119 = vadd.f32 %v8347, %v8981
      %v9120 = vadd.f32 %v8348, %v8983
      %v9121 = vadd.f32 %v8349, %v8986
      %v9122 = vadd.f32 %v8350, %v8988
      %v9123 = vadd.f32 %v8351, %v8991
      %v9124 = vadd.f32 %v8352, %v8993
      %v9125 = vadd.f32 %v8353, %v8996
      %v9126 = vadd.f32 %v8354, %v8998
      %v9127 = vadd.f32 %v8355, %v9001
      %v9128 = vadd.f32 %v8356, %v9003
      %v9129 = vadd.f32 %v8357, %v9006
      %v9130 = vadd.f32 %v8358, %v9008
      %v9131 = vadd.f32 %v8359, %v9011
      %v9132 = vadd.f32 %v8360, %v9013
      %v9133 = vadd.f32 %v8361, %v9016
      %v9134 = vadd.f32 %v8362, %v9018
      %v9135 = vadd.f32 %v8363, %v9021
      %v9136 = vadd.f32 %v8364, %v9023
      %v9137 = vadd.f32 %v8365, %v9026
      %v9138 = vadd.f32 %v8366, %v9028
      %v9139 = vadd.f32 %v8367, %v9031
      %v9140 = vadd.f32 %v8368, %v9033
      %v9141 = vadd.f32 %v8369, %v9036
      %v9142 = vadd.f32 %v8370, %v9038
      %v9143 = vadd.f32 %v8371, %v9041
      %v9144 = vadd.f32 %v8372, %v9043
      %v9145 = vadd.f32 %v8373, %v9046
      %v9146 = vadd.f32 %v8374, %v9048
      %v9147 = vadd.f32 %v8375, %v9051
      %v9148 = vadd.f32 %v8376, %v9053
      %v9149 = vadd.f32 %v8377, %v9056
      %v9150 = vadd.f32 %v8378, %v9058
      %v9151 = vadd.f32 %v8379, %v9061
      %v9152 = vadd.f32 %v8380, %v9063
      %v9153 = vadd.f32 %v8381, %v9066
      %v9154 = vadd.f32 %v8382, %v9068
      %v9155 = vadd.f32 %v8383, %v9071
      %v9156 = vadd.f32 %v8384, %v9073
      %v9157 = vadd.f32 %v8385, %v9076
      %v9158 = vadd.f32 %v8386, %v9078
      %v9159 = vadd.f32 %v8387, %v9081
      %v9160 = vadd.f32 %v8388, %v9083
      %v9161 = vadd.f32 %v8389, %v9086
      %v9162 = vadd.f32 %v8390, %v9088
      %v9163 = vadd.f32 %v8391, %v9091
      %v9164 = vadd.f32 %v8392, %v9093
      %v9165 = vadd.f32 %v8393, %v9096
      %v9166 = vadd.f32 %v8394, %v9098
      %v9167 = vadd.f32 %v8395, %v9101
      %v9168 = vadd.f32 %v8396, %v9103
      %v9169 = vpack.c.bf16 %v9105, %v9105
      %v9170 = vpack.c.bf16 %v9106, %v9106
      %v9171 = vpack.c.bf16 %v9107, %v9107
      %v9172 = vpack.c.bf16 %v9108, %v9108
      %v9173 = vpack.c.bf16 %v9109, %v9109
      %v9174 = vpack.c.bf16 %v9110, %v9110
      %v9175 = vpack.c.bf16 %v9111, %v9111
      %v9176 = vpack.c.bf16 %v9112, %v9112
      %v9177 = vpack.c.bf16 %v9113, %v9113
      %v9178 = vpack.c.bf16 %v9114, %v9114
      %v9179 = vpack.c.bf16 %v9115, %v9115
      %v9180 = vpack.c.bf16 %v9116, %v9116
      %v9181 = vpack.c.bf16 %v9117, %v9117
      %v9182 = vpack.c.bf16 %v9118, %v9118
      %v9183 = vpack.c.bf16 %v9119, %v9119
      %v9184 = vpack.c.bf16 %v9120, %v9120
      %v9185 = vpack.c.bf16 %v9121, %v9121
      %v9186 = vpack.c.bf16 %v9122, %v9122
      %v9187 = vpack.c.bf16 %v9123, %v9123
      %v9188 = vpack.c.bf16 %v9124, %v9124
      %v9189 = vpack.c.bf16 %v9125, %v9125
      %v9190 = vpack.c.bf16 %v9126, %v9126
      %v9191 = vpack.c.bf16 %v9127, %v9127
      %v9192 = vpack.c.bf16 %v9128, %v9128
      %v9193 = vpack.c.bf16 %v9129, %v9129
      %v9194 = vpack.c.bf16 %v9130, %v9130
      %v9195 = vpack.c.bf16 %v9131, %v9131
      %v9196 = vpack.c.bf16 %v9132, %v9132
      %v9197 = vpack.c.bf16 %v9133, %v9133
      %v9198 = vpack.c.bf16 %v9134, %v9134
      %v9199 = vpack.c.bf16 %v9135, %v9135
      %v9200 = vpack.c.bf16 %v9136, %v9136
      %v9201 = vpack.c.bf16 %v9137, %v9137
      %v9202 = vpack.c.bf16 %v9138, %v9138
      %v9203 = vpack.c.bf16 %v9139, %v9139
      %v9204 = vpack.c.bf16 %v9140, %v9140
      %v9205 = vpack.c.bf16 %v9141, %v9141
      %v9206 = vpack.c.bf16 %v9142, %v9142
      %v9207 = vpack.c.bf16 %v9143, %v9143
      %v9208 = vpack.c.bf16 %v9144, %v9144
      %v9209 = vpack.c.bf16 %v9145, %v9145
      %v9210 = vpack.c.bf16 %v9146, %v9146
      %v9211 = vpack.c.bf16 %v9147, %v9147
      %v9212 = vpack.c.bf16 %v9148, %v9148
      %v9213 = vpack.c.bf16 %v9149, %v9149
      %v9214 = vpack.c.bf16 %v9150, %v9150
      %v9215 = vpack.c.bf16 %v9151, %v9151
      %v9216 = vpack.c.bf16 %v9152, %v9152
      %v9217 = vpack.c.bf16 %v9153, %v9153
      %v9218 = vpack.c.bf16 %v9154, %v9154
      %v9219 = vpack.c.bf16 %v9155, %v9155
      %v9220 = vpack.c.bf16 %v9156, %v9156
      %v9221 = vpack.c.bf16 %v9157, %v9157
      %v9222 = vpack.c.bf16 %v9158, %v9158
      %v9223 = vpack.c.bf16 %v9159, %v9159
      %v9224 = vpack.c.bf16 %v9160, %v9160
      %v9225 = vpack.c.bf16 %v9161, %v9161
      %v9226 = vpack.c.bf16 %v9162, %v9162
      %v9227 = vpack.c.bf16 %v9163, %v9163
      %v9228 = vpack.c.bf16 %v9164, %v9164
      %v9229 = vpack.c.bf16 %v9165, %v9165
      %v9230 = vpack.c.bf16 %v9166, %v9166
      %v9231 = vpack.c.bf16 %v9167, %v9167
      %v9232 = vpack.c.bf16 %v9168, %v9168
      %9233 = vst [vmem:[%s177] sm:$0xf] %v9169
      %9234 = vst [vmem:[%s177 + $0x4] sm:$0xf] %v9170
      %9235 = vst [vmem:[%s177 + $0x8] sm:$0xf] %v9171
      %9236 = vst [vmem:[%s177 + $0xc] sm:$0xf] %v9172
      %9237 = vst [vmem:[%s177 + $0x10] sm:$0xf] %v9173
      %9238 = vst [vmem:[%s177 + $0x14] sm:$0xf] %v9174
      %9239 = vst [vmem:[%s177 + $0x18] sm:$0xf] %v9175
      %9240 = vst [vmem:[%s177 + $0x1c] sm:$0xf] %v9176
      %9241 = vst [vmem:[%s177 + $0x20] sm:$0xf] %v9177
      %9242 = vst [vmem:[%s177 + $0x24] sm:$0xf] %v9178
      %9243 = vst [vmem:[%s177 + $0x28] sm:$0xf] %v9179
      %9244 = vst [vmem:[%s177 + $0x2c] sm:$0xf] %v9180
      %9245 = vst [vmem:[%s177 + $0x30] sm:$0xf] %v9181
      %9246 = vst [vmem:[%s177 + $0x34] sm:$0xf] %v9182
      %9247 = vst [vmem:[%s177 + $0x38] sm:$0xf] %v9183
      %9248 = vst [vmem:[%s177 + $0x3c] sm:$0xf] %v9184
      %9249 = vst [vmem:[%s177 + $0x40] sm:$0xf] %v9185
      %9250 = vst [vmem:[%s177 + $0x44] sm:$0xf] %v9186
      %9251 = vst [vmem:[%s177 + $0x48] sm:$0xf] %v9187
      %9252 = vst [vmem:[%s177 + $0x4c] sm:$0xf] %v9188
      %9253 = vst [vmem:[%s177 + $0x50] sm:$0xf] %v9189
      %9254 = vst [vmem:[%s177 + $0x54] sm:$0xf] %v9190
      %9255 = vst [vmem:[%s177 + $0x58] sm:$0xf] %v9191
      %9256 = vst [vmem:[%s177 + $0x5c] sm:$0xf] %v9192
      %9257 = vst [vmem:[%s177 + $0x60] sm:$0xf] %v9193
      %9258 = vst [vmem:[%s177 + $0x64] sm:$0xf] %v9194
      %9259 = vst [vmem:[%s177 + $0x68] sm:$0xf] %v9195
      %9260 = vst [vmem:[%s177 + $0x6c] sm:$0xf] %v9196
      %9261 = vst [vmem:[%s177 + $0x70] sm:$0xf] %v9197
      %9262 = vst [vmem:[%s177 + $0x74] sm:$0xf] %v9198
      %9263 = vst [vmem:[%s177 + $0x78] sm:$0xf] %v9199
      %9264 = vst [vmem:[%s177 + $0x7c] sm:$0xf] %v9200
      %9265 = vst [vmem:[%s177 + $0x80] sm:$0xf] %v9201
      %9266 = vst [vmem:[%s177 + $0x84] sm:$0xf] %v9202
      %9267 = vst [vmem:[%s177 + $0x88] sm:$0xf] %v9203
      %9268 = vst [vmem:[%s177 + $0x8c] sm:$0xf] %v9204
      %9269 = vst [vmem:[%s177 + $0x90] sm:$0xf] %v9205
      %9270 = vst [vmem:[%s177 + $0x94] sm:$0xf] %v9206
      %9271 = vst [vmem:[%s177 + $0x98] sm:$0xf] %v9207
      %9272 = vst [vmem:[%s177 + $0x9c] sm:$0xf] %v9208
      %9273 = vst [vmem:[%s177 + $0xa0] sm:$0xf] %v9209
      %9274 = vst [vmem:[%s177 + $0xa4] sm:$0xf] %v9210
      %9275 = vst [vmem:[%s177 + $0xa8] sm:$0xf] %v9211
      %9276 = vst [vmem:[%s177 + $0xac] sm:$0xf] %v9212
      %9277 = vst [vmem:[%s177 + $0xb0] sm:$0xf] %v9213
      %9278 = vst [vmem:[%s177 + $0xb4] sm:$0xf] %v9214
      %9279 = vst [vmem:[%s177 + $0xb8] sm:$0xf] %v9215
      %9280 = vst [vmem:[%s177 + $0xbc] sm:$0xf] %v9216
      %9281 = vst [vmem:[%s177 + $0xc0] sm:$0xf] %v9217
      %9282 = vst [vmem:[%s177 + $0xc4] sm:$0xf] %v9218
      %9283 = vst [vmem:[%s177 + $0xc8] sm:$0xf] %v9219
      %9284 = vst [vmem:[%s177 + $0xcc] sm:$0xf] %v9220
      %9285 = vst [vmem:[%s177 + $0xd0] sm:$0xf] %v9221
      %9286 = vst [vmem:[%s177 + $0xd4] sm:$0xf] %v9222
      %9287 = vst [vmem:[%s177 + $0xd8] sm:$0xf] %v9223
      %9288 = vst [vmem:[%s177 + $0xdc] sm:$0xf] %v9224
      %9289 = vst [vmem:[%s177 + $0xe0] sm:$0xf] %v9225
      %9290 = vst [vmem:[%s177 + $0xe4] sm:$0xf] %v9226
      %9291 = vst [vmem:[%s177 + $0xe8] sm:$0xf] %v9227
      %9292 = vst [vmem:[%s177 + $0xec] sm:$0xf] %v9228
      %9293 = vst [vmem:[%s177 + $0xf0] sm:$0xf] %v9229
      %9294 = vst [vmem:[%s177 + $0xf4] sm:$0xf] %v9230
      %9295 = vst [vmem:[%s177 + $0xf8] sm:$0xf] %v9231
      %9296 = vst [vmem:[%s177 + $0xfc] sm:$0xf] %v9232
      %v9297 = vunpack.c.l.bf16 %v9169
      %v9298 = vunpack.c.l.bf16 %v9170
      %v9299 = vunpack.c.l.bf16 %v9171
      %v9300 = vunpack.c.l.bf16 %v9172
      %v9301 = vunpack.c.l.bf16 %v9173
      %v9302 = vunpack.c.l.bf16 %v9174
      %v9303 = vunpack.c.l.bf16 %v9175
      %v9304 = vunpack.c.l.bf16 %v9176
      %v9305 = vunpack.c.l.bf16 %v9177
      %v9306 = vunpack.c.l.bf16 %v9178
      %v9307 = vunpack.c.l.bf16 %v9179
      %v9308 = vunpack.c.l.bf16 %v9180
      %v9309 = vunpack.c.l.bf16 %v9181
      %v9310 = vunpack.c.l.bf16 %v9182
      %v9311 = vunpack.c.l.bf16 %v9183
      %v9312 = vunpack.c.l.bf16 %v9184
      %v9313 = vunpack.c.l.bf16 %v9185
      %v9314 = vunpack.c.l.bf16 %v9186
      %v9315 = vunpack.c.l.bf16 %v9187
      %v9316 = vunpack.c.l.bf16 %v9188
      %v9317 = vunpack.c.l.bf16 %v9189
      %v9318 = vunpack.c.l.bf16 %v9190
      %v9319 = vunpack.c.l.bf16 %v9191
      %v9320 = vunpack.c.l.bf16 %v9192
      %v9321 = vunpack.c.l.bf16 %v9193
      %v9322 = vunpack.c.l.bf16 %v9194
      %v9323 = vunpack.c.l.bf16 %v9195
      %v9324 = vunpack.c.l.bf16 %v9196
      %v9325 = vunpack.c.l.bf16 %v9197
      %v9326 = vunpack.c.l.bf16 %v9198
      %v9327 = vunpack.c.l.bf16 %v9199
      %v9328 = vunpack.c.l.bf16 %v9200
      %v9329 = vunpack.c.l.bf16 %v9201
      %v9330 = vunpack.c.l.bf16 %v9202
      %v9331 = vunpack.c.l.bf16 %v9203
      %v9332 = vunpack.c.l.bf16 %v9204
      %v9333 = vunpack.c.l.bf16 %v9205
      %v9334 = vunpack.c.l.bf16 %v9206
      %v9335 = vunpack.c.l.bf16 %v9207
      %v9336 = vunpack.c.l.bf16 %v9208
      %v9337 = vunpack.c.l.bf16 %v9209
      %v9338 = vunpack.c.l.bf16 %v9210
      %v9339 = vunpack.c.l.bf16 %v9211
      %v9340 = vunpack.c.l.bf16 %v9212
      %v9341 = vunpack.c.l.bf16 %v9213
      %v9342 = vunpack.c.l.bf16 %v9214
      %v9343 = vunpack.c.l.bf16 %v9215
      %v9344 = vunpack.c.l.bf16 %v9216
      %v9345 = vunpack.c.l.bf16 %v9217
      %v9346 = vunpack.c.l.bf16 %v9218
      %v9347 = vunpack.c.l.bf16 %v9219
      %v9348 = vunpack.c.l.bf16 %v9220
      %v9349 = vunpack.c.l.bf16 %v9221
      %v9350 = vunpack.c.l.bf16 %v9222
      %v9351 = vunpack.c.l.bf16 %v9223
      %v9352 = vunpack.c.l.bf16 %v9224
      %v9353 = vunpack.c.l.bf16 %v9225
      %v9354 = vunpack.c.l.bf16 %v9226
      %v9355 = vunpack.c.l.bf16 %v9227
      %v9356 = vunpack.c.l.bf16 %v9228
      %v9357 = vunpack.c.l.bf16 %v9229
      %v9358 = vunpack.c.l.bf16 %v9230
      %v9359 = vunpack.c.l.bf16 %v9231
      %v9360 = vunpack.c.l.bf16 %v9232
      %v9361 = vadd.f32 %v9297, %v9298
      %v9362 = vadd.f32 %v9361, %v9299
      %v9363 = vadd.f32 %v9362, %v9300
      %v9364 = vadd.f32 %v9363, %v9301
      %v9365 = vadd.f32 %v9364, %v9302
      %v9366 = vadd.f32 %v9365, %v9303
      %v9367 = vadd.f32 %v9366, %v9304
      %v9368 = vadd.f32 %v9367, %v9305
      %v9369 = vadd.f32 %v9368, %v9306
      %v9370 = vadd.f32 %v9369, %v9307
      %v9371 = vadd.f32 %v9370, %v9308
      %v9372 = vadd.f32 %v9371, %v9309
      %v9373 = vadd.f32 %v9372, %v9310
      %v9374 = vadd.f32 %v9373, %v9311
      %v9375 = vadd.f32 %v9374, %v9312
      %v9376 = vadd.f32 %v9375, %v9313
      %v9377 = vadd.f32 %v9376, %v9314
      %v9378 = vadd.f32 %v9377, %v9315
      %v9379 = vadd.f32 %v9378, %v9316
      %v9380 = vadd.f32 %v9379, %v9317
      %v9381 = vadd.f32 %v9380, %v9318
      %v9382 = vadd.f32 %v9381, %v9319
      %v9383 = vadd.f32 %v9382, %v9320
      %v9384 = vadd.f32 %v9383, %v9321
      %v9385 = vadd.f32 %v9384, %v9322
      %v9386 = vadd.f32 %v9385, %v9323
      %v9387 = vadd.f32 %v9386, %v9324
      %v9388 = vadd.f32 %v9387, %v9325
      %v9389 = vadd.f32 %v9388, %v9326
      %v9390 = vadd.f32 %v9389, %v9327
      %v9391 = vadd.f32 %v9390, %v9328
      %v9392 = vadd.f32 %v9391, %v9329
      %v9393 = vadd.f32 %v9392, %v9330
      %v9394 = vadd.f32 %v9393, %v9331
      %v9395 = vadd.f32 %v9394, %v9332
      %v9396 = vadd.f32 %v9395, %v9333
      %v9397 = vadd.f32 %v9396, %v9334
      %v9398 = vadd.f32 %v9397, %v9335
      %v9399 = vadd.f32 %v9398, %v9336
      %v9400 = vadd.f32 %v9399, %v9337
      %v9401 = vadd.f32 %v9400, %v9338
      %v9402 = vadd.f32 %v9401, %v9339
      %v9403 = vadd.f32 %v9402, %v9340
      %v9404 = vadd.f32 %v9403, %v9341
      %v9405 = vadd.f32 %v9404, %v9342
      %v9406 = vadd.f32 %v9405, %v9343
      %v9407 = vadd.f32 %v9406, %v9344
      %v9408 = vadd.f32 %v9407, %v9345
      %v9409 = vadd.f32 %v9408, %v9346
      %v9410 = vadd.f32 %v9409, %v9347
      %v9411 = vadd.f32 %v9410, %v9348
      %v9412 = vadd.f32 %v9411, %v9349
      %v9413 = vadd.f32 %v9412, %v9350
      %v9414 = vadd.f32 %v9413, %v9351
      %v9415 = vadd.f32 %v9414, %v9352
      %v9416 = vadd.f32 %v9415, %v9353
      %v9417 = vadd.f32 %v9416, %v9354
      %v9418 = vadd.f32 %v9417, %v9355
      %v9419 = vadd.f32 %v9418, %v9356
      %v9420 = vadd.f32 %v9419, %v9357
      %v9421 = vadd.f32 %v9420, %v9358
      %v9422 = vadd.f32 %v9421, %v9359
      %v9423 = vadd.f32 %v9422, %v9360
      %v9424 = vrot.slane %v9423, 4
      %v9425 = vadd.f32 %v9423, %v9424
      %v9426 = vrot.slane %v9425, 2
      %v9427 = vadd.f32 %v9425, %v9426
      %v9428 = vrot.slane %v9427, 1
      %v9429 = vadd.f32 %v9427, %v9428
      %v9430 = vmul.f32 %v9297, %v9297
      %v9431 = vmul.f32 %v9298, %v9298
      %v9432 = vmul.f32 %v9299, %v9299
      %v9433 = vmul.f32 %v9300, %v9300
      %v9434 = vmul.f32 %v9301, %v9301
      %v9435 = vmul.f32 %v9302, %v9302
      %v9436 = vmul.f32 %v9303, %v9303
      %v9437 = vmul.f32 %v9304, %v9304
      %v9438 = vmul.f32 %v9305, %v9305
      %v9439 = vmul.f32 %v9306, %v9306
      %v9440 = vmul.f32 %v9307, %v9307
      %v9441 = vmul.f32 %v9308, %v9308
      %v9442 = vmul.f32 %v9309, %v9309
      %v9443 = vmul.f32 %v9310, %v9310
      %v9444 = vmul.f32 %v9311, %v9311
      %v9445 = vmul.f32 %v9312, %v9312
      %v9446 = vmul.f32 %v9313, %v9313
      %v9447 = vmul.f32 %v9314, %v9314
      %v9448 = vmul.f32 %v9315, %v9315
      %v9449 = vmul.f32 %v9316, %v9316
      %v9450 = vmul.f32 %v9317, %v9317
      %v9451 = vmul.f32 %v9318, %v9318
      %v9452 = vmul.f32 %v9319, %v9319
      %v9453 = vmul.f32 %v9320, %v9320
      %v9454 = vmul.f32 %v9321, %v9321
      %v9455 = vmul.f32 %v9322, %v9322
      %v9456 = vmul.f32 %v9323, %v9323
      %v9457 = vmul.f32 %v9324, %v9324
      %v9458 = vmul.f32 %v9325, %v9325
      %v9459 = vmul.f32 %v9326, %v9326
      %v9460 = vmul.f32 %v9327, %v9327
      %v9461 = vmul.f32 %v9328, %v9328
      %v9462 = vmul.f32 %v9329, %v9329
      %v9463 = vmul.f32 %v9330, %v9330
      %v9464 = vmul.f32 %v9331, %v9331
      %v9465 = vmul.f32 %v9332, %v9332
      %v9466 = vmul.f32 %v9333, %v9333
      %v9467 = vmul.f32 %v9334, %v9334
      %v9468 = vmul.f32 %v9335, %v9335
      %v9469 = vmul.f32 %v9336, %v9336
      %v9470 = vmul.f32 %v9337, %v9337
      %v9471 = vmul.f32 %v9338, %v9338
      %v9472 = vmul.f32 %v9339, %v9339
      %v9473 = vmul.f32 %v9340, %v9340
      %v9474 = vmul.f32 %v9341, %v9341
      %v9475 = vmul.f32 %v9342, %v9342
      %v9476 = vmul.f32 %v9343, %v9343
      %v9477 = vmul.f32 %v9344, %v9344
      %v9478 = vmul.f32 %v9345, %v9345
      %v9479 = vmul.f32 %v9346, %v9346
      %v9480 = vmul.f32 %v9347, %v9347
      %v9481 = vmul.f32 %v9348, %v9348
      %v9482 = vmul.f32 %v9349, %v9349
      %v9483 = vmul.f32 %v9350, %v9350
      %v9484 = vmul.f32 %v9351, %v9351
      %v9485 = vmul.f32 %v9352, %v9352
      %v9486 = vmul.f32 %v9353, %v9353
      %v9487 = vmul.f32 %v9354, %v9354
      %v9488 = vmul.f32 %v9355, %v9355
      %v9489 = vmul.f32 %v9356, %v9356
      %v9490 = vmul.f32 %v9357, %v9357
      %v9491 = vmul.f32 %v9358, %v9358
      %v9492 = vmul.f32 %v9359, %v9359
      %v9493 = vmul.f32 %v9360, %v9360
      %v9494 = vadd.f32 %v9430, %v9431
      %v9495 = vadd.f32 %v9494, %v9432
      %v9496 = vadd.f32 %v9495, %v9433
      %v9497 = vadd.f32 %v9496, %v9434
      %v9498 = vadd.f32 %v9497, %v9435
      %v9499 = vadd.f32 %v9498, %v9436
      %v9500 = vadd.f32 %v9499, %v9437
      %v9501 = vadd.f32 %v9500, %v9438
      %v9502 = vadd.f32 %v9501, %v9439
      %v9503 = vadd.f32 %v9502, %v9440
      %v9504 = vadd.f32 %v9503, %v9441
      %v9505 = vadd.f32 %v9504, %v9442
      %v9506 = vadd.f32 %v9505, %v9443
      %v9507 = vadd.f32 %v9506, %v9444
      %v9508 = vadd.f32 %v9507, %v9445
      %v9509 = vadd.f32 %v9508, %v9446
      %v9510 = vadd.f32 %v9509, %v9447
      %v9511 = vadd.f32 %v9510, %v9448
      %v9512 = vadd.f32 %v9511, %v9449
      %v9513 = vadd.f32 %v9512, %v9450
      %v9514 = vadd.f32 %v9513, %v9451
      %v9515 = vadd.f32 %v9514, %v9452
      %v9516 = vadd.f32 %v9515, %v9453
      %v9517 = vadd.f32 %v9516, %v9454
      %v9518 = vadd.f32 %v9517, %v9455
      %v9519 = vadd.f32 %v9518, %v9456
      %v9520 = vadd.f32 %v9519, %v9457
      %v9521 = vadd.f32 %v9520, %v9458
      %v9522 = vadd.f32 %v9521, %v9459
      %v9523 = vadd.f32 %v9522, %v9460
      %v9524 = vadd.f32 %v9523, %v9461
      %v9525 = vadd.f32 %v9524, %v9462
      %v9526 = vadd.f32 %v9525, %v9463
      %v9527 = vadd.f32 %v9526, %v9464
      %v9528 = vadd.f32 %v9527, %v9465
      %v9529 = vadd.f32 %v9528, %v9466
      %v9530 = vadd.f32 %v9529, %v9467
      %v9531 = vadd.f32 %v9530, %v9468
      %v9532 = vadd.f32 %v9531, %v9469
      %v9533 = vadd.f32 %v9532, %v9470
      %v9534 = vadd.f32 %v9533, %v9471
      %v9535 = vadd.f32 %v9534, %v9472
      %v9536 = vadd.f32 %v9535, %v9473
      %v9537 = vadd.f32 %v9536, %v9474
      %v9538 = vadd.f32 %v9537, %v9475
      %v9539 = vadd.f32 %v9538, %v9476
      %v9540 = vadd.f32 %v9539, %v9477
      %v9541 = vadd.f32 %v9540, %v9478
      %v9542 = vadd.f32 %v9541, %v9479
      %v9543 = vadd.f32 %v9542, %v9480
      %v9544 = vadd.f32 %v9543, %v9481
      %v9545 = vadd.f32 %v9544, %v9482
      %v9546 = vadd.f32 %v9545, %v9483
      %v9547 = vadd.f32 %v9546, %v9484
      %v9548 = vadd.f32 %v9547, %v9485
      %v9549 = vadd.f32 %v9548, %v9486
      %v9550 = vadd.f32 %v9549, %v9487
      %v9551 = vadd.f32 %v9550, %v9488
      %v9552 = vadd.f32 %v9551, %v9489
      %v9553 = vadd.f32 %v9552, %v9490
      %v9554 = vadd.f32 %v9553, %v9491
      %v9555 = vadd.f32 %v9554, %v9492
      %v9556 = vadd.f32 %v9555, %v9493
      %v9557 = vrot.slane %v9556, 4
      %v9558 = vadd.f32 %v9556, %v9557
      %v9559 = vrot.slane %v9558, 2
      %v9560 = vadd.f32 %v9558, %v9559
      %v9561 = vrot.slane %v9560, 1
      %v9562 = vadd.f32 %v9560, %v9561
      %vm9563 = vcmask 1040384
      %v9564 = vsel %vm9563, %v9429, %v9562
      %9565 = vst [vmem:[%s181] sm:$0x3] %v9564
      %p9566 = scmp.lt.s32.totalorder %s15, 1
      %s9567 = scalar_select %p9566, %s15, 1
      %s9568 = smul.addr %s9567, 64
      %s9569 = smul.addr %s9568, 4
      %s9570 = scalar_lea.vmem %s2, %s9569
      %p9571 = scmp.lt.s32.totalorder %s15, 1
      %s9572 = scalar_select %p9571, %s15, 1
      %s9573 = smul.addr %s9572, 2
      %s9574 = scalar_lea.vmem %s3, %s9573
      // Predicated region
      $region29: #{residual_block_forward.8} parent=27 // pred_check
        %p9575 = pneg %p80
      $region30: #{residual_block_forward.8} parent=27 // pred_check_branch
        %9577 = sbr.rel (%p9575) target = $region32
      $region31: #{residual_block_forward.8} parent=27 // pred_region
        _
      $region32: #{residual_block_forward.8} parent=27 // pred_fallthru
        _
      // Predicated region
      $region33: #{residual_block_forward.8} parent=27 // pred_check
        %p9578 = pneg %p106
      $region34: #{residual_block_forward.8} parent=27 // pred_check_branch
        %9580 = sbr.rel (%p9578) target = $region36
      $region35: #{residual_block_forward.8} parent=27 // pred_region
        _
      $region36: #{residual_block_forward.8} parent=27 // pred_fallthru
        _
    $region28: #{residual_block_forward.8} parent=5 // pred_fallthru
      _
    %p9581 = scmp.le.s32.totalorder 2, %s10
    // Predicated region
    $region37: #{residual_block_forward.8} parent=5 // pred_check
      %p9582 = pneg %p9581
    $region38: #{residual_block_forward.8} parent=5 // pred_check_branch
      %9584 = sbr.rel (%p9582) target = $region40
    $region39: #{residual_block_forward.8} parent=5 // pred_region
      %s9585 = ssub.s32 %s10, 2
      // Predicated region
      $region41: #{residual_block_forward.8} parent=39 // pred_check
        %p9586 = pneg %p86
      $region42: #{residual_block_forward.8} parent=39 // pred_check_branch
        %9588 = sbr.rel (%p9586) target = $region44
      $region43: #{residual_block_forward.8} parent=39 // pred_region
        %p9589 = scmp.lt.s32.totalorder %s16, 1
        %s9590 = scalar_select %p9589, %s16, 1
        %s9591 = smul.addr %s9590, 64
        %s9592 = smul.addr %s9591, 4
        %s9593 = scalar_lea.vmem %s2, %s9592
      $region44: #{residual_block_forward.8} parent=39 // pred_fallthru
        _
      // Predicated region
      $region45: #{residual_block_forward.8} parent=39 // pred_check
        %p9594 = pneg %p112
      $region46: #{residual_block_forward.8} parent=39 // pred_check_branch
        %9596 = sbr.rel (%p9594) target = $region48
      $region47: #{residual_block_forward.8} parent=39 // pred_region
        %p9597 = scmp.lt.s32.totalorder %s16, 1
        %s9598 = scalar_select %p9597, %s16, 1
        %s9599 = smul.addr %s9598, 2
        %s9600 = scalar_lea.vmem %s3, %s9599
      $region48: #{residual_block_forward.8} parent=39 // pred_fallthru
        _
    $region40: #{residual_block_forward.8} parent=5 // pred_fallthru
      _
  $region6: #{residual_block_forward.8} parent=0 // loop_footer
    %s14 = sadd.s32 1, %s10
  $region7: #{residual_block_forward.8} parent=0 // loop_footer_branch
    %9 = sbr.rel target = $region3
  $region8: #{residual_block_forward.8} parent=0 // loop_exit
    _

</llo_original>
